<compile_context>
chip_gen: v7x
topology: tpu7x:2x2x1
jax: 0.10.0
libtpu: 0.0.40
codegen_flags: <defaults>
</compile_context>

<pallas_src>
import functools

import jax
import jax.numpy as jnp
from jax import lax
from jax.experimental import pallas as pl
from jax.experimental.pallas import tpu as pltpu


# ---------------------------------------------------------------------------
# Fused kernel: y = f2 - f1 ; o = f1 + sum_i sel[:, i] * branch_i(y)
# ---------------------------------------------------------------------------
def _fused_interp_kernel(f1_ref, f2_ref,      # VMEM (bn, H, W, C) f32
                         sel_ref,             # VMEM (bn, n_branch, C) f32 (lane-replicated)
                         w_ref,               # VMEM (n_branch*3, 9*C, C) bf16 (dy,dx folded into K)
                         b_ref,               # VMEM (n_branch*3, 1, C) f32
                         o_ref,               # VMEM (bn, H, W, C) f32
                         xpad_ref,            # VMEM scratch (bn, H+2, W+2, C) bf16
                         xcol_ref,            # VMEM scratch (bn, H, W, 9*C) bf16 (im2col operand)
                         *, n_branch, block_n, H, W, C):
    M = block_n * H * W
    bf = xpad_ref.dtype

    # Accumulate directly into the output block (no oacc scratch, no final copy).
    o_ref[...] = f1_ref[...]

    # SAME padding: zero only the 1-pixel border once per grid step.  The interior is
    # rewritten for every layer of every branch, so the border stays zero throughout.
    xpad_ref[:, 0, :, :] = jnp.zeros((block_n, W + 2, C), bf)
    xpad_ref[:, H + 1, :, :] = jnp.zeros((block_n, W + 2, C), bf)
    xpad_ref[:, 1:H + 1, 0:1, :] = jnp.zeros((block_n, H, 1, C), bf)
    xpad_ref[:, 1:H + 1, W + 1:W + 2, :] = jnp.zeros((block_n, H, 1, C), bf)

    def conv3x3(i, l, relu):
        # Full im2col: both taps (dy, dx) folded into the contraction dim, so each
        # layer is a single bf16 MXU matmul (M, 9C) x (9C, C) with f32 accumulation.
        for dy in range(3):
            for dx in range(3):
                k = dy * 3 + dx
                xcol_ref[:, :, :, k * C:(k + 1) * C] = (
                    xpad_ref[:, dy:dy + H, dx:dx + W, :])
        lhs = xcol_ref[...].reshape(M, 9 * C)
        # TODO(synk): at production C/M keep this f32 result in a VMEM scratch ref to
        # bound vreg pressure; at these shapes it fits the register file comfortably.
        acc = jnp.dot(lhs, w_ref[i * 3 + l], preferred_element_type=jnp.float32)
        acc = acc + b_ref[i * 3 + l]                     # f32 bias epilogue
        if relu:
            acc = jnp.maximum(acc, 0.0)                  # f32 ReLU epilogue
        return acc.reshape(block_n, H, W, C)

    for i in range(n_branch):
        # Layer-0 input: y = feat2 - feat1, computed in-kernel, cast once to bf16 and
        # written to the padded interior (border stays zero -> SAME padding).
        xpad_ref[:, 1:H + 1, 1:W + 1, :] = (f2_ref[...] - f1_ref[...]).astype(bf)
        for l in range(3):
            act = conv3x3(i, l, relu=(l < 2))
            if l < 2:
                # Intermediate activation stays VMEM/bf16-resident (MXU operand dtype).
                xpad_ref[:, 1:H + 1, 1:W + 1, :] = act.astype(bf)
            else:
                # Vectorized selective scaling: one broadcast FMA per branch.
                s = sel_ref[:, i, :].reshape(block_n, 1, 1, C)
                o_ref[...] = o_ref[...] + act * s


# ---------------------------------------------------------------------------
# Parameter init / packing
# ---------------------------------------------------------------------------
def init_interp_net_params(key, n_branch, channels):
    """Per branch: 3 conv layers. Weights HWIO (3,3,Cin,Cout) bf16; biases (Cout,) f32."""
    params = []
    for _ in range(n_branch):
        layers = []
        for _ in range(3):
            key, kw, kb = jax.random.split(key, 3)
            fan_in = 9 * channels
            w = (jax.random.normal(kw, (3, 3, channels, channels), jnp.float32)
                 * fan_in ** -0.5).astype(jnp.bfloat16)
            b = jax.random.normal(kb, (channels,), jnp.float32) * 0.01
            layers.append((w, b))
        params.append(layers)
    return params


def _pack_params(params, C):
    """HWIO (dy,dx,ci,co) -> w_all[branch*3+layer, (dy*3+dx)*C + ci, co]; biases stacked."""
    w_list, b_list = [], []
    for layers in params:
        for (w_hwio, b) in layers:
            w_list.append(w_hwio.reshape(9 * C, C))
            b_list.append(b.reshape(1, C).astype(jnp.float32))
    return (jnp.stack(w_list, axis=0).astype(jnp.bfloat16),
            jnp.stack(b_list, axis=0))


# ---------------------------------------------------------------------------
# Generation-aware tiling (VMEM-budget driven)
# ---------------------------------------------------------------------------
def _vmem_capacity_and_budget():
    default_cap = 64 * 1024 * 1024        # conservative: v7x per-core VMEM
    try:
        info = pltpu.get_tpu_info()
        cap = int(getattr(info, "vmem_capacity_bytes", 0) or default_cap)
    except Exception:
        cap = default_cap
    return cap, int(0.75 * cap)


def _vmem_estimate(block_n, H, W, C, n_branch):
    f32, bf16 = 4, 2
    tile = block_n * H * W * C
    io = 3 * 2 * tile * f32                                # f1/f2/out, double-buffered
    xpad = block_n * (H + 2) * (W + 2) * C * bf16
    xcol = block_n * H * W * 9 * C * bf16
    w = 2 * n_branch * 3 * 9 * C * C * bf16                # double-buffered weight blocks
    b = 2 * n_branch * 3 * C * f32
    sel = 2 * block_n * n_branch * C * f32
    acc = tile * f32                                       # live f32 matmul result
    return io + xpad + xcol + w + b + sel + acc


def _pick_block_n(N, H, W, C, n_branch, budget):
    # Keep >= 2 grid steps when N >= 2 so v7x's two TensorCores both get work.
    cap = max(1, N // 2) if N >= 2 else 1
    best = 1
    for d in range(1, N + 1):
        if N % d == 0 and d <= cap and _vmem_estimate(d, H, W, C, n_branch) <= budget:
            best = d
    return best


# ---------------------------------------------------------------------------
# interp_net forward (NCHW in / NCHW out, like the PyTorch module)
# ---------------------------------------------------------------------------
def interp_net_forward(params, feat1_nchw, feat2_nchw, selective_vector):
    """feat1/feat2: (N, C, H, W) float32, selective_vector: (N, n_branch)."""
    n_branch = len(params)
    f1 = jnp.transpose(feat1_nchw, (0, 2, 3, 1)).astype(jnp.float32)   # NCHW -> NHWC
    f2 = jnp.transpose(feat2_nchw, (0, 2, 3, 1)).astype(jnp.float32)
    N, H, W, C = f1.shape

    w_all, b_all = _pack_params(params, C)   # (n_branch*3, 9C, C) bf16, (n_branch*3, 1, C) f32
    # Lane-replicate the selective scalars so the kernel can do one broadcast FMA per
    # branch from a tiny VMEM tile (no SMEM, no per-image scalar reads).
    sel = jnp.broadcast_to(selective_vector.astype(jnp.float32)[:, :, None],
                           (N, n_branch, C))

    cap, budget = _vmem_capacity_and_budget()
    block_n = _pick_block_n(N, H, W, C, n_branch, budget)
    est = _vmem_estimate(block_n, H, W, C, n_branch)
    vmem_limit = int(min(cap, max(budget, 2 * est)))
    grid = (N // block_n,)

    kernel = functools.partial(_fused_interp_kernel, n_branch=n_branch,
                               block_n=block_n, H=H, W=W, C=C)
    out = pl.pallas_call(
        kernel,
        out_shape=jax.ShapeDtypeStruct((N, H, W, C), jnp.float32),
        grid=grid,
        in_specs=[
            pl.BlockSpec((block_n, H, W, C), lambda g: (g, 0, 0, 0)),        # feat1
            pl.BlockSpec((block_n, H, W, C), lambda g: (g, 0, 0, 0)),        # feat2
            pl.BlockSpec((block_n, n_branch, C), lambda g: (g, 0, 0)),       # selective
            # Constant-index weight/bias blocks (tiny at these shapes).
            # TODO(synk): for production C=512 stream per-branch weight blocks over an
            # 'arbitrary' grid axis (and single-buffer them) instead of loading all.
            pl.BlockSpec((n_branch * 3, 9 * C, C), lambda g: (0, 0, 0)),     # weights
            pl.BlockSpec((n_branch * 3, 1, C), lambda g: (0, 0, 0)),         # biases
        ],
        out_specs=pl.BlockSpec((block_n, H, W, C), lambda g: (g, 0, 0, 0)),
        scratch_shapes=[
            pltpu.VMEM((block_n, H + 2, W + 2, C), jnp.bfloat16),    # padded activation
            pltpu.VMEM((block_n, H, W, 9 * C), jnp.bfloat16),        # im2col matmul operand
        ],
        compiler_params=pltpu.CompilerParams(
            dimension_semantics=("parallel",),
            vmem_limit_bytes=vmem_limit,
        ),
    )(f1, f2, sel, w_all, b_all)
    return jnp.transpose(out, (0, 3, 1, 2))  # NHWC -> NCHW


# ---------------------------------------------------------------------------
# Pure-JAX reference (bf16-matched, for correctness check)
# ---------------------------------------------------------------------------
def _ref_conv(x_nhwc, w_hwio_bf16, b, relu):
    y = lax.conv_general_dilated(
        x_nhwc.astype(jnp.bfloat16), w_hwio_bf16,
        window_strides=(1, 1), padding="SAME",
        dimension_numbers=("NHWC", "HWIO", "NHWC"),
        preferred_element_type=jnp.float32)
    y = y + b
    return jnp.maximum(y, 0.0) if relu else y


def _ref_forward(params, feat1_nchw, feat2_nchw, selective_vector):
    f1 = jnp.transpose(feat1_nchw, (0, 2, 3, 1))
    f2 = jnp.transpose(feat2_nchw, (0, 2, 3, 1))
    y = f2 - f1
    z = f1
    for i, ((w0, b0), (w1, b1), (w2, b2)) in enumerate(params):
        t = _ref_conv(y, w0, b0, True)
        t = _ref_conv(t, w1, b1, True)
        t = _ref_conv(t, w2, b2, False)
        z = z + t * selective_vector[:, i][:, None, None, None]
    return jnp.transpose(z, (0, 3, 1, 2))


if __name__ == "__main__":
    N, C, H, W = 2, 32, 8, 8
    n_branch = 2

    key = jax.random.PRNGKey(0)
    kp, k1, k2, ks = jax.random.split(key, 4)
    params = init_interp_net_params(kp, n_branch, C)
    feat1 = jax.random.normal(k1, (N, C, H, W), jnp.float32)
    feat2 = jax.random.normal(k2, (N, C, H, W), jnp.float32)
    selective = jax.random.uniform(ks, (N, n_branch), jnp.float32)

    out = jax.block_until_ready(interp_net_forward(params, feat1, feat2, selective))
    ref = jax.block_until_ready(_ref_forward(params, feat1, feat2, selective))

    assert out.shape == (N, C, H, W)
    err = float(jnp.max(jnp.abs(out - ref)))
    assert jnp.allclose(out, ref, rtol=2e-3, atol=2e-3), f"mismatch vs reference: {err}"
    print("KERNEL_OK")
</pallas_src>

<mosaic_0001>
module attributes {stable_mosaic.version = 11 : i64} {
  func.func @_fused_interp_kernel(%arg0: i32, %arg1: memref<1x8x8x32xf32, #tpu.memory_space<vmem>>, %arg2: memref<1x8x8x32xf32, #tpu.memory_space<vmem>>, %arg3: memref<1x2x32xf32, #tpu.memory_space<vmem>>, %arg4: memref<6x288x32xbf16, #tpu.memory_space<vmem>>, %arg5: memref<6x1x32xf32, #tpu.memory_space<vmem>>, %arg6: memref<1x8x8x32xf32, #tpu.memory_space<vmem>>, %arg7: memref<1x10x10x32xbf16, #tpu.memory_space<vmem>>, %arg8: memref<1x8x8x288xbf16, #tpu.memory_space<vmem>>) attributes {dimension_semantics = [#tpu.dimension_semantics<parallel>], iteration_bounds = array<i64: 2>, scalar_prefetch = 0 : i64, scratch_operands = 2 : i64, tpu.core_type = #tpu.core_type<tc>, window_params = [{transform_indices = @transform_0, window_bounds = array<i64: 1, 8, 8, 32>}, {transform_indices = @transform_1, window_bounds = array<i64: 1, 8, 8, 32>}, {transform_indices = @transform_2, window_bounds = array<i64: 1, 2, 32>}, {pipeline_mode = #tpu.pipeline_mode<synchronous>, transform_indices = @transform_3, window_bounds = array<i64: 6, 288, 32>}, {pipeline_mode = #tpu.pipeline_mode<synchronous>, transform_indices = @transform_4, window_bounds = array<i64: 6, 1, 32>}, {transform_indices = @transform_5, window_bounds = array<i64: 1, 8, 8, 32>}]} {
    %c0 = arith.constant 0 : index
    %c0_0 = arith.constant 0 : index
    %c0_1 = arith.constant 0 : index
    %c0_2 = arith.constant 0 : index
    %0 = vector.load %arg1[%c0, %c0_0, %c0_1, %c0_2] : memref<1x8x8x32xf32, #tpu.memory_space<vmem>>, vector<1x8x8x32xf32>
    %c0_3 = arith.constant 0 : index
    %c0_4 = arith.constant 0 : index
    %c0_5 = arith.constant 0 : index
    %c0_6 = arith.constant 0 : index
    %1 = vector.load %arg6[%c0_3, %c0_4, %c0_5, %c0_6] : memref<1x8x8x32xf32, #tpu.memory_space<vmem>>, vector<1x8x8x32xf32>
    tpu.vector_store %arg6[%c0_3, %c0_4, %c0_5, %c0_6], %0 {strides = array<i32>} : memref<1x8x8x32xf32, #tpu.memory_space<vmem>>, vector<1x8x8x32xf32>,
    %cst = arith.constant 0.000000e+00 : bf16
    %2 = vector.broadcast %cst : bf16 to vector<1x10x32xbf16>
    %c0_7 = arith.constant 0 : index
    %c0_8 = arith.constant 0 : index
    %c0_9 = arith.constant 0 : index
    %c0_10 = arith.constant 0 : index
    %3 = vector.load %arg7[%c0_7, %c0_8, %c0_9, %c0_10] : memref<1x10x10x32xbf16, #tpu.memory_space<vmem>>, vector<1x1x10x32xbf16>
    %4 = vector.shape_cast %3 : vector<1x1x10x32xbf16> to vector<1x10x32xbf16>
    %5 = vector.shape_cast %2 : vector<1x10x32xbf16> to vector<1x1x10x32xbf16>
    tpu.vector_store %arg7[%c0_7, %c0_8, %c0_9, %c0_10], %5 {strides = array<i32>} : memref<1x10x10x32xbf16, #tpu.memory_space<vmem>>, vector<1x1x10x32xbf16>,
    %cst_11 = arith.constant 0.000000e+00 : bf16
    %6 = vector.broadcast %cst_11 : bf16 to vector<1x10x32xbf16>
    %c0_12 = arith.constant 0 : index
    %c9 = arith.constant 9 : index
    %c0_13 = arith.constant 0 : index
    %c0_14 = arith.constant 0 : index
    %7 = vector.load %arg7[%c0_12, %c9, %c0_13, %c0_14] : memref<1x10x10x32xbf16, #tpu.memory_space<vmem>>, vector<1x1x10x32xbf16>
    %8 = vector.shape_cast %7 : vector<1x1x10x32xbf16> to vector<1x10x32xbf16>
    %9 = vector.shape_cast %6 : vector<1x10x32xbf16> to vector<1x1x10x32xbf16>
    tpu.vector_store %arg7[%c0_12, %c9, %c0_13, %c0_14], %9 {strides = array<i32>} : memref<1x10x10x32xbf16, #tpu.memory_space<vmem>>, vector<1x1x10x32xbf16>,
    %cst_15 = arith.constant 0.000000e+00 : bf16
    %10 = vector.broadcast %cst_15 : bf16 to vector<1x8x1x32xbf16>
    %c0_16 = arith.constant 0 : index
    %c1 = arith.constant 1 : index
    %c0_17 = arith.constant 0 : index
    %c0_18 = arith.constant 0 : index
    %11 = vector.load %arg7[%c0_16, %c1, %c0_17, %c0_18] : memref<1x10x10x32xbf16, #tpu.memory_space<vmem>>, vector<1x8x1x32xbf16>
    tpu.vector_store %arg7[%c0_16, %c1, %c0_17, %c0_18], %10 {strides = array<i32>} : memref<1x10x10x32xbf16, #tpu.memory_space<vmem>>, vector<1x8x1x32xbf16>,
    %cst_19 = arith.constant 0.000000e+00 : bf16
    %12 = vector.broadcast %cst_19 : bf16 to vector<1x8x1x32xbf16>
    %c0_20 = arith.constant 0 : index
    %c1_21 = arith.constant 1 : index
    %c9_22 = arith.constant 9 : index
    %c0_23 = arith.constant 0 : index
    %13 = vector.load %arg7[%c0_20, %c1_21, %c9_22, %c0_23] : memref<1x10x10x32xbf16, #tpu.memory_space<vmem>>, vector<1x8x1x32xbf16>
    tpu.vector_store %arg7[%c0_20, %c1_21, %c9_22, %c0_23], %12 {strides = array<i32>} : memref<1x10x10x32xbf16, #tpu.memory_space<vmem>>, vector<1x8x1x32xbf16>,
    %c0_24 = arith.constant 0 : index
    %c0_25 = arith.constant 0 : index
    %c0_26 = arith.constant 0 : index
    %c0_27 = arith.constant 0 : index
    %14 = vector.load %arg2[%c0_24, %c0_25, %c0_26, %c0_27] : memref<1x8x8x32xf32, #tpu.memory_space<vmem>>, vector<1x8x8x32xf32>
    %c0_28 = arith.constant 0 : index
    %c0_29 = arith.constant 0 : index
    %c0_30 = arith.constant 0 : index
    %c0_31 = arith.constant 0 : index
    %15 = vector.load %arg1[%c0_28, %c0_29, %c0_30, %c0_31] : memref<1x8x8x32xf32, #tpu.memory_space<vmem>>, vector<1x8x8x32xf32>
    %16 = arith.subf %14, %15 : vector<1x8x8x32xf32>
    %17 = arith.truncf %16 : vector<1x8x8x32xf32> to vector<1x8x8x32xbf16>
    %c0_32 = arith.constant 0 : index
    %c1_33 = arith.constant 1 : index
    %c1_34 = arith.constant 1 : index
    %c0_35 = arith.constant 0 : index
    %18 = vector.load %arg7[%c0_32, %c1_33, %c1_34, %c0_35] : memref<1x10x10x32xbf16, #tpu.memory_space<vmem>>, vector<1x8x8x32xbf16>
    tpu.vector_store %arg7[%c0_32, %c1_33, %c1_34, %c0_35], %17 {strides = array<i32>} : memref<1x10x10x32xbf16, #tpu.memory_space<vmem>>, vector<1x8x8x32xbf16>,
    %c0_36 = arith.constant 0 : index
    %c0_37 = arith.constant 0 : index
    %c0_38 = arith.constant 0 : index
    %c0_39 = arith.constant 0 : index
    %19 = vector.load %arg7[%c0_36, %c0_37, %c0_38, %c0_39] : memref<1x10x10x32xbf16, #tpu.memory_space<vmem>>, vector<1x8x8x32xbf16>
    %c0_40 = arith.constant 0 : index
    %c0_41 = arith.constant 0 : index
    %c0_42 = arith.constant 0 : index
    %c0_43 = arith.constant 0 : index
    %20 = vector.load %arg8[%c0_40, %c0_41, %c0_42, %c0_43] : memref<1x8x8x288xbf16, #tpu.memory_space<vmem>>, vector<1x8x8x32xbf16>
    tpu.vector_store %arg8[%c0_40, %c0_41, %c0_42, %c0_43], %19 {strides = array<i32>} : memref<1x8x8x288xbf16, #tpu.memory_space<vmem>>, vector<1x8x8x32xbf16>,
    %c0_44 = arith.constant 0 : index
    %c0_45 = arith.constant 0 : index
    %c1_46 = arith.constant 1 : index
    %c0_47 = arith.constant 0 : index
    %21 = vector.load %arg7[%c0_44, %c0_45, %c1_46, %c0_47] : memref<1x10x10x32xbf16, #tpu.memory_space<vmem>>, vector<1x8x8x32xbf16>
    %c0_48 = arith.constant 0 : index
    %c0_49 = arith.constant 0 : index
    %c0_50 = arith.constant 0 : index
    %c32 = arith.constant 32 : index
    %22 = vector.load %arg8[%c0_48, %c0_49, %c0_50, %c32] : memref<1x8x8x288xbf16, #tpu.memory_space<vmem>>, vector<1x8x8x32xbf16>
    tpu.vector_store %arg8[%c0_48, %c0_49, %c0_50, %c32], %21 {strides = array<i32>} : memref<1x8x8x288xbf16, #tpu.memory_space<vmem>>, vector<1x8x8x32xbf16>,
    %c0_51 = arith.constant 0 : index
    %c0_52 = arith.constant 0 : index
    %c2 = arith.constant 2 : index
    %c0_53 = arith.constant 0 : index
    %23 = vector.load %arg7[%c0_51, %c0_52, %c2, %c0_53] : memref<1x10x10x32xbf16, #tpu.memory_space<vmem>>, vector<1x8x8x32xbf16>
    %c0_54 = arith.constant 0 : index
    %c0_55 = arith.constant 0 : index
    %c0_56 = arith.constant 0 : index
    %c64 = arith.constant 64 : index
    %24 = vector.load %arg8[%c0_54, %c0_55, %c0_56, %c64] : memref<1x8x8x288xbf16, #tpu.memory_space<vmem>>, vector<1x8x8x32xbf16>
    tpu.vector_store %arg8[%c0_54, %c0_55, %c0_56, %c64], %23 {strides = array<i32>} : memref<1x8x8x288xbf16, #tpu.memory_space<vmem>>, vector<1x8x8x32xbf16>,
    %c0_57 = arith.constant 0 : index
    %c1_58 = arith.constant 1 : index
    %c0_59 = arith.constant 0 : index
    %c0_60 = arith.constant 0 : index
    %25 = vector.load %arg7[%c0_57, %c1_58, %c0_59, %c0_60] : memref<1x10x10x32xbf16, #tpu.memory_space<vmem>>, vector<1x8x8x32xbf16>
    %c0_61 = arith.constant 0 : index
    %c0_62 = arith.constant 0 : index
    %c0_63 = arith.constant 0 : index
    %c96 = arith.constant 96 : index
    %26 = vector.load %arg8[%c0_61, %c0_62, %c0_63, %c96] : memref<1x8x8x288xbf16, #tpu.memory_space<vmem>>, vector<1x8x8x32xbf16>
    tpu.vector_store %arg8[%c0_61, %c0_62, %c0_63, %c96], %25 {strides = array<i32>} : memref<1x8x8x288xbf16, #tpu.memory_space<vmem>>, vector<1x8x8x32xbf16>,
    %c0_64 = arith.constant 0 : index
    %c1_65 = arith.constant 1 : index
    %c1_66 = arith.constant 1 : index
    %c0_67 = arith.constant 0 : index
    %27 = vector.load %arg7[%c0_64, %c1_65, %c1_66, %c0_67] : memref<1x10x10x32xbf16, #tpu.memory_space<vmem>>, vector<1x8x8x32xbf16>
    %c0_68 = arith.constant 0 : index
    %c0_69 = arith.constant 0 : index
    %c0_70 = arith.constant 0 : index
    %c128 = arith.constant 128 : index
    %28 = vector.load %arg8[%c0_68, %c0_69, %c0_70, %c128] : memref<1x8x8x288xbf16, #tpu.memory_space<vmem>>, vector<1x8x8x32xbf16>
    tpu.vector_store %arg8[%c0_68, %c0_69, %c0_70, %c128], %27 {strides = array<i32>} : memref<1x8x8x288xbf16, #tpu.memory_space<vmem>>, vector<1x8x8x32xbf16>,
    %c0_71 = arith.constant 0 : index
    %c1_72 = arith.constant 1 : index
    %c2_73 = arith.constant 2 : index
    %c0_74 = arith.constant 0 : index
    %29 = vector.load %arg7[%c0_71, %c1_72, %c2_73, %c0_74] : memref<1x10x10x32xbf16, #tpu.memory_space<vmem>>, vector<1x8x8x32xbf16>
    %c0_75 = arith.constant 0 : index
    %c0_76 = arith.constant 0 : index
    %c0_77 = arith.constant 0 : index
    %c160 = arith.constant 160 : index
    %30 = vector.load %arg8[%c0_75, %c0_76, %c0_77, %c160] : memref<1x8x8x288xbf16, #tpu.memory_space<vmem>>, vector<1x8x8x32xbf16>
    tpu.vector_store %arg8[%c0_75, %c0_76, %c0_77, %c160], %29 {strides = array<i32>} : memref<1x8x8x288xbf16, #tpu.memory_space<vmem>>, vector<1x8x8x32xbf16>,
    %c0_78 = arith.constant 0 : index
    %c2_79 = arith.constant 2 : index
    %c0_80 = arith.constant 0 : index
    %c0_81 = arith.constant 0 : index
    %31 = vector.load %arg7[%c0_78, %c2_79, %c0_80, %c0_81] : memref<1x10x10x32xbf16, #tpu.memory_space<vmem>>, vector<1x8x8x32xbf16>
    %c0_82 = arith.constant 0 : index
    %c0_83 = arith.constant 0 : index
    %c0_84 = arith.constant 0 : index
    %c192 = arith.constant 192 : index
    %32 = vector.load %arg8[%c0_82, %c0_83, %c0_84, %c192] : memref<1x8x8x288xbf16, #tpu.memory_space<vmem>>, vector<1x8x8x32xbf16>
    tpu.vector_store %arg8[%c0_82, %c0_83, %c0_84, %c192], %31 {strides = array<i32>} : memref<1x8x8x288xbf16, #tpu.memory_space<vmem>>, vector<1x8x8x32xbf16>,
    %c0_85 = arith.constant 0 : index
    %c2_86 = arith.constant 2 : index
    %c1_87 = arith.constant 1 : index
    %c0_88 = arith.constant 0 : index
    %33 = vector.load %arg7[%c0_85, %c2_86, %c1_87, %c0_88] : memref<1x10x10x32xbf16, #tpu.memory_space<vmem>>, vector<1x8x8x32xbf16>
    %c0_89 = arith.constant 0 : index
    %c0_90 = arith.constant 0 : index
    %c0_91 = arith.constant 0 : index
    %c224 = arith.constant 224 : index
    %34 = vector.load %arg8[%c0_89, %c0_90, %c0_91, %c224] : memref<1x8x8x288xbf16, #tpu.memory_space<vmem>>, vector<1x8x8x32xbf16>
    tpu.vector_store %arg8[%c0_89, %c0_90, %c0_91, %c224], %33 {strides = array<i32>} : memref<1x8x8x288xbf16, #tpu.memory_space<vmem>>, vector<1x8x8x32xbf16>,
    %c0_92 = arith.constant 0 : index
    %c2_93 = arith.constant 2 : index
    %c2_94 = arith.constant 2 : index
    %c0_95 = arith.constant 0 : index
    %35 = vector.load %arg7[%c0_92, %c2_93, %c2_94, %c0_95] : memref<1x10x10x32xbf16, #tpu.memory_space<vmem>>, vector<1x8x8x32xbf16>
    %c0_96 = arith.constant 0 : index
    %c0_97 = arith.constant 0 : index
    %c0_98 = arith.constant 0 : index
    %c256 = arith.constant 256 : index
    %36 = vector.load %arg8[%c0_96, %c0_97, %c0_98, %c256] : memref<1x8x8x288xbf16, #tpu.memory_space<vmem>>, vector<1x8x8x32xbf16>
    tpu.vector_store %arg8[%c0_96, %c0_97, %c0_98, %c256], %35 {strides = array<i32>} : memref<1x8x8x288xbf16, #tpu.memory_space<vmem>>, vector<1x8x8x32xbf16>,
    %c0_99 = arith.constant 0 : index
    %c0_100 = arith.constant 0 : index
    %c0_101 = arith.constant 0 : index
    %c0_102 = arith.constant 0 : index
    %37 = vector.load %arg8[%c0_99, %c0_100, %c0_101, %c0_102] : memref<1x8x8x288xbf16, #tpu.memory_space<vmem>>, vector<1x8x8x288xbf16>
    %38 = vector.shape_cast %37 : vector<1x8x8x288xbf16> to vector<64x288xbf16>
    %c0_103 = arith.constant 0 : index
    %c0_104 = arith.constant 0 : index
    %c0_105 = arith.constant 0 : index
    %39 = vector.load %arg4[%c0_103, %c0_104, %c0_105] : memref<6x288x32xbf16, #tpu.memory_space<vmem>>, vector<1x288x32xbf16>
    %40 = vector.shape_cast %39 : vector<1x288x32xbf16> to vector<288x32xbf16>
    %cst_106 = arith.constant dense<0.000000e+00> : vector<64x32xf32>
    %41 = tpu.matmul %38, %40, %cst_106 {dimension_numbers = #tpu.dot_dimension_numbers<[1], [0], [0], [1], [0, 0, 1, 1], [], []>} : vector<64x288xbf16>, vector<288x32xbf16>, vector<64x32xf32> -> vector<64x32xf32>
    %c0_107 = arith.constant 0 : index
    %c0_108 = arith.constant 0 : index
    %c0_109 = arith.constant 0 : index
    %42 = vector.load %arg5[%c0_107, %c0_108, %c0_109] : memref<6x1x32xf32, #tpu.memory_space<vmem>>, vector<1x1x32xf32>
    %43 = vector.shape_cast %42 : vector<1x1x32xf32> to vector<1x32xf32>
    %44 = vector.broadcast %43 : vector<1x32xf32> to vector<64x32xf32>
    %45 = arith.addf %41, %44 : vector<64x32xf32>
    %cst_110 = arith.constant 0.000000e+00 : f32
    %46 = vector.broadcast %cst_110 : f32 to vector<64x32xf32>
    %47 = arith.maximumf %45, %46 : vector<64x32xf32>
    %48 = vector.shape_cast %47 : vector<64x32xf32> to vector<1x8x8x32xf32>
    %49 = arith.truncf %48 : vector<1x8x8x32xf32> to vector<1x8x8x32xbf16>
    %c0_111 = arith.constant 0 : index
    %c1_112 = arith.constant 1 : index
    %c1_113 = arith.constant 1 : index
    %c0_114 = arith.constant 0 : index
    %50 = vector.load %arg7[%c0_111, %c1_112, %c1_113, %c0_114] : memref<1x10x10x32xbf16, #tpu.memory_space<vmem>>, vector<1x8x8x32xbf16>
    tpu.vector_store %arg7[%c0_111, %c1_112, %c1_113, %c0_114], %49 {strides = array<i32>} : memref<1x10x10x32xbf16, #tpu.memory_space<vmem>>, vector<1x8x8x32xbf16>,
    %c0_115 = arith.constant 0 : index
    %c0_116 = arith.constant 0 : index
    %c0_117 = arith.constant 0 : index
    %c0_118 = arith.constant 0 : index
    %51 = vector.load %arg7[%c0_115, %c0_116, %c0_117, %c0_118] : memref<1x10x10x32xbf16, #tpu.memory_space<vmem>>, vector<1x8x8x32xbf16>
    %c0_119 = arith.constant 0 : index
    %c0_120 = arith.constant 0 : index
    %c0_121 = arith.constant 0 : index
    %c0_122 = arith.constant 0 : index
    %52 = vector.load %arg8[%c0_119, %c0_120, %c0_121, %c0_122] : memref<1x8x8x288xbf16, #tpu.memory_space<vmem>>, vector<1x8x8x32xbf16>
    tpu.vector_store %arg8[%c0_119, %c0_120, %c0_121, %c0_122], %51 {strides = array<i32>} : memref<1x8x8x288xbf16, #tpu.memory_space<vmem>>, vector<1x8x8x32xbf16>,
    %c0_123 = arith.constant 0 : index
    %c0_124 = arith.constant 0 : index
    %c1_125 = arith.constant 1 : index
    %c0_126 = arith.constant 0 : index
    %53 = vector.load %arg7[%c0_123, %c0_124, %c1_125, %c0_126] : memref<1x10x10x32xbf16, #tpu.memory_space<vmem>>, vector<1x8x8x32xbf16>
    %c0_127 = arith.constant 0 : index
    %c0_128 = arith.constant 0 : index
    %c0_129 = arith.constant 0 : index
    %c32_130 = arith.constant 32 : index
    %54 = vector.load %arg8[%c0_127, %c0_128, %c0_129, %c32_130] : memref<1x8x8x288xbf16, #tpu.memory_space<vmem>>, vector<1x8x8x32xbf16>
    tpu.vector_store %arg8[%c0_127, %c0_128, %c0_129, %c32_130], %53 {strides = array<i32>} : memref<1x8x8x288xbf16, #tpu.memory_space<vmem>>, vector<1x8x8x32xbf16>,
    %c0_131 = arith.constant 0 : index
    %c0_132 = arith.constant 0 : index
    %c2_133 = arith.constant 2 : index
    %c0_134 = arith.constant 0 : index
    %55 = vector.load %arg7[%c0_131, %c0_132, %c2_133, %c0_134] : memref<1x10x10x32xbf16, #tpu.memory_space<vmem>>, vector<1x8x8x32xbf16>
    %c0_135 = arith.constant 0 : index
    %c0_136 = arith.constant 0 : index
    %c0_137 = arith.constant 0 : index
    %c64_138 = arith.constant 64 : index
    %56 = vector.load %arg8[%c0_135, %c0_136, %c0_137, %c64_138] : memref<1x8x8x288xbf16, #tpu.memory_space<vmem>>, vector<1x8x8x32xbf16>
    tpu.vector_store %arg8[%c0_135, %c0_136, %c0_137, %c64_138], %55 {strides = array<i32>} : memref<1x8x8x288xbf16, #tpu.memory_space<vmem>>, vector<1x8x8x32xbf16>,
    %c0_139 = arith.constant 0 : index
    %c1_140 = arith.constant 1 : index
    %c0_141 = arith.constant 0 : index
    %c0_142 = arith.constant 0 : index
    %57 = vector.load %arg7[%c0_139, %c1_140, %c0_141, %c0_142] : memref<1x10x10x32xbf16, #tpu.memory_space<vmem>>, vector<1x8x8x32xbf16>
    %c0_143 = arith.constant 0 : index
    %c0_144 = arith.constant 0 : index
    %c0_145 = arith.constant 0 : index
    %c96_146 = arith.constant 96 : index
    %58 = vector.load %arg8[%c0_143, %c0_144, %c0_145, %c96_146] : memref<1x8x8x288xbf16, #tpu.memory_space<vmem>>, vector<1x8x8x32xbf16>
    tpu.vector_store %arg8[%c0_143, %c0_144, %c0_145, %c96_146], %57 {strides = array<i32>} : memref<1x8x8x288xbf16, #tpu.memory_space<vmem>>, vector<1x8x8x32xbf16>,
    %c0_147 = arith.constant 0 : index
    %c1_148 = arith.constant 1 : index
    %c1_149 = arith.constant 1 : index
    %c0_150 = arith.constant 0 : index
    %59 = vector.load %arg7[%c0_147, %c1_148, %c1_149, %c0_150] : memref<1x10x10x32xbf16, #tpu.memory_space<vmem>>, vector<1x8x8x32xbf16>
    %c0_151 = arith.constant 0 : index
    %c0_152 = arith.constant 0 : index
    %c0_153 = arith.constant 0 : index
    %c128_154 = arith.constant 128 : index
    %60 = vector.load %arg8[%c0_151, %c0_152, %c0_153, %c128_154] : memref<1x8x8x288xbf16, #tpu.memory_space<vmem>>, vector<1x8x8x32xbf16>
    tpu.vector_store %arg8[%c0_151, %c0_152, %c0_153, %c128_154], %59 {strides = array<i32>} : memref<1x8x8x288xbf16, #tpu.memory_space<vmem>>, vector<1x8x8x32xbf16>,
    %c0_155 = arith.constant 0 : index
    %c1_156 = arith.constant 1 : index
    %c2_157 = arith.constant 2 : index
    %c0_158 = arith.constant 0 : index
    %61 = vector.load %arg7[%c0_155, %c1_156, %c2_157, %c0_158] : memref<1x10x10x32xbf16, #tpu.memory_space<vmem>>, vector<1x8x8x32xbf16>
    %c0_159 = arith.constant 0 : index
    %c0_160 = arith.constant 0 : index
    %c0_161 = arith.constant 0 : index
    %c160_162 = arith.constant 160 : index
    %62 = vector.load %arg8[%c0_159, %c0_160, %c0_161, %c160_162] : memref<1x8x8x288xbf16, #tpu.memory_space<vmem>>, vector<1x8x8x32xbf16>
    tpu.vector_store %arg8[%c0_159, %c0_160, %c0_161, %c160_162], %61 {strides = array<i32>} : memref<1x8x8x288xbf16, #tpu.memory_space<vmem>>, vector<1x8x8x32xbf16>,
    %c0_163 = arith.constant 0 : index
    %c2_164 = arith.constant 2 : index
    %c0_165 = arith.constant 0 : index
    %c0_166 = arith.constant 0 : index
    %63 = vector.load %arg7[%c0_163, %c2_164, %c0_165, %c0_166] : memref<1x10x10x32xbf16, #tpu.memory_space<vmem>>, vector<1x8x8x32xbf16>
    %c0_167 = arith.constant 0 : index
    %c0_168 = arith.constant 0 : index
    %c0_169 = arith.constant 0 : index
    %c192_170 = arith.constant 192 : index
    %64 = vector.load %arg8[%c0_167, %c0_168, %c0_169, %c192_170] : memref<1x8x8x288xbf16, #tpu.memory_space<vmem>>, vector<1x8x8x32xbf16>
    tpu.vector_store %arg8[%c0_167, %c0_168, %c0_169, %c192_170], %63 {strides = array<i32>} : memref<1x8x8x288xbf16, #tpu.memory_space<vmem>>, vector<1x8x8x32xbf16>,
    %c0_171 = arith.constant 0 : index
    %c2_172 = arith.constant 2 : index
    %c1_173 = arith.constant 1 : index
    %c0_174 = arith.constant 0 : index
    %65 = vector.load %arg7[%c0_171, %c2_172, %c1_173, %c0_174] : memref<1x10x10x32xbf16, #tpu.memory_space<vmem>>, vector<1x8x8x32xbf16>
    %c0_175 = arith.constant 0 : index
    %c0_176 = arith.constant 0 : index
    %c0_177 = arith.constant 0 : index
    %c224_178 = arith.constant 224 : index
    %66 = vector.load %arg8[%c0_175, %c0_176, %c0_177, %c224_178] : memref<1x8x8x288xbf16, #tpu.memory_space<vmem>>, vector<1x8x8x32xbf16>
    tpu.vector_store %arg8[%c0_175, %c0_176, %c0_177, %c224_178], %65 {strides = array<i32>} : memref<1x8x8x288xbf16, #tpu.memory_space<vmem>>, vector<1x8x8x32xbf16>,
    %c0_179 = arith.constant 0 : index
    %c2_180 = arith.constant 2 : index
    %c2_181 = arith.constant 2 : index
    %c0_182 = arith.constant 0 : index
    %67 = vector.load %arg7[%c0_179, %c2_180, %c2_181, %c0_182] : memref<1x10x10x32xbf16, #tpu.memory_space<vmem>>, vector<1x8x8x32xbf16>
    %c0_183 = arith.constant 0 : index
    %c0_184 = arith.constant 0 : index
    %c0_185 = arith.constant 0 : index
    %c256_186 = arith.constant 256 : index
    %68 = vector.load %arg8[%c0_183, %c0_184, %c0_185, %c256_186] : memref<1x8x8x288xbf16, #tpu.memory_space<vmem>>, vector<1x8x8x32xbf16>
    tpu.vector_store %arg8[%c0_183, %c0_184, %c0_185, %c256_186], %67 {strides = array<i32>} : memref<1x8x8x288xbf16, #tpu.memory_space<vmem>>, vector<1x8x8x32xbf16>,
    %c0_187 = arith.constant 0 : index
    %c0_188 = arith.constant 0 : index
    %c0_189 = arith.constant 0 : index
    %c0_190 = arith.constant 0 : index
    %69 = vector.load %arg8[%c0_187, %c0_188, %c0_189, %c0_190] : memref<1x8x8x288xbf16, #tpu.memory_space<vmem>>, vector<1x8x8x288xbf16>
    %70 = vector.shape_cast %69 : vector<1x8x8x288xbf16> to vector<64x288xbf16>
    %c1_191 = arith.constant 1 : index
    %c0_192 = arith.constant 0 : index
    %c0_193 = arith.constant 0 : index
    %71 = vector.load %arg4[%c1_191, %c0_192, %c0_193] : memref<6x288x32xbf16, #tpu.memory_space<vmem>>, vector<1x288x32xbf16>
    %72 = vector.shape_cast %71 : vector<1x288x32xbf16> to vector<288x32xbf16>
    %cst_194 = arith.constant dense<0.000000e+00> : vector<64x32xf32>
    %73 = tpu.matmul %70, %72, %cst_194 {dimension_numbers = #tpu.dot_dimension_numbers<[1], [0], [0], [1], [0, 0, 1, 1], [], []>} : vector<64x288xbf16>, vector<288x32xbf16>, vector<64x32xf32> -> vector<64x32xf32>
    %c1_195 = arith.constant 1 : index
    %c0_196 = arith.constant 0 : index
    %c0_197 = arith.constant 0 : index
    %74 = vector.load %arg5[%c1_195, %c0_196, %c0_197] : memref<6x1x32xf32, #tpu.memory_space<vmem>>, vector<1x1x32xf32>
    %75 = vector.shape_cast %74 : vector<1x1x32xf32> to vector<1x32xf32>
    %76 = vector.broadcast %75 : vector<1x32xf32> to vector<64x32xf32>
    %77 = arith.addf %73, %76 : vector<64x32xf32>
    %cst_198 = arith.constant 0.000000e+00 : f32
    %78 = vector.broadcast %cst_198 : f32 to vector<64x32xf32>
    %79 = arith.maximumf %77, %78 : vector<64x32xf32>
    %80 = vector.shape_cast %79 : vector<64x32xf32> to vector<1x8x8x32xf32>
    %81 = arith.truncf %80 : vector<1x8x8x32xf32> to vector<1x8x8x32xbf16>
    %c0_199 = arith.constant 0 : index
    %c1_200 = arith.constant 1 : index
    %c1_201 = arith.constant 1 : index
    %c0_202 = arith.constant 0 : index
    %82 = vector.load %arg7[%c0_199, %c1_200, %c1_201, %c0_202] : memref<1x10x10x32xbf16, #tpu.memory_space<vmem>>, vector<1x8x8x32xbf16>
    tpu.vector_store %arg7[%c0_199, %c1_200, %c1_201, %c0_202], %81 {strides = array<i32>} : memref<1x10x10x32xbf16, #tpu.memory_space<vmem>>, vector<1x8x8x32xbf16>,
    %c0_203 = arith.constant 0 : index
    %c0_204 = arith.constant 0 : index
    %c0_205 = arith.constant 0 : index
    %c0_206 = arith.constant 0 : index
    %83 = vector.load %arg7[%c0_203, %c0_204, %c0_205, %c0_206] : memref<1x10x10x32xbf16, #tpu.memory_space<vmem>>, vector<1x8x8x32xbf16>
    %c0_207 = arith.constant 0 : index
    %c0_208 = arith.constant 0 : index
    %c0_209 = arith.constant 0 : index
    %c0_210 = arith.constant 0 : index
    %84 = vector.load %arg8[%c0_207, %c0_208, %c0_209, %c0_210] : memref<1x8x8x288xbf16, #tpu.memory_space<vmem>>, vector<1x8x8x32xbf16>
    tpu.vector_store %arg8[%c0_207, %c0_208, %c0_209, %c0_210], %83 {strides = array<i32>} : memref<1x8x8x288xbf16, #tpu.memory_space<vmem>>, vector<1x8x8x32xbf16>,
    %c0_211 = arith.constant 0 : index
    %c0_212 = arith.constant 0 : index
    %c1_213 = arith.constant 1 : index
    %c0_214 = arith.constant 0 : index
    %85 = vector.load %arg7[%c0_211, %c0_212, %c1_213, %c0_214] : memref<1x10x10x32xbf16, #tpu.memory_space<vmem>>, vector<1x8x8x32xbf16>
    %c0_215 = arith.constant 0 : index
    %c0_216 = arith.constant 0 : index
    %c0_217 = arith.constant 0 : index
    %c32_218 = arith.constant 32 : index
    %86 = vector.load %arg8[%c0_215, %c0_216, %c0_217, %c32_218] : memref<1x8x8x288xbf16, #tpu.memory_space<vmem>>, vector<1x8x8x32xbf16>
    tpu.vector_store %arg8[%c0_215, %c0_216, %c0_217, %c32_218], %85 {strides = array<i32>} : memref<1x8x8x288xbf16, #tpu.memory_space<vmem>>, vector<1x8x8x32xbf16>,
    %c0_219 = arith.constant 0 : index
    %c0_220 = arith.constant 0 : index
    %c2_221 = arith.constant 2 : index
    %c0_222 = arith.constant 0 : index
    %87 = vector.load %arg7[%c0_219, %c0_220, %c2_221, %c0_222] : memref<1x10x10x32xbf16, #tpu.memory_space<vmem>>, vector<1x8x8x32xbf16>
    %c0_223 = arith.constant 0 : index
    %c0_224 = arith.constant 0 : index
    %c0_225 = arith.constant 0 : index
    %c64_226 = arith.constant 64 : index
    %88 = vector.load %arg8[%c0_223, %c0_224, %c0_225, %c64_226] : memref<1x8x8x288xbf16, #tpu.memory_space<vmem>>, vector<1x8x8x32xbf16>
    tpu.vector_store %arg8[%c0_223, %c0_224, %c0_225, %c64_226], %87 {strides = array<i32>} : memref<1x8x8x288xbf16, #tpu.memory_space<vmem>>, vector<1x8x8x32xbf16>,
    %c0_227 = arith.constant 0 : index
    %c1_228 = arith.constant 1 : index
    %c0_229 = arith.constant 0 : index
    %c0_230 = arith.constant 0 : index
    %89 = vector.load %arg7[%c0_227, %c1_228, %c0_229, %c0_230] : memref<1x10x10x32xbf16, #tpu.memory_space<vmem>>, vector<1x8x8x32xbf16>
    %c0_231 = arith.constant 0 : index
    %c0_232 = arith.constant 0 : index
    %c0_233 = arith.constant 0 : index
    %c96_234 = arith.constant 96 : index
    %90 = vector.load %arg8[%c0_231, %c0_232, %c0_233, %c96_234] : memref<1x8x8x288xbf16, #tpu.memory_space<vmem>>, vector<1x8x8x32xbf16>
    tpu.vector_store %arg8[%c0_231, %c0_232, %c0_233, %c96_234], %89 {strides = array<i32>} : memref<1x8x8x288xbf16, #tpu.memory_space<vmem>>, vector<1x8x8x32xbf16>,
    %c0_235 = arith.constant 0 : index
    %c1_236 = arith.constant 1 : index
    %c1_237 = arith.constant 1 : index
    %c0_238 = arith.constant 0 : index
    %91 = vector.load %arg7[%c0_235, %c1_236, %c1_237, %c0_238] : memref<1x10x10x32xbf16, #tpu.memory_space<vmem>>, vector<1x8x8x32xbf16>
    %c0_239 = arith.constant 0 : index
    %c0_240 = arith.constant 0 : index
    %c0_241 = arith.constant 0 : index
    %c128_242 = arith.constant 128 : index
    %92 = vector.load %arg8[%c0_239, %c0_240, %c0_241, %c128_242] : memref<1x8x8x288xbf16, #tpu.memory_space<vmem>>, vector<1x8x8x32xbf16>
    tpu.vector_store %arg8[%c0_239, %c0_240, %c0_241, %c128_242], %91 {strides = array<i32>} : memref<1x8x8x288xbf16, #tpu.memory_space<vmem>>, vector<1x8x8x32xbf16>,
    %c0_243 = arith.constant 0 : index
    %c1_244 = arith.constant 1 : index
    %c2_245 = arith.constant 2 : index
    %c0_246 = arith.constant 0 : index
    %93 = vector.load %arg7[%c0_243, %c1_244, %c2_245, %c0_246] : memref<1x10x10x32xbf16, #tpu.memory_space<vmem>>, vector<1x8x8x32xbf16>
    %c0_247 = arith.constant 0 : index
    %c0_248 = arith.constant 0 : index
    %c0_249 = arith.constant 0 : index
    %c160_250 = arith.constant 160 : index
    %94 = vector.load %arg8[%c0_247, %c0_248, %c0_249, %c160_250] : memref<1x8x8x288xbf16, #tpu.memory_space<vmem>>, vector<1x8x8x32xbf16>
    tpu.vector_store %arg8[%c0_247, %c0_248, %c0_249, %c160_250], %93 {strides = array<i32>} : memref<1x8x8x288xbf16, #tpu.memory_space<vmem>>, vector<1x8x8x32xbf16>,
    %c0_251 = arith.constant 0 : index
    %c2_252 = arith.constant 2 : index
    %c0_253 = arith.constant 0 : index
    %c0_254 = arith.constant 0 : index
    %95 = vector.load %arg7[%c0_251, %c2_252, %c0_253, %c0_254] : memref<1x10x10x32xbf16, #tpu.memory_space<vmem>>, vector<1x8x8x32xbf16>
    %c0_255 = arith.constant 0 : index
    %c0_256 = arith.constant 0 : index
    %c0_257 = arith.constant 0 : index
    %c192_258 = arith.constant 192 : index
    %96 = vector.load %arg8[%c0_255, %c0_256, %c0_257, %c192_258] : memref<1x8x8x288xbf16, #tpu.memory_space<vmem>>, vector<1x8x8x32xbf16>
    tpu.vector_store %arg8[%c0_255, %c0_256, %c0_257, %c192_258], %95 {strides = array<i32>} : memref<1x8x8x288xbf16, #tpu.memory_space<vmem>>, vector<1x8x8x32xbf16>,
    %c0_259 = arith.constant 0 : index
    %c2_260 = arith.constant 2 : index
    %c1_261 = arith.constant 1 : index
    %c0_262 = arith.constant 0 : index
    %97 = vector.load %arg7[%c0_259, %c2_260, %c1_261, %c0_262] : memref<1x10x10x32xbf16, #tpu.memory_space<vmem>>, vector<1x8x8x32xbf16>
    %c0_263 = arith.constant 0 : index
    %c0_264 = arith.constant 0 : index
    %c0_265 = arith.constant 0 : index
    %c224_266 = arith.constant 224 : index
    %98 = vector.load %arg8[%c0_263, %c0_264, %c0_265, %c224_266] : memref<1x8x8x288xbf16, #tpu.memory_space<vmem>>, vector<1x8x8x32xbf16>
    tpu.vector_store %arg8[%c0_263, %c0_264, %c0_265, %c224_266], %97 {strides = array<i32>} : memref<1x8x8x288xbf16, #tpu.memory_space<vmem>>, vector<1x8x8x32xbf16>,
    %c0_267 = arith.constant 0 : index
    %c2_268 = arith.constant 2 : index
    %c2_269 = arith.constant 2 : index
    %c0_270 = arith.constant 0 : index
    %99 = vector.load %arg7[%c0_267, %c2_268, %c2_269, %c0_270] : memref<1x10x10x32xbf16, #tpu.memory_space<vmem>>, vector<1x8x8x32xbf16>
    %c0_271 = arith.constant 0 : index
    %c0_272 = arith.constant 0 : index
    %c0_273 = arith.constant 0 : index
    %c256_274 = arith.constant 256 : index
    %100 = vector.load %arg8[%c0_271, %c0_272, %c0_273, %c256_274] : memref<1x8x8x288xbf16, #tpu.memory_space<vmem>>, vector<1x8x8x32xbf16>
    tpu.vector_store %arg8[%c0_271, %c0_272, %c0_273, %c256_274], %99 {strides = array<i32>} : memref<1x8x8x288xbf16, #tpu.memory_space<vmem>>, vector<1x8x8x32xbf16>,
    %c0_275 = arith.constant 0 : index
    %c0_276 = arith.constant 0 : index
    %c0_277 = arith.constant 0 : index
    %c0_278 = arith.constant 0 : index
    %101 = vector.load %arg8[%c0_275, %c0_276, %c0_277, %c0_278] : memref<1x8x8x288xbf16, #tpu.memory_space<vmem>>, vector<1x8x8x288xbf16>
    %102 = vector.shape_cast %101 : vector<1x8x8x288xbf16> to vector<64x288xbf16>
    %c2_279 = arith.constant 2 : index
    %c0_280 = arith.constant 0 : index
    %c0_281 = arith.constant 0 : index
    %103 = vector.load %arg4[%c2_279, %c0_280, %c0_281] : memref<6x288x32xbf16, #tpu.memory_space<vmem>>, vector<1x288x32xbf16>
    %104 = vector.shape_cast %103 : vector<1x288x32xbf16> to vector<288x32xbf16>
    %cst_282 = arith.constant dense<0.000000e+00> : vector<64x32xf32>
    %105 = tpu.matmul %102, %104, %cst_282 {dimension_numbers = #tpu.dot_dimension_numbers<[1], [0], [0], [1], [0, 0, 1, 1], [], []>} : vector<64x288xbf16>, vector<288x32xbf16>, vector<64x32xf32> -> vector<64x32xf32>
    %c2_283 = arith.constant 2 : index
    %c0_284 = arith.constant 0 : index
    %c0_285 = arith.constant 0 : index
    %106 = vector.load %arg5[%c2_283, %c0_284, %c0_285] : memref<6x1x32xf32, #tpu.memory_space<vmem>>, vector<1x1x32xf32>
    %107 = vector.shape_cast %106 : vector<1x1x32xf32> to vector<1x32xf32>
    %108 = vector.broadcast %107 : vector<1x32xf32> to vector<64x32xf32>
    %109 = arith.addf %105, %108 : vector<64x32xf32>
    %110 = vector.shape_cast %109 : vector<64x32xf32> to vector<1x8x8x32xf32>
    %c0_286 = arith.constant 0 : index
    %c0_287 = arith.constant 0 : index
    %c0_288 = arith.constant 0 : index
    %111 = vector.load %arg3[%c0_286, %c0_287, %c0_288] : memref<1x2x32xf32, #tpu.memory_space<vmem>>, vector<1x1x32xf32>
    %112 = vector.shape_cast %111 : vector<1x1x32xf32> to vector<1x32xf32>
    %113 = vector.shape_cast %112 : vector<1x32xf32> to vector<1x1x1x32xf32>
    %c0_289 = arith.constant 0 : index
    %c0_290 = arith.constant 0 : index
    %c0_291 = arith.constant 0 : index
    %c0_292 = arith.constant 0 : index
    %114 = vector.load %arg6[%c0_289, %c0_290, %c0_291, %c0_292] : memref<1x8x8x32xf32, #tpu.memory_space<vmem>>, vector<1x8x8x32xf32>
    %115 = vector.broadcast %113 : vector<1x1x1x32xf32> to vector<1x8x8x32xf32>
    %116 = arith.mulf %110, %115 : vector<1x8x8x32xf32>
    %117 = arith.addf %114, %116 : vector<1x8x8x32xf32>
    %c0_293 = arith.constant 0 : index
    %c0_294 = arith.constant 0 : index
    %c0_295 = arith.constant 0 : index
    %c0_296 = arith.constant 0 : index
    %118 = vector.load %arg6[%c0_293, %c0_294, %c0_295, %c0_296] : memref<1x8x8x32xf32, #tpu.memory_space<vmem>>, vector<1x8x8x32xf32>
    tpu.vector_store %arg6[%c0_293, %c0_294, %c0_295, %c0_296], %117 {strides = array<i32>} : memref<1x8x8x32xf32, #tpu.memory_space<vmem>>, vector<1x8x8x32xf32>,
    %c0_297 = arith.constant 0 : index
    %c0_298 = arith.constant 0 : index
    %c0_299 = arith.constant 0 : index
    %c0_300 = arith.constant 0 : index
    %119 = vector.load %arg2[%c0_297, %c0_298, %c0_299, %c0_300] : memref<1x8x8x32xf32, #tpu.memory_space<vmem>>, vector<1x8x8x32xf32>
    %c0_301 = arith.constant 0 : index
    %c0_302 = arith.constant 0 : index
    %c0_303 = arith.constant 0 : index
    %c0_304 = arith.constant 0 : index
    %120 = vector.load %arg1[%c0_301, %c0_302, %c0_303, %c0_304] : memref<1x8x8x32xf32, #tpu.memory_space<vmem>>, vector<1x8x8x32xf32>
    %121 = arith.subf %119, %120 : vector<1x8x8x32xf32>
    %122 = arith.truncf %121 : vector<1x8x8x32xf32> to vector<1x8x8x32xbf16>
    %c0_305 = arith.constant 0 : index
    %c1_306 = arith.constant 1 : index
    %c1_307 = arith.constant 1 : index
    %c0_308 = arith.constant 0 : index
    %123 = vector.load %arg7[%c0_305, %c1_306, %c1_307, %c0_308] : memref<1x10x10x32xbf16, #tpu.memory_space<vmem>>, vector<1x8x8x32xbf16>
    tpu.vector_store %arg7[%c0_305, %c1_306, %c1_307, %c0_308], %122 {strides = array<i32>} : memref<1x10x10x32xbf16, #tpu.memory_space<vmem>>, vector<1x8x8x32xbf16>,
    %c0_309 = arith.constant 0 : index
    %c0_310 = arith.constant 0 : index
    %c0_311 = arith.constant 0 : index
    %c0_312 = arith.constant 0 : index
    %124 = vector.load %arg7[%c0_309, %c0_310, %c0_311, %c0_312] : memref<1x10x10x32xbf16, #tpu.memory_space<vmem>>, vector<1x8x8x32xbf16>
    %c0_313 = arith.constant 0 : index
    %c0_314 = arith.constant 0 : index
    %c0_315 = arith.constant 0 : index
    %c0_316 = arith.constant 0 : index
    %125 = vector.load %arg8[%c0_313, %c0_314, %c0_315, %c0_316] : memref<1x8x8x288xbf16, #tpu.memory_space<vmem>>, vector<1x8x8x32xbf16>
    tpu.vector_store %arg8[%c0_313, %c0_314, %c0_315, %c0_316], %124 {strides = array<i32>} : memref<1x8x8x288xbf16, #tpu.memory_space<vmem>>, vector<1x8x8x32xbf16>,
    %c0_317 = arith.constant 0 : index
    %c0_318 = arith.constant 0 : index
    %c1_319 = arith.constant 1 : index
    %c0_320 = arith.constant 0 : index
    %126 = vector.load %arg7[%c0_317, %c0_318, %c1_319, %c0_320] : memref<1x10x10x32xbf16, #tpu.memory_space<vmem>>, vector<1x8x8x32xbf16>
    %c0_321 = arith.constant 0 : index
    %c0_322 = arith.constant 0 : index
    %c0_323 = arith.constant 0 : index
    %c32_324 = arith.constant 32 : index
    %127 = vector.load %arg8[%c0_321, %c0_322, %c0_323, %c32_324] : memref<1x8x8x288xbf16, #tpu.memory_space<vmem>>, vector<1x8x8x32xbf16>
    tpu.vector_store %arg8[%c0_321, %c0_322, %c0_323, %c32_324], %126 {strides = array<i32>} : memref<1x8x8x288xbf16, #tpu.memory_space<vmem>>, vector<1x8x8x32xbf16>,
    %c0_325 = arith.constant 0 : index
    %c0_326 = arith.constant 0 : index
    %c2_327 = arith.constant 2 : index
    %c0_328 = arith.constant 0 : index
    %128 = vector.load %arg7[%c0_325, %c0_326, %c2_327, %c0_328] : memref<1x10x10x32xbf16, #tpu.memory_space<vmem>>, vector<1x8x8x32xbf16>
    %c0_329 = arith.constant 0 : index
    %c0_330 = arith.constant 0 : index
    %c0_331 = arith.constant 0 : index
    %c64_332 = arith.constant 64 : index
    %129 = vector.load %arg8[%c0_329, %c0_330, %c0_331, %c64_332] : memref<1x8x8x288xbf16, #tpu.memory_space<vmem>>, vector<1x8x8x32xbf16>
    tpu.vector_store %arg8[%c0_329, %c0_330, %c0_331, %c64_332], %128 {strides = array<i32>} : memref<1x8x8x288xbf16, #tpu.memory_space<vmem>>, vector<1x8x8x32xbf16>,
    %c0_333 = arith.constant 0 : index
    %c1_334 = arith.constant 1 : index
    %c0_335 = arith.constant 0 : index
    %c0_336 = arith.constant 0 : index
    %130 = vector.load %arg7[%c0_333, %c1_334, %c0_335, %c0_336] : memref<1x10x10x32xbf16, #tpu.memory_space<vmem>>, vector<1x8x8x32xbf16>
    %c0_337 = arith.constant 0 : index
    %c0_338 = arith.constant 0 : index
    %c0_339 = arith.constant 0 : index
    %c96_340 = arith.constant 96 : index
    %131 = vector.load %arg8[%c0_337, %c0_338, %c0_339, %c96_340] : memref<1x8x8x288xbf16, #tpu.memory_space<vmem>>, vector<1x8x8x32xbf16>
    tpu.vector_store %arg8[%c0_337, %c0_338, %c0_339, %c96_340], %130 {strides = array<i32>} : memref<1x8x8x288xbf16, #tpu.memory_space<vmem>>, vector<1x8x8x32xbf16>,
    %c0_341 = arith.constant 0 : index
    %c1_342 = arith.constant 1 : index
    %c1_343 = arith.constant 1 : index
    %c0_344 = arith.constant 0 : index
    %132 = vector.load %arg7[%c0_341, %c1_342, %c1_343, %c0_344] : memref<1x10x10x32xbf16, #tpu.memory_space<vmem>>, vector<1x8x8x32xbf16>
    %c0_345 = arith.constant 0 : index
    %c0_346 = arith.constant 0 : index
    %c0_347 = arith.constant 0 : index
    %c128_348 = arith.constant 128 : index
    %133 = vector.load %arg8[%c0_345, %c0_346, %c0_347, %c128_348] : memref<1x8x8x288xbf16, #tpu.memory_space<vmem>>, vector<1x8x8x32xbf16>
    tpu.vector_store %arg8[%c0_345, %c0_346, %c0_347, %c128_348], %132 {strides = array<i32>} : memref<1x8x8x288xbf16, #tpu.memory_space<vmem>>, vector<1x8x8x32xbf16>,
    %c0_349 = arith.constant 0 : index
    %c1_350 = arith.constant 1 : index
    %c2_351 = arith.constant 2 : index
    %c0_352 = arith.constant 0 : index
    %134 = vector.load %arg7[%c0_349, %c1_350, %c2_351, %c0_352] : memref<1x10x10x32xbf16, #tpu.memory_space<vmem>>, vector<1x8x8x32xbf16>
    %c0_353 = arith.constant 0 : index
    %c0_354 = arith.constant 0 : index
    %c0_355 = arith.constant 0 : index
    %c160_356 = arith.constant 160 : index
    %135 = vector.load %arg8[%c0_353, %c0_354, %c0_355, %c160_356] : memref<1x8x8x288xbf16, #tpu.memory_space<vmem>>, vector<1x8x8x32xbf16>
    tpu.vector_store %arg8[%c0_353, %c0_354, %c0_355, %c160_356], %134 {strides = array<i32>} : memref<1x8x8x288xbf16, #tpu.memory_space<vmem>>, vector<1x8x8x32xbf16>,
    %c0_357 = arith.constant 0 : index
    %c2_358 = arith.constant 2 : index
    %c0_359 = arith.constant 0 : index
    %c0_360 = arith.constant 0 : index
    %136 = vector.load %arg7[%c0_357, %c2_358, %c0_359, %c0_360] : memref<1x10x10x32xbf16, #tpu.memory_space<vmem>>, vector<1x8x8x32xbf16>
    %c0_361 = arith.constant 0 : index
    %c0_362 = arith.constant 0 : index
    %c0_363 = arith.constant 0 : index
    %c192_364 = arith.constant 192 : index
    %137 = vector.load %arg8[%c0_361, %c0_362, %c0_363, %c192_364] : memref<1x8x8x288xbf16, #tpu.memory_space<vmem>>, vector<1x8x8x32xbf16>
    tpu.vector_store %arg8[%c0_361, %c0_362, %c0_363, %c192_364], %136 {strides = array<i32>} : memref<1x8x8x288xbf16, #tpu.memory_space<vmem>>, vector<1x8x8x32xbf16>,
    %c0_365 = arith.constant 0 : index
    %c2_366 = arith.constant 2 : index
    %c1_367 = arith.constant 1 : index
    %c0_368 = arith.constant 0 : index
    %138 = vector.load %arg7[%c0_365, %c2_366, %c1_367, %c0_368] : memref<1x10x10x32xbf16, #tpu.memory_space<vmem>>, vector<1x8x8x32xbf16>
    %c0_369 = arith.constant 0 : index
    %c0_370 = arith.constant 0 : index
    %c0_371 = arith.constant 0 : index
    %c224_372 = arith.constant 224 : index
    %139 = vector.load %arg8[%c0_369, %c0_370, %c0_371, %c224_372] : memref<1x8x8x288xbf16, #tpu.memory_space<vmem>>, vector<1x8x8x32xbf16>
    tpu.vector_store %arg8[%c0_369, %c0_370, %c0_371, %c224_372], %138 {strides = array<i32>} : memref<1x8x8x288xbf16, #tpu.memory_space<vmem>>, vector<1x8x8x32xbf16>,
    %c0_373 = arith.constant 0 : index
    %c2_374 = arith.constant 2 : index
    %c2_375 = arith.constant 2 : index
    %c0_376 = arith.constant 0 : index
    %140 = vector.load %arg7[%c0_373, %c2_374, %c2_375, %c0_376] : memref<1x10x10x32xbf16, #tpu.memory_space<vmem>>, vector<1x8x8x32xbf16>
    %c0_377 = arith.constant 0 : index
    %c0_378 = arith.constant 0 : index
    %c0_379 = arith.constant 0 : index
    %c256_380 = arith.constant 256 : index
    %141 = vector.load %arg8[%c0_377, %c0_378, %c0_379, %c256_380] : memref<1x8x8x288xbf16, #tpu.memory_space<vmem>>, vector<1x8x8x32xbf16>
    tpu.vector_store %arg8[%c0_377, %c0_378, %c0_379, %c256_380], %140 {strides = array<i32>} : memref<1x8x8x288xbf16, #tpu.memory_space<vmem>>, vector<1x8x8x32xbf16>,
    %c0_381 = arith.constant 0 : index
    %c0_382 = arith.constant 0 : index
    %c0_383 = arith.constant 0 : index
    %c0_384 = arith.constant 0 : index
    %142 = vector.load %arg8[%c0_381, %c0_382, %c0_383, %c0_384] : memref<1x8x8x288xbf16, #tpu.memory_space<vmem>>, vector<1x8x8x288xbf16>
    %143 = vector.shape_cast %142 : vector<1x8x8x288xbf16> to vector<64x288xbf16>
    %c3 = arith.constant 3 : index
    %c0_385 = arith.constant 0 : index
    %c0_386 = arith.constant 0 : index
    %144 = vector.load %arg4[%c3, %c0_385, %c0_386] : memref<6x288x32xbf16, #tpu.memory_space<vmem>>, vector<1x288x32xbf16>
    %145 = vector.shape_cast %144 : vector<1x288x32xbf16> to vector<288x32xbf16>
    %cst_387 = arith.constant dense<0.000000e+00> : vector<64x32xf32>
    %146 = tpu.matmul %143, %145, %cst_387 {dimension_numbers = #tpu.dot_dimension_numbers<[1], [0], [0], [1], [0, 0, 1, 1], [], []>} : vector<64x288xbf16>, vector<288x32xbf16>, vector<64x32xf32> -> vector<64x32xf32>
    %c3_388 = arith.constant 3 : index
    %c0_389 = arith.constant 0 : index
    %c0_390 = arith.constant 0 : index
    %147 = vector.load %arg5[%c3_388, %c0_389, %c0_390] : memref<6x1x32xf32, #tpu.memory_space<vmem>>, vector<1x1x32xf32>
    %148 = vector.shape_cast %147 : vector<1x1x32xf32> to vector<1x32xf32>
    %149 = vector.broadcast %148 : vector<1x32xf32> to vector<64x32xf32>
    %150 = arith.addf %146, %149 : vector<64x32xf32>
    %cst_391 = arith.constant 0.000000e+00 : f32
    %151 = vector.broadcast %cst_391 : f32 to vector<64x32xf32>
    %152 = arith.maximumf %150, %151 : vector<64x32xf32>
    %153 = vector.shape_cast %152 : vector<64x32xf32> to vector<1x8x8x32xf32>
    %154 = arith.truncf %153 : vector<1x8x8x32xf32> to vector<1x8x8x32xbf16>
    %c0_392 = arith.constant 0 : index
    %c1_393 = arith.constant 1 : index
    %c1_394 = arith.constant 1 : index
    %c0_395 = arith.constant 0 : index
    %155 = vector.load %arg7[%c0_392, %c1_393, %c1_394, %c0_395] : memref<1x10x10x32xbf16, #tpu.memory_space<vmem>>, vector<1x8x8x32xbf16>
    tpu.vector_store %arg7[%c0_392, %c1_393, %c1_394, %c0_395], %154 {strides = array<i32>} : memref<1x10x10x32xbf16, #tpu.memory_space<vmem>>, vector<1x8x8x32xbf16>,
    %c0_396 = arith.constant 0 : index
    %c0_397 = arith.constant 0 : index
    %c0_398 = arith.constant 0 : index
    %c0_399 = arith.constant 0 : index
    %156 = vector.load %arg7[%c0_396, %c0_397, %c0_398, %c0_399] : memref<1x10x10x32xbf16, #tpu.memory_space<vmem>>, vector<1x8x8x32xbf16>
    %c0_400 = arith.constant 0 : index
    %c0_401 = arith.constant 0 : index
    %c0_402 = arith.constant 0 : index
    %c0_403 = arith.constant 0 : index
    %157 = vector.load %arg8[%c0_400, %c0_401, %c0_402, %c0_403] : memref<1x8x8x288xbf16, #tpu.memory_space<vmem>>, vector<1x8x8x32xbf16>
    tpu.vector_store %arg8[%c0_400, %c0_401, %c0_402, %c0_403], %156 {strides = array<i32>} : memref<1x8x8x288xbf16, #tpu.memory_space<vmem>>, vector<1x8x8x32xbf16>,
    %c0_404 = arith.constant 0 : index
    %c0_405 = arith.constant 0 : index
    %c1_406 = arith.constant 1 : index
    %c0_407 = arith.constant 0 : index
    %158 = vector.load %arg7[%c0_404, %c0_405, %c1_406, %c0_407] : memref<1x10x10x32xbf16, #tpu.memory_space<vmem>>, vector<1x8x8x32xbf16>
    %c0_408 = arith.constant 0 : index
    %c0_409 = arith.constant 0 : index
    %c0_410 = arith.constant 0 : index
    %c32_411 = arith.constant 32 : index
    %159 = vector.load %arg8[%c0_408, %c0_409, %c0_410, %c32_411] : memref<1x8x8x288xbf16, #tpu.memory_space<vmem>>, vector<1x8x8x32xbf16>
    tpu.vector_store %arg8[%c0_408, %c0_409, %c0_410, %c32_411], %158 {strides = array<i32>} : memref<1x8x8x288xbf16, #tpu.memory_space<vmem>>, vector<1x8x8x32xbf16>,
    %c0_412 = arith.constant 0 : index
    %c0_413 = arith.constant 0 : index
    %c2_414 = arith.constant 2 : index
    %c0_415 = arith.constant 0 : index
    %160 = vector.load %arg7[%c0_412, %c0_413, %c2_414, %c0_415] : memref<1x10x10x32xbf16, #tpu.memory_space<vmem>>, vector<1x8x8x32xbf16>
    %c0_416 = arith.constant 0 : index
    %c0_417 = arith.constant 0 : index
    %c0_418 = arith.constant 0 : index
    %c64_419 = arith.constant 64 : index
    %161 = vector.load %arg8[%c0_416, %c0_417, %c0_418, %c64_419] : memref<1x8x8x288xbf16, #tpu.memory_space<vmem>>, vector<1x8x8x32xbf16>
    tpu.vector_store %arg8[%c0_416, %c0_417, %c0_418, %c64_419], %160 {strides = array<i32>} : memref<1x8x8x288xbf16, #tpu.memory_space<vmem>>, vector<1x8x8x32xbf16>,
    %c0_420 = arith.constant 0 : index
    %c1_421 = arith.constant 1 : index
    %c0_422 = arith.constant 0 : index
    %c0_423 = arith.constant 0 : index
    %162 = vector.load %arg7[%c0_420, %c1_421, %c0_422, %c0_423] : memref<1x10x10x32xbf16, #tpu.memory_space<vmem>>, vector<1x8x8x32xbf16>
    %c0_424 = arith.constant 0 : index
    %c0_425 = arith.constant 0 : index
    %c0_426 = arith.constant 0 : index
    %c96_427 = arith.constant 96 : index
    %163 = vector.load %arg8[%c0_424, %c0_425, %c0_426, %c96_427] : memref<1x8x8x288xbf16, #tpu.memory_space<vmem>>, vector<1x8x8x32xbf16>
    tpu.vector_store %arg8[%c0_424, %c0_425, %c0_426, %c96_427], %162 {strides = array<i32>} : memref<1x8x8x288xbf16, #tpu.memory_space<vmem>>, vector<1x8x8x32xbf16>,
    %c0_428 = arith.constant 0 : index
    %c1_429 = arith.constant 1 : index
    %c1_430 = arith.constant 1 : index
    %c0_431 = arith.constant 0 : index
    %164 = vector.load %arg7[%c0_428, %c1_429, %c1_430, %c0_431] : memref<1x10x10x32xbf16, #tpu.memory_space<vmem>>, vector<1x8x8x32xbf16>
    %c0_432 = arith.constant 0 : index
    %c0_433 = arith.constant 0 : index
    %c0_434 = arith.constant 0 : index
    %c128_435 = arith.constant 128 : index
    %165 = vector.load %arg8[%c0_432, %c0_433, %c0_434, %c128_435] : memref<1x8x8x288xbf16, #tpu.memory_space<vmem>>, vector<1x8x8x32xbf16>
    tpu.vector_store %arg8[%c0_432, %c0_433, %c0_434, %c128_435], %164 {strides = array<i32>} : memref<1x8x8x288xbf16, #tpu.memory_space<vmem>>, vector<1x8x8x32xbf16>,
    %c0_436 = arith.constant 0 : index
    %c1_437 = arith.constant 1 : index
    %c2_438 = arith.constant 2 : index
    %c0_439 = arith.constant 0 : index
    %166 = vector.load %arg7[%c0_436, %c1_437, %c2_438, %c0_439] : memref<1x10x10x32xbf16, #tpu.memory_space<vmem>>, vector<1x8x8x32xbf16>
    %c0_440 = arith.constant 0 : index
    %c0_441 = arith.constant 0 : index
    %c0_442 = arith.constant 0 : index
    %c160_443 = arith.constant 160 : index
    %167 = vector.load %arg8[%c0_440, %c0_441, %c0_442, %c160_443] : memref<1x8x8x288xbf16, #tpu.memory_space<vmem>>, vector<1x8x8x32xbf16>
    tpu.vector_store %arg8[%c0_440, %c0_441, %c0_442, %c160_443], %166 {strides = array<i32>} : memref<1x8x8x288xbf16, #tpu.memory_space<vmem>>, vector<1x8x8x32xbf16>,
    %c0_444 = arith.constant 0 : index
    %c2_445 = arith.constant 2 : index
    %c0_446 = arith.constant 0 : index
    %c0_447 = arith.constant 0 : index
    %168 = vector.load %arg7[%c0_444, %c2_445, %c0_446, %c0_447] : memref<1x10x10x32xbf16, #tpu.memory_space<vmem>>, vector<1x8x8x32xbf16>
    %c0_448 = arith.constant 0 : index
    %c0_449 = arith.constant 0 : index
    %c0_450 = arith.constant 0 : index
    %c192_451 = arith.constant 192 : index
    %169 = vector.load %arg8[%c0_448, %c0_449, %c0_450, %c192_451] : memref<1x8x8x288xbf16, #tpu.memory_space<vmem>>, vector<1x8x8x32xbf16>
    tpu.vector_store %arg8[%c0_448, %c0_449, %c0_450, %c192_451], %168 {strides = array<i32>} : memref<1x8x8x288xbf16, #tpu.memory_space<vmem>>, vector<1x8x8x32xbf16>,
    %c0_452 = arith.constant 0 : index
    %c2_453 = arith.constant 2 : index
    %c1_454 = arith.constant 1 : index
    %c0_455 = arith.constant 0 : index
    %170 = vector.load %arg7[%c0_452, %c2_453, %c1_454, %c0_455] : memref<1x10x10x32xbf16, #tpu.memory_space<vmem>>, vector<1x8x8x32xbf16>
    %c0_456 = arith.constant 0 : index
    %c0_457 = arith.constant 0 : index
    %c0_458 = arith.constant 0 : index
    %c224_459 = arith.constant 224 : index
    %171 = vector.load %arg8[%c0_456, %c0_457, %c0_458, %c224_459] : memref<1x8x8x288xbf16, #tpu.memory_space<vmem>>, vector<1x8x8x32xbf16>
    tpu.vector_store %arg8[%c0_456, %c0_457, %c0_458, %c224_459], %170 {strides = array<i32>} : memref<1x8x8x288xbf16, #tpu.memory_space<vmem>>, vector<1x8x8x32xbf16>,
    %c0_460 = arith.constant 0 : index
    %c2_461 = arith.constant 2 : index
    %c2_462 = arith.constant 2 : index
    %c0_463 = arith.constant 0 : index
    %172 = vector.load %arg7[%c0_460, %c2_461, %c2_462, %c0_463] : memref<1x10x10x32xbf16, #tpu.memory_space<vmem>>, vector<1x8x8x32xbf16>
    %c0_464 = arith.constant 0 : index
    %c0_465 = arith.constant 0 : index
    %c0_466 = arith.constant 0 : index
    %c256_467 = arith.constant 256 : index
    %173 = vector.load %arg8[%c0_464, %c0_465, %c0_466, %c256_467] : memref<1x8x8x288xbf16, #tpu.memory_space<vmem>>, vector<1x8x8x32xbf16>
    tpu.vector_store %arg8[%c0_464, %c0_465, %c0_466, %c256_467], %172 {strides = array<i32>} : memref<1x8x8x288xbf16, #tpu.memory_space<vmem>>, vector<1x8x8x32xbf16>,
    %c0_468 = arith.constant 0 : index
    %c0_469 = arith.constant 0 : index
    %c0_470 = arith.constant 0 : index
    %c0_471 = arith.constant 0 : index
    %174 = vector.load %arg8[%c0_468, %c0_469, %c0_470, %c0_471] : memref<1x8x8x288xbf16, #tpu.memory_space<vmem>>, vector<1x8x8x288xbf16>
    %175 = vector.shape_cast %174 : vector<1x8x8x288xbf16> to vector<64x288xbf16>
    %c4 = arith.constant 4 : index
    %c0_472 = arith.constant 0 : index
    %c0_473 = arith.constant 0 : index
    %176 = vector.load %arg4[%c4, %c0_472, %c0_473] : memref<6x288x32xbf16, #tpu.memory_space<vmem>>, vector<1x288x32xbf16>
    %177 = vector.shape_cast %176 : vector<1x288x32xbf16> to vector<288x32xbf16>
    %cst_474 = arith.constant dense<0.000000e+00> : vector<64x32xf32>
    %178 = tpu.matmul %175, %177, %cst_474 {dimension_numbers = #tpu.dot_dimension_numbers<[1], [0], [0], [1], [0, 0, 1, 1], [], []>} : vector<64x288xbf16>, vector<288x32xbf16>, vector<64x32xf32> -> vector<64x32xf32>
    %c4_475 = arith.constant 4 : index
    %c0_476 = arith.constant 0 : index
    %c0_477 = arith.constant 0 : index
    %179 = vector.load %arg5[%c4_475, %c0_476, %c0_477] : memref<6x1x32xf32, #tpu.memory_space<vmem>>, vector<1x1x32xf32>
    %180 = vector.shape_cast %179 : vector<1x1x32xf32> to vector<1x32xf32>
    %181 = vector.broadcast %180 : vector<1x32xf32> to vector<64x32xf32>
    %182 = arith.addf %178, %181 : vector<64x32xf32>
    %cst_478 = arith.constant 0.000000e+00 : f32
    %183 = vector.broadcast %cst_478 : f32 to vector<64x32xf32>
    %184 = arith.maximumf %182, %183 : vector<64x32xf32>
    %185 = vector.shape_cast %184 : vector<64x32xf32> to vector<1x8x8x32xf32>
    %186 = arith.truncf %185 : vector<1x8x8x32xf32> to vector<1x8x8x32xbf16>
    %c0_479 = arith.constant 0 : index
    %c1_480 = arith.constant 1 : index
    %c1_481 = arith.constant 1 : index
    %c0_482 = arith.constant 0 : index
    %187 = vector.load %arg7[%c0_479, %c1_480, %c1_481, %c0_482] : memref<1x10x10x32xbf16, #tpu.memory_space<vmem>>, vector<1x8x8x32xbf16>
    tpu.vector_store %arg7[%c0_479, %c1_480, %c1_481, %c0_482], %186 {strides = array<i32>} : memref<1x10x10x32xbf16, #tpu.memory_space<vmem>>, vector<1x8x8x32xbf16>,
    %c0_483 = arith.constant 0 : index
    %c0_484 = arith.constant 0 : index
    %c0_485 = arith.constant 0 : index
    %c0_486 = arith.constant 0 : index
    %188 = vector.load %arg7[%c0_483, %c0_484, %c0_485, %c0_486] : memref<1x10x10x32xbf16, #tpu.memory_space<vmem>>, vector<1x8x8x32xbf16>
    %c0_487 = arith.constant 0 : index
    %c0_488 = arith.constant 0 : index
    %c0_489 = arith.constant 0 : index
    %c0_490 = arith.constant 0 : index
    %189 = vector.load %arg8[%c0_487, %c0_488, %c0_489, %c0_490] : memref<1x8x8x288xbf16, #tpu.memory_space<vmem>>, vector<1x8x8x32xbf16>
    tpu.vector_store %arg8[%c0_487, %c0_488, %c0_489, %c0_490], %188 {strides = array<i32>} : memref<1x8x8x288xbf16, #tpu.memory_space<vmem>>, vector<1x8x8x32xbf16>,
    %c0_491 = arith.constant 0 : index
    %c0_492 = arith.constant 0 : index
    %c1_493 = arith.constant 1 : index
    %c0_494 = arith.constant 0 : index
    %190 = vector.load %arg7[%c0_491, %c0_492, %c1_493, %c0_494] : memref<1x10x10x32xbf16, #tpu.memory_space<vmem>>, vector<1x8x8x32xbf16>
    %c0_495 = arith.constant 0 : index
    %c0_496 = arith.constant 0 : index
    %c0_497 = arith.constant 0 : index
    %c32_498 = arith.constant 32 : index
    %191 = vector.load %arg8[%c0_495, %c0_496, %c0_497, %c32_498] : memref<1x8x8x288xbf16, #tpu.memory_space<vmem>>, vector<1x8x8x32xbf16>
    tpu.vector_store %arg8[%c0_495, %c0_496, %c0_497, %c32_498], %190 {strides = array<i32>} : memref<1x8x8x288xbf16, #tpu.memory_space<vmem>>, vector<1x8x8x32xbf16>,
    %c0_499 = arith.constant 0 : index
    %c0_500 = arith.constant 0 : index
    %c2_501 = arith.constant 2 : index
    %c0_502 = arith.constant 0 : index
    %192 = vector.load %arg7[%c0_499, %c0_500, %c2_501, %c0_502] : memref<1x10x10x32xbf16, #tpu.memory_space<vmem>>, vector<1x8x8x32xbf16>
    %c0_503 = arith.constant 0 : index
    %c0_504 = arith.constant 0 : index
    %c0_505 = arith.constant 0 : index
    %c64_506 = arith.constant 64 : index
    %193 = vector.load %arg8[%c0_503, %c0_504, %c0_505, %c64_506] : memref<1x8x8x288xbf16, #tpu.memory_space<vmem>>, vector<1x8x8x32xbf16>
    tpu.vector_store %arg8[%c0_503, %c0_504, %c0_505, %c64_506], %192 {strides = array<i32>} : memref<1x8x8x288xbf16, #tpu.memory_space<vmem>>, vector<1x8x8x32xbf16>,
    %c0_507 = arith.constant 0 : index
    %c1_508 = arith.constant 1 : index
    %c0_509 = arith.constant 0 : index
    %c0_510 = arith.constant 0 : index
    %194 = vector.load %arg7[%c0_507, %c1_508, %c0_509, %c0_510] : memref<1x10x10x32xbf16, #tpu.memory_space<vmem>>, vector<1x8x8x32xbf16>
    %c0_511 = arith.constant 0 : index
    %c0_512 = arith.constant 0 : index
    %c0_513 = arith.constant 0 : index
    %c96_514 = arith.constant 96 : index
    %195 = vector.load %arg8[%c0_511, %c0_512, %c0_513, %c96_514] : memref<1x8x8x288xbf16, #tpu.memory_space<vmem>>, vector<1x8x8x32xbf16>
    tpu.vector_store %arg8[%c0_511, %c0_512, %c0_513, %c96_514], %194 {strides = array<i32>} : memref<1x8x8x288xbf16, #tpu.memory_space<vmem>>, vector<1x8x8x32xbf16>,
    %c0_515 = arith.constant 0 : index
    %c1_516 = arith.constant 1 : index
    %c1_517 = arith.constant 1 : index
    %c0_518 = arith.constant 0 : index
    %196 = vector.load %arg7[%c0_515, %c1_516, %c1_517, %c0_518] : memref<1x10x10x32xbf16, #tpu.memory_space<vmem>>, vector<1x8x8x32xbf16>
    %c0_519 = arith.constant 0 : index
    %c0_520 = arith.constant 0 : index
    %c0_521 = arith.constant 0 : index
    %c128_522 = arith.constant 128 : index
    %197 = vector.load %arg8[%c0_519, %c0_520, %c0_521, %c128_522] : memref<1x8x8x288xbf16, #tpu.memory_space<vmem>>, vector<1x8x8x32xbf16>
    tpu.vector_store %arg8[%c0_519, %c0_520, %c0_521, %c128_522], %196 {strides = array<i32>} : memref<1x8x8x288xbf16, #tpu.memory_space<vmem>>, vector<1x8x8x32xbf16>,
    %c0_523 = arith.constant 0 : index
    %c1_524 = arith.constant 1 : index
    %c2_525 = arith.constant 2 : index
    %c0_526 = arith.constant 0 : index
    %198 = vector.load %arg7[%c0_523, %c1_524, %c2_525, %c0_526] : memref<1x10x10x32xbf16, #tpu.memory_space<vmem>>, vector<1x8x8x32xbf16>
    %c0_527 = arith.constant 0 : index
    %c0_528 = arith.constant 0 : index
    %c0_529 = arith.constant 0 : index
    %c160_530 = arith.constant 160 : index
    %199 = vector.load %arg8[%c0_527, %c0_528, %c0_529, %c160_530] : memref<1x8x8x288xbf16, #tpu.memory_space<vmem>>, vector<1x8x8x32xbf16>
    tpu.vector_store %arg8[%c0_527, %c0_528, %c0_529, %c160_530], %198 {strides = array<i32>} : memref<1x8x8x288xbf16, #tpu.memory_space<vmem>>, vector<1x8x8x32xbf16>,
    %c0_531 = arith.constant 0 : index
    %c2_532 = arith.constant 2 : index
    %c0_533 = arith.constant 0 : index
    %c0_534 = arith.constant 0 : index
    %200 = vector.load %arg7[%c0_531, %c2_532, %c0_533, %c0_534] : memref<1x10x10x32xbf16, #tpu.memory_space<vmem>>, vector<1x8x8x32xbf16>
    %c0_535 = arith.constant 0 : index
    %c0_536 = arith.constant 0 : index
    %c0_537 = arith.constant 0 : index
    %c192_538 = arith.constant 192 : index
    %201 = vector.load %arg8[%c0_535, %c0_536, %c0_537, %c192_538] : memref<1x8x8x288xbf16, #tpu.memory_space<vmem>>, vector<1x8x8x32xbf16>
    tpu.vector_store %arg8[%c0_535, %c0_536, %c0_537, %c192_538], %200 {strides = array<i32>} : memref<1x8x8x288xbf16, #tpu.memory_space<vmem>>, vector<1x8x8x32xbf16>,
    %c0_539 = arith.constant 0 : index
    %c2_540 = arith.constant 2 : index
    %c1_541 = arith.constant 1 : index
    %c0_542 = arith.constant 0 : index
    %202 = vector.load %arg7[%c0_539, %c2_540, %c1_541, %c0_542] : memref<1x10x10x32xbf16, #tpu.memory_space<vmem>>, vector<1x8x8x32xbf16>
    %c0_543 = arith.constant 0 : index
    %c0_544 = arith.constant 0 : index
    %c0_545 = arith.constant 0 : index
    %c224_546 = arith.constant 224 : index
    %203 = vector.load %arg8[%c0_543, %c0_544, %c0_545, %c224_546] : memref<1x8x8x288xbf16, #tpu.memory_space<vmem>>, vector<1x8x8x32xbf16>
    tpu.vector_store %arg8[%c0_543, %c0_544, %c0_545, %c224_546], %202 {strides = array<i32>} : memref<1x8x8x288xbf16, #tpu.memory_space<vmem>>, vector<1x8x8x32xbf16>,
    %c0_547 = arith.constant 0 : index
    %c2_548 = arith.constant 2 : index
    %c2_549 = arith.constant 2 : index
    %c0_550 = arith.constant 0 : index
    %204 = vector.load %arg7[%c0_547, %c2_548, %c2_549, %c0_550] : memref<1x10x10x32xbf16, #tpu.memory_space<vmem>>, vector<1x8x8x32xbf16>
    %c0_551 = arith.constant 0 : index
    %c0_552 = arith.constant 0 : index
    %c0_553 = arith.constant 0 : index
    %c256_554 = arith.constant 256 : index
    %205 = vector.load %arg8[%c0_551, %c0_552, %c0_553, %c256_554] : memref<1x8x8x288xbf16, #tpu.memory_space<vmem>>, vector<1x8x8x32xbf16>
    tpu.vector_store %arg8[%c0_551, %c0_552, %c0_553, %c256_554], %204 {strides = array<i32>} : memref<1x8x8x288xbf16, #tpu.memory_space<vmem>>, vector<1x8x8x32xbf16>,
    %c0_555 = arith.constant 0 : index
    %c0_556 = arith.constant 0 : index
    %c0_557 = arith.constant 0 : index
    %c0_558 = arith.constant 0 : index
    %206 = vector.load %arg8[%c0_555, %c0_556, %c0_557, %c0_558] : memref<1x8x8x288xbf16, #tpu.memory_space<vmem>>, vector<1x8x8x288xbf16>
    %207 = vector.shape_cast %206 : vector<1x8x8x288xbf16> to vector<64x288xbf16>
    %c5 = arith.constant 5 : index
    %c0_559 = arith.constant 0 : index
    %c0_560 = arith.constant 0 : index
    %208 = vector.load %arg4[%c5, %c0_559, %c0_560] : memref<6x288x32xbf16, #tpu.memory_space<vmem>>, vector<1x288x32xbf16>
    %209 = vector.shape_cast %208 : vector<1x288x32xbf16> to vector<288x32xbf16>
    %cst_561 = arith.constant dense<0.000000e+00> : vector<64x32xf32>
    %210 = tpu.matmul %207, %209, %cst_561 {dimension_numbers = #tpu.dot_dimension_numbers<[1], [0], [0], [1], [0, 0, 1, 1], [], []>} : vector<64x288xbf16>, vector<288x32xbf16>, vector<64x32xf32> -> vector<64x32xf32>
    %c5_562 = arith.constant 5 : index
    %c0_563 = arith.constant 0 : index
    %c0_564 = arith.constant 0 : index
    %211 = vector.load %arg5[%c5_562, %c0_563, %c0_564] : memref<6x1x32xf32, #tpu.memory_space<vmem>>, vector<1x1x32xf32>
    %212 = vector.shape_cast %211 : vector<1x1x32xf32> to vector<1x32xf32>
    %213 = vector.broadcast %212 : vector<1x32xf32> to vector<64x32xf32>
    %214 = arith.addf %210, %213 : vector<64x32xf32>
    %215 = vector.shape_cast %214 : vector<64x32xf32> to vector<1x8x8x32xf32>
    %c0_565 = arith.constant 0 : index
    %c1_566 = arith.constant 1 : index
    %c0_567 = arith.constant 0 : index
    %216 = vector.load %arg3[%c0_565, %c1_566, %c0_567] : memref<1x2x32xf32, #tpu.memory_space<vmem>>, vector<1x1x32xf32>
    %217 = vector.shape_cast %216 : vector<1x1x32xf32> to vector<1x32xf32>
    %218 = vector.shape_cast %217 : vector<1x32xf32> to vector<1x1x1x32xf32>
    %c0_568 = arith.constant 0 : index
    %c0_569 = arith.constant 0 : index
    %c0_570 = arith.constant 0 : index
    %c0_571 = arith.constant 0 : index
    %219 = vector.load %arg6[%c0_568, %c0_569, %c0_570, %c0_571] : memref<1x8x8x32xf32, #tpu.memory_space<vmem>>, vector<1x8x8x32xf32>
    %220 = vector.broadcast %218 : vector<1x1x1x32xf32> to vector<1x8x8x32xf32>
    %221 = arith.mulf %215, %220 : vector<1x8x8x32xf32>
    %222 = arith.addf %219, %221 : vector<1x8x8x32xf32>
    %c0_572 = arith.constant 0 : index
    %c0_573 = arith.constant 0 : index
    %c0_574 = arith.constant 0 : index
    %c0_575 = arith.constant 0 : index
    %223 = vector.load %arg6[%c0_572, %c0_573, %c0_574, %c0_575] : memref<1x8x8x32xf32, #tpu.memory_space<vmem>>, vector<1x8x8x32xf32>
    tpu.vector_store %arg6[%c0_572, %c0_573, %c0_574, %c0_575], %222 {strides = array<i32>} : memref<1x8x8x32xf32, #tpu.memory_space<vmem>>, vector<1x8x8x32xf32>,
    return
  }
  func.func @transform_0(%arg0: i32) -> (i32, i32, i32, i32) {
    %c0_i32 = arith.constant 0 : i32
    %c0_i32_0 = arith.constant 0 : i32
    %c0_i32_1 = arith.constant 0 : i32
    %c0_i32_2 = arith.constant 0 : i32
    return %arg0, %c0_i32, %c0_i32_0, %c0_i32_1 : i32, i32, i32, i32
  }
  func.func @transform_1(%arg0: i32) -> (i32, i32, i32, i32) {
    %c0_i32 = arith.constant 0 : i32
    %c0_i32_0 = arith.constant 0 : i32
    %c0_i32_1 = arith.constant 0 : i32
    %c0_i32_2 = arith.constant 0 : i32
    return %arg0, %c0_i32, %c0_i32_0, %c0_i32_1 : i32, i32, i32, i32
  }
  func.func @transform_2(%arg0: i32) -> (i32, i32, i32) {
    %c0_i32 = arith.constant 0 : i32
    %c0_i32_0 = arith.constant 0 : i32
    %c0_i32_1 = arith.constant 0 : i32
    return %arg0, %c0_i32, %c0_i32_0 : i32, i32, i32
  }
  func.func @transform_3(%arg0: i32) -> (i32, i32, i32) {
    %c0_i32 = arith.constant 0 : i32
    %c0_i32_0 = arith.constant 0 : i32
    %c0_i32_1 = arith.constant 0 : i32
    %c0_i32_2 = arith.constant 0 : i32
    return %c0_i32, %c0_i32_0, %c0_i32_1 : i32, i32, i32
  }
  func.func @transform_4(%arg0: i32) -> (i32, i32, i32) {
    %c0_i32 = arith.constant 0 : i32
    %c0_i32_0 = arith.constant 0 : i32
    %c0_i32_1 = arith.constant 0 : i32
    %c0_i32_2 = arith.constant 0 : i32
    return %c0_i32, %c0_i32_0, %c0_i32_1 : i32, i32, i32
  }
  func.func @transform_5(%arg0: i32) -> (i32, i32, i32, i32) {
    %c0_i32 = arith.constant 0 : i32
    %c0_i32_0 = arith.constant 0 : i32
    %c0_i32_1 = arith.constant 0 : i32
    %c0_i32_2 = arith.constant 0 : i32
    return %arg0, %c0_i32, %c0_i32_0, %c0_i32_1 : i32, i32, i32, i32
  }
}

</mosaic_0001>

<llo_original>
// kernel: tpu_custom_call.1
$region0: #{tpu_custom_call.1}
  #allocation0 [shape = 'u32[]', space=smem, size = 0x4, offset = 0x4, fixed_abs, tag = 'smem constant byte address 0x4 - core index']
  #allocation1 [shape = 'u32[144,128]{1,0:T(1,128)}', space=vmem, size = 0x12000, scoped, tag = 'internal scratch']
  #allocation2 [shape = 'bf16[1,10,10,32]{3,2,1,0:T(8,128)(2,1)}', space=vmem, size = 0xa000, scoped, tag = 'scratch operand']
  #allocation3 [shape = 'bf16[1,8,8,288]{3,2,1,0:T(8,128)(2,1)}', space=vmem, size = 0xc000, scoped, tag = 'scratch operand']
  %s0 = inlined_call_operand.vmem [shape: f32[2,8,8,32], index: 0, kind: input, shape index: {}]
  %s1 = inlined_call_operand.vmem [shape: f32[2,8,8,32], index: 1, kind: input, shape index: {}]
  %s2 = inlined_call_operand.vmem [shape: f32[2,2,32], index: 2, kind: input, shape index: {}]
  %s3 = inlined_call_operand.vmem [shape: bf16[6,288,32], index: 3, kind: input, shape index: {}]
  %s4 = inlined_call_operand.vmem [shape: f32[6,1,32], index: 4, kind: input, shape index: {}]
  %s5 = inlined_call_operand.hbm [shape: f32[2,8,8,32], index: 5, kind: output, shape index: {}]
  %s6 = sld [smem:[#allocation0]]
  $region53: #{tpu_custom_call.1} parent=0
    _
  %s8 = ssub.s32 1, %s6
  %s9 = scalar_select 0, %s8, %s6
  $region1: #{tpu_custom_call.1} parent=0
    #allocation4 [shape = 'u8[65536]{0}', space=vmem, size = 0x10000, scoped, tag = 'output window, operand 0']
    #allocation5 [shape = 's32[2]{0}', space=sflag, size = 0x8, scoped, tag = 'scoped memory for tpu_custom_call.1']
    %10 = vsyncpa [#allocation5], 0
    %s11 = scalar_lea.sflag [#allocation5], 1
    %12 = vsyncpa %s11, 0
    loop: start=0, step=1, limit=4
    $region2: #{tpu_custom_call.1} parent=1 // loop_pre_header
      _
    $region3: #{tpu_custom_call.1} parent=1 // loop_header
      %s14 = sphi 0, %s18
      %p15 = scmp.ge.s32.totalorder %s14, 4
      %s24 = sphi 0, %s26
      %s27 = sphi 0, %s24
      %s28 = sphi 0, %s27
      %s44 = sphi 0, %s28
      %s50 = sphi 0, %s52
      %s53 = sphi 0, %s50
      %s54 = sphi 0, %s53
      %s70 = sphi 0, %s54
      %s76 = sphi 0, %s78
      %s79 = sphi 0, %s76
      %s80 = sphi 0, %s79
      %s96 = sphi 0, %s80
      %s100 = sphi 0, %s100
      %s102 = sphi 0, %s100
      %s103 = sphi 0, %s102
      %s117 = sphi 0, %s103
      %s121 = sphi 0, %s121
      %s123 = sphi 0, %s121
      %s124 = sphi 0, %s123
      %s138 = sphi 0, %s124
      %s144 = sphi 0, %s146
      %s147 = sphi 0, %s144
      %s148 = sphi 0, %s147
      %s164 = sphi 0, %s148
    $region4: #{tpu_custom_call.1} parent=1 // loop_header_branch
      %17 = sbr.rel (%p15) target = $region8
    $region5: #{tpu_custom_call.1} parent=1 // loop_body
      %s19 = ssub.s32 %s14, 1
      %s20 = ssub.s32 %s14, 2
      %s21 = sadd.s32 %s14, 1
      %s22 = ssub.s32 %s14, %s21
      %p23 = scmp.eq.s32.totalorder %s22, 0
      %s25 = sadd.s32 %s24, 1
      %s26 = scalar_select %p23, %s24, %s25
      %p29 = pneg %p23
      %p30 = scmp.eq.s32.totalorder %s14, 1
      %p31 = por %p29, %p30
      %p32 = scmp.ne.s32.totalorder %s24, %s27
      %p33 = scmp.eq.s32.totalorder %s14, 0
      %p34 = por %p32, %p33
      %p35 = scmp.ne.s32.totalorder %s24, %s27
      %p36 = scmp.eq.s32.totalorder %s19, 1
      %p37 = por %p35, %p36
      %p38 = scmp.ne.s32.totalorder %s27, %s28
      %p39 = scmp.eq.s32.totalorder %s19, 0
      %p40 = por %p38, %p39
      %p41 = scmp.ne.s32.totalorder %s27, %s28
      %p42 = scmp.eq.s32.totalorder %s20, 1
      %p43 = por %p41, %p42
      %p45 = scmp.ne.s32.totalorder %s28, %s44
      %p46 = scmp.eq.s32.totalorder %s20, 0
      %p47 = por %p45, %p46
      %s48 = ssub.s32 %s14, %s21
      %p49 = scmp.eq.s32.totalorder %s48, 0
      %s51 = sadd.s32 %s50, 1
      %s52 = scalar_select %p49, %s50, %s51
      %p55 = pneg %p49
      %p56 = scmp.eq.s32.totalorder %s14, 1
      %p57 = por %p55, %p56
      %p58 = scmp.ne.s32.totalorder %s50, %s53
      %p59 = scmp.eq.s32.totalorder %s14, 0
      %p60 = por %p58, %p59
      %p61 = scmp.ne.s32.totalorder %s50, %s53
      %p62 = scmp.eq.s32.totalorder %s19, 1
      %p63 = por %p61, %p62
      %p64 = scmp.ne.s32.totalorder %s53, %s54
      %p65 = scmp.eq.s32.totalorder %s19, 0
      %p66 = por %p64, %p65
      %p67 = scmp.ne.s32.totalorder %s53, %s54
      %p68 = scmp.eq.s32.totalorder %s20, 1
      %p69 = por %p67, %p68
      %p71 = scmp.ne.s32.totalorder %s54, %s70
      %p72 = scmp.eq.s32.totalorder %s20, 0
      %p73 = por %p71, %p72
      %s74 = ssub.s32 %s14, %s21
      %p75 = scmp.eq.s32.totalorder %s74, 0
      %s77 = sadd.s32 %s76, 1
      %s78 = scalar_select %p75, %s76, %s77
      %p81 = pneg %p75
      %p82 = scmp.eq.s32.totalorder %s14, 1
      %p83 = por %p81, %p82
      %p84 = scmp.ne.s32.totalorder %s76, %s79
      %p85 = scmp.eq.s32.totalorder %s14, 0
      %p86 = por %p84, %p85
      %p87 = scmp.ne.s32.totalorder %s76, %s79
      %p88 = scmp.eq.s32.totalorder %s19, 1
      %p89 = por %p87, %p88
      %p90 = scmp.ne.s32.totalorder %s79, %s80
      %p91 = scmp.eq.s32.totalorder %s19, 0
      %p92 = por %p90, %p91
      %p93 = scmp.ne.s32.totalorder %s79, %s80
      %p94 = scmp.eq.s32.totalorder %s20, 1
      %p95 = por %p93, %p94
      %p97 = scmp.ne.s32.totalorder %s80, %s96
      %p98 = scmp.eq.s32.totalorder %s20, 0
      %p99 = por %p97, %p98
      %s101 = sadd.s32 %s100, 1
      %p104 = scmp.eq.s32.totalorder %s14, 1
      %p105 = scmp.ne.s32.totalorder %s100, %s102
      %p106 = scmp.eq.s32.totalorder %s14, 0
      %p107 = por %p105, %p106
      %p108 = scmp.ne.s32.totalorder %s100, %s102
      %p109 = scmp.eq.s32.totalorder %s19, 1
      %p110 = por %p108, %p109
      %p111 = scmp.ne.s32.totalorder %s102, %s103
      %p112 = scmp.eq.s32.totalorder %s19, 0
      %p113 = por %p111, %p112
      %p114 = scmp.ne.s32.totalorder %s102, %s103
      %p115 = scmp.eq.s32.totalorder %s20, 1
      %p116 = por %p114, %p115
      %p118 = scmp.ne.s32.totalorder %s103, %s117
      %p119 = scmp.eq.s32.totalorder %s20, 0
      %p120 = por %p118, %p119
      %s122 = sadd.s32 %s121, 1
      %p125 = scmp.eq.s32.totalorder %s14, 1
      %p126 = scmp.ne.s32.totalorder %s121, %s123
      %p127 = scmp.eq.s32.totalorder %s14, 0
      %p128 = por %p126, %p127
      %p129 = scmp.ne.s32.totalorder %s121, %s123
      %p130 = scmp.eq.s32.totalorder %s19, 1
      %p131 = por %p129, %p130
      %p132 = scmp.ne.s32.totalorder %s123, %s124
      %p133 = scmp.eq.s32.totalorder %s19, 0
      %p134 = por %p132, %p133
      %p135 = scmp.ne.s32.totalorder %s123, %s124
      %p136 = scmp.eq.s32.totalorder %s20, 1
      %p137 = por %p135, %p136
      %p139 = scmp.ne.s32.totalorder %s124, %s138
      %p140 = scmp.eq.s32.totalorder %s20, 0
      %p141 = por %p139, %p140
      %s142 = ssub.s32 %s14, %s21
      %p143 = scmp.eq.s32.totalorder %s142, 0
      %s145 = sadd.s32 %s144, 1
      %s146 = scalar_select %p143, %s144, %s145
      %p149 = pneg %p143
      %p150 = scmp.eq.s32.totalorder %s14, 1
      %p151 = por %p149, %p150
      %p152 = scmp.ne.s32.totalorder %s144, %s147
      %p153 = scmp.eq.s32.totalorder %s14, 0
      %p154 = por %p152, %p153
      %p155 = scmp.ne.s32.totalorder %s144, %s147
      %p156 = scmp.eq.s32.totalorder %s19, 1
      %p157 = por %p155, %p156
      %p158 = scmp.ne.s32.totalorder %s147, %s148
      %p159 = scmp.eq.s32.totalorder %s19, 0
      %p160 = por %p158, %p159
      %p161 = scmp.ne.s32.totalorder %s147, %s148
      %p162 = scmp.eq.s32.totalorder %s20, 1
      %p163 = por %p161, %p162
      %p165 = scmp.ne.s32.totalorder %s148, %s164
      %p166 = scmp.eq.s32.totalorder %s20, 0
      %p167 = por %p165, %p166
      %p168 = scmp.le.s32.totalorder 1, %s14
      %p169 = scmp.lt.s32.totalorder %s14, 3
      %p170 = pnand %p168, %p169
      %p171 = pneg %p170
      // Predicated region
      $region9: #{tpu_custom_call.1} parent=5 // pred_check
        _
      $region10: #{tpu_custom_call.1} parent=5 // pred_check_branch
        %173 = sbr.rel (%p170) target = $region12
      $region11: #{tpu_custom_call.1} parent=5 // pred_region
        %s174 = ssub.s32 %s14, 1
        // Predicated region
        $region13: #{tpu_custom_call.1} parent=11 // pred_check
          %p175 = pneg %p113
        $region14: #{tpu_custom_call.1} parent=11 // pred_check_branch
          %177 = sbr.rel (%p175) target = $region16
        $region15: #{tpu_custom_call.1} parent=11 // pred_region
          _
        $region16: #{tpu_custom_call.1} parent=11 // pred_fallthru
          _
        // Predicated region
        $region17: #{tpu_custom_call.1} parent=11 // pred_check
          %p178 = pneg %p134
        $region18: #{tpu_custom_call.1} parent=11 // pred_check_branch
          %180 = sbr.rel (%p178) target = $region20
        $region19: #{tpu_custom_call.1} parent=11 // pred_region
          _
        $region20: #{tpu_custom_call.1} parent=11 // pred_fallthru
          _
      $region12: #{tpu_custom_call.1} parent=5 // pred_fallthru
        _
      %p181 = scmp.lt.s32.totalorder %s14, 2
      // Predicated region
      $region21: #{tpu_custom_call.1} parent=5 // pred_check
        %p182 = pneg %p181
      $region22: #{tpu_custom_call.1} parent=5 // pred_check_branch
        %184 = sbr.rel (%p182) target = $region24
      $region23: #{tpu_custom_call.1} parent=5 // pred_region
        // Predicated region
        $region25: #{tpu_custom_call.1} parent=23 // pred_check
          %p185 = pneg %p34
        $region26: #{tpu_custom_call.1} parent=23 // pred_check_branch
          %187 = sbr.rel (%p185) target = $region28
        $region27: #{tpu_custom_call.1} parent=23 // pred_region
          %p188 = scmp.lt.s32.totalorder %s14, 1
          %s189 = scalar_select %p188, %s14, 1
          %s190 = smul.addr %s189, 8
          %s191 = smul.addr %s190, 8
          %s192 = scalar_lea.vmem %s0, %s191
        $region28: #{tpu_custom_call.1} parent=23 // pred_fallthru
          _
        // Predicated region
        $region29: #{tpu_custom_call.1} parent=23 // pred_check
          %p193 = pneg %p60
        $region30: #{tpu_custom_call.1} parent=23 // pred_check_branch
          %195 = sbr.rel (%p193) target = $region32
        $region31: #{tpu_custom_call.1} parent=23 // pred_region
          %p196 = scmp.lt.s32.totalorder %s14, 1
          %s197 = scalar_select %p196, %s14, 1
          %s198 = smul.addr %s197, 8
          %s199 = smul.addr %s198, 8
          %s200 = scalar_lea.vmem %s1, %s199
        $region32: #{tpu_custom_call.1} parent=23 // pred_fallthru
          _
        // Predicated region
        $region33: #{tpu_custom_call.1} parent=23 // pred_check
          %p201 = pneg %p86
        $region34: #{tpu_custom_call.1} parent=23 // pred_check_branch
          %203 = sbr.rel (%p201) target = $region36
        $region35: #{tpu_custom_call.1} parent=23 // pred_region
          %p204 = scmp.lt.s32.totalorder %s14, 1
          %s205 = scalar_select %p204, %s14, 1
          %s206 = smul.addr %s205, 2
          %s207 = scalar_lea.vmem %s2, %s206
        $region36: #{tpu_custom_call.1} parent=23 // pred_fallthru
          _
      $region24: #{tpu_custom_call.1} parent=5 // pred_fallthru
        _
      %p208 = scmp.le.s32.totalorder 1, %s14
      %p209 = scmp.lt.s32.totalorder %s14, 3
      %p210 = pnand %p208, %p209
      %p211 = pneg %p210
      // Predicated region
      $region37: #{tpu_custom_call.1} parent=5 // pred_check
        _
      $region38: #{tpu_custom_call.1} parent=5 // pred_check_branch
        %213 = sbr.rel (%p210) target = $region40
      $region39: #{tpu_custom_call.1} parent=5 // pred_region
        %s214 = ssub.s32 %s14, 1
        %p215 = scmp.lt.s32.totalorder %s19, 1
        %s216 = scalar_select %p215, %s19, 1
        %s217 = smul.addr %s216, 8
        %s218 = smul.addr %s217, 8
        %s219 = scalar_lea.vmem %s0, %s218
        %p220 = pneg %p40
        %p221 = pneg %p37
        %p222 = scmp.lt.s32.totalorder %s19, 1
        %s223 = scalar_select %p222, %s19, 1
        %s224 = smul.addr %s223, 8
        %s225 = smul.addr %s224, 8
        %s226 = scalar_lea.vmem %s1, %s225
        %p227 = pneg %p66
        %p228 = pneg %p63
        %p229 = scmp.lt.s32.totalorder %s19, 1
        %s230 = scalar_select %p229, %s19, 1
        %s231 = smul.addr %s230, 2
        %s232 = scalar_lea.vmem %s2, %s231
        %p233 = pneg %p92
        %p234 = pneg %p89
        %p235 = pneg %p113
        %p236 = pneg %p110
        %p237 = pneg %p134
        %p238 = pneg %p131
        %p239 = pneg %p160
        %p240 = pneg %p157
        %s241 = sand.u32 %s147, 1
        %s242 = scalar_lea.sflag [#allocation5], %s241
        %s243 = sand.u32 %s147, 1
        %s244 = smul.addr %s243, 64
        %s245 = scalar_lea.vmem [#allocation4], %s244
        %p246 = scmp.lt.s32.totalorder %s19, 1
        %s247 = scalar_select %p246, %s19, 1
        %s248 = smul.addr %s247, 8
        %s249 = smul.addr %s248, 8
        %s250 = scalar_lea.vmem %s0, %s249
        %p251 = scmp.lt.s32.totalorder %s19, 1
        %s252 = scalar_select %p251, %s19, 1
        %s253 = smul.addr %s252, 8
        %s254 = smul.addr %s253, 8
        %s255 = scalar_lea.vmem %s1, %s254
        %p256 = scmp.lt.s32.totalorder %s19, 1
        %s257 = scalar_select %p256, %s19, 1
        %s258 = smul.addr %s257, 2
        %s259 = scalar_lea.vmem %s2, %s258
        %v261 = vld [vmem:[%s250] sm:$0xff]
        %v262 = vld [vmem:[%s250 + $0x8] sm:$0xff]
        %v263 = vld [vmem:[%s250 + $0x10] sm:$0xff]
        %v264 = vld [vmem:[%s250 + $0x18] sm:$0xff]
        %v265 = vld [vmem:[%s250 + $0x20] sm:$0xff]
        %v266 = vld [vmem:[%s250 + $0x28] sm:$0xff]
        %v267 = vld [vmem:[%s250 + $0x30] sm:$0xff]
        %v268 = vld [vmem:[%s250 + $0x38] sm:$0xff]
        %vm269 = vcmask 261120
        %270 = vst.msk [vmem:[%s245] sm:$0xff] %vm269, %v261
        %271 = vst.msk [vmem:[%s245 + $0x8] sm:$0xff] %vm269, %v262
        %272 = vst.msk [vmem:[%s245 + $0x10] sm:$0xff] %vm269, %v263
        %273 = vst.msk [vmem:[%s245 + $0x18] sm:$0xff] %vm269, %v264
        %274 = vst.msk [vmem:[%s245 + $0x20] sm:$0xff] %vm269, %v265
        %275 = vst.msk [vmem:[%s245 + $0x28] sm:$0xff] %vm269, %v266
        %276 = vst.msk [vmem:[%s245 + $0x30] sm:$0xff] %vm269, %v267
        %277 = vst.msk [vmem:[%s245 + $0x38] sm:$0xff] %vm269, %v268
        %vm278 = vcmask 257024
        %279 = vst.msk [vmem:[#allocation2] sm:$0xf] %vm278, 0
        %vm280 = vcmask 253952
        %281 = vst.msk [vmem:[#allocation2 + $0x4] sm:$0x1] %vm280, 0
        %s282 = scalar_lea.vmem [#allocation2], 72
        %283 = vst.msk [vmem:[%s282] sm:$0xf] %vm278, 0
        %284 = vst.msk [vmem:[%s282 + $0x4] sm:$0x1] %vm280, 0
        %s285 = scalar_lea.vmem [#allocation2], 8
        %vm286 = vcmask 253952
        %vm287 = vsmask.f32 256
        %vm288 = vmand %vm286, %vm287
        %v289 = vld [vmem:[%s285] sm:$0x1]
        %v290 = vsel %vm288, 0, %v289
        %291 = vst [vmem:[%s285] sm:$0x1] %v290
        %v292 = vld [vmem:[%s285 + $0x8] sm:$0x1]
        %v293 = vsel %vm288, 0, %v292
        %294 = vst [vmem:[%s285 + $0x8] sm:$0x1] %v293
        %v295 = vld [vmem:[%s285 + $0x10] sm:$0x1]
        %v296 = vsel %vm288, 0, %v295
        %297 = vst [vmem:[%s285 + $0x10] sm:$0x1] %v296
        %v298 = vld [vmem:[%s285 + $0x18] sm:$0x1]
        %v299 = vsel %vm288, 0, %v298
        %300 = vst [vmem:[%s285 + $0x18] sm:$0x1] %v299
        %v301 = vld [vmem:[%s285 + $0x20] sm:$0x1]
        %v302 = vsel %vm288, 0, %v301
        %303 = vst [vmem:[%s285 + $0x20] sm:$0x1] %v302
        %v304 = vld [vmem:[%s285 + $0x28] sm:$0x1]
        %v305 = vsel %vm288, 0, %v304
        %306 = vst [vmem:[%s285 + $0x28] sm:$0x1] %v305
        %v307 = vld [vmem:[%s285 + $0x30] sm:$0x1]
        %v308 = vsel %vm288, 0, %v307
        %309 = vst [vmem:[%s285 + $0x30] sm:$0x1] %v308
        %v310 = vld [vmem:[%s285 + $0x38] sm:$0x1]
        %v311 = vsel %vm288, 0, %v310
        %312 = vst [vmem:[%s285 + $0x38] sm:$0x1] %v311
        %vm313 = vsmask.f32 7938
        %vm314 = vmand %vm286, %vm313
        %v315 = vld [vmem:[%s285 + $0x4] sm:$0x1]
        %v316 = vsel %vm314, 0, %v315
        %317 = vst [vmem:[%s285 + $0x4] sm:$0x1] %v316
        %v318 = vld [vmem:[%s285 + $0xc] sm:$0x1]
        %v319 = vsel %vm314, 0, %v318
        %320 = vst [vmem:[%s285 + $0xc] sm:$0x1] %v319
        %v321 = vld [vmem:[%s285 + $0x14] sm:$0x1]
        %v322 = vsel %vm314, 0, %v321
        %323 = vst [vmem:[%s285 + $0x14] sm:$0x1] %v322
        %v324 = vld [vmem:[%s285 + $0x1c] sm:$0x1]
        %v325 = vsel %vm314, 0, %v324
        %326 = vst [vmem:[%s285 + $0x1c] sm:$0x1] %v325
        %v327 = vld [vmem:[%s285 + $0x24] sm:$0x1]
        %v328 = vsel %vm314, 0, %v327
        %329 = vst [vmem:[%s285 + $0x24] sm:$0x1] %v328
        %v330 = vld [vmem:[%s285 + $0x2c] sm:$0x1]
        %v331 = vsel %vm314, 0, %v330
        %332 = vst [vmem:[%s285 + $0x2c] sm:$0x1] %v331
        %v333 = vld [vmem:[%s285 + $0x34] sm:$0x1]
        %v334 = vsel %vm314, 0, %v333
        %335 = vst [vmem:[%s285 + $0x34] sm:$0x1] %v334
        %v336 = vld [vmem:[%s285 + $0x3c] sm:$0x1]
        %v337 = vsel %vm314, 0, %v336
        %338 = vst [vmem:[%s285 + $0x3c] sm:$0x1] %v337
        %v339 = vld [vmem:[%s255] sm:$0xff]
        %v340 = vld [vmem:[%s255 + $0x8] sm:$0xff]
        %v341 = vld [vmem:[%s255 + $0x10] sm:$0xff]
        %v342 = vld [vmem:[%s255 + $0x18] sm:$0xff]
        %v343 = vld [vmem:[%s255 + $0x20] sm:$0xff]
        %v344 = vld [vmem:[%s255 + $0x28] sm:$0xff]
        %v345 = vld [vmem:[%s255 + $0x30] sm:$0xff]
        %v346 = vld [vmem:[%s255 + $0x38] sm:$0xff]
        %v347 = vld [vmem:[%s250] sm:$0xff]
        %v348 = vld [vmem:[%s250 + $0x8] sm:$0xff]
        %v349 = vld [vmem:[%s250 + $0x10] sm:$0xff]
        %v350 = vld [vmem:[%s250 + $0x18] sm:$0xff]
        %v351 = vld [vmem:[%s250 + $0x20] sm:$0xff]
        %v352 = vld [vmem:[%s250 + $0x28] sm:$0xff]
        %v353 = vld [vmem:[%s250 + $0x30] sm:$0xff]
        %v354 = vld [vmem:[%s250 + $0x38] sm:$0xff]
        %v355 = vsub.f32 %v339, %v347
        %v356 = vsub.f32 %v340, %v348
        %v357 = vsub.f32 %v341, %v349
        %v358 = vsub.f32 %v342, %v350
        %v359 = vsub.f32 %v343, %v351
        %v360 = vsub.f32 %v344, %v352
        %v361 = vsub.f32 %v345, %v353
        %v362 = vsub.f32 %v346, %v354
        %v363 = vpack.c.bf16 %v355, %v355
        %v364 = vpack.c.bf16 %v356, %v356
        %v365 = vpack.c.bf16 %v357, %v357
        %v366 = vpack.c.bf16 %v358, %v358
        %v367 = vpack.c.bf16 %v359, %v359
        %v368 = vpack.c.bf16 %v360, %v360
        %v369 = vpack.c.bf16 %v361, %v361
        %v370 = vpack.c.bf16 %v362, %v362
        %v379 = vunpack.c.l.b16 %v363
        %v380 = vunpack.c.l.b16 %v364
        %v381 = vunpack.c.l.b16 %v365
        %v382 = vunpack.c.l.b16 %v366
        %v383 = vunpack.c.l.b16 %v367
        %v384 = vunpack.c.l.b16 %v368
        %v385 = vunpack.c.l.b16 %v369
        %v386 = vunpack.c.l.b16 %v370
        %v387 = vpack.c.b16 %v379, %v379
        %v388 = vpack.c.b16 %v380, %v380
        %v389 = vpack.c.b16 %v381, %v381
        %v390 = vpack.c.b16 %v382, %v382
        %v391 = vpack.c.b16 %v383, %v383
        %v392 = vpack.c.b16 %v384, %v384
        %v393 = vpack.c.b16 %v385, %v385
        %v394 = vpack.c.b16 %v386, %v386
        %v396 = vshrl.u32 %v387, 16
        %v398 = vrot.slane %v396, 7
        %v399 = vshll.u32 %v387, 16
        %v401 = vor.u32 %v398, %v399
        %v402 = vrot.slane %v398, 4
        %v404 = vshrl.u32 %v388, 16
        %v406 = vrot.slane %v404, 7
        %v407 = vshll.u32 %v388, 16
        %v409 = vor.u32 %v406, %v407
        %v410 = vrot.slane %v406, 4
        %v412 = vshrl.u32 %v389, 16
        %v414 = vrot.slane %v412, 7
        %v415 = vshll.u32 %v389, 16
        %v417 = vor.u32 %v414, %v415
        %v418 = vrot.slane %v414, 4
        %v420 = vshrl.u32 %v390, 16
        %v422 = vrot.slane %v420, 7
        %v423 = vshll.u32 %v390, 16
        %v425 = vor.u32 %v422, %v423
        %v426 = vrot.slane %v422, 4
        %v428 = vshrl.u32 %v391, 16
        %v430 = vrot.slane %v428, 7
        %v431 = vshll.u32 %v391, 16
        %v433 = vor.u32 %v430, %v431
        %v434 = vrot.slane %v430, 4
        %v436 = vshrl.u32 %v392, 16
        %v438 = vrot.slane %v436, 7
        %v439 = vshll.u32 %v392, 16
        %v441 = vor.u32 %v438, %v439
        %v442 = vrot.slane %v438, 4
        %v444 = vshrl.u32 %v393, 16
        %v446 = vrot.slane %v444, 7
        %v447 = vshll.u32 %v393, 16
        %v449 = vor.u32 %v446, %v447
        %v450 = vrot.slane %v446, 4
        %v452 = vshrl.u32 %v394, 16
        %v454 = vrot.slane %v452, 7
        %v455 = vshll.u32 %v394, 16
        %v457 = vor.u32 %v454, %v455
        %v458 = vrot.slane %v454, 4
        %vm475 = vcmask 257024
        %vm476 = vmand %vm475, %vm313
        %v477 = vld [vmem:[%s285] sm:$0xf]
        %v478 = vsel %vm476, %v401, %v477
        %479 = vst [vmem:[%s285] sm:$0xf] %v478
        %v480 = vld [vmem:[%s285 + $0x4] sm:$0x1]
        %v481 = vsel %vm288, %v402, %v480
        %482 = vst [vmem:[%s285 + $0x4] sm:$0x1] %v481
        %v483 = vld [vmem:[%s285 + $0x8] sm:$0xf]
        %v484 = vsel %vm476, %v409, %v483
        %485 = vst [vmem:[%s285 + $0x8] sm:$0xf] %v484
        %v486 = vld [vmem:[%s285 + $0xc] sm:$0x1]
        %v487 = vsel %vm288, %v410, %v486
        %488 = vst [vmem:[%s285 + $0xc] sm:$0x1] %v487
        %v489 = vld [vmem:[%s285 + $0x10] sm:$0xf]
        %v490 = vsel %vm476, %v417, %v489
        %491 = vst [vmem:[%s285 + $0x10] sm:$0xf] %v490
        %v492 = vld [vmem:[%s285 + $0x14] sm:$0x1]
        %v493 = vsel %vm288, %v418, %v492
        %494 = vst [vmem:[%s285 + $0x14] sm:$0x1] %v493
        %v495 = vld [vmem:[%s285 + $0x18] sm:$0xf]
        %v496 = vsel %vm476, %v425, %v495
        %497 = vst [vmem:[%s285 + $0x18] sm:$0xf] %v496
        %v498 = vld [vmem:[%s285 + $0x1c] sm:$0x1]
        %v499 = vsel %vm288, %v426, %v498
        %500 = vst [vmem:[%s285 + $0x1c] sm:$0x1] %v499
        %v501 = vld [vmem:[%s285 + $0x20] sm:$0xf]
        %v502 = vsel %vm476, %v433, %v501
        %503 = vst [vmem:[%s285 + $0x20] sm:$0xf] %v502
        %v504 = vld [vmem:[%s285 + $0x24] sm:$0x1]
        %v505 = vsel %vm288, %v434, %v504
        %506 = vst [vmem:[%s285 + $0x24] sm:$0x1] %v505
        %v507 = vld [vmem:[%s285 + $0x28] sm:$0xf]
        %v508 = vsel %vm476, %v441, %v507
        %509 = vst [vmem:[%s285 + $0x28] sm:$0xf] %v508
        %v510 = vld [vmem:[%s285 + $0x2c] sm:$0x1]
        %v511 = vsel %vm288, %v442, %v510
        %512 = vst [vmem:[%s285 + $0x2c] sm:$0x1] %v511
        %v513 = vld [vmem:[%s285 + $0x30] sm:$0xf]
        %v514 = vsel %vm476, %v449, %v513
        %515 = vst [vmem:[%s285 + $0x30] sm:$0xf] %v514
        %v516 = vld [vmem:[%s285 + $0x34] sm:$0x1]
        %v517 = vsel %vm288, %v450, %v516
        %518 = vst [vmem:[%s285 + $0x34] sm:$0x1] %v517
        %v519 = vld [vmem:[%s285 + $0x38] sm:$0xf]
        %v520 = vsel %vm476, %v457, %v519
        %521 = vst [vmem:[%s285 + $0x38] sm:$0xf] %v520
        %v522 = vld [vmem:[%s285 + $0x3c] sm:$0x1]
        %v523 = vsel %vm288, %v458, %v522
        %524 = vst [vmem:[%s285 + $0x3c] sm:$0x1] %v523
        %v525 = vld [vmem:[#allocation2] sm:$0xf]
        %v526 = vld [vmem:[#allocation2 + $0x8] sm:$0xf]
        %v527 = vld [vmem:[#allocation2 + $0x10] sm:$0xf]
        %v528 = vld [vmem:[#allocation2 + $0x18] sm:$0xf]
        %v529 = vld [vmem:[#allocation2 + $0x20] sm:$0xf]
        %v530 = vld [vmem:[#allocation2 + $0x28] sm:$0xf]
        %v531 = vld [vmem:[#allocation2 + $0x30] sm:$0xf]
        %v532 = vld [vmem:[#allocation2 + $0x38] sm:$0xf]
        %533 = vst.msk [vmem:[#allocation3] sm:$0xf] %vm278, %v525
        %534 = vst.msk [vmem:[#allocation3 + $0xc] sm:$0xf] %vm278, %v526
        %535 = vst.msk [vmem:[#allocation3 + $0x18] sm:$0xf] %vm278, %v527
        %536 = vst.msk [vmem:[#allocation3 + $0x24] sm:$0xf] %vm278, %v528
        %537 = vst.msk [vmem:[#allocation3 + $0x30] sm:$0xf] %vm278, %v529
        %538 = vst.msk [vmem:[#allocation3 + $0x3c] sm:$0xf] %vm278, %v530
        %539 = vst.msk [vmem:[#allocation3 + $0x48] sm:$0xf] %vm278, %v531
        %540 = vst.msk [vmem:[#allocation3 + $0x54] sm:$0xf] %vm278, %v532
        %v541 = vld [vmem:[#allocation2] sm:$0xf]
        %v542 = vld [vmem:[#allocation2 + $0x4] sm:$0x1]
        %v543 = vld [vmem:[#allocation2 + $0x8] sm:$0xf]
        %v544 = vld [vmem:[#allocation2 + $0xc] sm:$0x1]
        %v545 = vld [vmem:[#allocation2 + $0x10] sm:$0xf]
        %v546 = vld [vmem:[#allocation2 + $0x14] sm:$0x1]
        %v547 = vld [vmem:[#allocation2 + $0x18] sm:$0xf]
        %v548 = vld [vmem:[#allocation2 + $0x1c] sm:$0x1]
        %v549 = vld [vmem:[#allocation2 + $0x20] sm:$0xf]
        %v550 = vld [vmem:[#allocation2 + $0x24] sm:$0x1]
        %v551 = vld [vmem:[#allocation2 + $0x28] sm:$0xf]
        %v552 = vld [vmem:[#allocation2 + $0x2c] sm:$0x1]
        %v553 = vld [vmem:[#allocation2 + $0x30] sm:$0xf]
        %v554 = vld [vmem:[#allocation2 + $0x34] sm:$0x1]
        %v555 = vld [vmem:[#allocation2 + $0x38] sm:$0xf]
        %v556 = vld [vmem:[#allocation2 + $0x3c] sm:$0x1]
        %vm557 = vsmask.f32 3328
        %vm558 = vsmask.f32 7440
        %vm559 = vmor %vm557, %vm558
        %v561 = vshrl.u32 %v541, 16
        %v563 = vrot.slane %v561, 4
        %v564 = vshll.u32 %v541, 16
        %v566 = vrot.slane %v564, 5
        %v567 = vor.u32 %v563, %v566
        %v568 = vrot.slane %v567, 4
        %v570 = vshll.u32 %v542, 16
        %v572 = vrot.slane %v570, 5
        %v573 = vsel %vm559, %v568, %v572
        %v575 = vshrl.u32 %v543, 16
        %v577 = vrot.slane %v575, 4
        %v578 = vshll.u32 %v543, 16
        %v580 = vrot.slane %v578, 5
        %v581 = vor.u32 %v577, %v580
        %v582 = vrot.slane %v581, 4
        %v584 = vshll.u32 %v544, 16
        %v586 = vrot.slane %v584, 5
        %v587 = vsel %vm559, %v582, %v586
        %v589 = vshrl.u32 %v545, 16
        %v591 = vrot.slane %v589, 4
        %v592 = vshll.u32 %v545, 16
        %v594 = vrot.slane %v592, 5
        %v595 = vor.u32 %v591, %v594
        %v596 = vrot.slane %v595, 4
        %v598 = vshll.u32 %v546, 16
        %v600 = vrot.slane %v598, 5
        %v601 = vsel %vm559, %v596, %v600
        %v603 = vshrl.u32 %v547, 16
        %v605 = vrot.slane %v603, 4
        %v606 = vshll.u32 %v547, 16
        %v608 = vrot.slane %v606, 5
        %v609 = vor.u32 %v605, %v608
        %v610 = vrot.slane %v609, 4
        %v612 = vshll.u32 %v548, 16
        %v614 = vrot.slane %v612, 5
        %v615 = vsel %vm559, %v610, %v614
        %v617 = vshrl.u32 %v549, 16
        %v619 = vrot.slane %v617, 4
        %v620 = vshll.u32 %v549, 16
        %v622 = vrot.slane %v620, 5
        %v623 = vor.u32 %v619, %v622
        %v624 = vrot.slane %v623, 4
        %v626 = vshll.u32 %v550, 16
        %v628 = vrot.slane %v626, 5
        %v629 = vsel %vm559, %v624, %v628
        %v631 = vshrl.u32 %v551, 16
        %v633 = vrot.slane %v631, 4
        %v634 = vshll.u32 %v551, 16
        %v636 = vrot.slane %v634, 5
        %v637 = vor.u32 %v633, %v636
        %v638 = vrot.slane %v637, 4
        %v640 = vshll.u32 %v552, 16
        %v642 = vrot.slane %v640, 5
        %v643 = vsel %vm559, %v638, %v642
        %v645 = vshrl.u32 %v553, 16
        %v647 = vrot.slane %v645, 4
        %v648 = vshll.u32 %v553, 16
        %v650 = vrot.slane %v648, 5
        %v651 = vor.u32 %v647, %v650
        %v652 = vrot.slane %v651, 4
        %v654 = vshll.u32 %v554, 16
        %v656 = vrot.slane %v654, 5
        %v657 = vsel %vm559, %v652, %v656
        %v659 = vshrl.u32 %v555, 16
        %v661 = vrot.slane %v659, 4
        %v662 = vshll.u32 %v555, 16
        %v664 = vrot.slane %v662, 5
        %v665 = vor.u32 %v661, %v664
        %v666 = vrot.slane %v665, 4
        %v668 = vshll.u32 %v556, 16
        %v670 = vrot.slane %v668, 5
        %v671 = vsel %vm559, %v666, %v670
        %672 = vrot.lane.b32.xlu0 %v573, 32
        %v673 = vpop.permute.xlu0 %672
        %674 = vrot.lane.b32.xlu0 %v587, 32
        %v675 = vpop.permute.xlu0 %674
        %676 = vrot.lane.b32.xlu0 %v601, 32
        %v677 = vpop.permute.xlu0 %676
        %678 = vrot.lane.b32.xlu0 %v615, 32
        %v679 = vpop.permute.xlu0 %678
        %680 = vrot.lane.b32.xlu0 %v629, 32
        %v681 = vpop.permute.xlu0 %680
        %682 = vrot.lane.b32.xlu0 %v643, 32
        %v683 = vpop.permute.xlu0 %682
        %684 = vrot.lane.b32.xlu0 %v657, 32
        %v685 = vpop.permute.xlu0 %684
        %686 = vrot.lane.b32.xlu0 %v671, 32
        %v687 = vpop.permute.xlu0 %686
        %vm696 = vcmask 519424
        %697 = vst.msk [vmem:[#allocation3] sm:$0xf] %vm696, %v673
        %698 = vst.msk [vmem:[#allocation3 + $0xc] sm:$0xf] %vm696, %v675
        %699 = vst.msk [vmem:[#allocation3 + $0x18] sm:$0xf] %vm696, %v677
        %700 = vst.msk [vmem:[#allocation3 + $0x24] sm:$0xf] %vm696, %v679
        %701 = vst.msk [vmem:[#allocation3 + $0x30] sm:$0xf] %vm696, %v681
        %702 = vst.msk [vmem:[#allocation3 + $0x3c] sm:$0xf] %vm696, %v683
        %703 = vst.msk [vmem:[#allocation3 + $0x48] sm:$0xf] %vm696, %v685
        %704 = vst.msk [vmem:[#allocation3 + $0x54] sm:$0xf] %vm696, %v687
        %v705 = vld [vmem:[#allocation2] sm:$0xe]
        %v706 = vld [vmem:[#allocation2 + $0x4] sm:$0x1]
        %v707 = vld [vmem:[#allocation2 + $0x8] sm:$0xe]
        %v708 = vld [vmem:[#allocation2 + $0xc] sm:$0x1]
        %v709 = vld [vmem:[#allocation2 + $0x10] sm:$0xe]
        %v710 = vld [vmem:[#allocation2 + $0x14] sm:$0x1]
        %v711 = vld [vmem:[#allocation2 + $0x18] sm:$0xe]
        %v712 = vld [vmem:[#allocation2 + $0x1c] sm:$0x1]
        %v713 = vld [vmem:[#allocation2 + $0x20] sm:$0xe]
        %v714 = vld [vmem:[#allocation2 + $0x24] sm:$0x1]
        %v715 = vld [vmem:[#allocation2 + $0x28] sm:$0xe]
        %v716 = vld [vmem:[#allocation2 + $0x2c] sm:$0x1]
        %v717 = vld [vmem:[#allocation2 + $0x30] sm:$0xe]
        %v718 = vld [vmem:[#allocation2 + $0x34] sm:$0x1]
        %v719 = vld [vmem:[#allocation2 + $0x38] sm:$0xe]
        %v720 = vld [vmem:[#allocation2 + $0x3c] sm:$0x1]
        %vm737 = vcmask 1042432
        %vm738 = vcmask 1046532
        %vm739 = vmor %vm737, %vm738
        %v740 = vrot.slane %v705, 5
        %v741 = vrot.slane %v740, 4
        %v742 = vrot.slane %v706, 5
        %v743 = vsel %vm739, %v741, %v742
        %v744 = vrot.slane %v707, 5
        %v745 = vrot.slane %v744, 4
        %v746 = vrot.slane %v708, 5
        %v747 = vsel %vm739, %v745, %v746
        %v748 = vrot.slane %v709, 5
        %v749 = vrot.slane %v748, 4
        %v750 = vrot.slane %v710, 5
        %v751 = vsel %vm739, %v749, %v750
        %v752 = vrot.slane %v711, 5
        %v753 = vrot.slane %v752, 4
        %v754 = vrot.slane %v712, 5
        %v755 = vsel %vm739, %v753, %v754
        %v756 = vrot.slane %v713, 5
        %v757 = vrot.slane %v756, 4
        %v758 = vrot.slane %v714, 5
        %v759 = vsel %vm739, %v757, %v758
        %v760 = vrot.slane %v715, 5
        %v761 = vrot.slane %v760, 4
        %v762 = vrot.slane %v716, 5
        %v763 = vsel %vm739, %v761, %v762
        %v764 = vrot.slane %v717, 5
        %v765 = vrot.slane %v764, 4
        %v766 = vrot.slane %v718, 5
        %v767 = vsel %vm739, %v765, %v766
        %v768 = vrot.slane %v719, 5
        %v769 = vrot.slane %v768, 4
        %v770 = vrot.slane %v720, 5
        %v771 = vsel %vm739, %v769, %v770
        %772 = vrot.lane.b32.xlu0 %v743, 64
        %v773 = vpop.permute.xlu0 %772
        %774 = vrot.lane.b32.xlu0 %v747, 64
        %v775 = vpop.permute.xlu0 %774
        %776 = vrot.lane.b32.xlu0 %v751, 64
        %v777 = vpop.permute.xlu0 %776
        %778 = vrot.lane.b32.xlu0 %v755, 64
        %v779 = vpop.permute.xlu0 %778
        %780 = vrot.lane.b32.xlu0 %v759, 64
        %v781 = vpop.permute.xlu0 %780
        %782 = vrot.lane.b32.xlu0 %v763, 64
        %v783 = vpop.permute.xlu0 %782
        %784 = vrot.lane.b32.xlu0 %v767, 64
        %v785 = vpop.permute.xlu0 %784
        %786 = vrot.lane.b32.xlu0 %v771, 64
        %v787 = vpop.permute.xlu0 %786
        %vm796 = vcmask 781824
        %797 = vst.msk [vmem:[#allocation3] sm:$0xf] %vm796, %v773
        %798 = vst.msk [vmem:[#allocation3 + $0xc] sm:$0xf] %vm796, %v775
        %799 = vst.msk [vmem:[#allocation3 + $0x18] sm:$0xf] %vm796, %v777
        %800 = vst.msk [vmem:[#allocation3 + $0x24] sm:$0xf] %vm796, %v779
        %801 = vst.msk [vmem:[#allocation3 + $0x30] sm:$0xf] %vm796, %v781
        %802 = vst.msk [vmem:[#allocation3 + $0x3c] sm:$0xf] %vm796, %v783
        %803 = vst.msk [vmem:[#allocation3 + $0x48] sm:$0xf] %vm796, %v785
        %804 = vst.msk [vmem:[#allocation3 + $0x54] sm:$0xf] %vm796, %v787
        %v805 = vld [vmem:[%s285] sm:$0xf]
        %v806 = vld [vmem:[%s285 + $0x8] sm:$0xf]
        %v807 = vld [vmem:[%s285 + $0x10] sm:$0xf]
        %v808 = vld [vmem:[%s285 + $0x18] sm:$0xf]
        %v809 = vld [vmem:[%s285 + $0x20] sm:$0xf]
        %v810 = vld [vmem:[%s285 + $0x28] sm:$0xf]
        %v811 = vld [vmem:[%s285 + $0x30] sm:$0xf]
        %v812 = vld [vmem:[%s285 + $0x38] sm:$0xf]
        %821 = vrot.lane.b32.xlu0 %v805, 96
        %v822 = vpop.permute.xlu0 %821
        %823 = vrot.lane.b32.xlu0 %v806, 96
        %v824 = vpop.permute.xlu0 %823
        %825 = vrot.lane.b32.xlu0 %v807, 96
        %v826 = vpop.permute.xlu0 %825
        %827 = vrot.lane.b32.xlu0 %v808, 96
        %v828 = vpop.permute.xlu0 %827
        %829 = vrot.lane.b32.xlu0 %v809, 96
        %v830 = vpop.permute.xlu0 %829
        %831 = vrot.lane.b32.xlu0 %v810, 96
        %v832 = vpop.permute.xlu0 %831
        %833 = vrot.lane.b32.xlu0 %v811, 96
        %v834 = vpop.permute.xlu0 %833
        %835 = vrot.lane.b32.xlu0 %v812, 96
        %v836 = vpop.permute.xlu0 %835
        %vm845 = vcmask 1044224
        %846 = vst.msk [vmem:[#allocation3] sm:$0xf] %vm845, %v822
        %847 = vst.msk [vmem:[#allocation3 + $0xc] sm:$0xf] %vm845, %v824
        %848 = vst.msk [vmem:[#allocation3 + $0x18] sm:$0xf] %vm845, %v826
        %849 = vst.msk [vmem:[#allocation3 + $0x24] sm:$0xf] %vm845, %v828
        %850 = vst.msk [vmem:[#allocation3 + $0x30] sm:$0xf] %vm845, %v830
        %851 = vst.msk [vmem:[#allocation3 + $0x3c] sm:$0xf] %vm845, %v832
        %852 = vst.msk [vmem:[#allocation3 + $0x48] sm:$0xf] %vm845, %v834
        %853 = vst.msk [vmem:[#allocation3 + $0x54] sm:$0xf] %vm845, %v836
        %v854 = vld [vmem:[%s285] sm:$0xf]
        %v855 = vld [vmem:[%s285 + $0x4] sm:$0x1]
        %v856 = vld [vmem:[%s285 + $0x8] sm:$0xf]
        %v857 = vld [vmem:[%s285 + $0xc] sm:$0x1]
        %v858 = vld [vmem:[%s285 + $0x10] sm:$0xf]
        %v859 = vld [vmem:[%s285 + $0x14] sm:$0x1]
        %v860 = vld [vmem:[%s285 + $0x18] sm:$0xf]
        %v861 = vld [vmem:[%s285 + $0x1c] sm:$0x1]
        %v862 = vld [vmem:[%s285 + $0x20] sm:$0xf]
        %v863 = vld [vmem:[%s285 + $0x24] sm:$0x1]
        %v864 = vld [vmem:[%s285 + $0x28] sm:$0xf]
        %v865 = vld [vmem:[%s285 + $0x2c] sm:$0x1]
        %v866 = vld [vmem:[%s285 + $0x30] sm:$0xf]
        %v867 = vld [vmem:[%s285 + $0x34] sm:$0x1]
        %v868 = vld [vmem:[%s285 + $0x38] sm:$0xf]
        %v869 = vld [vmem:[%s285 + $0x3c] sm:$0x1]
        %v871 = vshrl.u32 %v854, 16
        %v873 = vrot.slane %v871, 4
        %v874 = vshll.u32 %v854, 16
        %v876 = vrot.slane %v874, 5
        %v877 = vor.u32 %v873, %v876
        %v878 = vrot.slane %v877, 4
        %v880 = vshll.u32 %v855, 16
        %v882 = vrot.slane %v880, 5
        %v883 = vsel %vm559, %v878, %v882
        %v885 = vshrl.u32 %v856, 16
        %v887 = vrot.slane %v885, 4
        %v888 = vshll.u32 %v856, 16
        %v890 = vrot.slane %v888, 5
        %v891 = vor.u32 %v887, %v890
        %v892 = vrot.slane %v891, 4
        %v894 = vshll.u32 %v857, 16
        %v896 = vrot.slane %v894, 5
        %v897 = vsel %vm559, %v892, %v896
        %v899 = vshrl.u32 %v858, 16
        %v901 = vrot.slane %v899, 4
        %v902 = vshll.u32 %v858, 16
        %v904 = vrot.slane %v902, 5
        %v905 = vor.u32 %v901, %v904
        %v906 = vrot.slane %v905, 4
        %v908 = vshll.u32 %v859, 16
        %v910 = vrot.slane %v908, 5
        %v911 = vsel %vm559, %v906, %v910
        %v913 = vshrl.u32 %v860, 16
        %v915 = vrot.slane %v913, 4
        %v916 = vshll.u32 %v860, 16
        %v918 = vrot.slane %v916, 5
        %v919 = vor.u32 %v915, %v918
        %v920 = vrot.slane %v919, 4
        %v922 = vshll.u32 %v861, 16
        %v924 = vrot.slane %v922, 5
        %v925 = vsel %vm559, %v920, %v924
        %v927 = vshrl.u32 %v862, 16
        %v929 = vrot.slane %v927, 4
        %v930 = vshll.u32 %v862, 16
        %v932 = vrot.slane %v930, 5
        %v933 = vor.u32 %v929, %v932
        %v934 = vrot.slane %v933, 4
        %v936 = vshll.u32 %v863, 16
        %v938 = vrot.slane %v936, 5
        %v939 = vsel %vm559, %v934, %v938
        %v941 = vshrl.u32 %v864, 16
        %v943 = vrot.slane %v941, 4
        %v944 = vshll.u32 %v864, 16
        %v946 = vrot.slane %v944, 5
        %v947 = vor.u32 %v943, %v946
        %v948 = vrot.slane %v947, 4
        %v950 = vshll.u32 %v865, 16
        %v952 = vrot.slane %v950, 5
        %v953 = vsel %vm559, %v948, %v952
        %v955 = vshrl.u32 %v866, 16
        %v957 = vrot.slane %v955, 4
        %v958 = vshll.u32 %v866, 16
        %v960 = vrot.slane %v958, 5
        %v961 = vor.u32 %v957, %v960
        %v962 = vrot.slane %v961, 4
        %v964 = vshll.u32 %v867, 16
        %v966 = vrot.slane %v964, 5
        %v967 = vsel %vm559, %v962, %v966
        %v969 = vshrl.u32 %v868, 16
        %v971 = vrot.slane %v969, 4
        %v972 = vshll.u32 %v868, 16
        %v974 = vrot.slane %v972, 5
        %v975 = vor.u32 %v971, %v974
        %v976 = vrot.slane %v975, 4
        %v978 = vshll.u32 %v869, 16
        %v980 = vrot.slane %v978, 5
        %v981 = vsel %vm559, %v976, %v980
        %990 = vst.msk [vmem:[#allocation3 + $0x4] sm:$0xf] %vm278, %v883
        %991 = vst.msk [vmem:[#allocation3 + $0x10] sm:$0xf] %vm278, %v897
        %992 = vst.msk [vmem:[#allocation3 + $0x1c] sm:$0xf] %vm278, %v911
        %993 = vst.msk [vmem:[#allocation3 + $0x28] sm:$0xf] %vm278, %v925
        %994 = vst.msk [vmem:[#allocation3 + $0x34] sm:$0xf] %vm278, %v939
        %995 = vst.msk [vmem:[#allocation3 + $0x40] sm:$0xf] %vm278, %v953
        %996 = vst.msk [vmem:[#allocation3 + $0x4c] sm:$0xf] %vm278, %v967
        %997 = vst.msk [vmem:[#allocation3 + $0x58] sm:$0xf] %vm278, %v981
        %v998 = vld [vmem:[%s285] sm:$0xe]
        %v999 = vld [vmem:[%s285 + $0x4] sm:$0x1]
        %v1000 = vld [vmem:[%s285 + $0x8] sm:$0xe]
        %v1001 = vld [vmem:[%s285 + $0xc] sm:$0x1]
        %v1002 = vld [vmem:[%s285 + $0x10] sm:$0xe]
        %v1003 = vld [vmem:[%s285 + $0x14] sm:$0x1]
        %v1004 = vld [vmem:[%s285 + $0x18] sm:$0xe]
        %v1005 = vld [vmem:[%s285 + $0x1c] sm:$0x1]
        %v1006 = vld [vmem:[%s285 + $0x20] sm:$0xe]
        %v1007 = vld [vmem:[%s285 + $0x24] sm:$0x1]
        %v1008 = vld [vmem:[%s285 + $0x28] sm:$0xe]
        %v1009 = vld [vmem:[%s285 + $0x2c] sm:$0x1]
        %v1010 = vld [vmem:[%s285 + $0x30] sm:$0xe]
        %v1011 = vld [vmem:[%s285 + $0x34] sm:$0x1]
        %v1012 = vld [vmem:[%s285 + $0x38] sm:$0xe]
        %v1013 = vld [vmem:[%s285 + $0x3c] sm:$0x1]
        %v1030 = vrot.slane %v998, 5
        %v1031 = vrot.slane %v1030, 4
        %v1032 = vrot.slane %v999, 5
        %v1033 = vsel %vm739, %v1031, %v1032
        %v1034 = vrot.slane %v1000, 5
        %v1035 = vrot.slane %v1034, 4
        %v1036 = vrot.slane %v1001, 5
        %v1037 = vsel %vm739, %v1035, %v1036
        %v1038 = vrot.slane %v1002, 5
        %v1039 = vrot.slane %v1038, 4
        %v1040 = vrot.slane %v1003, 5
        %v1041 = vsel %vm739, %v1039, %v1040
        %v1042 = vrot.slane %v1004, 5
        %v1043 = vrot.slane %v1042, 4
        %v1044 = vrot.slane %v1005, 5
        %v1045 = vsel %vm739, %v1043, %v1044
        %v1046 = vrot.slane %v1006, 5
        %v1047 = vrot.slane %v1046, 4
        %v1048 = vrot.slane %v1007, 5
        %v1049 = vsel %vm739, %v1047, %v1048
        %v1050 = vrot.slane %v1008, 5
        %v1051 = vrot.slane %v1050, 4
        %v1052 = vrot.slane %v1009, 5
        %v1053 = vsel %vm739, %v1051, %v1052
        %v1054 = vrot.slane %v1010, 5
        %v1055 = vrot.slane %v1054, 4
        %v1056 = vrot.slane %v1011, 5
        %v1057 = vsel %vm739, %v1055, %v1056
        %v1058 = vrot.slane %v1012, 5
        %v1059 = vrot.slane %v1058, 4
        %v1060 = vrot.slane %v1013, 5
        %v1061 = vsel %vm739, %v1059, %v1060
        %1062 = vrot.lane.b32.xlu0 %v1033, 32
        %v1063 = vpop.permute.xlu0 %1062
        %1064 = vrot.lane.b32.xlu0 %v1037, 32
        %v1065 = vpop.permute.xlu0 %1064
        %1066 = vrot.lane.b32.xlu0 %v1041, 32
        %v1067 = vpop.permute.xlu0 %1066
        %1068 = vrot.lane.b32.xlu0 %v1045, 32
        %v1069 = vpop.permute.xlu0 %1068
        %1070 = vrot.lane.b32.xlu0 %v1049, 32
        %v1071 = vpop.permute.xlu0 %1070
        %1072 = vrot.lane.b32.xlu0 %v1053, 32
        %v1073 = vpop.permute.xlu0 %1072
        %1074 = vrot.lane.b32.xlu0 %v1057, 32
        %v1075 = vpop.permute.xlu0 %1074
        %1076 = vrot.lane.b32.xlu0 %v1061, 32
        %v1077 = vpop.permute.xlu0 %1076
        %1086 = vst.msk [vmem:[#allocation3 + $0x4] sm:$0xf] %vm696, %v1063
        %1087 = vst.msk [vmem:[#allocation3 + $0x10] sm:$0xf] %vm696, %v1065
        %1088 = vst.msk [vmem:[#allocation3 + $0x1c] sm:$0xf] %vm696, %v1067
        %1089 = vst.msk [vmem:[#allocation3 + $0x28] sm:$0xf] %vm696, %v1069
        %1090 = vst.msk [vmem:[#allocation3 + $0x34] sm:$0xf] %vm696, %v1071
        %1091 = vst.msk [vmem:[#allocation3 + $0x40] sm:$0xf] %vm696, %v1073
        %1092 = vst.msk [vmem:[#allocation3 + $0x4c] sm:$0xf] %vm696, %v1075
        %1093 = vst.msk [vmem:[#allocation3 + $0x58] sm:$0xf] %vm696, %v1077
        %s1094 = scalar_lea.vmem [#allocation2], 16
        %v1095 = vld [vmem:[%s1094] sm:$0xf]
        %v1096 = vld [vmem:[%s1094 + $0x8] sm:$0xf]
        %v1097 = vld [vmem:[%s1094 + $0x10] sm:$0xf]
        %v1098 = vld [vmem:[%s1094 + $0x18] sm:$0xf]
        %v1099 = vld [vmem:[%s1094 + $0x20] sm:$0xf]
        %v1100 = vld [vmem:[%s1094 + $0x28] sm:$0xf]
        %v1101 = vld [vmem:[%s1094 + $0x30] sm:$0xf]
        %v1102 = vld [vmem:[%s1094 + $0x38] sm:$0xf]
        %1111 = vrot.lane.b32.xlu0 %v1095, 64
        %v1112 = vpop.permute.xlu0 %1111
        %1113 = vrot.lane.b32.xlu0 %v1096, 64
        %v1114 = vpop.permute.xlu0 %1113
        %1115 = vrot.lane.b32.xlu0 %v1097, 64
        %v1116 = vpop.permute.xlu0 %1115
        %1117 = vrot.lane.b32.xlu0 %v1098, 64
        %v1118 = vpop.permute.xlu0 %1117
        %1119 = vrot.lane.b32.xlu0 %v1099, 64
        %v1120 = vpop.permute.xlu0 %1119
        %1121 = vrot.lane.b32.xlu0 %v1100, 64
        %v1122 = vpop.permute.xlu0 %1121
        %1123 = vrot.lane.b32.xlu0 %v1101, 64
        %v1124 = vpop.permute.xlu0 %1123
        %1125 = vrot.lane.b32.xlu0 %v1102, 64
        %v1126 = vpop.permute.xlu0 %1125
        %1135 = vst.msk [vmem:[#allocation3 + $0x4] sm:$0xf] %vm796, %v1112
        %1136 = vst.msk [vmem:[#allocation3 + $0x10] sm:$0xf] %vm796, %v1114
        %1137 = vst.msk [vmem:[#allocation3 + $0x1c] sm:$0xf] %vm796, %v1116
        %1138 = vst.msk [vmem:[#allocation3 + $0x28] sm:$0xf] %vm796, %v1118
        %1139 = vst.msk [vmem:[#allocation3 + $0x34] sm:$0xf] %vm796, %v1120
        %1140 = vst.msk [vmem:[#allocation3 + $0x40] sm:$0xf] %vm796, %v1122
        %1141 = vst.msk [vmem:[#allocation3 + $0x4c] sm:$0xf] %vm796, %v1124
        %1142 = vst.msk [vmem:[#allocation3 + $0x58] sm:$0xf] %vm796, %v1126
        %v1143 = vld [vmem:[%s1094] sm:$0xf]
        %v1144 = vld [vmem:[%s1094 + $0x4] sm:$0x1]
        %v1145 = vld [vmem:[%s1094 + $0x8] sm:$0xf]
        %v1146 = vld [vmem:[%s1094 + $0xc] sm:$0x1]
        %v1147 = vld [vmem:[%s1094 + $0x10] sm:$0xf]
        %v1148 = vld [vmem:[%s1094 + $0x14] sm:$0x1]
        %v1149 = vld [vmem:[%s1094 + $0x18] sm:$0xf]
        %v1150 = vld [vmem:[%s1094 + $0x1c] sm:$0x1]
        %v1151 = vld [vmem:[%s1094 + $0x20] sm:$0xf]
        %v1152 = vld [vmem:[%s1094 + $0x24] sm:$0x1]
        %v1153 = vld [vmem:[%s1094 + $0x28] sm:$0xf]
        %v1154 = vld [vmem:[%s1094 + $0x2c] sm:$0x1]
        %v1155 = vld [vmem:[%s1094 + $0x30] sm:$0xf]
        %v1156 = vld [vmem:[%s1094 + $0x34] sm:$0x1]
        %v1157 = vld [vmem:[%s1094 + $0x38] sm:$0xf]
        %v1158 = vld [vmem:[%s1094 + $0x3c] sm:$0x1]
        %v1160 = vshrl.u32 %v1143, 16
        %v1162 = vrot.slane %v1160, 4
        %v1163 = vshll.u32 %v1143, 16
        %v1165 = vrot.slane %v1163, 5
        %v1166 = vor.u32 %v1162, %v1165
        %v1167 = vrot.slane %v1166, 4
        %v1169 = vshll.u32 %v1144, 16
        %v1171 = vrot.slane %v1169, 5
        %v1172 = vsel %vm559, %v1167, %v1171
        %v1174 = vshrl.u32 %v1145, 16
        %v1176 = vrot.slane %v1174, 4
        %v1177 = vshll.u32 %v1145, 16
        %v1179 = vrot.slane %v1177, 5
        %v1180 = vor.u32 %v1176, %v1179
        %v1181 = vrot.slane %v1180, 4
        %v1183 = vshll.u32 %v1146, 16
        %v1185 = vrot.slane %v1183, 5
        %v1186 = vsel %vm559, %v1181, %v1185
        %v1188 = vshrl.u32 %v1147, 16
        %v1190 = vrot.slane %v1188, 4
        %v1191 = vshll.u32 %v1147, 16
        %v1193 = vrot.slane %v1191, 5
        %v1194 = vor.u32 %v1190, %v1193
        %v1195 = vrot.slane %v1194, 4
        %v1197 = vshll.u32 %v1148, 16
        %v1199 = vrot.slane %v1197, 5
        %v1200 = vsel %vm559, %v1195, %v1199
        %v1202 = vshrl.u32 %v1149, 16
        %v1204 = vrot.slane %v1202, 4
        %v1205 = vshll.u32 %v1149, 16
        %v1207 = vrot.slane %v1205, 5
        %v1208 = vor.u32 %v1204, %v1207
        %v1209 = vrot.slane %v1208, 4
        %v1211 = vshll.u32 %v1150, 16
        %v1213 = vrot.slane %v1211, 5
        %v1214 = vsel %vm559, %v1209, %v1213
        %v1216 = vshrl.u32 %v1151, 16
        %v1218 = vrot.slane %v1216, 4
        %v1219 = vshll.u32 %v1151, 16
        %v1221 = vrot.slane %v1219, 5
        %v1222 = vor.u32 %v1218, %v1221
        %v1223 = vrot.slane %v1222, 4
        %v1225 = vshll.u32 %v1152, 16
        %v1227 = vrot.slane %v1225, 5
        %v1228 = vsel %vm559, %v1223, %v1227
        %v1230 = vshrl.u32 %v1153, 16
        %v1232 = vrot.slane %v1230, 4
        %v1233 = vshll.u32 %v1153, 16
        %v1235 = vrot.slane %v1233, 5
        %v1236 = vor.u32 %v1232, %v1235
        %v1237 = vrot.slane %v1236, 4
        %v1239 = vshll.u32 %v1154, 16
        %v1241 = vrot.slane %v1239, 5
        %v1242 = vsel %vm559, %v1237, %v1241
        %v1244 = vshrl.u32 %v1155, 16
        %v1246 = vrot.slane %v1244, 4
        %v1247 = vshll.u32 %v1155, 16
        %v1249 = vrot.slane %v1247, 5
        %v1250 = vor.u32 %v1246, %v1249
        %v1251 = vrot.slane %v1250, 4
        %v1253 = vshll.u32 %v1156, 16
        %v1255 = vrot.slane %v1253, 5
        %v1256 = vsel %vm559, %v1251, %v1255
        %v1258 = vshrl.u32 %v1157, 16
        %v1260 = vrot.slane %v1258, 4
        %v1261 = vshll.u32 %v1157, 16
        %v1263 = vrot.slane %v1261, 5
        %v1264 = vor.u32 %v1260, %v1263
        %v1265 = vrot.slane %v1264, 4
        %v1267 = vshll.u32 %v1158, 16
        %v1269 = vrot.slane %v1267, 5
        %v1270 = vsel %vm559, %v1265, %v1269
        %1271 = vrot.lane.b32.xlu0 %v1172, 96
        %v1272 = vpop.permute.xlu0 %1271
        %1273 = vrot.lane.b32.xlu0 %v1186, 96
        %v1274 = vpop.permute.xlu0 %1273
        %1275 = vrot.lane.b32.xlu0 %v1200, 96
        %v1276 = vpop.permute.xlu0 %1275
        %1277 = vrot.lane.b32.xlu0 %v1214, 96
        %v1278 = vpop.permute.xlu0 %1277
        %1279 = vrot.lane.b32.xlu0 %v1228, 96
        %v1280 = vpop.permute.xlu0 %1279
        %1281 = vrot.lane.b32.xlu0 %v1242, 96
        %v1282 = vpop.permute.xlu0 %1281
        %1283 = vrot.lane.b32.xlu0 %v1256, 96
        %v1284 = vpop.permute.xlu0 %1283
        %1285 = vrot.lane.b32.xlu0 %v1270, 96
        %v1286 = vpop.permute.xlu0 %1285
        %1295 = vst.msk [vmem:[#allocation3 + $0x4] sm:$0xf] %vm845, %v1272
        %1296 = vst.msk [vmem:[#allocation3 + $0x10] sm:$0xf] %vm845, %v1274
        %1297 = vst.msk [vmem:[#allocation3 + $0x1c] sm:$0xf] %vm845, %v1276
        %1298 = vst.msk [vmem:[#allocation3 + $0x28] sm:$0xf] %vm845, %v1278
        %1299 = vst.msk [vmem:[#allocation3 + $0x34] sm:$0xf] %vm845, %v1280
        %1300 = vst.msk [vmem:[#allocation3 + $0x40] sm:$0xf] %vm845, %v1282
        %1301 = vst.msk [vmem:[#allocation3 + $0x4c] sm:$0xf] %vm845, %v1284
        %1302 = vst.msk [vmem:[#allocation3 + $0x58] sm:$0xf] %vm845, %v1286
        %v1303 = vld [vmem:[%s1094] sm:$0xe]
        %v1304 = vld [vmem:[%s1094 + $0x4] sm:$0x1]
        %v1305 = vld [vmem:[%s1094 + $0x8] sm:$0xe]
        %v1306 = vld [vmem:[%s1094 + $0xc] sm:$0x1]
        %v1307 = vld [vmem:[%s1094 + $0x10] sm:$0xe]
        %v1308 = vld [vmem:[%s1094 + $0x14] sm:$0x1]
        %v1309 = vld [vmem:[%s1094 + $0x18] sm:$0xe]
        %v1310 = vld [vmem:[%s1094 + $0x1c] sm:$0x1]
        %v1311 = vld [vmem:[%s1094 + $0x20] sm:$0xe]
        %v1312 = vld [vmem:[%s1094 + $0x24] sm:$0x1]
        %v1313 = vld [vmem:[%s1094 + $0x28] sm:$0xe]
        %v1314 = vld [vmem:[%s1094 + $0x2c] sm:$0x1]
        %v1315 = vld [vmem:[%s1094 + $0x30] sm:$0xe]
        %v1316 = vld [vmem:[%s1094 + $0x34] sm:$0x1]
        %v1317 = vld [vmem:[%s1094 + $0x38] sm:$0xe]
        %v1318 = vld [vmem:[%s1094 + $0x3c] sm:$0x1]
        %v1335 = vrot.slane %v1303, 5
        %v1336 = vrot.slane %v1335, 4
        %v1337 = vrot.slane %v1304, 5
        %v1338 = vsel %vm739, %v1336, %v1337
        %v1339 = vrot.slane %v1305, 5
        %v1340 = vrot.slane %v1339, 4
        %v1341 = vrot.slane %v1306, 5
        %v1342 = vsel %vm739, %v1340, %v1341
        %v1343 = vrot.slane %v1307, 5
        %v1344 = vrot.slane %v1343, 4
        %v1345 = vrot.slane %v1308, 5
        %v1346 = vsel %vm739, %v1344, %v1345
        %v1347 = vrot.slane %v1309, 5
        %v1348 = vrot.slane %v1347, 4
        %v1349 = vrot.slane %v1310, 5
        %v1350 = vsel %vm739, %v1348, %v1349
        %v1351 = vrot.slane %v1311, 5
        %v1352 = vrot.slane %v1351, 4
        %v1353 = vrot.slane %v1312, 5
        %v1354 = vsel %vm739, %v1352, %v1353
        %v1355 = vrot.slane %v1313, 5
        %v1356 = vrot.slane %v1355, 4
        %v1357 = vrot.slane %v1314, 5
        %v1358 = vsel %vm739, %v1356, %v1357
        %v1359 = vrot.slane %v1315, 5
        %v1360 = vrot.slane %v1359, 4
        %v1361 = vrot.slane %v1316, 5
        %v1362 = vsel %vm739, %v1360, %v1361
        %v1363 = vrot.slane %v1317, 5
        %v1364 = vrot.slane %v1363, 4
        %v1365 = vrot.slane %v1318, 5
        %v1366 = vsel %vm739, %v1364, %v1365
        %1375 = vst.msk [vmem:[#allocation3 + $0x8] sm:$0xf] %vm278, %v1338
        %1376 = vst.msk [vmem:[#allocation3 + $0x14] sm:$0xf] %vm278, %v1342
        %1377 = vst.msk [vmem:[#allocation3 + $0x20] sm:$0xf] %vm278, %v1346
        %1378 = vst.msk [vmem:[#allocation3 + $0x2c] sm:$0xf] %vm278, %v1350
        %1379 = vst.msk [vmem:[#allocation3 + $0x38] sm:$0xf] %vm278, %v1354
        %1380 = vst.msk [vmem:[#allocation3 + $0x44] sm:$0xf] %vm278, %v1358
        %1381 = vst.msk [vmem:[#allocation3 + $0x50] sm:$0xf] %vm278, %v1362
        %1382 = vst.msk [vmem:[#allocation3 + $0x5c] sm:$0xf] %vm278, %v1366
        %v1383 = vld [vmem:[#allocation3] sm:$0xff]
        %v1384 = vld [vmem:[#allocation3 + $0x8] sm:$0xf]
        %v1385 = vld [vmem:[#allocation3 + $0xc] sm:$0xff]
        %v1386 = vld [vmem:[#allocation3 + $0x14] sm:$0xf]
        %v1387 = vld [vmem:[#allocation3 + $0x18] sm:$0xff]
        %v1388 = vld [vmem:[#allocation3 + $0x20] sm:$0xf]
        %v1389 = vld [vmem:[#allocation3 + $0x24] sm:$0xff]
        %v1390 = vld [vmem:[#allocation3 + $0x2c] sm:$0xf]
        %v1391 = vld [vmem:[#allocation3 + $0x30] sm:$0xff]
        %v1392 = vld [vmem:[#allocation3 + $0x38] sm:$0xf]
        %v1393 = vld [vmem:[#allocation3 + $0x3c] sm:$0xff]
        %v1394 = vld [vmem:[#allocation3 + $0x44] sm:$0xf]
        %v1395 = vld [vmem:[#allocation3 + $0x48] sm:$0xff]
        %v1396 = vld [vmem:[#allocation3 + $0x50] sm:$0xf]
        %v1397 = vld [vmem:[#allocation3 + $0x54] sm:$0xff]
        %v1398 = vld [vmem:[#allocation3 + $0x5c] sm:$0xf]
        %v1399 = vld [vmem:[%s3] sm:$0xf]
        %v1400 = vld [vmem:[%s3 + $0x4] sm:$0xf]
        %v1401 = vld [vmem:[%s3 + $0x8] sm:$0xf]
        %v1402 = vld [vmem:[%s3 + $0xc] sm:$0xf]
        %v1403 = vld [vmem:[%s3 + $0x10] sm:$0xf]
        %v1404 = vld [vmem:[%s3 + $0x14] sm:$0xf]
        %v1405 = vld [vmem:[%s3 + $0x18] sm:$0xf]
        %v1406 = vld [vmem:[%s3 + $0x1c] sm:$0xf]
        %v1407 = vld [vmem:[%s3 + $0x20] sm:$0xf]
        %v1408 = vld [vmem:[%s3 + $0x24] sm:$0xf]
        %v1409 = vld [vmem:[%s3 + $0x28] sm:$0xf]
        %v1410 = vld [vmem:[%s3 + $0x2c] sm:$0xf]
        %v1411 = vld [vmem:[%s3 + $0x30] sm:$0xf]
        %v1412 = vld [vmem:[%s3 + $0x34] sm:$0xf]
        %v1413 = vld [vmem:[%s3 + $0x38] sm:$0xf]
        %v1414 = vld [vmem:[%s3 + $0x3c] sm:$0xf]
        %v1415 = vld [vmem:[%s3 + $0x40] sm:$0xf]
        %v1416 = vld [vmem:[%s3 + $0x44] sm:$0xf]
        %v1417 = vld [vmem:[%s3 + $0x48] sm:$0xf]
        %v1418 = vld [vmem:[%s3 + $0x4c] sm:$0xf]
        %v1419 = vld [vmem:[%s3 + $0x50] sm:$0xf]
        %v1420 = vld [vmem:[%s3 + $0x54] sm:$0xf]
        %v1421 = vld [vmem:[%s3 + $0x58] sm:$0xf]
        %v1422 = vld [vmem:[%s3 + $0x5c] sm:$0xf]
        %v1423 = vld [vmem:[%s3 + $0x60] sm:$0xf]
        %v1424 = vld [vmem:[%s3 + $0x64] sm:$0xf]
        %v1425 = vld [vmem:[%s3 + $0x68] sm:$0xf]
        %v1426 = vld [vmem:[%s3 + $0x6c] sm:$0xf]
        %v1427 = vld [vmem:[%s3 + $0x70] sm:$0xf]
        %v1428 = vld [vmem:[%s3 + $0x74] sm:$0xf]
        %v1429 = vld [vmem:[%s3 + $0x78] sm:$0xf]
        %v1430 = vld [vmem:[%s3 + $0x7c] sm:$0xf]
        %v1431 = vld [vmem:[%s3 + $0x80] sm:$0xf]
        %v1432 = vld [vmem:[%s3 + $0x84] sm:$0xf]
        %v1433 = vld [vmem:[%s3 + $0x88] sm:$0xf]
        %v1434 = vld [vmem:[%s3 + $0x8c] sm:$0xf]
        %v1435 = vld [vmem:[%s4] sm:$0x1]
        %v1437 = vlaneseq
        %v1438 = vshrl.u32 %v1437, 7
        %v1439 = vsub.s32 0, %v1438
        %v1440 = vrot.slane %v1435, %v1439
        %v1458 = vunpack.c.l.b16 %v1383
        %v1459 = vunpack.c.h.b16 %v1383
        %v1460 = vunpack.c.l.b16 %v1384
        %v1461 = vunpack.c.l.b16 %v1385
        %v1462 = vunpack.c.h.b16 %v1385
        %v1463 = vunpack.c.l.b16 %v1386
        %v1464 = vunpack.c.l.b16 %v1387
        %v1465 = vunpack.c.h.b16 %v1387
        %v1466 = vunpack.c.l.b16 %v1388
        %v1467 = vunpack.c.l.b16 %v1389
        %v1468 = vunpack.c.h.b16 %v1389
        %v1469 = vunpack.c.l.b16 %v1390
        %v1470 = vunpack.c.l.b16 %v1391
        %v1471 = vunpack.c.h.b16 %v1391
        %v1472 = vunpack.c.l.b16 %v1392
        %v1473 = vunpack.c.l.b16 %v1393
        %v1474 = vunpack.c.h.b16 %v1393
        %v1475 = vunpack.c.l.b16 %v1394
        %v1476 = vunpack.c.l.b16 %v1395
        %v1477 = vunpack.c.h.b16 %v1395
        %v1478 = vunpack.c.l.b16 %v1396
        %v1479 = vunpack.c.l.b16 %v1397
        %v1480 = vunpack.c.h.b16 %v1397
        %v1481 = vunpack.c.l.b16 %v1398
        %v1482 = vpack.c.b16 %v1461, %v1458
        %v1483 = vpack.c.b16 %v1462, %v1459
        %v1484 = vpack.c.b16 %v1463, %v1460
        %v1485 = vpack.c.b16 %v1467, %v1464
        %v1486 = vpack.c.b16 %v1468, %v1465
        %v1487 = vpack.c.b16 %v1469, %v1466
        %v1488 = vpack.c.b16 %v1473, %v1470
        %v1489 = vpack.c.b16 %v1474, %v1471
        %v1490 = vpack.c.b16 %v1475, %v1472
        %v1491 = vpack.c.b16 %v1479, %v1476
        %v1492 = vpack.c.b16 %v1480, %v1477
        %v1493 = vpack.c.b16 %v1481, %v1478
        %v1538 = vunpack.c.l.b16 %v1399
        %v1539 = vunpack.c.l.b16 %v1400
        %v1540 = vunpack.c.l.b16 %v1401
        %v1541 = vunpack.c.l.b16 %v1402
        %v1542 = vunpack.c.l.b16 %v1403
        %v1543 = vunpack.c.l.b16 %v1404
        %v1544 = vunpack.c.l.b16 %v1405
        %v1545 = vunpack.c.l.b16 %v1406
        %v1546 = vunpack.c.l.b16 %v1407
        %v1547 = vunpack.c.l.b16 %v1408
        %v1548 = vunpack.c.l.b16 %v1409
        %v1549 = vunpack.c.l.b16 %v1410
        %v1550 = vunpack.c.l.b16 %v1411
        %v1551 = vunpack.c.l.b16 %v1412
        %v1552 = vunpack.c.l.b16 %v1413
        %v1553 = vunpack.c.l.b16 %v1414
        %v1554 = vunpack.c.l.b16 %v1415
        %v1555 = vunpack.c.l.b16 %v1416
        %v1556 = vunpack.c.l.b16 %v1417
        %v1557 = vunpack.c.l.b16 %v1418
        %v1558 = vunpack.c.l.b16 %v1419
        %v1559 = vunpack.c.l.b16 %v1420
        %v1560 = vunpack.c.l.b16 %v1421
        %v1561 = vunpack.c.l.b16 %v1422
        %v1562 = vunpack.c.l.b16 %v1423
        %v1563 = vunpack.c.l.b16 %v1424
        %v1564 = vunpack.c.l.b16 %v1425
        %v1565 = vunpack.c.l.b16 %v1426
        %v1566 = vunpack.c.l.b16 %v1427
        %v1567 = vunpack.c.l.b16 %v1428
        %v1568 = vunpack.c.l.b16 %v1429
        %v1569 = vunpack.c.l.b16 %v1430
        %v1570 = vunpack.c.l.b16 %v1431
        %v1571 = vunpack.c.l.b16 %v1432
        %v1572 = vunpack.c.l.b16 %v1433
        %v1573 = vunpack.c.l.b16 %v1434
        %v1574 = vpack.c.b16 %v1539, %v1538
        %v1575 = vpack.c.b16 %v1541, %v1540
        %v1576 = vpack.c.b16 %v1543, %v1542
        %v1577 = vpack.c.b16 %v1545, %v1544
        %v1578 = vpack.c.b16 %v1547, %v1546
        %v1579 = vpack.c.b16 %v1549, %v1548
        %v1580 = vpack.c.b16 %v1551, %v1550
        %v1581 = vpack.c.b16 %v1553, %v1552
        %v1582 = vpack.c.b16 %v1555, %v1554
        %v1583 = vpack.c.b16 %v1557, %v1556
        %v1584 = vpack.c.b16 %v1559, %v1558
        %v1585 = vpack.c.b16 %v1561, %v1560
        %v1586 = vpack.c.b16 %v1563, %v1562
        %v1587 = vpack.c.b16 %v1565, %v1564
        %v1588 = vpack.c.b16 %v1567, %v1566
        %v1589 = vpack.c.b16 %v1569, %v1568
        %v1590 = vpack.c.b16 %v1571, %v1570
        %v1591 = vpack.c.b16 %v1573, %v1572
        %v1611 = vsel %vm269, %v1484, 0
        %v1614 = vsel %vm269, %v1487, 0
        %v1617 = vsel %vm269, %v1490, 0
        %v1620 = vsel %vm269, %v1493, 0
        %1622 = vmatprep.subr.bf16.mxu0 0
        %1623 = vmatpush1.bf16.msra.mxu0 %v1574
        %1624 = vmatprep.subr.bf16.mxu0 0
        %1625 = vmatpush1.bf16.msra.mxu0 %v1575
        %1626 = vmatprep.subr.bf16.mxu0 0
        %1627 = vmatpush1.bf16.msra.mxu0 %v1576
        %1628 = vmatprep.subr.bf16.mxu0 0
        %1629 = vmatpush1.bf16.msra.mxu0 %v1577
        %1630 = vmatprep.subr.bf16.mxu0 0
        %1631 = vmatpush1.bf16.msra.mxu0 %v1578
        %1632 = vmatprep.subr.bf16.mxu0 0
        %1633 = vmatpush1.bf16.msra.mxu0 %v1579
        %1634 = vmatprep.subr.bf16.mxu0 0
        %1635 = vmatpush1.bf16.msra.mxu0 %v1580
        %1636 = vmatprep.subr.bf16.mxu0 0
        %1637 = vmatpush1.bf16.msra.mxu0 %v1581
        %1638 = vmatprep.subr.bf16.mxu0 0
        %1639 = vmatpush1.bf16.msra.mxu0 %v1582
        %1640 = vmatprep.subr.bf16.mxu0 0
        %1641 = vmatpush1.bf16.msra.mxu0 %v1583
        %1642 = vmatprep.subr.bf16.mxu0 0
        %1643 = vmatpush1.bf16.msra.mxu0 %v1584
        %1644 = vmatprep.subr.bf16.mxu0 0
        %1645 = vmatpush1.bf16.msra.mxu0 %v1585
        %1646 = vmatprep.subr.bf16.mxu0 0
        %1647 = vmatpush1.bf16.msra.mxu0 %v1586
        %1648 = vmatprep.subr.bf16.mxu0 0
        %1649 = vmatpush1.bf16.msra.mxu0 %v1587
        %1650 = vmatprep.subr.bf16.mxu0 0
        %1651 = vmatpush1.bf16.msra.mxu0 %v1588
        %1652 = vmatprep.subr.bf16.mxu0 0
        %1653 = vmatpush1.bf16.msra.mxu0 %v1589
        %1654 = vmatprep.mubr.bf16.mxu0 %v1483
        %1655 = vmatmul.mubr.bf16.gmra.mrb[0].mxu0 %v1482
        %v1656 = vpop.f32.mrb[0].mxu0
        %v1657 = vadd.f32 %v1440, %v1656
        %v1658 = vpop.f32.mrb[0].mxu0
        %v1659 = vpop.f32.mrb[0].mxu0
        %v1660 = vadd.f32 %v1440, %v1659
        %v1661 = vpop.f32.mrb[0].mxu0
        %1662 = vmatprep.mubr.bf16.mxu0 %v1486
        %1663 = vmatmul.mubr.bf16.gmra.mrb[0].mxu0 %v1485
        %v1664 = vpop.f32.mrb[0].mxu0
        %v1665 = vadd.f32 %v1440, %v1664
        %v1666 = vpop.f32.mrb[0].mxu0
        %v1667 = vpop.f32.mrb[0].mxu0
        %v1668 = vadd.f32 %v1440, %v1667
        %v1669 = vpop.f32.mrb[0].mxu0
        %1670 = vmatprep.mubr.bf16.mxu0 %v1489
        %1671 = vmatmul.mubr.bf16.gmra.mrb[0].mxu0 %v1488
        %v1672 = vpop.f32.mrb[0].mxu0
        %v1673 = vadd.f32 %v1440, %v1672
        %v1674 = vpop.f32.mrb[0].mxu0
        %v1675 = vpop.f32.mrb[0].mxu0
        %v1676 = vadd.f32 %v1440, %v1675
        %v1677 = vpop.f32.mrb[0].mxu0
        %1678 = vmatprep.mubr.bf16.mxu0 %v1492
        %1679 = vmatmul.mubr.bf16.gmra.mrb[0].mxu0 %v1491
        %v1680 = vpop.f32.mrb[0].mxu0
        %v1681 = vadd.f32 %v1440, %v1680
        %v1682 = vpop.f32.mrb[0].mxu0
        %v1683 = vpop.f32.mrb[0].mxu0
        %v1684 = vadd.f32 %v1440, %v1683
        %v1685 = vpop.f32.mrb[0].mxu0
        %1686 = vdwg.mxu0
        %1687 = vmatprep.subr.bf16.mxu0 0
        %1688 = vmatpush1.bf16.msra.mxu0 %v1590
        %1689 = vmatprep.subr.bf16.mxu0 0
        %1690 = vmatpush1.bf16.msra.mxu0 %v1591
        %1691 = vmatprep.subr.bf16.mxu0 0
        %1692 = vmatpush1.bf16.msra.mxu0 0
        %1693 = vmatprep.subr.bf16.mxu0 0
        %1694 = vmatpush1.bf16.msra.mxu0 0
        %1695 = vmatprep.subr.bf16.mxu0 0
        %1696 = vmatpush1.bf16.msra.mxu0 0
        %1697 = vmatprep.subr.bf16.mxu0 0
        %1698 = vmatpush1.bf16.msra.mxu0 0
        %1699 = vmatprep.subr.bf16.mxu0 0
        %1700 = vmatpush1.bf16.msra.mxu0 0
        %1701 = vmatprep.subr.bf16.mxu0 0
        %1702 = vmatpush1.bf16.msra.mxu0 0
        %1703 = vmatprep.subr.bf16.mxu0 0
        %1704 = vmatpush1.bf16.msra.mxu0 0
        %1705 = vmatprep.subr.bf16.mxu0 0
        %1706 = vmatpush1.bf16.msra.mxu0 0
        %1707 = vmatprep.subr.bf16.mxu0 0
        %1708 = vmatpush1.bf16.msra.mxu0 0
        %1709 = vmatprep.subr.bf16.mxu0 0
        %1710 = vmatpush1.bf16.msra.mxu0 0
        %1711 = vmatprep.subr.bf16.mxu0 0
        %1712 = vmatpush1.bf16.msra.mxu0 0
        %1713 = vmatprep.subr.bf16.mxu0 0
        %1714 = vmatpush1.bf16.msra.mxu0 0
        %1715 = vmatprep.subr.bf16.mxu0 0
        %1716 = vmatpush1.bf16.msra.mxu0 0
        %1717 = vmatprep.subr.bf16.mxu0 0
        %1718 = vmatpush1.bf16.msra.mxu0 0
        %1719 = vmatprep.mubr.bf16.mxu0 0
        %1720 = vmatmul.mubr.bf16.gmra.mrb[0].mxu0 %v1611
        %v1721 = vpop.f32.mrb[0].mxu0
        %v1722 = vadd.f32 %v1657, %v1721
        %v1723 = vpop.f32.mrb[0].mxu0
        %v1724 = vpop.f32.mrb[0].mxu0
        %v1725 = vadd.f32 %v1660, %v1724
        %v1726 = vpop.f32.mrb[0].mxu0
        %1727 = vmatprep.mubr.bf16.mxu0 0
        %1728 = vmatmul.mubr.bf16.gmra.mrb[0].mxu0 %v1614
        %v1729 = vpop.f32.mrb[0].mxu0
        %v1730 = vadd.f32 %v1665, %v1729
        %v1731 = vpop.f32.mrb[0].mxu0
        %v1732 = vpop.f32.mrb[0].mxu0
        %v1733 = vadd.f32 %v1668, %v1732
        %v1734 = vpop.f32.mrb[0].mxu0
        %1735 = vmatprep.mubr.bf16.mxu0 0
        %1736 = vmatmul.mubr.bf16.gmra.mrb[0].mxu0 %v1617
        %v1737 = vpop.f32.mrb[0].mxu0
        %v1738 = vadd.f32 %v1673, %v1737
        %v1739 = vpop.f32.mrb[0].mxu0
        %v1740 = vpop.f32.mrb[0].mxu0
        %v1741 = vadd.f32 %v1676, %v1740
        %v1742 = vpop.f32.mrb[0].mxu0
        %1743 = vmatprep.mubr.bf16.mxu0 0
        %1744 = vmatmul.mubr.bf16.gmra.mrb[0].mxu0 %v1620
        %v1745 = vpop.f32.mrb[0].mxu0
        %v1746 = vadd.f32 %v1681, %v1745
        %v1747 = vpop.f32.mrb[0].mxu0
        %v1748 = vpop.f32.mrb[0].mxu0
        %v1749 = vadd.f32 %v1684, %v1748
        %v1750 = vpop.f32.mrb[0].mxu0
        %1751 = vdwg.mxu0
        %v1752 = vmax.f32 %v1722, 0.0
        %v1753 = vmax.f32 %v1725, 0.0
        %v1754 = vmax.f32 %v1730, 0.0
        %v1755 = vmax.f32 %v1733, 0.0
        %v1756 = vmax.f32 %v1738, 0.0
        %v1757 = vmax.f32 %v1741, 0.0
        %v1758 = vmax.f32 %v1746, 0.0
        %v1759 = vmax.f32 %v1749, 0.0
        %v1760 = vpack.c.bf16 %v1752, %v1752
        %v1761 = vpack.c.bf16 %v1753, %v1753
        %v1762 = vpack.c.bf16 %v1754, %v1754
        %v1763 = vpack.c.bf16 %v1755, %v1755
        %v1764 = vpack.c.bf16 %v1756, %v1756
        %v1765 = vpack.c.bf16 %v1757, %v1757
        %v1766 = vpack.c.bf16 %v1758, %v1758
        %v1767 = vpack.c.bf16 %v1759, %v1759
        %v1776 = vunpack.c.l.b16 %v1760
        %v1777 = vunpack.c.l.b16 %v1761
        %v1778 = vunpack.c.l.b16 %v1762
        %v1779 = vunpack.c.l.b16 %v1763
        %v1780 = vunpack.c.l.b16 %v1764
        %v1781 = vunpack.c.l.b16 %v1765
        %v1782 = vunpack.c.l.b16 %v1766
        %v1783 = vunpack.c.l.b16 %v1767
        %v1784 = vpack.c.b16 %v1776, %v1776
        %v1785 = vpack.c.b16 %v1777, %v1777
        %v1786 = vpack.c.b16 %v1778, %v1778
        %v1787 = vpack.c.b16 %v1779, %v1779
        %v1788 = vpack.c.b16 %v1780, %v1780
        %v1789 = vpack.c.b16 %v1781, %v1781
        %v1790 = vpack.c.b16 %v1782, %v1782
        %v1791 = vpack.c.b16 %v1783, %v1783
        %v1793 = vshrl.u32 %v1784, 16
        %v1795 = vrot.slane %v1793, 7
        %v1796 = vshll.u32 %v1784, 16
        %v1798 = vor.u32 %v1795, %v1796
        %v1799 = vrot.slane %v1795, 4
        %v1801 = vshrl.u32 %v1785, 16
        %v1803 = vrot.slane %v1801, 7
        %v1804 = vshll.u32 %v1785, 16
        %v1806 = vor.u32 %v1803, %v1804
        %v1807 = vrot.slane %v1803, 4
        %v1809 = vshrl.u32 %v1786, 16
        %v1811 = vrot.slane %v1809, 7
        %v1812 = vshll.u32 %v1786, 16
        %v1814 = vor.u32 %v1811, %v1812
        %v1815 = vrot.slane %v1811, 4
        %v1817 = vshrl.u32 %v1787, 16
        %v1819 = vrot.slane %v1817, 7
        %v1820 = vshll.u32 %v1787, 16
        %v1822 = vor.u32 %v1819, %v1820
        %v1823 = vrot.slane %v1819, 4
        %v1825 = vshrl.u32 %v1788, 16
        %v1827 = vrot.slane %v1825, 7
        %v1828 = vshll.u32 %v1788, 16
        %v1830 = vor.u32 %v1827, %v1828
        %v1831 = vrot.slane %v1827, 4
        %v1833 = vshrl.u32 %v1789, 16
        %v1835 = vrot.slane %v1833, 7
        %v1836 = vshll.u32 %v1789, 16
        %v1838 = vor.u32 %v1835, %v1836
        %v1839 = vrot.slane %v1835, 4
        %v1841 = vshrl.u32 %v1790, 16
        %v1843 = vrot.slane %v1841, 7
        %v1844 = vshll.u32 %v1790, 16
        %v1846 = vor.u32 %v1843, %v1844
        %v1847 = vrot.slane %v1843, 4
        %v1849 = vshrl.u32 %v1791, 16
        %v1851 = vrot.slane %v1849, 7
        %v1852 = vshll.u32 %v1791, 16
        %v1854 = vor.u32 %v1851, %v1852
        %v1855 = vrot.slane %v1851, 4
        %v1872 = vld [vmem:[%s285] sm:$0xf]
        %v1873 = vsel %vm476, %v1798, %v1872
        %1874 = vst [vmem:[%s285] sm:$0xf] %v1873
        %v1875 = vld [vmem:[%s285 + $0x4] sm:$0x1]
        %v1876 = vsel %vm288, %v1799, %v1875
        %1877 = vst [vmem:[%s285 + $0x4] sm:$0x1] %v1876
        %v1878 = vld [vmem:[%s285 + $0x8] sm:$0xf]
        %v1879 = vsel %vm476, %v1806, %v1878
        %1880 = vst [vmem:[%s285 + $0x8] sm:$0xf] %v1879
        %v1881 = vld [vmem:[%s285 + $0xc] sm:$0x1]
        %v1882 = vsel %vm288, %v1807, %v1881
        %1883 = vst [vmem:[%s285 + $0xc] sm:$0x1] %v1882
        %v1884 = vld [vmem:[%s285 + $0x10] sm:$0xf]
        %v1885 = vsel %vm476, %v1814, %v1884
        %1886 = vst [vmem:[%s285 + $0x10] sm:$0xf] %v1885
        %v1887 = vld [vmem:[%s285 + $0x14] sm:$0x1]
        %v1888 = vsel %vm288, %v1815, %v1887
        %1889 = vst [vmem:[%s285 + $0x14] sm:$0x1] %v1888
        %v1890 = vld [vmem:[%s285 + $0x18] sm:$0xf]
        %v1891 = vsel %vm476, %v1822, %v1890
        %1892 = vst [vmem:[%s285 + $0x18] sm:$0xf] %v1891
        %v1893 = vld [vmem:[%s285 + $0x1c] sm:$0x1]
        %v1894 = vsel %vm288, %v1823, %v1893
        %1895 = vst [vmem:[%s285 + $0x1c] sm:$0x1] %v1894
        %v1896 = vld [vmem:[%s285 + $0x20] sm:$0xf]
        %v1897 = vsel %vm476, %v1830, %v1896
        %1898 = vst [vmem:[%s285 + $0x20] sm:$0xf] %v1897
        %v1899 = vld [vmem:[%s285 + $0x24] sm:$0x1]
        %v1900 = vsel %vm288, %v1831, %v1899
        %1901 = vst [vmem:[%s285 + $0x24] sm:$0x1] %v1900
        %v1902 = vld [vmem:[%s285 + $0x28] sm:$0xf]
        %v1903 = vsel %vm476, %v1838, %v1902
        %1904 = vst [vmem:[%s285 + $0x28] sm:$0xf] %v1903
        %v1905 = vld [vmem:[%s285 + $0x2c] sm:$0x1]
        %v1906 = vsel %vm288, %v1839, %v1905
        %1907 = vst [vmem:[%s285 + $0x2c] sm:$0x1] %v1906
        %v1908 = vld [vmem:[%s285 + $0x30] sm:$0xf]
        %v1909 = vsel %vm476, %v1846, %v1908
        %1910 = vst [vmem:[%s285 + $0x30] sm:$0xf] %v1909
        %v1911 = vld [vmem:[%s285 + $0x34] sm:$0x1]
        %v1912 = vsel %vm288, %v1847, %v1911
        %1913 = vst [vmem:[%s285 + $0x34] sm:$0x1] %v1912
        %v1914 = vld [vmem:[%s285 + $0x38] sm:$0xf]
        %v1915 = vsel %vm476, %v1854, %v1914
        %1916 = vst [vmem:[%s285 + $0x38] sm:$0xf] %v1915
        %v1917 = vld [vmem:[%s285 + $0x3c] sm:$0x1]
        %v1918 = vsel %vm288, %v1855, %v1917
        %1919 = vst [vmem:[%s285 + $0x3c] sm:$0x1] %v1918
        %v1920 = vld [vmem:[#allocation2] sm:$0xf]
        %v1921 = vld [vmem:[#allocation2 + $0x8] sm:$0xf]
        %v1922 = vld [vmem:[#allocation2 + $0x10] sm:$0xf]
        %v1923 = vld [vmem:[#allocation2 + $0x18] sm:$0xf]
        %v1924 = vld [vmem:[#allocation2 + $0x20] sm:$0xf]
        %v1925 = vld [vmem:[#allocation2 + $0x28] sm:$0xf]
        %v1926 = vld [vmem:[#allocation2 + $0x30] sm:$0xf]
        %v1927 = vld [vmem:[#allocation2 + $0x38] sm:$0xf]
        %1928 = vst.msk [vmem:[#allocation3] sm:$0xf] %vm278, %v1920
        %1929 = vst.msk [vmem:[#allocation3 + $0xc] sm:$0xf] %vm278, %v1921
        %1930 = vst.msk [vmem:[#allocation3 + $0x18] sm:$0xf] %vm278, %v1922
        %1931 = vst.msk [vmem:[#allocation3 + $0x24] sm:$0xf] %vm278, %v1923
        %1932 = vst.msk [vmem:[#allocation3 + $0x30] sm:$0xf] %vm278, %v1924
        %1933 = vst.msk [vmem:[#allocation3 + $0x3c] sm:$0xf] %vm278, %v1925
        %1934 = vst.msk [vmem:[#allocation3 + $0x48] sm:$0xf] %vm278, %v1926
        %1935 = vst.msk [vmem:[#allocation3 + $0x54] sm:$0xf] %vm278, %v1927
        %v1936 = vld [vmem:[#allocation2] sm:$0xf]
        %v1937 = vld [vmem:[#allocation2 + $0x4] sm:$0x1]
        %v1938 = vld [vmem:[#allocation2 + $0x8] sm:$0xf]
        %v1939 = vld [vmem:[#allocation2 + $0xc] sm:$0x1]
        %v1940 = vld [vmem:[#allocation2 + $0x10] sm:$0xf]
        %v1941 = vld [vmem:[#allocation2 + $0x14] sm:$0x1]
        %v1942 = vld [vmem:[#allocation2 + $0x18] sm:$0xf]
        %v1943 = vld [vmem:[#allocation2 + $0x1c] sm:$0x1]
        %v1944 = vld [vmem:[#allocation2 + $0x20] sm:$0xf]
        %v1945 = vld [vmem:[#allocation2 + $0x24] sm:$0x1]
        %v1946 = vld [vmem:[#allocation2 + $0x28] sm:$0xf]
        %v1947 = vld [vmem:[#allocation2 + $0x2c] sm:$0x1]
        %v1948 = vld [vmem:[#allocation2 + $0x30] sm:$0xf]
        %v1949 = vld [vmem:[#allocation2 + $0x34] sm:$0x1]
        %v1950 = vld [vmem:[#allocation2 + $0x38] sm:$0xf]
        %v1951 = vld [vmem:[#allocation2 + $0x3c] sm:$0x1]
        %v1953 = vshrl.u32 %v1936, 16
        %v1955 = vrot.slane %v1953, 4
        %v1956 = vshll.u32 %v1936, 16
        %v1958 = vrot.slane %v1956, 5
        %v1959 = vor.u32 %v1955, %v1958
        %v1960 = vrot.slane %v1959, 4
        %v1962 = vshll.u32 %v1937, 16
        %v1964 = vrot.slane %v1962, 5
        %v1965 = vsel %vm559, %v1960, %v1964
        %v1967 = vshrl.u32 %v1938, 16
        %v1969 = vrot.slane %v1967, 4
        %v1970 = vshll.u32 %v1938, 16
        %v1972 = vrot.slane %v1970, 5
        %v1973 = vor.u32 %v1969, %v1972
        %v1974 = vrot.slane %v1973, 4
        %v1976 = vshll.u32 %v1939, 16
        %v1978 = vrot.slane %v1976, 5
        %v1979 = vsel %vm559, %v1974, %v1978
        %v1981 = vshrl.u32 %v1940, 16
        %v1983 = vrot.slane %v1981, 4
        %v1984 = vshll.u32 %v1940, 16
        %v1986 = vrot.slane %v1984, 5
        %v1987 = vor.u32 %v1983, %v1986
        %v1988 = vrot.slane %v1987, 4
        %v1990 = vshll.u32 %v1941, 16
        %v1992 = vrot.slane %v1990, 5
        %v1993 = vsel %vm559, %v1988, %v1992
        %v1995 = vshrl.u32 %v1942, 16
        %v1997 = vrot.slane %v1995, 4
        %v1998 = vshll.u32 %v1942, 16
        %v2000 = vrot.slane %v1998, 5
        %v2001 = vor.u32 %v1997, %v2000
        %v2002 = vrot.slane %v2001, 4
        %v2004 = vshll.u32 %v1943, 16
        %v2006 = vrot.slane %v2004, 5
        %v2007 = vsel %vm559, %v2002, %v2006
        %v2009 = vshrl.u32 %v1944, 16
        %v2011 = vrot.slane %v2009, 4
        %v2012 = vshll.u32 %v1944, 16
        %v2014 = vrot.slane %v2012, 5
        %v2015 = vor.u32 %v2011, %v2014
        %v2016 = vrot.slane %v2015, 4
        %v2018 = vshll.u32 %v1945, 16
        %v2020 = vrot.slane %v2018, 5
        %v2021 = vsel %vm559, %v2016, %v2020
        %v2023 = vshrl.u32 %v1946, 16
        %v2025 = vrot.slane %v2023, 4
        %v2026 = vshll.u32 %v1946, 16
        %v2028 = vrot.slane %v2026, 5
        %v2029 = vor.u32 %v2025, %v2028
        %v2030 = vrot.slane %v2029, 4
        %v2032 = vshll.u32 %v1947, 16
        %v2034 = vrot.slane %v2032, 5
        %v2035 = vsel %vm559, %v2030, %v2034
        %v2037 = vshrl.u32 %v1948, 16
        %v2039 = vrot.slane %v2037, 4
        %v2040 = vshll.u32 %v1948, 16
        %v2042 = vrot.slane %v2040, 5
        %v2043 = vor.u32 %v2039, %v2042
        %v2044 = vrot.slane %v2043, 4
        %v2046 = vshll.u32 %v1949, 16
        %v2048 = vrot.slane %v2046, 5
        %v2049 = vsel %vm559, %v2044, %v2048
        %v2051 = vshrl.u32 %v1950, 16
        %v2053 = vrot.slane %v2051, 4
        %v2054 = vshll.u32 %v1950, 16
        %v2056 = vrot.slane %v2054, 5
        %v2057 = vor.u32 %v2053, %v2056
        %v2058 = vrot.slane %v2057, 4
        %v2060 = vshll.u32 %v1951, 16
        %v2062 = vrot.slane %v2060, 5
        %v2063 = vsel %vm559, %v2058, %v2062
        %2064 = vrot.lane.b32.xlu0 %v1965, 32
        %v2065 = vpop.permute.xlu0 %2064
        %2066 = vrot.lane.b32.xlu0 %v1979, 32
        %v2067 = vpop.permute.xlu0 %2066
        %2068 = vrot.lane.b32.xlu0 %v1993, 32
        %v2069 = vpop.permute.xlu0 %2068
        %2070 = vrot.lane.b32.xlu0 %v2007, 32
        %v2071 = vpop.permute.xlu0 %2070
        %2072 = vrot.lane.b32.xlu0 %v2021, 32
        %v2073 = vpop.permute.xlu0 %2072
        %2074 = vrot.lane.b32.xlu0 %v2035, 32
        %v2075 = vpop.permute.xlu0 %2074
        %2076 = vrot.lane.b32.xlu0 %v2049, 32
        %v2077 = vpop.permute.xlu0 %2076
        %2078 = vrot.lane.b32.xlu0 %v2063, 32
        %v2079 = vpop.permute.xlu0 %2078
        %2088 = vst.msk [vmem:[#allocation3] sm:$0xf] %vm696, %v2065
        %2089 = vst.msk [vmem:[#allocation3 + $0xc] sm:$0xf] %vm696, %v2067
        %2090 = vst.msk [vmem:[#allocation3 + $0x18] sm:$0xf] %vm696, %v2069
        %2091 = vst.msk [vmem:[#allocation3 + $0x24] sm:$0xf] %vm696, %v2071
        %2092 = vst.msk [vmem:[#allocation3 + $0x30] sm:$0xf] %vm696, %v2073
        %2093 = vst.msk [vmem:[#allocation3 + $0x3c] sm:$0xf] %vm696, %v2075
        %2094 = vst.msk [vmem:[#allocation3 + $0x48] sm:$0xf] %vm696, %v2077
        %2095 = vst.msk [vmem:[#allocation3 + $0x54] sm:$0xf] %vm696, %v2079
        %v2096 = vld [vmem:[#allocation2] sm:$0xe]
        %v2097 = vld [vmem:[#allocation2 + $0x4] sm:$0x1]
        %v2098 = vld [vmem:[#allocation2 + $0x8] sm:$0xe]
        %v2099 = vld [vmem:[#allocation2 + $0xc] sm:$0x1]
        %v2100 = vld [vmem:[#allocation2 + $0x10] sm:$0xe]
        %v2101 = vld [vmem:[#allocation2 + $0x14] sm:$0x1]
        %v2102 = vld [vmem:[#allocation2 + $0x18] sm:$0xe]
        %v2103 = vld [vmem:[#allocation2 + $0x1c] sm:$0x1]
        %v2104 = vld [vmem:[#allocation2 + $0x20] sm:$0xe]
        %v2105 = vld [vmem:[#allocation2 + $0x24] sm:$0x1]
        %v2106 = vld [vmem:[#allocation2 + $0x28] sm:$0xe]
        %v2107 = vld [vmem:[#allocation2 + $0x2c] sm:$0x1]
        %v2108 = vld [vmem:[#allocation2 + $0x30] sm:$0xe]
        %v2109 = vld [vmem:[#allocation2 + $0x34] sm:$0x1]
        %v2110 = vld [vmem:[#allocation2 + $0x38] sm:$0xe]
        %v2111 = vld [vmem:[#allocation2 + $0x3c] sm:$0x1]
        %v2128 = vrot.slane %v2096, 5
        %v2129 = vrot.slane %v2128, 4
        %v2130 = vrot.slane %v2097, 5
        %v2131 = vsel %vm739, %v2129, %v2130
        %v2132 = vrot.slane %v2098, 5
        %v2133 = vrot.slane %v2132, 4
        %v2134 = vrot.slane %v2099, 5
        %v2135 = vsel %vm739, %v2133, %v2134
        %v2136 = vrot.slane %v2100, 5
        %v2137 = vrot.slane %v2136, 4
        %v2138 = vrot.slane %v2101, 5
        %v2139 = vsel %vm739, %v2137, %v2138
        %v2140 = vrot.slane %v2102, 5
        %v2141 = vrot.slane %v2140, 4
        %v2142 = vrot.slane %v2103, 5
        %v2143 = vsel %vm739, %v2141, %v2142
        %v2144 = vrot.slane %v2104, 5
        %v2145 = vrot.slane %v2144, 4
        %v2146 = vrot.slane %v2105, 5
        %v2147 = vsel %vm739, %v2145, %v2146
        %v2148 = vrot.slane %v2106, 5
        %v2149 = vrot.slane %v2148, 4
        %v2150 = vrot.slane %v2107, 5
        %v2151 = vsel %vm739, %v2149, %v2150
        %v2152 = vrot.slane %v2108, 5
        %v2153 = vrot.slane %v2152, 4
        %v2154 = vrot.slane %v2109, 5
        %v2155 = vsel %vm739, %v2153, %v2154
        %v2156 = vrot.slane %v2110, 5
        %v2157 = vrot.slane %v2156, 4
        %v2158 = vrot.slane %v2111, 5
        %v2159 = vsel %vm739, %v2157, %v2158
        %2160 = vrot.lane.b32.xlu0 %v2131, 64
        %v2161 = vpop.permute.xlu0 %2160
        %2162 = vrot.lane.b32.xlu0 %v2135, 64
        %v2163 = vpop.permute.xlu0 %2162
        %2164 = vrot.lane.b32.xlu0 %v2139, 64
        %v2165 = vpop.permute.xlu0 %2164
        %2166 = vrot.lane.b32.xlu0 %v2143, 64
        %v2167 = vpop.permute.xlu0 %2166
        %2168 = vrot.lane.b32.xlu0 %v2147, 64
        %v2169 = vpop.permute.xlu0 %2168
        %2170 = vrot.lane.b32.xlu0 %v2151, 64
        %v2171 = vpop.permute.xlu0 %2170
        %2172 = vrot.lane.b32.xlu0 %v2155, 64
        %v2173 = vpop.permute.xlu0 %2172
        %2174 = vrot.lane.b32.xlu0 %v2159, 64
        %v2175 = vpop.permute.xlu0 %2174
        %2184 = vst.msk [vmem:[#allocation3] sm:$0xf] %vm796, %v2161
        %2185 = vst.msk [vmem:[#allocation3 + $0xc] sm:$0xf] %vm796, %v2163
        %2186 = vst.msk [vmem:[#allocation3 + $0x18] sm:$0xf] %vm796, %v2165
        %2187 = vst.msk [vmem:[#allocation3 + $0x24] sm:$0xf] %vm796, %v2167
        %2188 = vst.msk [vmem:[#allocation3 + $0x30] sm:$0xf] %vm796, %v2169
        %2189 = vst.msk [vmem:[#allocation3 + $0x3c] sm:$0xf] %vm796, %v2171
        %2190 = vst.msk [vmem:[#allocation3 + $0x48] sm:$0xf] %vm796, %v2173
        %2191 = vst.msk [vmem:[#allocation3 + $0x54] sm:$0xf] %vm796, %v2175
        %v2192 = vld [vmem:[%s285] sm:$0xf]
        %v2193 = vld [vmem:[%s285 + $0x8] sm:$0xf]
        %v2194 = vld [vmem:[%s285 + $0x10] sm:$0xf]
        %v2195 = vld [vmem:[%s285 + $0x18] sm:$0xf]
        %v2196 = vld [vmem:[%s285 + $0x20] sm:$0xf]
        %v2197 = vld [vmem:[%s285 + $0x28] sm:$0xf]
        %v2198 = vld [vmem:[%s285 + $0x30] sm:$0xf]
        %v2199 = vld [vmem:[%s285 + $0x38] sm:$0xf]
        %2208 = vrot.lane.b32.xlu0 %v2192, 96
        %v2209 = vpop.permute.xlu0 %2208
        %2210 = vrot.lane.b32.xlu0 %v2193, 96
        %v2211 = vpop.permute.xlu0 %2210
        %2212 = vrot.lane.b32.xlu0 %v2194, 96
        %v2213 = vpop.permute.xlu0 %2212
        %2214 = vrot.lane.b32.xlu0 %v2195, 96
        %v2215 = vpop.permute.xlu0 %2214
        %2216 = vrot.lane.b32.xlu0 %v2196, 96
        %v2217 = vpop.permute.xlu0 %2216
        %2218 = vrot.lane.b32.xlu0 %v2197, 96
        %v2219 = vpop.permute.xlu0 %2218
        %2220 = vrot.lane.b32.xlu0 %v2198, 96
        %v2221 = vpop.permute.xlu0 %2220
        %2222 = vrot.lane.b32.xlu0 %v2199, 96
        %v2223 = vpop.permute.xlu0 %2222
        %2232 = vst.msk [vmem:[#allocation3] sm:$0xf] %vm845, %v2209
        %2233 = vst.msk [vmem:[#allocation3 + $0xc] sm:$0xf] %vm845, %v2211
        %2234 = vst.msk [vmem:[#allocation3 + $0x18] sm:$0xf] %vm845, %v2213
        %2235 = vst.msk [vmem:[#allocation3 + $0x24] sm:$0xf] %vm845, %v2215
        %2236 = vst.msk [vmem:[#allocation3 + $0x30] sm:$0xf] %vm845, %v2217
        %2237 = vst.msk [vmem:[#allocation3 + $0x3c] sm:$0xf] %vm845, %v2219
        %2238 = vst.msk [vmem:[#allocation3 + $0x48] sm:$0xf] %vm845, %v2221
        %2239 = vst.msk [vmem:[#allocation3 + $0x54] sm:$0xf] %vm845, %v2223
        %v2240 = vld [vmem:[%s285] sm:$0xf]
        %v2241 = vld [vmem:[%s285 + $0x4] sm:$0x1]
        %v2242 = vld [vmem:[%s285 + $0x8] sm:$0xf]
        %v2243 = vld [vmem:[%s285 + $0xc] sm:$0x1]
        %v2244 = vld [vmem:[%s285 + $0x10] sm:$0xf]
        %v2245 = vld [vmem:[%s285 + $0x14] sm:$0x1]
        %v2246 = vld [vmem:[%s285 + $0x18] sm:$0xf]
        %v2247 = vld [vmem:[%s285 + $0x1c] sm:$0x1]
        %v2248 = vld [vmem:[%s285 + $0x20] sm:$0xf]
        %v2249 = vld [vmem:[%s285 + $0x24] sm:$0x1]
        %v2250 = vld [vmem:[%s285 + $0x28] sm:$0xf]
        %v2251 = vld [vmem:[%s285 + $0x2c] sm:$0x1]
        %v2252 = vld [vmem:[%s285 + $0x30] sm:$0xf]
        %v2253 = vld [vmem:[%s285 + $0x34] sm:$0x1]
        %v2254 = vld [vmem:[%s285 + $0x38] sm:$0xf]
        %v2255 = vld [vmem:[%s285 + $0x3c] sm:$0x1]
        %v2257 = vshrl.u32 %v2240, 16
        %v2259 = vrot.slane %v2257, 4
        %v2260 = vshll.u32 %v2240, 16
        %v2262 = vrot.slane %v2260, 5
        %v2263 = vor.u32 %v2259, %v2262
        %v2264 = vrot.slane %v2263, 4
        %v2266 = vshll.u32 %v2241, 16
        %v2268 = vrot.slane %v2266, 5
        %v2269 = vsel %vm559, %v2264, %v2268
        %v2271 = vshrl.u32 %v2242, 16
        %v2273 = vrot.slane %v2271, 4
        %v2274 = vshll.u32 %v2242, 16
        %v2276 = vrot.slane %v2274, 5
        %v2277 = vor.u32 %v2273, %v2276
        %v2278 = vrot.slane %v2277, 4
        %v2280 = vshll.u32 %v2243, 16
        %v2282 = vrot.slane %v2280, 5
        %v2283 = vsel %vm559, %v2278, %v2282
        %v2285 = vshrl.u32 %v2244, 16
        %v2287 = vrot.slane %v2285, 4
        %v2288 = vshll.u32 %v2244, 16
        %v2290 = vrot.slane %v2288, 5
        %v2291 = vor.u32 %v2287, %v2290
        %v2292 = vrot.slane %v2291, 4
        %v2294 = vshll.u32 %v2245, 16
        %v2296 = vrot.slane %v2294, 5
        %v2297 = vsel %vm559, %v2292, %v2296
        %v2299 = vshrl.u32 %v2246, 16
        %v2301 = vrot.slane %v2299, 4
        %v2302 = vshll.u32 %v2246, 16
        %v2304 = vrot.slane %v2302, 5
        %v2305 = vor.u32 %v2301, %v2304
        %v2306 = vrot.slane %v2305, 4
        %v2308 = vshll.u32 %v2247, 16
        %v2310 = vrot.slane %v2308, 5
        %v2311 = vsel %vm559, %v2306, %v2310
        %v2313 = vshrl.u32 %v2248, 16
        %v2315 = vrot.slane %v2313, 4
        %v2316 = vshll.u32 %v2248, 16
        %v2318 = vrot.slane %v2316, 5
        %v2319 = vor.u32 %v2315, %v2318
        %v2320 = vrot.slane %v2319, 4
        %v2322 = vshll.u32 %v2249, 16
        %v2324 = vrot.slane %v2322, 5
        %v2325 = vsel %vm559, %v2320, %v2324
        %v2327 = vshrl.u32 %v2250, 16
        %v2329 = vrot.slane %v2327, 4
        %v2330 = vshll.u32 %v2250, 16
        %v2332 = vrot.slane %v2330, 5
        %v2333 = vor.u32 %v2329, %v2332
        %v2334 = vrot.slane %v2333, 4
        %v2336 = vshll.u32 %v2251, 16
        %v2338 = vrot.slane %v2336, 5
        %v2339 = vsel %vm559, %v2334, %v2338
        %v2341 = vshrl.u32 %v2252, 16
        %v2343 = vrot.slane %v2341, 4
        %v2344 = vshll.u32 %v2252, 16
        %v2346 = vrot.slane %v2344, 5
        %v2347 = vor.u32 %v2343, %v2346
        %v2348 = vrot.slane %v2347, 4
        %v2350 = vshll.u32 %v2253, 16
        %v2352 = vrot.slane %v2350, 5
        %v2353 = vsel %vm559, %v2348, %v2352
        %v2355 = vshrl.u32 %v2254, 16
        %v2357 = vrot.slane %v2355, 4
        %v2358 = vshll.u32 %v2254, 16
        %v2360 = vrot.slane %v2358, 5
        %v2361 = vor.u32 %v2357, %v2360
        %v2362 = vrot.slane %v2361, 4
        %v2364 = vshll.u32 %v2255, 16
        %v2366 = vrot.slane %v2364, 5
        %v2367 = vsel %vm559, %v2362, %v2366
        %2376 = vst.msk [vmem:[#allocation3 + $0x4] sm:$0xf] %vm278, %v2269
        %2377 = vst.msk [vmem:[#allocation3 + $0x10] sm:$0xf] %vm278, %v2283
        %2378 = vst.msk [vmem:[#allocation3 + $0x1c] sm:$0xf] %vm278, %v2297
        %2379 = vst.msk [vmem:[#allocation3 + $0x28] sm:$0xf] %vm278, %v2311
        %2380 = vst.msk [vmem:[#allocation3 + $0x34] sm:$0xf] %vm278, %v2325
        %2381 = vst.msk [vmem:[#allocation3 + $0x40] sm:$0xf] %vm278, %v2339
        %2382 = vst.msk [vmem:[#allocation3 + $0x4c] sm:$0xf] %vm278, %v2353
        %2383 = vst.msk [vmem:[#allocation3 + $0x58] sm:$0xf] %vm278, %v2367
        %v2384 = vld [vmem:[%s285] sm:$0xe]
        %v2385 = vld [vmem:[%s285 + $0x4] sm:$0x1]
        %v2386 = vld [vmem:[%s285 + $0x8] sm:$0xe]
        %v2387 = vld [vmem:[%s285 + $0xc] sm:$0x1]
        %v2388 = vld [vmem:[%s285 + $0x10] sm:$0xe]
        %v2389 = vld [vmem:[%s285 + $0x14] sm:$0x1]
        %v2390 = vld [vmem:[%s285 + $0x18] sm:$0xe]
        %v2391 = vld [vmem:[%s285 + $0x1c] sm:$0x1]
        %v2392 = vld [vmem:[%s285 + $0x20] sm:$0xe]
        %v2393 = vld [vmem:[%s285 + $0x24] sm:$0x1]
        %v2394 = vld [vmem:[%s285 + $0x28] sm:$0xe]
        %v2395 = vld [vmem:[%s285 + $0x2c] sm:$0x1]
        %v2396 = vld [vmem:[%s285 + $0x30] sm:$0xe]
        %v2397 = vld [vmem:[%s285 + $0x34] sm:$0x1]
        %v2398 = vld [vmem:[%s285 + $0x38] sm:$0xe]
        %v2399 = vld [vmem:[%s285 + $0x3c] sm:$0x1]
        %v2416 = vrot.slane %v2384, 5
        %v2417 = vrot.slane %v2416, 4
        %v2418 = vrot.slane %v2385, 5
        %v2419 = vsel %vm739, %v2417, %v2418
        %v2420 = vrot.slane %v2386, 5
        %v2421 = vrot.slane %v2420, 4
        %v2422 = vrot.slane %v2387, 5
        %v2423 = vsel %vm739, %v2421, %v2422
        %v2424 = vrot.slane %v2388, 5
        %v2425 = vrot.slane %v2424, 4
        %v2426 = vrot.slane %v2389, 5
        %v2427 = vsel %vm739, %v2425, %v2426
        %v2428 = vrot.slane %v2390, 5
        %v2429 = vrot.slane %v2428, 4
        %v2430 = vrot.slane %v2391, 5
        %v2431 = vsel %vm739, %v2429, %v2430
        %v2432 = vrot.slane %v2392, 5
        %v2433 = vrot.slane %v2432, 4
        %v2434 = vrot.slane %v2393, 5
        %v2435 = vsel %vm739, %v2433, %v2434
        %v2436 = vrot.slane %v2394, 5
        %v2437 = vrot.slane %v2436, 4
        %v2438 = vrot.slane %v2395, 5
        %v2439 = vsel %vm739, %v2437, %v2438
        %v2440 = vrot.slane %v2396, 5
        %v2441 = vrot.slane %v2440, 4
        %v2442 = vrot.slane %v2397, 5
        %v2443 = vsel %vm739, %v2441, %v2442
        %v2444 = vrot.slane %v2398, 5
        %v2445 = vrot.slane %v2444, 4
        %v2446 = vrot.slane %v2399, 5
        %v2447 = vsel %vm739, %v2445, %v2446
        %2448 = vrot.lane.b32.xlu0 %v2419, 32
        %v2449 = vpop.permute.xlu0 %2448
        %2450 = vrot.lane.b32.xlu0 %v2423, 32
        %v2451 = vpop.permute.xlu0 %2450
        %2452 = vrot.lane.b32.xlu0 %v2427, 32
        %v2453 = vpop.permute.xlu0 %2452
        %2454 = vrot.lane.b32.xlu0 %v2431, 32
        %v2455 = vpop.permute.xlu0 %2454
        %2456 = vrot.lane.b32.xlu0 %v2435, 32
        %v2457 = vpop.permute.xlu0 %2456
        %2458 = vrot.lane.b32.xlu0 %v2439, 32
        %v2459 = vpop.permute.xlu0 %2458
        %2460 = vrot.lane.b32.xlu0 %v2443, 32
        %v2461 = vpop.permute.xlu0 %2460
        %2462 = vrot.lane.b32.xlu0 %v2447, 32
        %v2463 = vpop.permute.xlu0 %2462
        %2472 = vst.msk [vmem:[#allocation3 + $0x4] sm:$0xf] %vm696, %v2449
        %2473 = vst.msk [vmem:[#allocation3 + $0x10] sm:$0xf] %vm696, %v2451
        %2474 = vst.msk [vmem:[#allocation3 + $0x1c] sm:$0xf] %vm696, %v2453
        %2475 = vst.msk [vmem:[#allocation3 + $0x28] sm:$0xf] %vm696, %v2455
        %2476 = vst.msk [vmem:[#allocation3 + $0x34] sm:$0xf] %vm696, %v2457
        %2477 = vst.msk [vmem:[#allocation3 + $0x40] sm:$0xf] %vm696, %v2459
        %2478 = vst.msk [vmem:[#allocation3 + $0x4c] sm:$0xf] %vm696, %v2461
        %2479 = vst.msk [vmem:[#allocation3 + $0x58] sm:$0xf] %vm696, %v2463
        %v2480 = vld [vmem:[%s1094] sm:$0xf]
        %v2481 = vld [vmem:[%s1094 + $0x8] sm:$0xf]
        %v2482 = vld [vmem:[%s1094 + $0x10] sm:$0xf]
        %v2483 = vld [vmem:[%s1094 + $0x18] sm:$0xf]
        %v2484 = vld [vmem:[%s1094 + $0x20] sm:$0xf]
        %v2485 = vld [vmem:[%s1094 + $0x28] sm:$0xf]
        %v2486 = vld [vmem:[%s1094 + $0x30] sm:$0xf]
        %v2487 = vld [vmem:[%s1094 + $0x38] sm:$0xf]
        %2496 = vrot.lane.b32.xlu0 %v2480, 64
        %v2497 = vpop.permute.xlu0 %2496
        %2498 = vrot.lane.b32.xlu0 %v2481, 64
        %v2499 = vpop.permute.xlu0 %2498
        %2500 = vrot.lane.b32.xlu0 %v2482, 64
        %v2501 = vpop.permute.xlu0 %2500
        %2502 = vrot.lane.b32.xlu0 %v2483, 64
        %v2503 = vpop.permute.xlu0 %2502
        %2504 = vrot.lane.b32.xlu0 %v2484, 64
        %v2505 = vpop.permute.xlu0 %2504
        %2506 = vrot.lane.b32.xlu0 %v2485, 64
        %v2507 = vpop.permute.xlu0 %2506
        %2508 = vrot.lane.b32.xlu0 %v2486, 64
        %v2509 = vpop.permute.xlu0 %2508
        %2510 = vrot.lane.b32.xlu0 %v2487, 64
        %v2511 = vpop.permute.xlu0 %2510
        %2520 = vst.msk [vmem:[#allocation3 + $0x4] sm:$0xf] %vm796, %v2497
        %2521 = vst.msk [vmem:[#allocation3 + $0x10] sm:$0xf] %vm796, %v2499
        %2522 = vst.msk [vmem:[#allocation3 + $0x1c] sm:$0xf] %vm796, %v2501
        %2523 = vst.msk [vmem:[#allocation3 + $0x28] sm:$0xf] %vm796, %v2503
        %2524 = vst.msk [vmem:[#allocation3 + $0x34] sm:$0xf] %vm796, %v2505
        %2525 = vst.msk [vmem:[#allocation3 + $0x40] sm:$0xf] %vm796, %v2507
        %2526 = vst.msk [vmem:[#allocation3 + $0x4c] sm:$0xf] %vm796, %v2509
        %2527 = vst.msk [vmem:[#allocation3 + $0x58] sm:$0xf] %vm796, %v2511
        %v2528 = vld [vmem:[%s1094] sm:$0xf]
        %v2529 = vld [vmem:[%s1094 + $0x4] sm:$0x1]
        %v2530 = vld [vmem:[%s1094 + $0x8] sm:$0xf]
        %v2531 = vld [vmem:[%s1094 + $0xc] sm:$0x1]
        %v2532 = vld [vmem:[%s1094 + $0x10] sm:$0xf]
        %v2533 = vld [vmem:[%s1094 + $0x14] sm:$0x1]
        %v2534 = vld [vmem:[%s1094 + $0x18] sm:$0xf]
        %v2535 = vld [vmem:[%s1094 + $0x1c] sm:$0x1]
        %v2536 = vld [vmem:[%s1094 + $0x20] sm:$0xf]
        %v2537 = vld [vmem:[%s1094 + $0x24] sm:$0x1]
        %v2538 = vld [vmem:[%s1094 + $0x28] sm:$0xf]
        %v2539 = vld [vmem:[%s1094 + $0x2c] sm:$0x1]
        %v2540 = vld [vmem:[%s1094 + $0x30] sm:$0xf]
        %v2541 = vld [vmem:[%s1094 + $0x34] sm:$0x1]
        %v2542 = vld [vmem:[%s1094 + $0x38] sm:$0xf]
        %v2543 = vld [vmem:[%s1094 + $0x3c] sm:$0x1]
        %v2545 = vshrl.u32 %v2528, 16
        %v2547 = vrot.slane %v2545, 4
        %v2548 = vshll.u32 %v2528, 16
        %v2550 = vrot.slane %v2548, 5
        %v2551 = vor.u32 %v2547, %v2550
        %v2552 = vrot.slane %v2551, 4
        %v2554 = vshll.u32 %v2529, 16
        %v2556 = vrot.slane %v2554, 5
        %v2557 = vsel %vm559, %v2552, %v2556
        %v2559 = vshrl.u32 %v2530, 16
        %v2561 = vrot.slane %v2559, 4
        %v2562 = vshll.u32 %v2530, 16
        %v2564 = vrot.slane %v2562, 5
        %v2565 = vor.u32 %v2561, %v2564
        %v2566 = vrot.slane %v2565, 4
        %v2568 = vshll.u32 %v2531, 16
        %v2570 = vrot.slane %v2568, 5
        %v2571 = vsel %vm559, %v2566, %v2570
        %v2573 = vshrl.u32 %v2532, 16
        %v2575 = vrot.slane %v2573, 4
        %v2576 = vshll.u32 %v2532, 16
        %v2578 = vrot.slane %v2576, 5
        %v2579 = vor.u32 %v2575, %v2578
        %v2580 = vrot.slane %v2579, 4
        %v2582 = vshll.u32 %v2533, 16
        %v2584 = vrot.slane %v2582, 5
        %v2585 = vsel %vm559, %v2580, %v2584
        %v2587 = vshrl.u32 %v2534, 16
        %v2589 = vrot.slane %v2587, 4
        %v2590 = vshll.u32 %v2534, 16
        %v2592 = vrot.slane %v2590, 5
        %v2593 = vor.u32 %v2589, %v2592
        %v2594 = vrot.slane %v2593, 4
        %v2596 = vshll.u32 %v2535, 16
        %v2598 = vrot.slane %v2596, 5
        %v2599 = vsel %vm559, %v2594, %v2598
        %v2601 = vshrl.u32 %v2536, 16
        %v2603 = vrot.slane %v2601, 4
        %v2604 = vshll.u32 %v2536, 16
        %v2606 = vrot.slane %v2604, 5
        %v2607 = vor.u32 %v2603, %v2606
        %v2608 = vrot.slane %v2607, 4
        %v2610 = vshll.u32 %v2537, 16
        %v2612 = vrot.slane %v2610, 5
        %v2613 = vsel %vm559, %v2608, %v2612
        %v2615 = vshrl.u32 %v2538, 16
        %v2617 = vrot.slane %v2615, 4
        %v2618 = vshll.u32 %v2538, 16
        %v2620 = vrot.slane %v2618, 5
        %v2621 = vor.u32 %v2617, %v2620
        %v2622 = vrot.slane %v2621, 4
        %v2624 = vshll.u32 %v2539, 16
        %v2626 = vrot.slane %v2624, 5
        %v2627 = vsel %vm559, %v2622, %v2626
        %v2629 = vshrl.u32 %v2540, 16
        %v2631 = vrot.slane %v2629, 4
        %v2632 = vshll.u32 %v2540, 16
        %v2634 = vrot.slane %v2632, 5
        %v2635 = vor.u32 %v2631, %v2634
        %v2636 = vrot.slane %v2635, 4
        %v2638 = vshll.u32 %v2541, 16
        %v2640 = vrot.slane %v2638, 5
        %v2641 = vsel %vm559, %v2636, %v2640
        %v2643 = vshrl.u32 %v2542, 16
        %v2645 = vrot.slane %v2643, 4
        %v2646 = vshll.u32 %v2542, 16
        %v2648 = vrot.slane %v2646, 5
        %v2649 = vor.u32 %v2645, %v2648
        %v2650 = vrot.slane %v2649, 4
        %v2652 = vshll.u32 %v2543, 16
        %v2654 = vrot.slane %v2652, 5
        %v2655 = vsel %vm559, %v2650, %v2654
        %2656 = vrot.lane.b32.xlu0 %v2557, 96
        %v2657 = vpop.permute.xlu0 %2656
        %2658 = vrot.lane.b32.xlu0 %v2571, 96
        %v2659 = vpop.permute.xlu0 %2658
        %2660 = vrot.lane.b32.xlu0 %v2585, 96
        %v2661 = vpop.permute.xlu0 %2660
        %2662 = vrot.lane.b32.xlu0 %v2599, 96
        %v2663 = vpop.permute.xlu0 %2662
        %2664 = vrot.lane.b32.xlu0 %v2613, 96
        %v2665 = vpop.permute.xlu0 %2664
        %2666 = vrot.lane.b32.xlu0 %v2627, 96
        %v2667 = vpop.permute.xlu0 %2666
        %2668 = vrot.lane.b32.xlu0 %v2641, 96
        %v2669 = vpop.permute.xlu0 %2668
        %2670 = vrot.lane.b32.xlu0 %v2655, 96
        %v2671 = vpop.permute.xlu0 %2670
        %2680 = vst.msk [vmem:[#allocation3 + $0x4] sm:$0xf] %vm845, %v2657
        %2681 = vst.msk [vmem:[#allocation3 + $0x10] sm:$0xf] %vm845, %v2659
        %2682 = vst.msk [vmem:[#allocation3 + $0x1c] sm:$0xf] %vm845, %v2661
        %2683 = vst.msk [vmem:[#allocation3 + $0x28] sm:$0xf] %vm845, %v2663
        %2684 = vst.msk [vmem:[#allocation3 + $0x34] sm:$0xf] %vm845, %v2665
        %2685 = vst.msk [vmem:[#allocation3 + $0x40] sm:$0xf] %vm845, %v2667
        %2686 = vst.msk [vmem:[#allocation3 + $0x4c] sm:$0xf] %vm845, %v2669
        %2687 = vst.msk [vmem:[#allocation3 + $0x58] sm:$0xf] %vm845, %v2671
        %v2688 = vld [vmem:[%s1094] sm:$0xe]
        %v2689 = vld [vmem:[%s1094 + $0x4] sm:$0x1]
        %v2690 = vld [vmem:[%s1094 + $0x8] sm:$0xe]
        %v2691 = vld [vmem:[%s1094 + $0xc] sm:$0x1]
        %v2692 = vld [vmem:[%s1094 + $0x10] sm:$0xe]
        %v2693 = vld [vmem:[%s1094 + $0x14] sm:$0x1]
        %v2694 = vld [vmem:[%s1094 + $0x18] sm:$0xe]
        %v2695 = vld [vmem:[%s1094 + $0x1c] sm:$0x1]
        %v2696 = vld [vmem:[%s1094 + $0x20] sm:$0xe]
        %v2697 = vld [vmem:[%s1094 + $0x24] sm:$0x1]
        %v2698 = vld [vmem:[%s1094 + $0x28] sm:$0xe]
        %v2699 = vld [vmem:[%s1094 + $0x2c] sm:$0x1]
        %v2700 = vld [vmem:[%s1094 + $0x30] sm:$0xe]
        %v2701 = vld [vmem:[%s1094 + $0x34] sm:$0x1]
        %v2702 = vld [vmem:[%s1094 + $0x38] sm:$0xe]
        %v2703 = vld [vmem:[%s1094 + $0x3c] sm:$0x1]
        %v2720 = vrot.slane %v2688, 5
        %v2721 = vrot.slane %v2720, 4
        %v2722 = vrot.slane %v2689, 5
        %v2723 = vsel %vm739, %v2721, %v2722
        %v2724 = vrot.slane %v2690, 5
        %v2725 = vrot.slane %v2724, 4
        %v2726 = vrot.slane %v2691, 5
        %v2727 = vsel %vm739, %v2725, %v2726
        %v2728 = vrot.slane %v2692, 5
        %v2729 = vrot.slane %v2728, 4
        %v2730 = vrot.slane %v2693, 5
        %v2731 = vsel %vm739, %v2729, %v2730
        %v2732 = vrot.slane %v2694, 5
        %v2733 = vrot.slane %v2732, 4
        %v2734 = vrot.slane %v2695, 5
        %v2735 = vsel %vm739, %v2733, %v2734
        %v2736 = vrot.slane %v2696, 5
        %v2737 = vrot.slane %v2736, 4
        %v2738 = vrot.slane %v2697, 5
        %v2739 = vsel %vm739, %v2737, %v2738
        %v2740 = vrot.slane %v2698, 5
        %v2741 = vrot.slane %v2740, 4
        %v2742 = vrot.slane %v2699, 5
        %v2743 = vsel %vm739, %v2741, %v2742
        %v2744 = vrot.slane %v2700, 5
        %v2745 = vrot.slane %v2744, 4
        %v2746 = vrot.slane %v2701, 5
        %v2747 = vsel %vm739, %v2745, %v2746
        %v2748 = vrot.slane %v2702, 5
        %v2749 = vrot.slane %v2748, 4
        %v2750 = vrot.slane %v2703, 5
        %v2751 = vsel %vm739, %v2749, %v2750
        %2760 = vst.msk [vmem:[#allocation3 + $0x8] sm:$0xf] %vm278, %v2723
        %2761 = vst.msk [vmem:[#allocation3 + $0x14] sm:$0xf] %vm278, %v2727
        %2762 = vst.msk [vmem:[#allocation3 + $0x20] sm:$0xf] %vm278, %v2731
        %2763 = vst.msk [vmem:[#allocation3 + $0x2c] sm:$0xf] %vm278, %v2735
        %2764 = vst.msk [vmem:[#allocation3 + $0x38] sm:$0xf] %vm278, %v2739
        %2765 = vst.msk [vmem:[#allocation3 + $0x44] sm:$0xf] %vm278, %v2743
        %2766 = vst.msk [vmem:[#allocation3 + $0x50] sm:$0xf] %vm278, %v2747
        %2767 = vst.msk [vmem:[#allocation3 + $0x5c] sm:$0xf] %vm278, %v2751
        %v2768 = vld [vmem:[#allocation3] sm:$0xff]
        %v2769 = vld [vmem:[#allocation3 + $0x8] sm:$0xf]
        %v2770 = vld [vmem:[#allocation3 + $0xc] sm:$0xff]
        %v2771 = vld [vmem:[#allocation3 + $0x14] sm:$0xf]
        %v2772 = vld [vmem:[#allocation3 + $0x18] sm:$0xff]
        %v2773 = vld [vmem:[#allocation3 + $0x20] sm:$0xf]
        %v2774 = vld [vmem:[#allocation3 + $0x24] sm:$0xff]
        %v2775 = vld [vmem:[#allocation3 + $0x2c] sm:$0xf]
        %v2776 = vld [vmem:[#allocation3 + $0x30] sm:$0xff]
        %v2777 = vld [vmem:[#allocation3 + $0x38] sm:$0xf]
        %v2778 = vld [vmem:[#allocation3 + $0x3c] sm:$0xff]
        %v2779 = vld [vmem:[#allocation3 + $0x44] sm:$0xf]
        %v2780 = vld [vmem:[#allocation3 + $0x48] sm:$0xff]
        %v2781 = vld [vmem:[#allocation3 + $0x50] sm:$0xf]
        %v2782 = vld [vmem:[#allocation3 + $0x54] sm:$0xff]
        %v2783 = vld [vmem:[#allocation3 + $0x5c] sm:$0xf]
        %s2784 = scalar_lea.vmem %s3, 144
        %v2785 = vld [vmem:[%s2784] sm:$0xf]
        %v2786 = vld [vmem:[%s2784 + $0x4] sm:$0xf]
        %v2787 = vld [vmem:[%s2784 + $0x8] sm:$0xf]
        %v2788 = vld [vmem:[%s2784 + $0xc] sm:$0xf]
        %v2789 = vld [vmem:[%s2784 + $0x10] sm:$0xf]
        %v2790 = vld [vmem:[%s2784 + $0x14] sm:$0xf]
        %v2791 = vld [vmem:[%s2784 + $0x18] sm:$0xf]
        %v2792 = vld [vmem:[%s2784 + $0x1c] sm:$0xf]
        %v2793 = vld [vmem:[%s2784 + $0x20] sm:$0xf]
        %v2794 = vld [vmem:[%s2784 + $0x24] sm:$0xf]
        %v2795 = vld [vmem:[%s2784 + $0x28] sm:$0xf]
        %v2796 = vld [vmem:[%s2784 + $0x2c] sm:$0xf]
        %v2797 = vld [vmem:[%s2784 + $0x30] sm:$0xf]
        %v2798 = vld [vmem:[%s2784 + $0x34] sm:$0xf]
        %v2799 = vld [vmem:[%s2784 + $0x38] sm:$0xf]
        %v2800 = vld [vmem:[%s2784 + $0x3c] sm:$0xf]
        %v2801 = vld [vmem:[%s2784 + $0x40] sm:$0xf]
        %v2802 = vld [vmem:[%s2784 + $0x44] sm:$0xf]
        %v2803 = vld [vmem:[%s2784 + $0x48] sm:$0xf]
        %v2804 = vld [vmem:[%s2784 + $0x4c] sm:$0xf]
        %v2805 = vld [vmem:[%s2784 + $0x50] sm:$0xf]
        %v2806 = vld [vmem:[%s2784 + $0x54] sm:$0xf]
        %v2807 = vld [vmem:[%s2784 + $0x58] sm:$0xf]
        %v2808 = vld [vmem:[%s2784 + $0x5c] sm:$0xf]
        %v2809 = vld [vmem:[%s2784 + $0x60] sm:$0xf]
        %v2810 = vld [vmem:[%s2784 + $0x64] sm:$0xf]
        %v2811 = vld [vmem:[%s2784 + $0x68] sm:$0xf]
        %v2812 = vld [vmem:[%s2784 + $0x6c] sm:$0xf]
        %v2813 = vld [vmem:[%s2784 + $0x70] sm:$0xf]
        %v2814 = vld [vmem:[%s2784 + $0x74] sm:$0xf]
        %v2815 = vld [vmem:[%s2784 + $0x78] sm:$0xf]
        %v2816 = vld [vmem:[%s2784 + $0x7c] sm:$0xf]
        %v2817 = vld [vmem:[%s2784 + $0x80] sm:$0xf]
        %v2818 = vld [vmem:[%s2784 + $0x84] sm:$0xf]
        %v2819 = vld [vmem:[%s2784 + $0x88] sm:$0xf]
        %v2820 = vld [vmem:[%s2784 + $0x8c] sm:$0xf]
        %s2821 = scalar_lea.vmem %s4, 1
        %v2822 = vld [vmem:[%s2821] sm:$0x1]
        %v2824 = vlaneseq
        %v2825 = vshrl.u32 %v2824, 7
        %v2826 = vsub.s32 0, %v2825
        %v2827 = vrot.slane %v2822, %v2826
        %v2845 = vunpack.c.l.b16 %v2768
        %v2846 = vunpack.c.h.b16 %v2768
        %v2847 = vunpack.c.l.b16 %v2769
        %v2848 = vunpack.c.l.b16 %v2770
        %v2849 = vunpack.c.h.b16 %v2770
        %v2850 = vunpack.c.l.b16 %v2771
        %v2851 = vunpack.c.l.b16 %v2772
        %v2852 = vunpack.c.h.b16 %v2772
        %v2853 = vunpack.c.l.b16 %v2773
        %v2854 = vunpack.c.l.b16 %v2774
        %v2855 = vunpack.c.h.b16 %v2774
        %v2856 = vunpack.c.l.b16 %v2775
        %v2857 = vunpack.c.l.b16 %v2776
        %v2858 = vunpack.c.h.b16 %v2776
        %v2859 = vunpack.c.l.b16 %v2777
        %v2860 = vunpack.c.l.b16 %v2778
        %v2861 = vunpack.c.h.b16 %v2778
        %v2862 = vunpack.c.l.b16 %v2779
        %v2863 = vunpack.c.l.b16 %v2780
        %v2864 = vunpack.c.h.b16 %v2780
        %v2865 = vunpack.c.l.b16 %v2781
        %v2866 = vunpack.c.l.b16 %v2782
        %v2867 = vunpack.c.h.b16 %v2782
        %v2868 = vunpack.c.l.b16 %v2783
        %v2869 = vpack.c.b16 %v2848, %v2845
        %v2870 = vpack.c.b16 %v2849, %v2846
        %v2871 = vpack.c.b16 %v2850, %v2847
        %v2872 = vpack.c.b16 %v2854, %v2851
        %v2873 = vpack.c.b16 %v2855, %v2852
        %v2874 = vpack.c.b16 %v2856, %v2853
        %v2875 = vpack.c.b16 %v2860, %v2857
        %v2876 = vpack.c.b16 %v2861, %v2858
        %v2877 = vpack.c.b16 %v2862, %v2859
        %v2878 = vpack.c.b16 %v2866, %v2863
        %v2879 = vpack.c.b16 %v2867, %v2864
        %v2880 = vpack.c.b16 %v2868, %v2865
        %v2925 = vunpack.c.l.b16 %v2785
        %v2926 = vunpack.c.l.b16 %v2786
        %v2927 = vunpack.c.l.b16 %v2787
        %v2928 = vunpack.c.l.b16 %v2788
        %v2929 = vunpack.c.l.b16 %v2789
        %v2930 = vunpack.c.l.b16 %v2790
        %v2931 = vunpack.c.l.b16 %v2791
        %v2932 = vunpack.c.l.b16 %v2792
        %v2933 = vunpack.c.l.b16 %v2793
        %v2934 = vunpack.c.l.b16 %v2794
        %v2935 = vunpack.c.l.b16 %v2795
        %v2936 = vunpack.c.l.b16 %v2796
        %v2937 = vunpack.c.l.b16 %v2797
        %v2938 = vunpack.c.l.b16 %v2798
        %v2939 = vunpack.c.l.b16 %v2799
        %v2940 = vunpack.c.l.b16 %v2800
        %v2941 = vunpack.c.l.b16 %v2801
        %v2942 = vunpack.c.l.b16 %v2802
        %v2943 = vunpack.c.l.b16 %v2803
        %v2944 = vunpack.c.l.b16 %v2804
        %v2945 = vunpack.c.l.b16 %v2805
        %v2946 = vunpack.c.l.b16 %v2806
        %v2947 = vunpack.c.l.b16 %v2807
        %v2948 = vunpack.c.l.b16 %v2808
        %v2949 = vunpack.c.l.b16 %v2809
        %v2950 = vunpack.c.l.b16 %v2810
        %v2951 = vunpack.c.l.b16 %v2811
        %v2952 = vunpack.c.l.b16 %v2812
        %v2953 = vunpack.c.l.b16 %v2813
        %v2954 = vunpack.c.l.b16 %v2814
        %v2955 = vunpack.c.l.b16 %v2815
        %v2956 = vunpack.c.l.b16 %v2816
        %v2957 = vunpack.c.l.b16 %v2817
        %v2958 = vunpack.c.l.b16 %v2818
        %v2959 = vunpack.c.l.b16 %v2819
        %v2960 = vunpack.c.l.b16 %v2820
        %v2961 = vpack.c.b16 %v2926, %v2925
        %v2962 = vpack.c.b16 %v2928, %v2927
        %v2963 = vpack.c.b16 %v2930, %v2929
        %v2964 = vpack.c.b16 %v2932, %v2931
        %v2965 = vpack.c.b16 %v2934, %v2933
        %v2966 = vpack.c.b16 %v2936, %v2935
        %v2967 = vpack.c.b16 %v2938, %v2937
        %v2968 = vpack.c.b16 %v2940, %v2939
        %v2969 = vpack.c.b16 %v2942, %v2941
        %v2970 = vpack.c.b16 %v2944, %v2943
        %v2971 = vpack.c.b16 %v2946, %v2945
        %v2972 = vpack.c.b16 %v2948, %v2947
        %v2973 = vpack.c.b16 %v2950, %v2949
        %v2974 = vpack.c.b16 %v2952, %v2951
        %v2975 = vpack.c.b16 %v2954, %v2953
        %v2976 = vpack.c.b16 %v2956, %v2955
        %v2977 = vpack.c.b16 %v2958, %v2957
        %v2978 = vpack.c.b16 %v2960, %v2959
        %v2998 = vsel %vm269, %v2871, 0
        %v3001 = vsel %vm269, %v2874, 0
        %v3004 = vsel %vm269, %v2877, 0
        %v3007 = vsel %vm269, %v2880, 0
        %3009 = vmatprep.subr.bf16.mxu0 0
        %3010 = vmatpush1.bf16.msra.mxu0 %v2961
        %3011 = vmatprep.subr.bf16.mxu0 0
        %3012 = vmatpush1.bf16.msra.mxu0 %v2962
        %3013 = vmatprep.subr.bf16.mxu0 0
        %3014 = vmatpush1.bf16.msra.mxu0 %v2963
        %3015 = vmatprep.subr.bf16.mxu0 0
        %3016 = vmatpush1.bf16.msra.mxu0 %v2964
        %3017 = vmatprep.subr.bf16.mxu0 0
        %3018 = vmatpush1.bf16.msra.mxu0 %v2965
        %3019 = vmatprep.subr.bf16.mxu0 0
        %3020 = vmatpush1.bf16.msra.mxu0 %v2966
        %3021 = vmatprep.subr.bf16.mxu0 0
        %3022 = vmatpush1.bf16.msra.mxu0 %v2967
        %3023 = vmatprep.subr.bf16.mxu0 0
        %3024 = vmatpush1.bf16.msra.mxu0 %v2968
        %3025 = vmatprep.subr.bf16.mxu0 0
        %3026 = vmatpush1.bf16.msra.mxu0 %v2969
        %3027 = vmatprep.subr.bf16.mxu0 0
        %3028 = vmatpush1.bf16.msra.mxu0 %v2970
        %3029 = vmatprep.subr.bf16.mxu0 0
        %3030 = vmatpush1.bf16.msra.mxu0 %v2971
        %3031 = vmatprep.subr.bf16.mxu0 0
        %3032 = vmatpush1.bf16.msra.mxu0 %v2972
        %3033 = vmatprep.subr.bf16.mxu0 0
        %3034 = vmatpush1.bf16.msra.mxu0 %v2973
        %3035 = vmatprep.subr.bf16.mxu0 0
        %3036 = vmatpush1.bf16.msra.mxu0 %v2974
        %3037 = vmatprep.subr.bf16.mxu0 0
        %3038 = vmatpush1.bf16.msra.mxu0 %v2975
        %3039 = vmatprep.subr.bf16.mxu0 0
        %3040 = vmatpush1.bf16.msra.mxu0 %v2976
        %3041 = vmatprep.mubr.bf16.mxu0 %v2870
        %3042 = vmatmul.mubr.bf16.gmra.mrb[0].mxu0 %v2869
        %v3043 = vpop.f32.mrb[0].mxu0
        %v3044 = vadd.f32 %v2827, %v3043
        %v3045 = vpop.f32.mrb[0].mxu0
        %v3046 = vpop.f32.mrb[0].mxu0
        %v3047 = vadd.f32 %v2827, %v3046
        %v3048 = vpop.f32.mrb[0].mxu0
        %3049 = vmatprep.mubr.bf16.mxu0 %v2873
        %3050 = vmatmul.mubr.bf16.gmra.mrb[0].mxu0 %v2872
        %v3051 = vpop.f32.mrb[0].mxu0
        %v3052 = vadd.f32 %v2827, %v3051
        %v3053 = vpop.f32.mrb[0].mxu0
        %v3054 = vpop.f32.mrb[0].mxu0
        %v3055 = vadd.f32 %v2827, %v3054
        %v3056 = vpop.f32.mrb[0].mxu0
        %3057 = vmatprep.mubr.bf16.mxu0 %v2876
        %3058 = vmatmul.mubr.bf16.gmra.mrb[0].mxu0 %v2875
        %v3059 = vpop.f32.mrb[0].mxu0
        %v3060 = vadd.f32 %v2827, %v3059
        %v3061 = vpop.f32.mrb[0].mxu0
        %v3062 = vpop.f32.mrb[0].mxu0
        %v3063 = vadd.f32 %v2827, %v3062
        %v3064 = vpop.f32.mrb[0].mxu0
        %3065 = vmatprep.mubr.bf16.mxu0 %v2879
        %3066 = vmatmul.mubr.bf16.gmra.mrb[0].mxu0 %v2878
        %v3067 = vpop.f32.mrb[0].mxu0
        %v3068 = vadd.f32 %v2827, %v3067
        %v3069 = vpop.f32.mrb[0].mxu0
        %v3070 = vpop.f32.mrb[0].mxu0
        %v3071 = vadd.f32 %v2827, %v3070
        %v3072 = vpop.f32.mrb[0].mxu0
        %3073 = vdwg.mxu0
        %3074 = vmatprep.subr.bf16.mxu0 0
        %3075 = vmatpush1.bf16.msra.mxu0 %v2977
        %3076 = vmatprep.subr.bf16.mxu0 0
        %3077 = vmatpush1.bf16.msra.mxu0 %v2978
        %3078 = vmatprep.subr.bf16.mxu0 0
        %3079 = vmatpush1.bf16.msra.mxu0 0
        %3080 = vmatprep.subr.bf16.mxu0 0
        %3081 = vmatpush1.bf16.msra.mxu0 0
        %3082 = vmatprep.subr.bf16.mxu0 0
        %3083 = vmatpush1.bf16.msra.mxu0 0
        %3084 = vmatprep.subr.bf16.mxu0 0
        %3085 = vmatpush1.bf16.msra.mxu0 0
        %3086 = vmatprep.subr.bf16.mxu0 0
        %3087 = vmatpush1.bf16.msra.mxu0 0
        %3088 = vmatprep.subr.bf16.mxu0 0
        %3089 = vmatpush1.bf16.msra.mxu0 0
        %3090 = vmatprep.subr.bf16.mxu0 0
        %3091 = vmatpush1.bf16.msra.mxu0 0
        %3092 = vmatprep.subr.bf16.mxu0 0
        %3093 = vmatpush1.bf16.msra.mxu0 0
        %3094 = vmatprep.subr.bf16.mxu0 0
        %3095 = vmatpush1.bf16.msra.mxu0 0
        %3096 = vmatprep.subr.bf16.mxu0 0
        %3097 = vmatpush1.bf16.msra.mxu0 0
        %3098 = vmatprep.subr.bf16.mxu0 0
        %3099 = vmatpush1.bf16.msra.mxu0 0
        %3100 = vmatprep.subr.bf16.mxu0 0
        %3101 = vmatpush1.bf16.msra.mxu0 0
        %3102 = vmatprep.subr.bf16.mxu0 0
        %3103 = vmatpush1.bf16.msra.mxu0 0
        %3104 = vmatprep.subr.bf16.mxu0 0
        %3105 = vmatpush1.bf16.msra.mxu0 0
        %3106 = vmatprep.mubr.bf16.mxu0 0
        %3107 = vmatmul.mubr.bf16.gmra.mrb[0].mxu0 %v2998
        %v3108 = vpop.f32.mrb[0].mxu0
        %v3109 = vadd.f32 %v3044, %v3108
        %v3110 = vpop.f32.mrb[0].mxu0
        %v3111 = vpop.f32.mrb[0].mxu0
        %v3112 = vadd.f32 %v3047, %v3111
        %v3113 = vpop.f32.mrb[0].mxu0
        %3114 = vmatprep.mubr.bf16.mxu0 0
        %3115 = vmatmul.mubr.bf16.gmra.mrb[0].mxu0 %v3001
        %v3116 = vpop.f32.mrb[0].mxu0
        %v3117 = vadd.f32 %v3052, %v3116
        %v3118 = vpop.f32.mrb[0].mxu0
        %v3119 = vpop.f32.mrb[0].mxu0
        %v3120 = vadd.f32 %v3055, %v3119
        %v3121 = vpop.f32.mrb[0].mxu0
        %3122 = vmatprep.mubr.bf16.mxu0 0
        %3123 = vmatmul.mubr.bf16.gmra.mrb[0].mxu0 %v3004
        %v3124 = vpop.f32.mrb[0].mxu0
        %v3125 = vadd.f32 %v3060, %v3124
        %v3126 = vpop.f32.mrb[0].mxu0
        %v3127 = vpop.f32.mrb[0].mxu0
        %v3128 = vadd.f32 %v3063, %v3127
        %v3129 = vpop.f32.mrb[0].mxu0
        %3130 = vmatprep.mubr.bf16.mxu0 0
        %3131 = vmatmul.mubr.bf16.gmra.mrb[0].mxu0 %v3007
        %v3132 = vpop.f32.mrb[0].mxu0
        %v3133 = vadd.f32 %v3068, %v3132
        %v3134 = vpop.f32.mrb[0].mxu0
        %v3135 = vpop.f32.mrb[0].mxu0
        %v3136 = vadd.f32 %v3071, %v3135
        %v3137 = vpop.f32.mrb[0].mxu0
        %3138 = vdwg.mxu0
        %v3139 = vmax.f32 %v3109, 0.0
        %v3140 = vmax.f32 %v3112, 0.0
        %v3141 = vmax.f32 %v3117, 0.0
        %v3142 = vmax.f32 %v3120, 0.0
        %v3143 = vmax.f32 %v3125, 0.0
        %v3144 = vmax.f32 %v3128, 0.0
        %v3145 = vmax.f32 %v3133, 0.0
        %v3146 = vmax.f32 %v3136, 0.0
        %v3147 = vpack.c.bf16 %v3139, %v3139
        %v3148 = vpack.c.bf16 %v3140, %v3140
        %v3149 = vpack.c.bf16 %v3141, %v3141
        %v3150 = vpack.c.bf16 %v3142, %v3142
        %v3151 = vpack.c.bf16 %v3143, %v3143
        %v3152 = vpack.c.bf16 %v3144, %v3144
        %v3153 = vpack.c.bf16 %v3145, %v3145
        %v3154 = vpack.c.bf16 %v3146, %v3146
        %v3163 = vunpack.c.l.b16 %v3147
        %v3164 = vunpack.c.l.b16 %v3148
        %v3165 = vunpack.c.l.b16 %v3149
        %v3166 = vunpack.c.l.b16 %v3150
        %v3167 = vunpack.c.l.b16 %v3151
        %v3168 = vunpack.c.l.b16 %v3152
        %v3169 = vunpack.c.l.b16 %v3153
        %v3170 = vunpack.c.l.b16 %v3154
        %v3171 = vpack.c.b16 %v3163, %v3163
        %v3172 = vpack.c.b16 %v3164, %v3164
        %v3173 = vpack.c.b16 %v3165, %v3165
        %v3174 = vpack.c.b16 %v3166, %v3166
        %v3175 = vpack.c.b16 %v3167, %v3167
        %v3176 = vpack.c.b16 %v3168, %v3168
        %v3177 = vpack.c.b16 %v3169, %v3169
        %v3178 = vpack.c.b16 %v3170, %v3170
        %v3180 = vshrl.u32 %v3171, 16
        %v3182 = vrot.slane %v3180, 7
        %v3183 = vshll.u32 %v3171, 16
        %v3185 = vor.u32 %v3182, %v3183
        %v3186 = vrot.slane %v3182, 4
        %v3188 = vshrl.u32 %v3172, 16
        %v3190 = vrot.slane %v3188, 7
        %v3191 = vshll.u32 %v3172, 16
        %v3193 = vor.u32 %v3190, %v3191
        %v3194 = vrot.slane %v3190, 4
        %v3196 = vshrl.u32 %v3173, 16
        %v3198 = vrot.slane %v3196, 7
        %v3199 = vshll.u32 %v3173, 16
        %v3201 = vor.u32 %v3198, %v3199
        %v3202 = vrot.slane %v3198, 4
        %v3204 = vshrl.u32 %v3174, 16
        %v3206 = vrot.slane %v3204, 7
        %v3207 = vshll.u32 %v3174, 16
        %v3209 = vor.u32 %v3206, %v3207
        %v3210 = vrot.slane %v3206, 4
        %v3212 = vshrl.u32 %v3175, 16
        %v3214 = vrot.slane %v3212, 7
        %v3215 = vshll.u32 %v3175, 16
        %v3217 = vor.u32 %v3214, %v3215
        %v3218 = vrot.slane %v3214, 4
        %v3220 = vshrl.u32 %v3176, 16
        %v3222 = vrot.slane %v3220, 7
        %v3223 = vshll.u32 %v3176, 16
        %v3225 = vor.u32 %v3222, %v3223
        %v3226 = vrot.slane %v3222, 4
        %v3228 = vshrl.u32 %v3177, 16
        %v3230 = vrot.slane %v3228, 7
        %v3231 = vshll.u32 %v3177, 16
        %v3233 = vor.u32 %v3230, %v3231
        %v3234 = vrot.slane %v3230, 4
        %v3236 = vshrl.u32 %v3178, 16
        %v3238 = vrot.slane %v3236, 7
        %v3239 = vshll.u32 %v3178, 16
        %v3241 = vor.u32 %v3238, %v3239
        %v3242 = vrot.slane %v3238, 4
        %v3259 = vld [vmem:[%s285] sm:$0xf]
        %v3260 = vsel %vm476, %v3185, %v3259
        %3261 = vst [vmem:[%s285] sm:$0xf] %v3260
        %v3262 = vld [vmem:[%s285 + $0x4] sm:$0x1]
        %v3263 = vsel %vm288, %v3186, %v3262
        %3264 = vst [vmem:[%s285 + $0x4] sm:$0x1] %v3263
        %v3265 = vld [vmem:[%s285 + $0x8] sm:$0xf]
        %v3266 = vsel %vm476, %v3193, %v3265
        %3267 = vst [vmem:[%s285 + $0x8] sm:$0xf] %v3266
        %v3268 = vld [vmem:[%s285 + $0xc] sm:$0x1]
        %v3269 = vsel %vm288, %v3194, %v3268
        %3270 = vst [vmem:[%s285 + $0xc] sm:$0x1] %v3269
        %v3271 = vld [vmem:[%s285 + $0x10] sm:$0xf]
        %v3272 = vsel %vm476, %v3201, %v3271
        %3273 = vst [vmem:[%s285 + $0x10] sm:$0xf] %v3272
        %v3274 = vld [vmem:[%s285 + $0x14] sm:$0x1]
        %v3275 = vsel %vm288, %v3202, %v3274
        %3276 = vst [vmem:[%s285 + $0x14] sm:$0x1] %v3275
        %v3277 = vld [vmem:[%s285 + $0x18] sm:$0xf]
        %v3278 = vsel %vm476, %v3209, %v3277
        %3279 = vst [vmem:[%s285 + $0x18] sm:$0xf] %v3278
        %v3280 = vld [vmem:[%s285 + $0x1c] sm:$0x1]
        %v3281 = vsel %vm288, %v3210, %v3280
        %3282 = vst [vmem:[%s285 + $0x1c] sm:$0x1] %v3281
        %v3283 = vld [vmem:[%s285 + $0x20] sm:$0xf]
        %v3284 = vsel %vm476, %v3217, %v3283
        %3285 = vst [vmem:[%s285 + $0x20] sm:$0xf] %v3284
        %v3286 = vld [vmem:[%s285 + $0x24] sm:$0x1]
        %v3287 = vsel %vm288, %v3218, %v3286
        %3288 = vst [vmem:[%s285 + $0x24] sm:$0x1] %v3287
        %v3289 = vld [vmem:[%s285 + $0x28] sm:$0xf]
        %v3290 = vsel %vm476, %v3225, %v3289
        %3291 = vst [vmem:[%s285 + $0x28] sm:$0xf] %v3290
        %v3292 = vld [vmem:[%s285 + $0x2c] sm:$0x1]
        %v3293 = vsel %vm288, %v3226, %v3292
        %3294 = vst [vmem:[%s285 + $0x2c] sm:$0x1] %v3293
        %v3295 = vld [vmem:[%s285 + $0x30] sm:$0xf]
        %v3296 = vsel %vm476, %v3233, %v3295
        %3297 = vst [vmem:[%s285 + $0x30] sm:$0xf] %v3296
        %v3298 = vld [vmem:[%s285 + $0x34] sm:$0x1]
        %v3299 = vsel %vm288, %v3234, %v3298
        %3300 = vst [vmem:[%s285 + $0x34] sm:$0x1] %v3299
        %v3301 = vld [vmem:[%s285 + $0x38] sm:$0xf]
        %v3302 = vsel %vm476, %v3241, %v3301
        %3303 = vst [vmem:[%s285 + $0x38] sm:$0xf] %v3302
        %v3304 = vld [vmem:[%s285 + $0x3c] sm:$0x1]
        %v3305 = vsel %vm288, %v3242, %v3304
        %3306 = vst [vmem:[%s285 + $0x3c] sm:$0x1] %v3305
        %v3307 = vld [vmem:[#allocation2] sm:$0xf]
        %v3308 = vld [vmem:[#allocation2 + $0x8] sm:$0xf]
        %v3309 = vld [vmem:[#allocation2 + $0x10] sm:$0xf]
        %v3310 = vld [vmem:[#allocation2 + $0x18] sm:$0xf]
        %v3311 = vld [vmem:[#allocation2 + $0x20] sm:$0xf]
        %v3312 = vld [vmem:[#allocation2 + $0x28] sm:$0xf]
        %v3313 = vld [vmem:[#allocation2 + $0x30] sm:$0xf]
        %v3314 = vld [vmem:[#allocation2 + $0x38] sm:$0xf]
        %3315 = vst.msk [vmem:[#allocation3] sm:$0xf] %vm278, %v3307
        %3316 = vst.msk [vmem:[#allocation3 + $0xc] sm:$0xf] %vm278, %v3308
        %3317 = vst.msk [vmem:[#allocation3 + $0x18] sm:$0xf] %vm278, %v3309
        %3318 = vst.msk [vmem:[#allocation3 + $0x24] sm:$0xf] %vm278, %v3310
        %3319 = vst.msk [vmem:[#allocation3 + $0x30] sm:$0xf] %vm278, %v3311
        %3320 = vst.msk [vmem:[#allocation3 + $0x3c] sm:$0xf] %vm278, %v3312
        %3321 = vst.msk [vmem:[#allocation3 + $0x48] sm:$0xf] %vm278, %v3313
        %3322 = vst.msk [vmem:[#allocation3 + $0x54] sm:$0xf] %vm278, %v3314
        %v3323 = vld [vmem:[#allocation2] sm:$0xf]
        %v3324 = vld [vmem:[#allocation2 + $0x4] sm:$0x1]
        %v3325 = vld [vmem:[#allocation2 + $0x8] sm:$0xf]
        %v3326 = vld [vmem:[#allocation2 + $0xc] sm:$0x1]
        %v3327 = vld [vmem:[#allocation2 + $0x10] sm:$0xf]
        %v3328 = vld [vmem:[#allocation2 + $0x14] sm:$0x1]
        %v3329 = vld [vmem:[#allocation2 + $0x18] sm:$0xf]
        %v3330 = vld [vmem:[#allocation2 + $0x1c] sm:$0x1]
        %v3331 = vld [vmem:[#allocation2 + $0x20] sm:$0xf]
        %v3332 = vld [vmem:[#allocation2 + $0x24] sm:$0x1]
        %v3333 = vld [vmem:[#allocation2 + $0x28] sm:$0xf]
        %v3334 = vld [vmem:[#allocation2 + $0x2c] sm:$0x1]
        %v3335 = vld [vmem:[#allocation2 + $0x30] sm:$0xf]
        %v3336 = vld [vmem:[#allocation2 + $0x34] sm:$0x1]
        %v3337 = vld [vmem:[#allocation2 + $0x38] sm:$0xf]
        %v3338 = vld [vmem:[#allocation2 + $0x3c] sm:$0x1]
        %v3340 = vshrl.u32 %v3323, 16
        %v3342 = vrot.slane %v3340, 4
        %v3343 = vshll.u32 %v3323, 16
        %v3345 = vrot.slane %v3343, 5
        %v3346 = vor.u32 %v3342, %v3345
        %v3347 = vrot.slane %v3346, 4
        %v3349 = vshll.u32 %v3324, 16
        %v3351 = vrot.slane %v3349, 5
        %v3352 = vsel %vm559, %v3347, %v3351
        %v3354 = vshrl.u32 %v3325, 16
        %v3356 = vrot.slane %v3354, 4
        %v3357 = vshll.u32 %v3325, 16
        %v3359 = vrot.slane %v3357, 5
        %v3360 = vor.u32 %v3356, %v3359
        %v3361 = vrot.slane %v3360, 4
        %v3363 = vshll.u32 %v3326, 16
        %v3365 = vrot.slane %v3363, 5
        %v3366 = vsel %vm559, %v3361, %v3365
        %v3368 = vshrl.u32 %v3327, 16
        %v3370 = vrot.slane %v3368, 4
        %v3371 = vshll.u32 %v3327, 16
        %v3373 = vrot.slane %v3371, 5
        %v3374 = vor.u32 %v3370, %v3373
        %v3375 = vrot.slane %v3374, 4
        %v3377 = vshll.u32 %v3328, 16
        %v3379 = vrot.slane %v3377, 5
        %v3380 = vsel %vm559, %v3375, %v3379
        %v3382 = vshrl.u32 %v3329, 16
        %v3384 = vrot.slane %v3382, 4
        %v3385 = vshll.u32 %v3329, 16
        %v3387 = vrot.slane %v3385, 5
        %v3388 = vor.u32 %v3384, %v3387
        %v3389 = vrot.slane %v3388, 4
        %v3391 = vshll.u32 %v3330, 16
        %v3393 = vrot.slane %v3391, 5
        %v3394 = vsel %vm559, %v3389, %v3393
        %v3396 = vshrl.u32 %v3331, 16
        %v3398 = vrot.slane %v3396, 4
        %v3399 = vshll.u32 %v3331, 16
        %v3401 = vrot.slane %v3399, 5
        %v3402 = vor.u32 %v3398, %v3401
        %v3403 = vrot.slane %v3402, 4
        %v3405 = vshll.u32 %v3332, 16
        %v3407 = vrot.slane %v3405, 5
        %v3408 = vsel %vm559, %v3403, %v3407
        %v3410 = vshrl.u32 %v3333, 16
        %v3412 = vrot.slane %v3410, 4
        %v3413 = vshll.u32 %v3333, 16
        %v3415 = vrot.slane %v3413, 5
        %v3416 = vor.u32 %v3412, %v3415
        %v3417 = vrot.slane %v3416, 4
        %v3419 = vshll.u32 %v3334, 16
        %v3421 = vrot.slane %v3419, 5
        %v3422 = vsel %vm559, %v3417, %v3421
        %v3424 = vshrl.u32 %v3335, 16
        %v3426 = vrot.slane %v3424, 4
        %v3427 = vshll.u32 %v3335, 16
        %v3429 = vrot.slane %v3427, 5
        %v3430 = vor.u32 %v3426, %v3429
        %v3431 = vrot.slane %v3430, 4
        %v3433 = vshll.u32 %v3336, 16
        %v3435 = vrot.slane %v3433, 5
        %v3436 = vsel %vm559, %v3431, %v3435
        %v3438 = vshrl.u32 %v3337, 16
        %v3440 = vrot.slane %v3438, 4
        %v3441 = vshll.u32 %v3337, 16
        %v3443 = vrot.slane %v3441, 5
        %v3444 = vor.u32 %v3440, %v3443
        %v3445 = vrot.slane %v3444, 4
        %v3447 = vshll.u32 %v3338, 16
        %v3449 = vrot.slane %v3447, 5
        %v3450 = vsel %vm559, %v3445, %v3449
        %3451 = vrot.lane.b32.xlu0 %v3352, 32
        %v3452 = vpop.permute.xlu0 %3451
        %3453 = vrot.lane.b32.xlu0 %v3366, 32
        %v3454 = vpop.permute.xlu0 %3453
        %3455 = vrot.lane.b32.xlu0 %v3380, 32
        %v3456 = vpop.permute.xlu0 %3455
        %3457 = vrot.lane.b32.xlu0 %v3394, 32
        %v3458 = vpop.permute.xlu0 %3457
        %3459 = vrot.lane.b32.xlu0 %v3408, 32
        %v3460 = vpop.permute.xlu0 %3459
        %3461 = vrot.lane.b32.xlu0 %v3422, 32
        %v3462 = vpop.permute.xlu0 %3461
        %3463 = vrot.lane.b32.xlu0 %v3436, 32
        %v3464 = vpop.permute.xlu0 %3463
        %3465 = vrot.lane.b32.xlu0 %v3450, 32
        %v3466 = vpop.permute.xlu0 %3465
        %3475 = vst.msk [vmem:[#allocation3] sm:$0xf] %vm696, %v3452
        %3476 = vst.msk [vmem:[#allocation3 + $0xc] sm:$0xf] %vm696, %v3454
        %3477 = vst.msk [vmem:[#allocation3 + $0x18] sm:$0xf] %vm696, %v3456
        %3478 = vst.msk [vmem:[#allocation3 + $0x24] sm:$0xf] %vm696, %v3458
        %3479 = vst.msk [vmem:[#allocation3 + $0x30] sm:$0xf] %vm696, %v3460
        %3480 = vst.msk [vmem:[#allocation3 + $0x3c] sm:$0xf] %vm696, %v3462
        %3481 = vst.msk [vmem:[#allocation3 + $0x48] sm:$0xf] %vm696, %v3464
        %3482 = vst.msk [vmem:[#allocation3 + $0x54] sm:$0xf] %vm696, %v3466
        %v3483 = vld [vmem:[#allocation2] sm:$0xe]
        %v3484 = vld [vmem:[#allocation2 + $0x4] sm:$0x1]
        %v3485 = vld [vmem:[#allocation2 + $0x8] sm:$0xe]
        %v3486 = vld [vmem:[#allocation2 + $0xc] sm:$0x1]
        %v3487 = vld [vmem:[#allocation2 + $0x10] sm:$0xe]
        %v3488 = vld [vmem:[#allocation2 + $0x14] sm:$0x1]
        %v3489 = vld [vmem:[#allocation2 + $0x18] sm:$0xe]
        %v3490 = vld [vmem:[#allocation2 + $0x1c] sm:$0x1]
        %v3491 = vld [vmem:[#allocation2 + $0x20] sm:$0xe]
        %v3492 = vld [vmem:[#allocation2 + $0x24] sm:$0x1]
        %v3493 = vld [vmem:[#allocation2 + $0x28] sm:$0xe]
        %v3494 = vld [vmem:[#allocation2 + $0x2c] sm:$0x1]
        %v3495 = vld [vmem:[#allocation2 + $0x30] sm:$0xe]
        %v3496 = vld [vmem:[#allocation2 + $0x34] sm:$0x1]
        %v3497 = vld [vmem:[#allocation2 + $0x38] sm:$0xe]
        %v3498 = vld [vmem:[#allocation2 + $0x3c] sm:$0x1]
        %v3515 = vrot.slane %v3483, 5
        %v3516 = vrot.slane %v3515, 4
        %v3517 = vrot.slane %v3484, 5
        %v3518 = vsel %vm739, %v3516, %v3517
        %v3519 = vrot.slane %v3485, 5
        %v3520 = vrot.slane %v3519, 4
        %v3521 = vrot.slane %v3486, 5
        %v3522 = vsel %vm739, %v3520, %v3521
        %v3523 = vrot.slane %v3487, 5
        %v3524 = vrot.slane %v3523, 4
        %v3525 = vrot.slane %v3488, 5
        %v3526 = vsel %vm739, %v3524, %v3525
        %v3527 = vrot.slane %v3489, 5
        %v3528 = vrot.slane %v3527, 4
        %v3529 = vrot.slane %v3490, 5
        %v3530 = vsel %vm739, %v3528, %v3529
        %v3531 = vrot.slane %v3491, 5
        %v3532 = vrot.slane %v3531, 4
        %v3533 = vrot.slane %v3492, 5
        %v3534 = vsel %vm739, %v3532, %v3533
        %v3535 = vrot.slane %v3493, 5
        %v3536 = vrot.slane %v3535, 4
        %v3537 = vrot.slane %v3494, 5
        %v3538 = vsel %vm739, %v3536, %v3537
        %v3539 = vrot.slane %v3495, 5
        %v3540 = vrot.slane %v3539, 4
        %v3541 = vrot.slane %v3496, 5
        %v3542 = vsel %vm739, %v3540, %v3541
        %v3543 = vrot.slane %v3497, 5
        %v3544 = vrot.slane %v3543, 4
        %v3545 = vrot.slane %v3498, 5
        %v3546 = vsel %vm739, %v3544, %v3545
        %3547 = vrot.lane.b32.xlu0 %v3518, 64
        %v3548 = vpop.permute.xlu0 %3547
        %3549 = vrot.lane.b32.xlu0 %v3522, 64
        %v3550 = vpop.permute.xlu0 %3549
        %3551 = vrot.lane.b32.xlu0 %v3526, 64
        %v3552 = vpop.permute.xlu0 %3551
        %3553 = vrot.lane.b32.xlu0 %v3530, 64
        %v3554 = vpop.permute.xlu0 %3553
        %3555 = vrot.lane.b32.xlu0 %v3534, 64
        %v3556 = vpop.permute.xlu0 %3555
        %3557 = vrot.lane.b32.xlu0 %v3538, 64
        %v3558 = vpop.permute.xlu0 %3557
        %3559 = vrot.lane.b32.xlu0 %v3542, 64
        %v3560 = vpop.permute.xlu0 %3559
        %3561 = vrot.lane.b32.xlu0 %v3546, 64
        %v3562 = vpop.permute.xlu0 %3561
        %3571 = vst.msk [vmem:[#allocation3] sm:$0xf] %vm796, %v3548
        %3572 = vst.msk [vmem:[#allocation3 + $0xc] sm:$0xf] %vm796, %v3550
        %3573 = vst.msk [vmem:[#allocation3 + $0x18] sm:$0xf] %vm796, %v3552
        %3574 = vst.msk [vmem:[#allocation3 + $0x24] sm:$0xf] %vm796, %v3554
        %3575 = vst.msk [vmem:[#allocation3 + $0x30] sm:$0xf] %vm796, %v3556
        %3576 = vst.msk [vmem:[#allocation3 + $0x3c] sm:$0xf] %vm796, %v3558
        %3577 = vst.msk [vmem:[#allocation3 + $0x48] sm:$0xf] %vm796, %v3560
        %3578 = vst.msk [vmem:[#allocation3 + $0x54] sm:$0xf] %vm796, %v3562
        %v3579 = vld [vmem:[%s285] sm:$0xf]
        %v3580 = vld [vmem:[%s285 + $0x8] sm:$0xf]
        %v3581 = vld [vmem:[%s285 + $0x10] sm:$0xf]
        %v3582 = vld [vmem:[%s285 + $0x18] sm:$0xf]
        %v3583 = vld [vmem:[%s285 + $0x20] sm:$0xf]
        %v3584 = vld [vmem:[%s285 + $0x28] sm:$0xf]
        %v3585 = vld [vmem:[%s285 + $0x30] sm:$0xf]
        %v3586 = vld [vmem:[%s285 + $0x38] sm:$0xf]
        %3595 = vrot.lane.b32.xlu0 %v3579, 96
        %v3596 = vpop.permute.xlu0 %3595
        %3597 = vrot.lane.b32.xlu0 %v3580, 96
        %v3598 = vpop.permute.xlu0 %3597
        %3599 = vrot.lane.b32.xlu0 %v3581, 96
        %v3600 = vpop.permute.xlu0 %3599
        %3601 = vrot.lane.b32.xlu0 %v3582, 96
        %v3602 = vpop.permute.xlu0 %3601
        %3603 = vrot.lane.b32.xlu0 %v3583, 96
        %v3604 = vpop.permute.xlu0 %3603
        %3605 = vrot.lane.b32.xlu0 %v3584, 96
        %v3606 = vpop.permute.xlu0 %3605
        %3607 = vrot.lane.b32.xlu0 %v3585, 96
        %v3608 = vpop.permute.xlu0 %3607
        %3609 = vrot.lane.b32.xlu0 %v3586, 96
        %v3610 = vpop.permute.xlu0 %3609
        %3619 = vst.msk [vmem:[#allocation3] sm:$0xf] %vm845, %v3596
        %3620 = vst.msk [vmem:[#allocation3 + $0xc] sm:$0xf] %vm845, %v3598
        %3621 = vst.msk [vmem:[#allocation3 + $0x18] sm:$0xf] %vm845, %v3600
        %3622 = vst.msk [vmem:[#allocation3 + $0x24] sm:$0xf] %vm845, %v3602
        %3623 = vst.msk [vmem:[#allocation3 + $0x30] sm:$0xf] %vm845, %v3604
        %3624 = vst.msk [vmem:[#allocation3 + $0x3c] sm:$0xf] %vm845, %v3606
        %3625 = vst.msk [vmem:[#allocation3 + $0x48] sm:$0xf] %vm845, %v3608
        %3626 = vst.msk [vmem:[#allocation3 + $0x54] sm:$0xf] %vm845, %v3610
        %v3627 = vld [vmem:[%s285] sm:$0xf]
        %v3628 = vld [vmem:[%s285 + $0x4] sm:$0x1]
        %v3629 = vld [vmem:[%s285 + $0x8] sm:$0xf]
        %v3630 = vld [vmem:[%s285 + $0xc] sm:$0x1]
        %v3631 = vld [vmem:[%s285 + $0x10] sm:$0xf]
        %v3632 = vld [vmem:[%s285 + $0x14] sm:$0x1]
        %v3633 = vld [vmem:[%s285 + $0x18] sm:$0xf]
        %v3634 = vld [vmem:[%s285 + $0x1c] sm:$0x1]
        %v3635 = vld [vmem:[%s285 + $0x20] sm:$0xf]
        %v3636 = vld [vmem:[%s285 + $0x24] sm:$0x1]
        %v3637 = vld [vmem:[%s285 + $0x28] sm:$0xf]
        %v3638 = vld [vmem:[%s285 + $0x2c] sm:$0x1]
        %v3639 = vld [vmem:[%s285 + $0x30] sm:$0xf]
        %v3640 = vld [vmem:[%s285 + $0x34] sm:$0x1]
        %v3641 = vld [vmem:[%s285 + $0x38] sm:$0xf]
        %v3642 = vld [vmem:[%s285 + $0x3c] sm:$0x1]
        %v3644 = vshrl.u32 %v3627, 16
        %v3646 = vrot.slane %v3644, 4
        %v3647 = vshll.u32 %v3627, 16
        %v3649 = vrot.slane %v3647, 5
        %v3650 = vor.u32 %v3646, %v3649
        %v3651 = vrot.slane %v3650, 4
        %v3653 = vshll.u32 %v3628, 16
        %v3655 = vrot.slane %v3653, 5
        %v3656 = vsel %vm559, %v3651, %v3655
        %v3658 = vshrl.u32 %v3629, 16
        %v3660 = vrot.slane %v3658, 4
        %v3661 = vshll.u32 %v3629, 16
        %v3663 = vrot.slane %v3661, 5
        %v3664 = vor.u32 %v3660, %v3663
        %v3665 = vrot.slane %v3664, 4
        %v3667 = vshll.u32 %v3630, 16
        %v3669 = vrot.slane %v3667, 5
        %v3670 = vsel %vm559, %v3665, %v3669
        %v3672 = vshrl.u32 %v3631, 16
        %v3674 = vrot.slane %v3672, 4
        %v3675 = vshll.u32 %v3631, 16
        %v3677 = vrot.slane %v3675, 5
        %v3678 = vor.u32 %v3674, %v3677
        %v3679 = vrot.slane %v3678, 4
        %v3681 = vshll.u32 %v3632, 16
        %v3683 = vrot.slane %v3681, 5
        %v3684 = vsel %vm559, %v3679, %v3683
        %v3686 = vshrl.u32 %v3633, 16
        %v3688 = vrot.slane %v3686, 4
        %v3689 = vshll.u32 %v3633, 16
        %v3691 = vrot.slane %v3689, 5
        %v3692 = vor.u32 %v3688, %v3691
        %v3693 = vrot.slane %v3692, 4
        %v3695 = vshll.u32 %v3634, 16
        %v3697 = vrot.slane %v3695, 5
        %v3698 = vsel %vm559, %v3693, %v3697
        %v3700 = vshrl.u32 %v3635, 16
        %v3702 = vrot.slane %v3700, 4
        %v3703 = vshll.u32 %v3635, 16
        %v3705 = vrot.slane %v3703, 5
        %v3706 = vor.u32 %v3702, %v3705
        %v3707 = vrot.slane %v3706, 4
        %v3709 = vshll.u32 %v3636, 16
        %v3711 = vrot.slane %v3709, 5
        %v3712 = vsel %vm559, %v3707, %v3711
        %v3714 = vshrl.u32 %v3637, 16
        %v3716 = vrot.slane %v3714, 4
        %v3717 = vshll.u32 %v3637, 16
        %v3719 = vrot.slane %v3717, 5
        %v3720 = vor.u32 %v3716, %v3719
        %v3721 = vrot.slane %v3720, 4
        %v3723 = vshll.u32 %v3638, 16
        %v3725 = vrot.slane %v3723, 5
        %v3726 = vsel %vm559, %v3721, %v3725
        %v3728 = vshrl.u32 %v3639, 16
        %v3730 = vrot.slane %v3728, 4
        %v3731 = vshll.u32 %v3639, 16
        %v3733 = vrot.slane %v3731, 5
        %v3734 = vor.u32 %v3730, %v3733
        %v3735 = vrot.slane %v3734, 4
        %v3737 = vshll.u32 %v3640, 16
        %v3739 = vrot.slane %v3737, 5
        %v3740 = vsel %vm559, %v3735, %v3739
        %v3742 = vshrl.u32 %v3641, 16
        %v3744 = vrot.slane %v3742, 4
        %v3745 = vshll.u32 %v3641, 16
        %v3747 = vrot.slane %v3745, 5
        %v3748 = vor.u32 %v3744, %v3747
        %v3749 = vrot.slane %v3748, 4
        %v3751 = vshll.u32 %v3642, 16
        %v3753 = vrot.slane %v3751, 5
        %v3754 = vsel %vm559, %v3749, %v3753
        %3763 = vst.msk [vmem:[#allocation3 + $0x4] sm:$0xf] %vm278, %v3656
        %3764 = vst.msk [vmem:[#allocation3 + $0x10] sm:$0xf] %vm278, %v3670
        %3765 = vst.msk [vmem:[#allocation3 + $0x1c] sm:$0xf] %vm278, %v3684
        %3766 = vst.msk [vmem:[#allocation3 + $0x28] sm:$0xf] %vm278, %v3698
        %3767 = vst.msk [vmem:[#allocation3 + $0x34] sm:$0xf] %vm278, %v3712
        %3768 = vst.msk [vmem:[#allocation3 + $0x40] sm:$0xf] %vm278, %v3726
        %3769 = vst.msk [vmem:[#allocation3 + $0x4c] sm:$0xf] %vm278, %v3740
        %3770 = vst.msk [vmem:[#allocation3 + $0x58] sm:$0xf] %vm278, %v3754
        %v3771 = vld [vmem:[%s285] sm:$0xe]
        %v3772 = vld [vmem:[%s285 + $0x4] sm:$0x1]
        %v3773 = vld [vmem:[%s285 + $0x8] sm:$0xe]
        %v3774 = vld [vmem:[%s285 + $0xc] sm:$0x1]
        %v3775 = vld [vmem:[%s285 + $0x10] sm:$0xe]
        %v3776 = vld [vmem:[%s285 + $0x14] sm:$0x1]
        %v3777 = vld [vmem:[%s285 + $0x18] sm:$0xe]
        %v3778 = vld [vmem:[%s285 + $0x1c] sm:$0x1]
        %v3779 = vld [vmem:[%s285 + $0x20] sm:$0xe]
        %v3780 = vld [vmem:[%s285 + $0x24] sm:$0x1]
        %v3781 = vld [vmem:[%s285 + $0x28] sm:$0xe]
        %v3782 = vld [vmem:[%s285 + $0x2c] sm:$0x1]
        %v3783 = vld [vmem:[%s285 + $0x30] sm:$0xe]
        %v3784 = vld [vmem:[%s285 + $0x34] sm:$0x1]
        %v3785 = vld [vmem:[%s285 + $0x38] sm:$0xe]
        %v3786 = vld [vmem:[%s285 + $0x3c] sm:$0x1]
        %v3803 = vrot.slane %v3771, 5
        %v3804 = vrot.slane %v3803, 4
        %v3805 = vrot.slane %v3772, 5
        %v3806 = vsel %vm739, %v3804, %v3805
        %v3807 = vrot.slane %v3773, 5
        %v3808 = vrot.slane %v3807, 4
        %v3809 = vrot.slane %v3774, 5
        %v3810 = vsel %vm739, %v3808, %v3809
        %v3811 = vrot.slane %v3775, 5
        %v3812 = vrot.slane %v3811, 4
        %v3813 = vrot.slane %v3776, 5
        %v3814 = vsel %vm739, %v3812, %v3813
        %v3815 = vrot.slane %v3777, 5
        %v3816 = vrot.slane %v3815, 4
        %v3817 = vrot.slane %v3778, 5
        %v3818 = vsel %vm739, %v3816, %v3817
        %v3819 = vrot.slane %v3779, 5
        %v3820 = vrot.slane %v3819, 4
        %v3821 = vrot.slane %v3780, 5
        %v3822 = vsel %vm739, %v3820, %v3821
        %v3823 = vrot.slane %v3781, 5
        %v3824 = vrot.slane %v3823, 4
        %v3825 = vrot.slane %v3782, 5
        %v3826 = vsel %vm739, %v3824, %v3825
        %v3827 = vrot.slane %v3783, 5
        %v3828 = vrot.slane %v3827, 4
        %v3829 = vrot.slane %v3784, 5
        %v3830 = vsel %vm739, %v3828, %v3829
        %v3831 = vrot.slane %v3785, 5
        %v3832 = vrot.slane %v3831, 4
        %v3833 = vrot.slane %v3786, 5
        %v3834 = vsel %vm739, %v3832, %v3833
        %3835 = vrot.lane.b32.xlu0 %v3806, 32
        %v3836 = vpop.permute.xlu0 %3835
        %3837 = vrot.lane.b32.xlu0 %v3810, 32
        %v3838 = vpop.permute.xlu0 %3837
        %3839 = vrot.lane.b32.xlu0 %v3814, 32
        %v3840 = vpop.permute.xlu0 %3839
        %3841 = vrot.lane.b32.xlu0 %v3818, 32
        %v3842 = vpop.permute.xlu0 %3841
        %3843 = vrot.lane.b32.xlu0 %v3822, 32
        %v3844 = vpop.permute.xlu0 %3843
        %3845 = vrot.lane.b32.xlu0 %v3826, 32
        %v3846 = vpop.permute.xlu0 %3845
        %3847 = vrot.lane.b32.xlu0 %v3830, 32
        %v3848 = vpop.permute.xlu0 %3847
        %3849 = vrot.lane.b32.xlu0 %v3834, 32
        %v3850 = vpop.permute.xlu0 %3849
        %3859 = vst.msk [vmem:[#allocation3 + $0x4] sm:$0xf] %vm696, %v3836
        %3860 = vst.msk [vmem:[#allocation3 + $0x10] sm:$0xf] %vm696, %v3838
        %3861 = vst.msk [vmem:[#allocation3 + $0x1c] sm:$0xf] %vm696, %v3840
        %3862 = vst.msk [vmem:[#allocation3 + $0x28] sm:$0xf] %vm696, %v3842
        %3863 = vst.msk [vmem:[#allocation3 + $0x34] sm:$0xf] %vm696, %v3844
        %3864 = vst.msk [vmem:[#allocation3 + $0x40] sm:$0xf] %vm696, %v3846
        %3865 = vst.msk [vmem:[#allocation3 + $0x4c] sm:$0xf] %vm696, %v3848
        %3866 = vst.msk [vmem:[#allocation3 + $0x58] sm:$0xf] %vm696, %v3850
        %v3867 = vld [vmem:[%s1094] sm:$0xf]
        %v3868 = vld [vmem:[%s1094 + $0x8] sm:$0xf]
        %v3869 = vld [vmem:[%s1094 + $0x10] sm:$0xf]
        %v3870 = vld [vmem:[%s1094 + $0x18] sm:$0xf]
        %v3871 = vld [vmem:[%s1094 + $0x20] sm:$0xf]
        %v3872 = vld [vmem:[%s1094 + $0x28] sm:$0xf]
        %v3873 = vld [vmem:[%s1094 + $0x30] sm:$0xf]
        %v3874 = vld [vmem:[%s1094 + $0x38] sm:$0xf]
        %3883 = vrot.lane.b32.xlu0 %v3867, 64
        %v3884 = vpop.permute.xlu0 %3883
        %3885 = vrot.lane.b32.xlu0 %v3868, 64
        %v3886 = vpop.permute.xlu0 %3885
        %3887 = vrot.lane.b32.xlu0 %v3869, 64
        %v3888 = vpop.permute.xlu0 %3887
        %3889 = vrot.lane.b32.xlu0 %v3870, 64
        %v3890 = vpop.permute.xlu0 %3889
        %3891 = vrot.lane.b32.xlu0 %v3871, 64
        %v3892 = vpop.permute.xlu0 %3891
        %3893 = vrot.lane.b32.xlu0 %v3872, 64
        %v3894 = vpop.permute.xlu0 %3893
        %3895 = vrot.lane.b32.xlu0 %v3873, 64
        %v3896 = vpop.permute.xlu0 %3895
        %3897 = vrot.lane.b32.xlu0 %v3874, 64
        %v3898 = vpop.permute.xlu0 %3897
        %3907 = vst.msk [vmem:[#allocation3 + $0x4] sm:$0xf] %vm796, %v3884
        %3908 = vst.msk [vmem:[#allocation3 + $0x10] sm:$0xf] %vm796, %v3886
        %3909 = vst.msk [vmem:[#allocation3 + $0x1c] sm:$0xf] %vm796, %v3888
        %3910 = vst.msk [vmem:[#allocation3 + $0x28] sm:$0xf] %vm796, %v3890
        %3911 = vst.msk [vmem:[#allocation3 + $0x34] sm:$0xf] %vm796, %v3892
        %3912 = vst.msk [vmem:[#allocation3 + $0x40] sm:$0xf] %vm796, %v3894
        %3913 = vst.msk [vmem:[#allocation3 + $0x4c] sm:$0xf] %vm796, %v3896
        %3914 = vst.msk [vmem:[#allocation3 + $0x58] sm:$0xf] %vm796, %v3898
        %v3915 = vld [vmem:[%s1094] sm:$0xf]
        %v3916 = vld [vmem:[%s1094 + $0x4] sm:$0x1]
        %v3917 = vld [vmem:[%s1094 + $0x8] sm:$0xf]
        %v3918 = vld [vmem:[%s1094 + $0xc] sm:$0x1]
        %v3919 = vld [vmem:[%s1094 + $0x10] sm:$0xf]
        %v3920 = vld [vmem:[%s1094 + $0x14] sm:$0x1]
        %v3921 = vld [vmem:[%s1094 + $0x18] sm:$0xf]
        %v3922 = vld [vmem:[%s1094 + $0x1c] sm:$0x1]
        %v3923 = vld [vmem:[%s1094 + $0x20] sm:$0xf]
        %v3924 = vld [vmem:[%s1094 + $0x24] sm:$0x1]
        %v3925 = vld [vmem:[%s1094 + $0x28] sm:$0xf]
        %v3926 = vld [vmem:[%s1094 + $0x2c] sm:$0x1]
        %v3927 = vld [vmem:[%s1094 + $0x30] sm:$0xf]
        %v3928 = vld [vmem:[%s1094 + $0x34] sm:$0x1]
        %v3929 = vld [vmem:[%s1094 + $0x38] sm:$0xf]
        %v3930 = vld [vmem:[%s1094 + $0x3c] sm:$0x1]
        %v3932 = vshrl.u32 %v3915, 16
        %v3934 = vrot.slane %v3932, 4
        %v3935 = vshll.u32 %v3915, 16
        %v3937 = vrot.slane %v3935, 5
        %v3938 = vor.u32 %v3934, %v3937
        %v3939 = vrot.slane %v3938, 4
        %v3941 = vshll.u32 %v3916, 16
        %v3943 = vrot.slane %v3941, 5
        %v3944 = vsel %vm559, %v3939, %v3943
        %v3946 = vshrl.u32 %v3917, 16
        %v3948 = vrot.slane %v3946, 4
        %v3949 = vshll.u32 %v3917, 16
        %v3951 = vrot.slane %v3949, 5
        %v3952 = vor.u32 %v3948, %v3951
        %v3953 = vrot.slane %v3952, 4
        %v3955 = vshll.u32 %v3918, 16
        %v3957 = vrot.slane %v3955, 5
        %v3958 = vsel %vm559, %v3953, %v3957
        %v3960 = vshrl.u32 %v3919, 16
        %v3962 = vrot.slane %v3960, 4
        %v3963 = vshll.u32 %v3919, 16
        %v3965 = vrot.slane %v3963, 5
        %v3966 = vor.u32 %v3962, %v3965
        %v3967 = vrot.slane %v3966, 4
        %v3969 = vshll.u32 %v3920, 16
        %v3971 = vrot.slane %v3969, 5
        %v3972 = vsel %vm559, %v3967, %v3971
        %v3974 = vshrl.u32 %v3921, 16
        %v3976 = vrot.slane %v3974, 4
        %v3977 = vshll.u32 %v3921, 16
        %v3979 = vrot.slane %v3977, 5
        %v3980 = vor.u32 %v3976, %v3979
        %v3981 = vrot.slane %v3980, 4
        %v3983 = vshll.u32 %v3922, 16
        %v3985 = vrot.slane %v3983, 5
        %v3986 = vsel %vm559, %v3981, %v3985
        %v3988 = vshrl.u32 %v3923, 16
        %v3990 = vrot.slane %v3988, 4
        %v3991 = vshll.u32 %v3923, 16
        %v3993 = vrot.slane %v3991, 5
        %v3994 = vor.u32 %v3990, %v3993
        %v3995 = vrot.slane %v3994, 4
        %v3997 = vshll.u32 %v3924, 16
        %v3999 = vrot.slane %v3997, 5
        %v4000 = vsel %vm559, %v3995, %v3999
        %v4002 = vshrl.u32 %v3925, 16
        %v4004 = vrot.slane %v4002, 4
        %v4005 = vshll.u32 %v3925, 16
        %v4007 = vrot.slane %v4005, 5
        %v4008 = vor.u32 %v4004, %v4007
        %v4009 = vrot.slane %v4008, 4
        %v4011 = vshll.u32 %v3926, 16
        %v4013 = vrot.slane %v4011, 5
        %v4014 = vsel %vm559, %v4009, %v4013
        %v4016 = vshrl.u32 %v3927, 16
        %v4018 = vrot.slane %v4016, 4
        %v4019 = vshll.u32 %v3927, 16
        %v4021 = vrot.slane %v4019, 5
        %v4022 = vor.u32 %v4018, %v4021
        %v4023 = vrot.slane %v4022, 4
        %v4025 = vshll.u32 %v3928, 16
        %v4027 = vrot.slane %v4025, 5
        %v4028 = vsel %vm559, %v4023, %v4027
        %v4030 = vshrl.u32 %v3929, 16
        %v4032 = vrot.slane %v4030, 4
        %v4033 = vshll.u32 %v3929, 16
        %v4035 = vrot.slane %v4033, 5
        %v4036 = vor.u32 %v4032, %v4035
        %v4037 = vrot.slane %v4036, 4
        %v4039 = vshll.u32 %v3930, 16
        %v4041 = vrot.slane %v4039, 5
        %v4042 = vsel %vm559, %v4037, %v4041
        %4043 = vrot.lane.b32.xlu0 %v3944, 96
        %v4044 = vpop.permute.xlu0 %4043
        %4045 = vrot.lane.b32.xlu0 %v3958, 96
        %v4046 = vpop.permute.xlu0 %4045
        %4047 = vrot.lane.b32.xlu0 %v3972, 96
        %v4048 = vpop.permute.xlu0 %4047
        %4049 = vrot.lane.b32.xlu0 %v3986, 96
        %v4050 = vpop.permute.xlu0 %4049
        %4051 = vrot.lane.b32.xlu0 %v4000, 96
        %v4052 = vpop.permute.xlu0 %4051
        %4053 = vrot.lane.b32.xlu0 %v4014, 96
        %v4054 = vpop.permute.xlu0 %4053
        %4055 = vrot.lane.b32.xlu0 %v4028, 96
        %v4056 = vpop.permute.xlu0 %4055
        %4057 = vrot.lane.b32.xlu0 %v4042, 96
        %v4058 = vpop.permute.xlu0 %4057
        %4067 = vst.msk [vmem:[#allocation3 + $0x4] sm:$0xf] %vm845, %v4044
        %4068 = vst.msk [vmem:[#allocation3 + $0x10] sm:$0xf] %vm845, %v4046
        %4069 = vst.msk [vmem:[#allocation3 + $0x1c] sm:$0xf] %vm845, %v4048
        %4070 = vst.msk [vmem:[#allocation3 + $0x28] sm:$0xf] %vm845, %v4050
        %4071 = vst.msk [vmem:[#allocation3 + $0x34] sm:$0xf] %vm845, %v4052
        %4072 = vst.msk [vmem:[#allocation3 + $0x40] sm:$0xf] %vm845, %v4054
        %4073 = vst.msk [vmem:[#allocation3 + $0x4c] sm:$0xf] %vm845, %v4056
        %4074 = vst.msk [vmem:[#allocation3 + $0x58] sm:$0xf] %vm845, %v4058
        %v4075 = vld [vmem:[%s1094] sm:$0xe]
        %v4076 = vld [vmem:[%s1094 + $0x4] sm:$0x1]
        %v4077 = vld [vmem:[%s1094 + $0x8] sm:$0xe]
        %v4078 = vld [vmem:[%s1094 + $0xc] sm:$0x1]
        %v4079 = vld [vmem:[%s1094 + $0x10] sm:$0xe]
        %v4080 = vld [vmem:[%s1094 + $0x14] sm:$0x1]
        %v4081 = vld [vmem:[%s1094 + $0x18] sm:$0xe]
        %v4082 = vld [vmem:[%s1094 + $0x1c] sm:$0x1]
        %v4083 = vld [vmem:[%s1094 + $0x20] sm:$0xe]
        %v4084 = vld [vmem:[%s1094 + $0x24] sm:$0x1]
        %v4085 = vld [vmem:[%s1094 + $0x28] sm:$0xe]
        %v4086 = vld [vmem:[%s1094 + $0x2c] sm:$0x1]
        %v4087 = vld [vmem:[%s1094 + $0x30] sm:$0xe]
        %v4088 = vld [vmem:[%s1094 + $0x34] sm:$0x1]
        %v4089 = vld [vmem:[%s1094 + $0x38] sm:$0xe]
        %v4090 = vld [vmem:[%s1094 + $0x3c] sm:$0x1]
        %v4107 = vrot.slane %v4075, 5
        %v4108 = vrot.slane %v4107, 4
        %v4109 = vrot.slane %v4076, 5
        %v4110 = vsel %vm739, %v4108, %v4109
        %v4111 = vrot.slane %v4077, 5
        %v4112 = vrot.slane %v4111, 4
        %v4113 = vrot.slane %v4078, 5
        %v4114 = vsel %vm739, %v4112, %v4113
        %v4115 = vrot.slane %v4079, 5
        %v4116 = vrot.slane %v4115, 4
        %v4117 = vrot.slane %v4080, 5
        %v4118 = vsel %vm739, %v4116, %v4117
        %v4119 = vrot.slane %v4081, 5
        %v4120 = vrot.slane %v4119, 4
        %v4121 = vrot.slane %v4082, 5
        %v4122 = vsel %vm739, %v4120, %v4121
        %v4123 = vrot.slane %v4083, 5
        %v4124 = vrot.slane %v4123, 4
        %v4125 = vrot.slane %v4084, 5
        %v4126 = vsel %vm739, %v4124, %v4125
        %v4127 = vrot.slane %v4085, 5
        %v4128 = vrot.slane %v4127, 4
        %v4129 = vrot.slane %v4086, 5
        %v4130 = vsel %vm739, %v4128, %v4129
        %v4131 = vrot.slane %v4087, 5
        %v4132 = vrot.slane %v4131, 4
        %v4133 = vrot.slane %v4088, 5
        %v4134 = vsel %vm739, %v4132, %v4133
        %v4135 = vrot.slane %v4089, 5
        %v4136 = vrot.slane %v4135, 4
        %v4137 = vrot.slane %v4090, 5
        %v4138 = vsel %vm739, %v4136, %v4137
        %4147 = vst.msk [vmem:[#allocation3 + $0x8] sm:$0xf] %vm278, %v4110
        %4148 = vst.msk [vmem:[#allocation3 + $0x14] sm:$0xf] %vm278, %v4114
        %4149 = vst.msk [vmem:[#allocation3 + $0x20] sm:$0xf] %vm278, %v4118
        %4150 = vst.msk [vmem:[#allocation3 + $0x2c] sm:$0xf] %vm278, %v4122
        %4151 = vst.msk [vmem:[#allocation3 + $0x38] sm:$0xf] %vm278, %v4126
        %4152 = vst.msk [vmem:[#allocation3 + $0x44] sm:$0xf] %vm278, %v4130
        %4153 = vst.msk [vmem:[#allocation3 + $0x50] sm:$0xf] %vm278, %v4134
        %4154 = vst.msk [vmem:[#allocation3 + $0x5c] sm:$0xf] %vm278, %v4138
        %v4155 = vld [vmem:[#allocation3] sm:$0xff]
        %v4156 = vld [vmem:[#allocation3 + $0x8] sm:$0xf]
        %v4157 = vld [vmem:[#allocation3 + $0xc] sm:$0xff]
        %v4158 = vld [vmem:[#allocation3 + $0x14] sm:$0xf]
        %v4159 = vld [vmem:[#allocation3 + $0x18] sm:$0xff]
        %v4160 = vld [vmem:[#allocation3 + $0x20] sm:$0xf]
        %v4161 = vld [vmem:[#allocation3 + $0x24] sm:$0xff]
        %v4162 = vld [vmem:[#allocation3 + $0x2c] sm:$0xf]
        %v4163 = vld [vmem:[#allocation3 + $0x30] sm:$0xff]
        %v4164 = vld [vmem:[#allocation3 + $0x38] sm:$0xf]
        %v4165 = vld [vmem:[#allocation3 + $0x3c] sm:$0xff]
        %v4166 = vld [vmem:[#allocation3 + $0x44] sm:$0xf]
        %v4167 = vld [vmem:[#allocation3 + $0x48] sm:$0xff]
        %v4168 = vld [vmem:[#allocation3 + $0x50] sm:$0xf]
        %v4169 = vld [vmem:[#allocation3 + $0x54] sm:$0xff]
        %v4170 = vld [vmem:[#allocation3 + $0x5c] sm:$0xf]
        %s4171 = scalar_lea.vmem %s3, 288
        %v4172 = vld [vmem:[%s4171] sm:$0xf]
        %v4173 = vld [vmem:[%s4171 + $0x4] sm:$0xf]
        %v4174 = vld [vmem:[%s4171 + $0x8] sm:$0xf]
        %v4175 = vld [vmem:[%s4171 + $0xc] sm:$0xf]
        %v4176 = vld [vmem:[%s4171 + $0x10] sm:$0xf]
        %v4177 = vld [vmem:[%s4171 + $0x14] sm:$0xf]
        %v4178 = vld [vmem:[%s4171 + $0x18] sm:$0xf]
        %v4179 = vld [vmem:[%s4171 + $0x1c] sm:$0xf]
        %v4180 = vld [vmem:[%s4171 + $0x20] sm:$0xf]
        %v4181 = vld [vmem:[%s4171 + $0x24] sm:$0xf]
        %v4182 = vld [vmem:[%s4171 + $0x28] sm:$0xf]
        %v4183 = vld [vmem:[%s4171 + $0x2c] sm:$0xf]
        %v4184 = vld [vmem:[%s4171 + $0x30] sm:$0xf]
        %v4185 = vld [vmem:[%s4171 + $0x34] sm:$0xf]
        %v4186 = vld [vmem:[%s4171 + $0x38] sm:$0xf]
        %v4187 = vld [vmem:[%s4171 + $0x3c] sm:$0xf]
        %v4188 = vld [vmem:[%s4171 + $0x40] sm:$0xf]
        %v4189 = vld [vmem:[%s4171 + $0x44] sm:$0xf]
        %v4190 = vld [vmem:[%s4171 + $0x48] sm:$0xf]
        %v4191 = vld [vmem:[%s4171 + $0x4c] sm:$0xf]
        %v4192 = vld [vmem:[%s4171 + $0x50] sm:$0xf]
        %v4193 = vld [vmem:[%s4171 + $0x54] sm:$0xf]
        %v4194 = vld [vmem:[%s4171 + $0x58] sm:$0xf]
        %v4195 = vld [vmem:[%s4171 + $0x5c] sm:$0xf]
        %v4196 = vld [vmem:[%s4171 + $0x60] sm:$0xf]
        %v4197 = vld [vmem:[%s4171 + $0x64] sm:$0xf]
        %v4198 = vld [vmem:[%s4171 + $0x68] sm:$0xf]
        %v4199 = vld [vmem:[%s4171 + $0x6c] sm:$0xf]
        %v4200 = vld [vmem:[%s4171 + $0x70] sm:$0xf]
        %v4201 = vld [vmem:[%s4171 + $0x74] sm:$0xf]
        %v4202 = vld [vmem:[%s4171 + $0x78] sm:$0xf]
        %v4203 = vld [vmem:[%s4171 + $0x7c] sm:$0xf]
        %v4204 = vld [vmem:[%s4171 + $0x80] sm:$0xf]
        %v4205 = vld [vmem:[%s4171 + $0x84] sm:$0xf]
        %v4206 = vld [vmem:[%s4171 + $0x88] sm:$0xf]
        %v4207 = vld [vmem:[%s4171 + $0x8c] sm:$0xf]
        %s4208 = scalar_lea.vmem %s4, 2
        %v4209 = vld [vmem:[%s4208] sm:$0x1]
        %v4211 = vlaneseq
        %v4212 = vshrl.u32 %v4211, 7
        %v4213 = vsub.s32 0, %v4212
        %v4214 = vrot.slane %v4209, %v4213
        %v4232 = vunpack.c.l.b16 %v4155
        %v4233 = vunpack.c.h.b16 %v4155
        %v4234 = vunpack.c.l.b16 %v4156
        %v4235 = vunpack.c.l.b16 %v4157
        %v4236 = vunpack.c.h.b16 %v4157
        %v4237 = vunpack.c.l.b16 %v4158
        %v4238 = vunpack.c.l.b16 %v4159
        %v4239 = vunpack.c.h.b16 %v4159
        %v4240 = vunpack.c.l.b16 %v4160
        %v4241 = vunpack.c.l.b16 %v4161
        %v4242 = vunpack.c.h.b16 %v4161
        %v4243 = vunpack.c.l.b16 %v4162
        %v4244 = vunpack.c.l.b16 %v4163
        %v4245 = vunpack.c.h.b16 %v4163
        %v4246 = vunpack.c.l.b16 %v4164
        %v4247 = vunpack.c.l.b16 %v4165
        %v4248 = vunpack.c.h.b16 %v4165
        %v4249 = vunpack.c.l.b16 %v4166
        %v4250 = vunpack.c.l.b16 %v4167
        %v4251 = vunpack.c.h.b16 %v4167
        %v4252 = vunpack.c.l.b16 %v4168
        %v4253 = vunpack.c.l.b16 %v4169
        %v4254 = vunpack.c.h.b16 %v4169
        %v4255 = vunpack.c.l.b16 %v4170
        %v4256 = vpack.c.b16 %v4235, %v4232
        %v4257 = vpack.c.b16 %v4236, %v4233
        %v4258 = vpack.c.b16 %v4237, %v4234
        %v4259 = vpack.c.b16 %v4241, %v4238
        %v4260 = vpack.c.b16 %v4242, %v4239
        %v4261 = vpack.c.b16 %v4243, %v4240
        %v4262 = vpack.c.b16 %v4247, %v4244
        %v4263 = vpack.c.b16 %v4248, %v4245
        %v4264 = vpack.c.b16 %v4249, %v4246
        %v4265 = vpack.c.b16 %v4253, %v4250
        %v4266 = vpack.c.b16 %v4254, %v4251
        %v4267 = vpack.c.b16 %v4255, %v4252
        %v4312 = vunpack.c.l.b16 %v4172
        %v4313 = vunpack.c.l.b16 %v4173
        %v4314 = vunpack.c.l.b16 %v4174
        %v4315 = vunpack.c.l.b16 %v4175
        %v4316 = vunpack.c.l.b16 %v4176
        %v4317 = vunpack.c.l.b16 %v4177
        %v4318 = vunpack.c.l.b16 %v4178
        %v4319 = vunpack.c.l.b16 %v4179
        %v4320 = vunpack.c.l.b16 %v4180
        %v4321 = vunpack.c.l.b16 %v4181
        %v4322 = vunpack.c.l.b16 %v4182
        %v4323 = vunpack.c.l.b16 %v4183
        %v4324 = vunpack.c.l.b16 %v4184
        %v4325 = vunpack.c.l.b16 %v4185
        %v4326 = vunpack.c.l.b16 %v4186
        %v4327 = vunpack.c.l.b16 %v4187
        %v4328 = vunpack.c.l.b16 %v4188
        %v4329 = vunpack.c.l.b16 %v4189
        %v4330 = vunpack.c.l.b16 %v4190
        %v4331 = vunpack.c.l.b16 %v4191
        %v4332 = vunpack.c.l.b16 %v4192
        %v4333 = vunpack.c.l.b16 %v4193
        %v4334 = vunpack.c.l.b16 %v4194
        %v4335 = vunpack.c.l.b16 %v4195
        %v4336 = vunpack.c.l.b16 %v4196
        %v4337 = vunpack.c.l.b16 %v4197
        %v4338 = vunpack.c.l.b16 %v4198
        %v4339 = vunpack.c.l.b16 %v4199
        %v4340 = vunpack.c.l.b16 %v4200
        %v4341 = vunpack.c.l.b16 %v4201
        %v4342 = vunpack.c.l.b16 %v4202
        %v4343 = vunpack.c.l.b16 %v4203
        %v4344 = vunpack.c.l.b16 %v4204
        %v4345 = vunpack.c.l.b16 %v4205
        %v4346 = vunpack.c.l.b16 %v4206
        %v4347 = vunpack.c.l.b16 %v4207
        %v4348 = vpack.c.b16 %v4313, %v4312
        %v4349 = vpack.c.b16 %v4315, %v4314
        %v4350 = vpack.c.b16 %v4317, %v4316
        %v4351 = vpack.c.b16 %v4319, %v4318
        %v4352 = vpack.c.b16 %v4321, %v4320
        %v4353 = vpack.c.b16 %v4323, %v4322
        %v4354 = vpack.c.b16 %v4325, %v4324
        %v4355 = vpack.c.b16 %v4327, %v4326
        %v4356 = vpack.c.b16 %v4329, %v4328
        %v4357 = vpack.c.b16 %v4331, %v4330
        %v4358 = vpack.c.b16 %v4333, %v4332
        %v4359 = vpack.c.b16 %v4335, %v4334
        %v4360 = vpack.c.b16 %v4337, %v4336
        %v4361 = vpack.c.b16 %v4339, %v4338
        %v4362 = vpack.c.b16 %v4341, %v4340
        %v4363 = vpack.c.b16 %v4343, %v4342
        %v4364 = vpack.c.b16 %v4345, %v4344
        %v4365 = vpack.c.b16 %v4347, %v4346
        %v4385 = vsel %vm269, %v4258, 0
        %v4388 = vsel %vm269, %v4261, 0
        %v4391 = vsel %vm269, %v4264, 0
        %v4394 = vsel %vm269, %v4267, 0
        %4396 = vmatprep.subr.bf16.mxu0 0
        %4397 = vmatpush1.bf16.msra.mxu0 %v4348
        %4398 = vmatprep.subr.bf16.mxu0 0
        %4399 = vmatpush1.bf16.msra.mxu0 %v4349
        %4400 = vmatprep.subr.bf16.mxu0 0
        %4401 = vmatpush1.bf16.msra.mxu0 %v4350
        %4402 = vmatprep.subr.bf16.mxu0 0
        %4403 = vmatpush1.bf16.msra.mxu0 %v4351
        %4404 = vmatprep.subr.bf16.mxu0 0
        %4405 = vmatpush1.bf16.msra.mxu0 %v4352
        %4406 = vmatprep.subr.bf16.mxu0 0
        %4407 = vmatpush1.bf16.msra.mxu0 %v4353
        %4408 = vmatprep.subr.bf16.mxu0 0
        %4409 = vmatpush1.bf16.msra.mxu0 %v4354
        %4410 = vmatprep.subr.bf16.mxu0 0
        %4411 = vmatpush1.bf16.msra.mxu0 %v4355
        %4412 = vmatprep.subr.bf16.mxu0 0
        %4413 = vmatpush1.bf16.msra.mxu0 %v4356
        %4414 = vmatprep.subr.bf16.mxu0 0
        %4415 = vmatpush1.bf16.msra.mxu0 %v4357
        %4416 = vmatprep.subr.bf16.mxu0 0
        %4417 = vmatpush1.bf16.msra.mxu0 %v4358
        %4418 = vmatprep.subr.bf16.mxu0 0
        %4419 = vmatpush1.bf16.msra.mxu0 %v4359
        %4420 = vmatprep.subr.bf16.mxu0 0
        %4421 = vmatpush1.bf16.msra.mxu0 %v4360
        %4422 = vmatprep.subr.bf16.mxu0 0
        %4423 = vmatpush1.bf16.msra.mxu0 %v4361
        %4424 = vmatprep.subr.bf16.mxu0 0
        %4425 = vmatpush1.bf16.msra.mxu0 %v4362
        %4426 = vmatprep.subr.bf16.mxu0 0
        %4427 = vmatpush1.bf16.msra.mxu0 %v4363
        %4428 = vmatprep.mubr.bf16.mxu0 %v4257
        %4429 = vmatmul.mubr.bf16.gmra.mrb[0].mxu0 %v4256
        %v4430 = vpop.f32.mrb[0].mxu0
        %v4431 = vadd.f32 %v4214, %v4430
        %v4432 = vpop.f32.mrb[0].mxu0
        %v4433 = vpop.f32.mrb[0].mxu0
        %v4434 = vadd.f32 %v4214, %v4433
        %v4435 = vpop.f32.mrb[0].mxu0
        %4436 = vmatprep.mubr.bf16.mxu0 %v4260
        %4437 = vmatmul.mubr.bf16.gmra.mrb[0].mxu0 %v4259
        %v4438 = vpop.f32.mrb[0].mxu0
        %v4439 = vadd.f32 %v4214, %v4438
        %v4440 = vpop.f32.mrb[0].mxu0
        %v4441 = vpop.f32.mrb[0].mxu0
        %v4442 = vadd.f32 %v4214, %v4441
        %v4443 = vpop.f32.mrb[0].mxu0
        %4444 = vmatprep.mubr.bf16.mxu0 %v4263
        %4445 = vmatmul.mubr.bf16.gmra.mrb[0].mxu0 %v4262
        %v4446 = vpop.f32.mrb[0].mxu0
        %v4447 = vadd.f32 %v4214, %v4446
        %v4448 = vpop.f32.mrb[0].mxu0
        %v4449 = vpop.f32.mrb[0].mxu0
        %v4450 = vadd.f32 %v4214, %v4449
        %v4451 = vpop.f32.mrb[0].mxu0
        %4452 = vmatprep.mubr.bf16.mxu0 %v4266
        %4453 = vmatmul.mubr.bf16.gmra.mrb[0].mxu0 %v4265
        %v4454 = vpop.f32.mrb[0].mxu0
        %v4455 = vadd.f32 %v4214, %v4454
        %v4456 = vpop.f32.mrb[0].mxu0
        %v4457 = vpop.f32.mrb[0].mxu0
        %v4458 = vadd.f32 %v4214, %v4457
        %v4459 = vpop.f32.mrb[0].mxu0
        %4460 = vdwg.mxu0
        %4461 = vmatprep.subr.bf16.mxu0 0
        %4462 = vmatpush1.bf16.msra.mxu0 %v4364
        %4463 = vmatprep.subr.bf16.mxu0 0
        %4464 = vmatpush1.bf16.msra.mxu0 %v4365
        %4465 = vmatprep.subr.bf16.mxu0 0
        %4466 = vmatpush1.bf16.msra.mxu0 0
        %4467 = vmatprep.subr.bf16.mxu0 0
        %4468 = vmatpush1.bf16.msra.mxu0 0
        %4469 = vmatprep.subr.bf16.mxu0 0
        %4470 = vmatpush1.bf16.msra.mxu0 0
        %4471 = vmatprep.subr.bf16.mxu0 0
        %4472 = vmatpush1.bf16.msra.mxu0 0
        %4473 = vmatprep.subr.bf16.mxu0 0
        %4474 = vmatpush1.bf16.msra.mxu0 0
        %4475 = vmatprep.subr.bf16.mxu0 0
        %4476 = vmatpush1.bf16.msra.mxu0 0
        %4477 = vmatprep.subr.bf16.mxu0 0
        %4478 = vmatpush1.bf16.msra.mxu0 0
        %4479 = vmatprep.subr.bf16.mxu0 0
        %4480 = vmatpush1.bf16.msra.mxu0 0
        %4481 = vmatprep.subr.bf16.mxu0 0
        %4482 = vmatpush1.bf16.msra.mxu0 0
        %4483 = vmatprep.subr.bf16.mxu0 0
        %4484 = vmatpush1.bf16.msra.mxu0 0
        %4485 = vmatprep.subr.bf16.mxu0 0
        %4486 = vmatpush1.bf16.msra.mxu0 0
        %4487 = vmatprep.subr.bf16.mxu0 0
        %4488 = vmatpush1.bf16.msra.mxu0 0
        %4489 = vmatprep.subr.bf16.mxu0 0
        %4490 = vmatpush1.bf16.msra.mxu0 0
        %4491 = vmatprep.subr.bf16.mxu0 0
        %4492 = vmatpush1.bf16.msra.mxu0 0
        %4493 = vmatprep.mubr.bf16.mxu0 0
        %4494 = vmatmul.mubr.bf16.gmra.mrb[0].mxu0 %v4385
        %v4495 = vpop.f32.mrb[0].mxu0
        %v4496 = vadd.f32 %v4431, %v4495
        %v4497 = vpop.f32.mrb[0].mxu0
        %v4498 = vpop.f32.mrb[0].mxu0
        %v4499 = vadd.f32 %v4434, %v4498
        %v4500 = vpop.f32.mrb[0].mxu0
        %4501 = vmatprep.mubr.bf16.mxu0 0
        %4502 = vmatmul.mubr.bf16.gmra.mrb[0].mxu0 %v4388
        %v4503 = vpop.f32.mrb[0].mxu0
        %v4504 = vadd.f32 %v4439, %v4503
        %v4505 = vpop.f32.mrb[0].mxu0
        %v4506 = vpop.f32.mrb[0].mxu0
        %v4507 = vadd.f32 %v4442, %v4506
        %v4508 = vpop.f32.mrb[0].mxu0
        %4509 = vmatprep.mubr.bf16.mxu0 0
        %4510 = vmatmul.mubr.bf16.gmra.mrb[0].mxu0 %v4391
        %v4511 = vpop.f32.mrb[0].mxu0
        %v4512 = vadd.f32 %v4447, %v4511
        %v4513 = vpop.f32.mrb[0].mxu0
        %v4514 = vpop.f32.mrb[0].mxu0
        %v4515 = vadd.f32 %v4450, %v4514
        %v4516 = vpop.f32.mrb[0].mxu0
        %4517 = vmatprep.mubr.bf16.mxu0 0
        %4518 = vmatmul.mubr.bf16.gmra.mrb[0].mxu0 %v4394
        %v4519 = vpop.f32.mrb[0].mxu0
        %v4520 = vadd.f32 %v4455, %v4519
        %v4521 = vpop.f32.mrb[0].mxu0
        %v4522 = vpop.f32.mrb[0].mxu0
        %v4523 = vadd.f32 %v4458, %v4522
        %v4524 = vpop.f32.mrb[0].mxu0
        %4525 = vdwg.mxu0
        %v4526 = vld [vmem:[%s259] sm:$0x1]
        %v4527 = vld [vmem:[%s245] sm:$0xff]
        %v4528 = vld [vmem:[%s245 + $0x8] sm:$0xff]
        %v4529 = vld [vmem:[%s245 + $0x10] sm:$0xff]
        %v4530 = vld [vmem:[%s245 + $0x18] sm:$0xff]
        %v4531 = vld [vmem:[%s245 + $0x20] sm:$0xff]
        %v4532 = vld [vmem:[%s245 + $0x28] sm:$0xff]
        %v4533 = vld [vmem:[%s245 + $0x30] sm:$0xff]
        %v4534 = vld [vmem:[%s245 + $0x38] sm:$0xff]
        %v4535 = vlaneseq
        %v4536 = vshrl.u32 %v4535, 7
        %v4537 = vsub.s32 0, %v4536
        %v4538 = vrot.slane %v4526, %v4537
        %v4539 = vmul.f32 %v4496, %v4538
        %v4540 = vmul.f32 %v4499, %v4538
        %v4541 = vmul.f32 %v4504, %v4538
        %v4542 = vmul.f32 %v4507, %v4538
        %v4543 = vmul.f32 %v4512, %v4538
        %v4544 = vmul.f32 %v4515, %v4538
        %v4545 = vmul.f32 %v4520, %v4538
        %v4546 = vmul.f32 %v4523, %v4538
        %v4547 = vadd.f32 %v4527, %v4539
        %v4548 = vadd.f32 %v4528, %v4540
        %v4549 = vadd.f32 %v4529, %v4541
        %v4550 = vadd.f32 %v4530, %v4542
        %v4551 = vadd.f32 %v4531, %v4543
        %v4552 = vadd.f32 %v4532, %v4544
        %v4553 = vadd.f32 %v4533, %v4545
        %v4554 = vadd.f32 %v4534, %v4546
        %4555 = vst.msk [vmem:[%s245] sm:$0xff] %vm269, %v4547
        %4556 = vst.msk [vmem:[%s245 + $0x8] sm:$0xff] %vm269, %v4548
        %4557 = vst.msk [vmem:[%s245 + $0x10] sm:$0xff] %vm269, %v4549
        %4558 = vst.msk [vmem:[%s245 + $0x18] sm:$0xff] %vm269, %v4550
        %4559 = vst.msk [vmem:[%s245 + $0x20] sm:$0xff] %vm269, %v4551
        %4560 = vst.msk [vmem:[%s245 + $0x28] sm:$0xff] %vm269, %v4552
        %4561 = vst.msk [vmem:[%s245 + $0x30] sm:$0xff] %vm269, %v4553
        %4562 = vst.msk [vmem:[%s245 + $0x38] sm:$0xff] %vm269, %v4554
        %v4563 = vld [vmem:[%s255] sm:$0xff]
        %v4564 = vld [vmem:[%s255 + $0x8] sm:$0xff]
        %v4565 = vld [vmem:[%s255 + $0x10] sm:$0xff]
        %v4566 = vld [vmem:[%s255 + $0x18] sm:$0xff]
        %v4567 = vld [vmem:[%s255 + $0x20] sm:$0xff]
        %v4568 = vld [vmem:[%s255 + $0x28] sm:$0xff]
        %v4569 = vld [vmem:[%s255 + $0x30] sm:$0xff]
        %v4570 = vld [vmem:[%s255 + $0x38] sm:$0xff]
        %v4571 = vld [vmem:[%s250] sm:$0xff]
        %v4572 = vld [vmem:[%s250 + $0x8] sm:$0xff]
        %v4573 = vld [vmem:[%s250 + $0x10] sm:$0xff]
        %v4574 = vld [vmem:[%s250 + $0x18] sm:$0xff]
        %v4575 = vld [vmem:[%s250 + $0x20] sm:$0xff]
        %v4576 = vld [vmem:[%s250 + $0x28] sm:$0xff]
        %v4577 = vld [vmem:[%s250 + $0x30] sm:$0xff]
        %v4578 = vld [vmem:[%s250 + $0x38] sm:$0xff]
        %v4579 = vsub.f32 %v4563, %v4571
        %v4580 = vsub.f32 %v4564, %v4572
        %v4581 = vsub.f32 %v4565, %v4573
        %v4582 = vsub.f32 %v4566, %v4574
        %v4583 = vsub.f32 %v4567, %v4575
        %v4584 = vsub.f32 %v4568, %v4576
        %v4585 = vsub.f32 %v4569, %v4577
        %v4586 = vsub.f32 %v4570, %v4578
        %v4587 = vpack.c.bf16 %v4579, %v4579
        %v4588 = vpack.c.bf16 %v4580, %v4580
        %v4589 = vpack.c.bf16 %v4581, %v4581
        %v4590 = vpack.c.bf16 %v4582, %v4582
        %v4591 = vpack.c.bf16 %v4583, %v4583
        %v4592 = vpack.c.bf16 %v4584, %v4584
        %v4593 = vpack.c.bf16 %v4585, %v4585
        %v4594 = vpack.c.bf16 %v4586, %v4586
        %v4603 = vunpack.c.l.b16 %v4587
        %v4604 = vunpack.c.l.b16 %v4588
        %v4605 = vunpack.c.l.b16 %v4589
        %v4606 = vunpack.c.l.b16 %v4590
        %v4607 = vunpack.c.l.b16 %v4591
        %v4608 = vunpack.c.l.b16 %v4592
        %v4609 = vunpack.c.l.b16 %v4593
        %v4610 = vunpack.c.l.b16 %v4594
        %v4611 = vpack.c.b16 %v4603, %v4603
        %v4612 = vpack.c.b16 %v4604, %v4604
        %v4613 = vpack.c.b16 %v4605, %v4605
        %v4614 = vpack.c.b16 %v4606, %v4606
        %v4615 = vpack.c.b16 %v4607, %v4607
        %v4616 = vpack.c.b16 %v4608, %v4608
        %v4617 = vpack.c.b16 %v4609, %v4609
        %v4618 = vpack.c.b16 %v4610, %v4610
        %v4620 = vshrl.u32 %v4611, 16
        %v4622 = vrot.slane %v4620, 7
        %v4623 = vshll.u32 %v4611, 16
        %v4625 = vor.u32 %v4622, %v4623
        %v4626 = vrot.slane %v4622, 4
        %v4628 = vshrl.u32 %v4612, 16
        %v4630 = vrot.slane %v4628, 7
        %v4631 = vshll.u32 %v4612, 16
        %v4633 = vor.u32 %v4630, %v4631
        %v4634 = vrot.slane %v4630, 4
        %v4636 = vshrl.u32 %v4613, 16
        %v4638 = vrot.slane %v4636, 7
        %v4639 = vshll.u32 %v4613, 16
        %v4641 = vor.u32 %v4638, %v4639
        %v4642 = vrot.slane %v4638, 4
        %v4644 = vshrl.u32 %v4614, 16
        %v4646 = vrot.slane %v4644, 7
        %v4647 = vshll.u32 %v4614, 16
        %v4649 = vor.u32 %v4646, %v4647
        %v4650 = vrot.slane %v4646, 4
        %v4652 = vshrl.u32 %v4615, 16
        %v4654 = vrot.slane %v4652, 7
        %v4655 = vshll.u32 %v4615, 16
        %v4657 = vor.u32 %v4654, %v4655
        %v4658 = vrot.slane %v4654, 4
        %v4660 = vshrl.u32 %v4616, 16
        %v4662 = vrot.slane %v4660, 7
        %v4663 = vshll.u32 %v4616, 16
        %v4665 = vor.u32 %v4662, %v4663
        %v4666 = vrot.slane %v4662, 4
        %v4668 = vshrl.u32 %v4617, 16
        %v4670 = vrot.slane %v4668, 7
        %v4671 = vshll.u32 %v4617, 16
        %v4673 = vor.u32 %v4670, %v4671
        %v4674 = vrot.slane %v4670, 4
        %v4676 = vshrl.u32 %v4618, 16
        %v4678 = vrot.slane %v4676, 7
        %v4679 = vshll.u32 %v4618, 16
        %v4681 = vor.u32 %v4678, %v4679
        %v4682 = vrot.slane %v4678, 4
        %v4699 = vld [vmem:[%s285] sm:$0xf]
        %v4700 = vsel %vm476, %v4625, %v4699
        %4701 = vst [vmem:[%s285] sm:$0xf] %v4700
        %v4702 = vld [vmem:[%s285 + $0x4] sm:$0x1]
        %v4703 = vsel %vm288, %v4626, %v4702
        %4704 = vst [vmem:[%s285 + $0x4] sm:$0x1] %v4703
        %v4705 = vld [vmem:[%s285 + $0x8] sm:$0xf]
        %v4706 = vsel %vm476, %v4633, %v4705
        %4707 = vst [vmem:[%s285 + $0x8] sm:$0xf] %v4706
        %v4708 = vld [vmem:[%s285 + $0xc] sm:$0x1]
        %v4709 = vsel %vm288, %v4634, %v4708
        %4710 = vst [vmem:[%s285 + $0xc] sm:$0x1] %v4709
        %v4711 = vld [vmem:[%s285 + $0x10] sm:$0xf]
        %v4712 = vsel %vm476, %v4641, %v4711
        %4713 = vst [vmem:[%s285 + $0x10] sm:$0xf] %v4712
        %v4714 = vld [vmem:[%s285 + $0x14] sm:$0x1]
        %v4715 = vsel %vm288, %v4642, %v4714
        %4716 = vst [vmem:[%s285 + $0x14] sm:$0x1] %v4715
        %v4717 = vld [vmem:[%s285 + $0x18] sm:$0xf]
        %v4718 = vsel %vm476, %v4649, %v4717
        %4719 = vst [vmem:[%s285 + $0x18] sm:$0xf] %v4718
        %v4720 = vld [vmem:[%s285 + $0x1c] sm:$0x1]
        %v4721 = vsel %vm288, %v4650, %v4720
        %4722 = vst [vmem:[%s285 + $0x1c] sm:$0x1] %v4721
        %v4723 = vld [vmem:[%s285 + $0x20] sm:$0xf]
        %v4724 = vsel %vm476, %v4657, %v4723
        %4725 = vst [vmem:[%s285 + $0x20] sm:$0xf] %v4724
        %v4726 = vld [vmem:[%s285 + $0x24] sm:$0x1]
        %v4727 = vsel %vm288, %v4658, %v4726
        %4728 = vst [vmem:[%s285 + $0x24] sm:$0x1] %v4727
        %v4729 = vld [vmem:[%s285 + $0x28] sm:$0xf]
        %v4730 = vsel %vm476, %v4665, %v4729
        %4731 = vst [vmem:[%s285 + $0x28] sm:$0xf] %v4730
        %v4732 = vld [vmem:[%s285 + $0x2c] sm:$0x1]
        %v4733 = vsel %vm288, %v4666, %v4732
        %4734 = vst [vmem:[%s285 + $0x2c] sm:$0x1] %v4733
        %v4735 = vld [vmem:[%s285 + $0x30] sm:$0xf]
        %v4736 = vsel %vm476, %v4673, %v4735
        %4737 = vst [vmem:[%s285 + $0x30] sm:$0xf] %v4736
        %v4738 = vld [vmem:[%s285 + $0x34] sm:$0x1]
        %v4739 = vsel %vm288, %v4674, %v4738
        %4740 = vst [vmem:[%s285 + $0x34] sm:$0x1] %v4739
        %v4741 = vld [vmem:[%s285 + $0x38] sm:$0xf]
        %v4742 = vsel %vm476, %v4681, %v4741
        %4743 = vst [vmem:[%s285 + $0x38] sm:$0xf] %v4742
        %v4744 = vld [vmem:[%s285 + $0x3c] sm:$0x1]
        %v4745 = vsel %vm288, %v4682, %v4744
        %4746 = vst [vmem:[%s285 + $0x3c] sm:$0x1] %v4745
        %v4747 = vld [vmem:[#allocation2] sm:$0xf]
        %v4748 = vld [vmem:[#allocation2 + $0x8] sm:$0xf]
        %v4749 = vld [vmem:[#allocation2 + $0x10] sm:$0xf]
        %v4750 = vld [vmem:[#allocation2 + $0x18] sm:$0xf]
        %v4751 = vld [vmem:[#allocation2 + $0x20] sm:$0xf]
        %v4752 = vld [vmem:[#allocation2 + $0x28] sm:$0xf]
        %v4753 = vld [vmem:[#allocation2 + $0x30] sm:$0xf]
        %v4754 = vld [vmem:[#allocation2 + $0x38] sm:$0xf]
        %4755 = vst.msk [vmem:[#allocation3] sm:$0xf] %vm278, %v4747
        %4756 = vst.msk [vmem:[#allocation3 + $0xc] sm:$0xf] %vm278, %v4748
        %4757 = vst.msk [vmem:[#allocation3 + $0x18] sm:$0xf] %vm278, %v4749
        %4758 = vst.msk [vmem:[#allocation3 + $0x24] sm:$0xf] %vm278, %v4750
        %4759 = vst.msk [vmem:[#allocation3 + $0x30] sm:$0xf] %vm278, %v4751
        %4760 = vst.msk [vmem:[#allocation3 + $0x3c] sm:$0xf] %vm278, %v4752
        %4761 = vst.msk [vmem:[#allocation3 + $0x48] sm:$0xf] %vm278, %v4753
        %4762 = vst.msk [vmem:[#allocation3 + $0x54] sm:$0xf] %vm278, %v4754
        %v4763 = vld [vmem:[#allocation2] sm:$0xf]
        %v4764 = vld [vmem:[#allocation2 + $0x4] sm:$0x1]
        %v4765 = vld [vmem:[#allocation2 + $0x8] sm:$0xf]
        %v4766 = vld [vmem:[#allocation2 + $0xc] sm:$0x1]
        %v4767 = vld [vmem:[#allocation2 + $0x10] sm:$0xf]
        %v4768 = vld [vmem:[#allocation2 + $0x14] sm:$0x1]
        %v4769 = vld [vmem:[#allocation2 + $0x18] sm:$0xf]
        %v4770 = vld [vmem:[#allocation2 + $0x1c] sm:$0x1]
        %v4771 = vld [vmem:[#allocation2 + $0x20] sm:$0xf]
        %v4772 = vld [vmem:[#allocation2 + $0x24] sm:$0x1]
        %v4773 = vld [vmem:[#allocation2 + $0x28] sm:$0xf]
        %v4774 = vld [vmem:[#allocation2 + $0x2c] sm:$0x1]
        %v4775 = vld [vmem:[#allocation2 + $0x30] sm:$0xf]
        %v4776 = vld [vmem:[#allocation2 + $0x34] sm:$0x1]
        %v4777 = vld [vmem:[#allocation2 + $0x38] sm:$0xf]
        %v4778 = vld [vmem:[#allocation2 + $0x3c] sm:$0x1]
        %v4780 = vshrl.u32 %v4763, 16
        %v4782 = vrot.slane %v4780, 4
        %v4783 = vshll.u32 %v4763, 16
        %v4785 = vrot.slane %v4783, 5
        %v4786 = vor.u32 %v4782, %v4785
        %v4787 = vrot.slane %v4786, 4
        %v4789 = vshll.u32 %v4764, 16
        %v4791 = vrot.slane %v4789, 5
        %v4792 = vsel %vm559, %v4787, %v4791
        %v4794 = vshrl.u32 %v4765, 16
        %v4796 = vrot.slane %v4794, 4
        %v4797 = vshll.u32 %v4765, 16
        %v4799 = vrot.slane %v4797, 5
        %v4800 = vor.u32 %v4796, %v4799
        %v4801 = vrot.slane %v4800, 4
        %v4803 = vshll.u32 %v4766, 16
        %v4805 = vrot.slane %v4803, 5
        %v4806 = vsel %vm559, %v4801, %v4805
        %v4808 = vshrl.u32 %v4767, 16
        %v4810 = vrot.slane %v4808, 4
        %v4811 = vshll.u32 %v4767, 16
        %v4813 = vrot.slane %v4811, 5
        %v4814 = vor.u32 %v4810, %v4813
        %v4815 = vrot.slane %v4814, 4
        %v4817 = vshll.u32 %v4768, 16
        %v4819 = vrot.slane %v4817, 5
        %v4820 = vsel %vm559, %v4815, %v4819
        %v4822 = vshrl.u32 %v4769, 16
        %v4824 = vrot.slane %v4822, 4
        %v4825 = vshll.u32 %v4769, 16
        %v4827 = vrot.slane %v4825, 5
        %v4828 = vor.u32 %v4824, %v4827
        %v4829 = vrot.slane %v4828, 4
        %v4831 = vshll.u32 %v4770, 16
        %v4833 = vrot.slane %v4831, 5
        %v4834 = vsel %vm559, %v4829, %v4833
        %v4836 = vshrl.u32 %v4771, 16
        %v4838 = vrot.slane %v4836, 4
        %v4839 = vshll.u32 %v4771, 16
        %v4841 = vrot.slane %v4839, 5
        %v4842 = vor.u32 %v4838, %v4841
        %v4843 = vrot.slane %v4842, 4
        %v4845 = vshll.u32 %v4772, 16
        %v4847 = vrot.slane %v4845, 5
        %v4848 = vsel %vm559, %v4843, %v4847
        %v4850 = vshrl.u32 %v4773, 16
        %v4852 = vrot.slane %v4850, 4
        %v4853 = vshll.u32 %v4773, 16
        %v4855 = vrot.slane %v4853, 5
        %v4856 = vor.u32 %v4852, %v4855
        %v4857 = vrot.slane %v4856, 4
        %v4859 = vshll.u32 %v4774, 16
        %v4861 = vrot.slane %v4859, 5
        %v4862 = vsel %vm559, %v4857, %v4861
        %v4864 = vshrl.u32 %v4775, 16
        %v4866 = vrot.slane %v4864, 4
        %v4867 = vshll.u32 %v4775, 16
        %v4869 = vrot.slane %v4867, 5
        %v4870 = vor.u32 %v4866, %v4869
        %v4871 = vrot.slane %v4870, 4
        %v4873 = vshll.u32 %v4776, 16
        %v4875 = vrot.slane %v4873, 5
        %v4876 = vsel %vm559, %v4871, %v4875
        %v4878 = vshrl.u32 %v4777, 16
        %v4880 = vrot.slane %v4878, 4
        %v4881 = vshll.u32 %v4777, 16
        %v4883 = vrot.slane %v4881, 5
        %v4884 = vor.u32 %v4880, %v4883
        %v4885 = vrot.slane %v4884, 4
        %v4887 = vshll.u32 %v4778, 16
        %v4889 = vrot.slane %v4887, 5
        %v4890 = vsel %vm559, %v4885, %v4889
        %4891 = vrot.lane.b32.xlu0 %v4792, 32
        %v4892 = vpop.permute.xlu0 %4891
        %4893 = vrot.lane.b32.xlu0 %v4806, 32
        %v4894 = vpop.permute.xlu0 %4893
        %4895 = vrot.lane.b32.xlu0 %v4820, 32
        %v4896 = vpop.permute.xlu0 %4895
        %4897 = vrot.lane.b32.xlu0 %v4834, 32
        %v4898 = vpop.permute.xlu0 %4897
        %4899 = vrot.lane.b32.xlu0 %v4848, 32
        %v4900 = vpop.permute.xlu0 %4899
        %4901 = vrot.lane.b32.xlu0 %v4862, 32
        %v4902 = vpop.permute.xlu0 %4901
        %4903 = vrot.lane.b32.xlu0 %v4876, 32
        %v4904 = vpop.permute.xlu0 %4903
        %4905 = vrot.lane.b32.xlu0 %v4890, 32
        %v4906 = vpop.permute.xlu0 %4905
        %4915 = vst.msk [vmem:[#allocation3] sm:$0xf] %vm696, %v4892
        %4916 = vst.msk [vmem:[#allocation3 + $0xc] sm:$0xf] %vm696, %v4894
        %4917 = vst.msk [vmem:[#allocation3 + $0x18] sm:$0xf] %vm696, %v4896
        %4918 = vst.msk [vmem:[#allocation3 + $0x24] sm:$0xf] %vm696, %v4898
        %4919 = vst.msk [vmem:[#allocation3 + $0x30] sm:$0xf] %vm696, %v4900
        %4920 = vst.msk [vmem:[#allocation3 + $0x3c] sm:$0xf] %vm696, %v4902
        %4921 = vst.msk [vmem:[#allocation3 + $0x48] sm:$0xf] %vm696, %v4904
        %4922 = vst.msk [vmem:[#allocation3 + $0x54] sm:$0xf] %vm696, %v4906
        %v4923 = vld [vmem:[#allocation2] sm:$0xe]
        %v4924 = vld [vmem:[#allocation2 + $0x4] sm:$0x1]
        %v4925 = vld [vmem:[#allocation2 + $0x8] sm:$0xe]
        %v4926 = vld [vmem:[#allocation2 + $0xc] sm:$0x1]
        %v4927 = vld [vmem:[#allocation2 + $0x10] sm:$0xe]
        %v4928 = vld [vmem:[#allocation2 + $0x14] sm:$0x1]
        %v4929 = vld [vmem:[#allocation2 + $0x18] sm:$0xe]
        %v4930 = vld [vmem:[#allocation2 + $0x1c] sm:$0x1]
        %v4931 = vld [vmem:[#allocation2 + $0x20] sm:$0xe]
        %v4932 = vld [vmem:[#allocation2 + $0x24] sm:$0x1]
        %v4933 = vld [vmem:[#allocation2 + $0x28] sm:$0xe]
        %v4934 = vld [vmem:[#allocation2 + $0x2c] sm:$0x1]
        %v4935 = vld [vmem:[#allocation2 + $0x30] sm:$0xe]
        %v4936 = vld [vmem:[#allocation2 + $0x34] sm:$0x1]
        %v4937 = vld [vmem:[#allocation2 + $0x38] sm:$0xe]
        %v4938 = vld [vmem:[#allocation2 + $0x3c] sm:$0x1]
        %v4955 = vrot.slane %v4923, 5
        %v4956 = vrot.slane %v4955, 4
        %v4957 = vrot.slane %v4924, 5
        %v4958 = vsel %vm739, %v4956, %v4957
        %v4959 = vrot.slane %v4925, 5
        %v4960 = vrot.slane %v4959, 4
        %v4961 = vrot.slane %v4926, 5
        %v4962 = vsel %vm739, %v4960, %v4961
        %v4963 = vrot.slane %v4927, 5
        %v4964 = vrot.slane %v4963, 4
        %v4965 = vrot.slane %v4928, 5
        %v4966 = vsel %vm739, %v4964, %v4965
        %v4967 = vrot.slane %v4929, 5
        %v4968 = vrot.slane %v4967, 4
        %v4969 = vrot.slane %v4930, 5
        %v4970 = vsel %vm739, %v4968, %v4969
        %v4971 = vrot.slane %v4931, 5
        %v4972 = vrot.slane %v4971, 4
        %v4973 = vrot.slane %v4932, 5
        %v4974 = vsel %vm739, %v4972, %v4973
        %v4975 = vrot.slane %v4933, 5
        %v4976 = vrot.slane %v4975, 4
        %v4977 = vrot.slane %v4934, 5
        %v4978 = vsel %vm739, %v4976, %v4977
        %v4979 = vrot.slane %v4935, 5
        %v4980 = vrot.slane %v4979, 4
        %v4981 = vrot.slane %v4936, 5
        %v4982 = vsel %vm739, %v4980, %v4981
        %v4983 = vrot.slane %v4937, 5
        %v4984 = vrot.slane %v4983, 4
        %v4985 = vrot.slane %v4938, 5
        %v4986 = vsel %vm739, %v4984, %v4985
        %4987 = vrot.lane.b32.xlu0 %v4958, 64
        %v4988 = vpop.permute.xlu0 %4987
        %4989 = vrot.lane.b32.xlu0 %v4962, 64
        %v4990 = vpop.permute.xlu0 %4989
        %4991 = vrot.lane.b32.xlu0 %v4966, 64
        %v4992 = vpop.permute.xlu0 %4991
        %4993 = vrot.lane.b32.xlu0 %v4970, 64
        %v4994 = vpop.permute.xlu0 %4993
        %4995 = vrot.lane.b32.xlu0 %v4974, 64
        %v4996 = vpop.permute.xlu0 %4995
        %4997 = vrot.lane.b32.xlu0 %v4978, 64
        %v4998 = vpop.permute.xlu0 %4997
        %4999 = vrot.lane.b32.xlu0 %v4982, 64
        %v5000 = vpop.permute.xlu0 %4999
        %5001 = vrot.lane.b32.xlu0 %v4986, 64
        %v5002 = vpop.permute.xlu0 %5001
        %5011 = vst.msk [vmem:[#allocation3] sm:$0xf] %vm796, %v4988
        %5012 = vst.msk [vmem:[#allocation3 + $0xc] sm:$0xf] %vm796, %v4990
        %5013 = vst.msk [vmem:[#allocation3 + $0x18] sm:$0xf] %vm796, %v4992
        %5014 = vst.msk [vmem:[#allocation3 + $0x24] sm:$0xf] %vm796, %v4994
        %5015 = vst.msk [vmem:[#allocation3 + $0x30] sm:$0xf] %vm796, %v4996
        %5016 = vst.msk [vmem:[#allocation3 + $0x3c] sm:$0xf] %vm796, %v4998
        %5017 = vst.msk [vmem:[#allocation3 + $0x48] sm:$0xf] %vm796, %v5000
        %5018 = vst.msk [vmem:[#allocation3 + $0x54] sm:$0xf] %vm796, %v5002
        %v5019 = vld [vmem:[%s285] sm:$0xf]
        %v5020 = vld [vmem:[%s285 + $0x8] sm:$0xf]
        %v5021 = vld [vmem:[%s285 + $0x10] sm:$0xf]
        %v5022 = vld [vmem:[%s285 + $0x18] sm:$0xf]
        %v5023 = vld [vmem:[%s285 + $0x20] sm:$0xf]
        %v5024 = vld [vmem:[%s285 + $0x28] sm:$0xf]
        %v5025 = vld [vmem:[%s285 + $0x30] sm:$0xf]
        %v5026 = vld [vmem:[%s285 + $0x38] sm:$0xf]
        %5035 = vrot.lane.b32.xlu0 %v5019, 96
        %v5036 = vpop.permute.xlu0 %5035
        %5037 = vrot.lane.b32.xlu0 %v5020, 96
        %v5038 = vpop.permute.xlu0 %5037
        %5039 = vrot.lane.b32.xlu0 %v5021, 96
        %v5040 = vpop.permute.xlu0 %5039
        %5041 = vrot.lane.b32.xlu0 %v5022, 96
        %v5042 = vpop.permute.xlu0 %5041
        %5043 = vrot.lane.b32.xlu0 %v5023, 96
        %v5044 = vpop.permute.xlu0 %5043
        %5045 = vrot.lane.b32.xlu0 %v5024, 96
        %v5046 = vpop.permute.xlu0 %5045
        %5047 = vrot.lane.b32.xlu0 %v5025, 96
        %v5048 = vpop.permute.xlu0 %5047
        %5049 = vrot.lane.b32.xlu0 %v5026, 96
        %v5050 = vpop.permute.xlu0 %5049
        %5059 = vst.msk [vmem:[#allocation3] sm:$0xf] %vm845, %v5036
        %5060 = vst.msk [vmem:[#allocation3 + $0xc] sm:$0xf] %vm845, %v5038
        %5061 = vst.msk [vmem:[#allocation3 + $0x18] sm:$0xf] %vm845, %v5040
        %5062 = vst.msk [vmem:[#allocation3 + $0x24] sm:$0xf] %vm845, %v5042
        %5063 = vst.msk [vmem:[#allocation3 + $0x30] sm:$0xf] %vm845, %v5044
        %5064 = vst.msk [vmem:[#allocation3 + $0x3c] sm:$0xf] %vm845, %v5046
        %5065 = vst.msk [vmem:[#allocation3 + $0x48] sm:$0xf] %vm845, %v5048
        %5066 = vst.msk [vmem:[#allocation3 + $0x54] sm:$0xf] %vm845, %v5050
        %v5067 = vld [vmem:[%s285] sm:$0xf]
        %v5068 = vld [vmem:[%s285 + $0x4] sm:$0x1]
        %v5069 = vld [vmem:[%s285 + $0x8] sm:$0xf]
        %v5070 = vld [vmem:[%s285 + $0xc] sm:$0x1]
        %v5071 = vld [vmem:[%s285 + $0x10] sm:$0xf]
        %v5072 = vld [vmem:[%s285 + $0x14] sm:$0x1]
        %v5073 = vld [vmem:[%s285 + $0x18] sm:$0xf]
        %v5074 = vld [vmem:[%s285 + $0x1c] sm:$0x1]
        %v5075 = vld [vmem:[%s285 + $0x20] sm:$0xf]
        %v5076 = vld [vmem:[%s285 + $0x24] sm:$0x1]
        %v5077 = vld [vmem:[%s285 + $0x28] sm:$0xf]
        %v5078 = vld [vmem:[%s285 + $0x2c] sm:$0x1]
        %v5079 = vld [vmem:[%s285 + $0x30] sm:$0xf]
        %v5080 = vld [vmem:[%s285 + $0x34] sm:$0x1]
        %v5081 = vld [vmem:[%s285 + $0x38] sm:$0xf]
        %v5082 = vld [vmem:[%s285 + $0x3c] sm:$0x1]
        %v5084 = vshrl.u32 %v5067, 16
        %v5086 = vrot.slane %v5084, 4
        %v5087 = vshll.u32 %v5067, 16
        %v5089 = vrot.slane %v5087, 5
        %v5090 = vor.u32 %v5086, %v5089
        %v5091 = vrot.slane %v5090, 4
        %v5093 = vshll.u32 %v5068, 16
        %v5095 = vrot.slane %v5093, 5
        %v5096 = vsel %vm559, %v5091, %v5095
        %v5098 = vshrl.u32 %v5069, 16
        %v5100 = vrot.slane %v5098, 4
        %v5101 = vshll.u32 %v5069, 16
        %v5103 = vrot.slane %v5101, 5
        %v5104 = vor.u32 %v5100, %v5103
        %v5105 = vrot.slane %v5104, 4
        %v5107 = vshll.u32 %v5070, 16
        %v5109 = vrot.slane %v5107, 5
        %v5110 = vsel %vm559, %v5105, %v5109
        %v5112 = vshrl.u32 %v5071, 16
        %v5114 = vrot.slane %v5112, 4
        %v5115 = vshll.u32 %v5071, 16
        %v5117 = vrot.slane %v5115, 5
        %v5118 = vor.u32 %v5114, %v5117
        %v5119 = vrot.slane %v5118, 4
        %v5121 = vshll.u32 %v5072, 16
        %v5123 = vrot.slane %v5121, 5
        %v5124 = vsel %vm559, %v5119, %v5123
        %v5126 = vshrl.u32 %v5073, 16
        %v5128 = vrot.slane %v5126, 4
        %v5129 = vshll.u32 %v5073, 16
        %v5131 = vrot.slane %v5129, 5
        %v5132 = vor.u32 %v5128, %v5131
        %v5133 = vrot.slane %v5132, 4
        %v5135 = vshll.u32 %v5074, 16
        %v5137 = vrot.slane %v5135, 5
        %v5138 = vsel %vm559, %v5133, %v5137
        %v5140 = vshrl.u32 %v5075, 16
        %v5142 = vrot.slane %v5140, 4
        %v5143 = vshll.u32 %v5075, 16
        %v5145 = vrot.slane %v5143, 5
        %v5146 = vor.u32 %v5142, %v5145
        %v5147 = vrot.slane %v5146, 4
        %v5149 = vshll.u32 %v5076, 16
        %v5151 = vrot.slane %v5149, 5
        %v5152 = vsel %vm559, %v5147, %v5151
        %v5154 = vshrl.u32 %v5077, 16
        %v5156 = vrot.slane %v5154, 4
        %v5157 = vshll.u32 %v5077, 16
        %v5159 = vrot.slane %v5157, 5
        %v5160 = vor.u32 %v5156, %v5159
        %v5161 = vrot.slane %v5160, 4
        %v5163 = vshll.u32 %v5078, 16
        %v5165 = vrot.slane %v5163, 5
        %v5166 = vsel %vm559, %v5161, %v5165
        %v5168 = vshrl.u32 %v5079, 16
        %v5170 = vrot.slane %v5168, 4
        %v5171 = vshll.u32 %v5079, 16
        %v5173 = vrot.slane %v5171, 5
        %v5174 = vor.u32 %v5170, %v5173
        %v5175 = vrot.slane %v5174, 4
        %v5177 = vshll.u32 %v5080, 16
        %v5179 = vrot.slane %v5177, 5
        %v5180 = vsel %vm559, %v5175, %v5179
        %v5182 = vshrl.u32 %v5081, 16
        %v5184 = vrot.slane %v5182, 4
        %v5185 = vshll.u32 %v5081, 16
        %v5187 = vrot.slane %v5185, 5
        %v5188 = vor.u32 %v5184, %v5187
        %v5189 = vrot.slane %v5188, 4
        %v5191 = vshll.u32 %v5082, 16
        %v5193 = vrot.slane %v5191, 5
        %v5194 = vsel %vm559, %v5189, %v5193
        %5203 = vst.msk [vmem:[#allocation3 + $0x4] sm:$0xf] %vm278, %v5096
        %5204 = vst.msk [vmem:[#allocation3 + $0x10] sm:$0xf] %vm278, %v5110
        %5205 = vst.msk [vmem:[#allocation3 + $0x1c] sm:$0xf] %vm278, %v5124
        %5206 = vst.msk [vmem:[#allocation3 + $0x28] sm:$0xf] %vm278, %v5138
        %5207 = vst.msk [vmem:[#allocation3 + $0x34] sm:$0xf] %vm278, %v5152
        %5208 = vst.msk [vmem:[#allocation3 + $0x40] sm:$0xf] %vm278, %v5166
        %5209 = vst.msk [vmem:[#allocation3 + $0x4c] sm:$0xf] %vm278, %v5180
        %5210 = vst.msk [vmem:[#allocation3 + $0x58] sm:$0xf] %vm278, %v5194
        %v5211 = vld [vmem:[%s285] sm:$0xe]
        %v5212 = vld [vmem:[%s285 + $0x4] sm:$0x1]
        %v5213 = vld [vmem:[%s285 + $0x8] sm:$0xe]
        %v5214 = vld [vmem:[%s285 + $0xc] sm:$0x1]
        %v5215 = vld [vmem:[%s285 + $0x10] sm:$0xe]
        %v5216 = vld [vmem:[%s285 + $0x14] sm:$0x1]
        %v5217 = vld [vmem:[%s285 + $0x18] sm:$0xe]
        %v5218 = vld [vmem:[%s285 + $0x1c] sm:$0x1]
        %v5219 = vld [vmem:[%s285 + $0x20] sm:$0xe]
        %v5220 = vld [vmem:[%s285 + $0x24] sm:$0x1]
        %v5221 = vld [vmem:[%s285 + $0x28] sm:$0xe]
        %v5222 = vld [vmem:[%s285 + $0x2c] sm:$0x1]
        %v5223 = vld [vmem:[%s285 + $0x30] sm:$0xe]
        %v5224 = vld [vmem:[%s285 + $0x34] sm:$0x1]
        %v5225 = vld [vmem:[%s285 + $0x38] sm:$0xe]
        %v5226 = vld [vmem:[%s285 + $0x3c] sm:$0x1]
        %v5243 = vrot.slane %v5211, 5
        %v5244 = vrot.slane %v5243, 4
        %v5245 = vrot.slane %v5212, 5
        %v5246 = vsel %vm739, %v5244, %v5245
        %v5247 = vrot.slane %v5213, 5
        %v5248 = vrot.slane %v5247, 4
        %v5249 = vrot.slane %v5214, 5
        %v5250 = vsel %vm739, %v5248, %v5249
        %v5251 = vrot.slane %v5215, 5
        %v5252 = vrot.slane %v5251, 4
        %v5253 = vrot.slane %v5216, 5
        %v5254 = vsel %vm739, %v5252, %v5253
        %v5255 = vrot.slane %v5217, 5
        %v5256 = vrot.slane %v5255, 4
        %v5257 = vrot.slane %v5218, 5
        %v5258 = vsel %vm739, %v5256, %v5257
        %v5259 = vrot.slane %v5219, 5
        %v5260 = vrot.slane %v5259, 4
        %v5261 = vrot.slane %v5220, 5
        %v5262 = vsel %vm739, %v5260, %v5261
        %v5263 = vrot.slane %v5221, 5
        %v5264 = vrot.slane %v5263, 4
        %v5265 = vrot.slane %v5222, 5
        %v5266 = vsel %vm739, %v5264, %v5265
        %v5267 = vrot.slane %v5223, 5
        %v5268 = vrot.slane %v5267, 4
        %v5269 = vrot.slane %v5224, 5
        %v5270 = vsel %vm739, %v5268, %v5269
        %v5271 = vrot.slane %v5225, 5
        %v5272 = vrot.slane %v5271, 4
        %v5273 = vrot.slane %v5226, 5
        %v5274 = vsel %vm739, %v5272, %v5273
        %5275 = vrot.lane.b32.xlu0 %v5246, 32
        %v5276 = vpop.permute.xlu0 %5275
        %5277 = vrot.lane.b32.xlu0 %v5250, 32
        %v5278 = vpop.permute.xlu0 %5277
        %5279 = vrot.lane.b32.xlu0 %v5254, 32
        %v5280 = vpop.permute.xlu0 %5279
        %5281 = vrot.lane.b32.xlu0 %v5258, 32
        %v5282 = vpop.permute.xlu0 %5281
        %5283 = vrot.lane.b32.xlu0 %v5262, 32
        %v5284 = vpop.permute.xlu0 %5283
        %5285 = vrot.lane.b32.xlu0 %v5266, 32
        %v5286 = vpop.permute.xlu0 %5285
        %5287 = vrot.lane.b32.xlu0 %v5270, 32
        %v5288 = vpop.permute.xlu0 %5287
        %5289 = vrot.lane.b32.xlu0 %v5274, 32
        %v5290 = vpop.permute.xlu0 %5289
        %5299 = vst.msk [vmem:[#allocation3 + $0x4] sm:$0xf] %vm696, %v5276
        %5300 = vst.msk [vmem:[#allocation3 + $0x10] sm:$0xf] %vm696, %v5278
        %5301 = vst.msk [vmem:[#allocation3 + $0x1c] sm:$0xf] %vm696, %v5280
        %5302 = vst.msk [vmem:[#allocation3 + $0x28] sm:$0xf] %vm696, %v5282
        %5303 = vst.msk [vmem:[#allocation3 + $0x34] sm:$0xf] %vm696, %v5284
        %5304 = vst.msk [vmem:[#allocation3 + $0x40] sm:$0xf] %vm696, %v5286
        %5305 = vst.msk [vmem:[#allocation3 + $0x4c] sm:$0xf] %vm696, %v5288
        %5306 = vst.msk [vmem:[#allocation3 + $0x58] sm:$0xf] %vm696, %v5290
        %v5307 = vld [vmem:[%s1094] sm:$0xf]
        %v5308 = vld [vmem:[%s1094 + $0x8] sm:$0xf]
        %v5309 = vld [vmem:[%s1094 + $0x10] sm:$0xf]
        %v5310 = vld [vmem:[%s1094 + $0x18] sm:$0xf]
        %v5311 = vld [vmem:[%s1094 + $0x20] sm:$0xf]
        %v5312 = vld [vmem:[%s1094 + $0x28] sm:$0xf]
        %v5313 = vld [vmem:[%s1094 + $0x30] sm:$0xf]
        %v5314 = vld [vmem:[%s1094 + $0x38] sm:$0xf]
        %5323 = vrot.lane.b32.xlu0 %v5307, 64
        %v5324 = vpop.permute.xlu0 %5323
        %5325 = vrot.lane.b32.xlu0 %v5308, 64
        %v5326 = vpop.permute.xlu0 %5325
        %5327 = vrot.lane.b32.xlu0 %v5309, 64
        %v5328 = vpop.permute.xlu0 %5327
        %5329 = vrot.lane.b32.xlu0 %v5310, 64
        %v5330 = vpop.permute.xlu0 %5329
        %5331 = vrot.lane.b32.xlu0 %v5311, 64
        %v5332 = vpop.permute.xlu0 %5331
        %5333 = vrot.lane.b32.xlu0 %v5312, 64
        %v5334 = vpop.permute.xlu0 %5333
        %5335 = vrot.lane.b32.xlu0 %v5313, 64
        %v5336 = vpop.permute.xlu0 %5335
        %5337 = vrot.lane.b32.xlu0 %v5314, 64
        %v5338 = vpop.permute.xlu0 %5337
        %5347 = vst.msk [vmem:[#allocation3 + $0x4] sm:$0xf] %vm796, %v5324
        %5348 = vst.msk [vmem:[#allocation3 + $0x10] sm:$0xf] %vm796, %v5326
        %5349 = vst.msk [vmem:[#allocation3 + $0x1c] sm:$0xf] %vm796, %v5328
        %5350 = vst.msk [vmem:[#allocation3 + $0x28] sm:$0xf] %vm796, %v5330
        %5351 = vst.msk [vmem:[#allocation3 + $0x34] sm:$0xf] %vm796, %v5332
        %5352 = vst.msk [vmem:[#allocation3 + $0x40] sm:$0xf] %vm796, %v5334
        %5353 = vst.msk [vmem:[#allocation3 + $0x4c] sm:$0xf] %vm796, %v5336
        %5354 = vst.msk [vmem:[#allocation3 + $0x58] sm:$0xf] %vm796, %v5338
        %v5355 = vld [vmem:[%s1094] sm:$0xf]
        %v5356 = vld [vmem:[%s1094 + $0x4] sm:$0x1]
        %v5357 = vld [vmem:[%s1094 + $0x8] sm:$0xf]
        %v5358 = vld [vmem:[%s1094 + $0xc] sm:$0x1]
        %v5359 = vld [vmem:[%s1094 + $0x10] sm:$0xf]
        %v5360 = vld [vmem:[%s1094 + $0x14] sm:$0x1]
        %v5361 = vld [vmem:[%s1094 + $0x18] sm:$0xf]
        %v5362 = vld [vmem:[%s1094 + $0x1c] sm:$0x1]
        %v5363 = vld [vmem:[%s1094 + $0x20] sm:$0xf]
        %v5364 = vld [vmem:[%s1094 + $0x24] sm:$0x1]
        %v5365 = vld [vmem:[%s1094 + $0x28] sm:$0xf]
        %v5366 = vld [vmem:[%s1094 + $0x2c] sm:$0x1]
        %v5367 = vld [vmem:[%s1094 + $0x30] sm:$0xf]
        %v5368 = vld [vmem:[%s1094 + $0x34] sm:$0x1]
        %v5369 = vld [vmem:[%s1094 + $0x38] sm:$0xf]
        %v5370 = vld [vmem:[%s1094 + $0x3c] sm:$0x1]
        %v5372 = vshrl.u32 %v5355, 16
        %v5374 = vrot.slane %v5372, 4
        %v5375 = vshll.u32 %v5355, 16
        %v5377 = vrot.slane %v5375, 5
        %v5378 = vor.u32 %v5374, %v5377
        %v5379 = vrot.slane %v5378, 4
        %v5381 = vshll.u32 %v5356, 16
        %v5383 = vrot.slane %v5381, 5
        %v5384 = vsel %vm559, %v5379, %v5383
        %v5386 = vshrl.u32 %v5357, 16
        %v5388 = vrot.slane %v5386, 4
        %v5389 = vshll.u32 %v5357, 16
        %v5391 = vrot.slane %v5389, 5
        %v5392 = vor.u32 %v5388, %v5391
        %v5393 = vrot.slane %v5392, 4
        %v5395 = vshll.u32 %v5358, 16
        %v5397 = vrot.slane %v5395, 5
        %v5398 = vsel %vm559, %v5393, %v5397
        %v5400 = vshrl.u32 %v5359, 16
        %v5402 = vrot.slane %v5400, 4
        %v5403 = vshll.u32 %v5359, 16
        %v5405 = vrot.slane %v5403, 5
        %v5406 = vor.u32 %v5402, %v5405
        %v5407 = vrot.slane %v5406, 4
        %v5409 = vshll.u32 %v5360, 16
        %v5411 = vrot.slane %v5409, 5
        %v5412 = vsel %vm559, %v5407, %v5411
        %v5414 = vshrl.u32 %v5361, 16
        %v5416 = vrot.slane %v5414, 4
        %v5417 = vshll.u32 %v5361, 16
        %v5419 = vrot.slane %v5417, 5
        %v5420 = vor.u32 %v5416, %v5419
        %v5421 = vrot.slane %v5420, 4
        %v5423 = vshll.u32 %v5362, 16
        %v5425 = vrot.slane %v5423, 5
        %v5426 = vsel %vm559, %v5421, %v5425
        %v5428 = vshrl.u32 %v5363, 16
        %v5430 = vrot.slane %v5428, 4
        %v5431 = vshll.u32 %v5363, 16
        %v5433 = vrot.slane %v5431, 5
        %v5434 = vor.u32 %v5430, %v5433
        %v5435 = vrot.slane %v5434, 4
        %v5437 = vshll.u32 %v5364, 16
        %v5439 = vrot.slane %v5437, 5
        %v5440 = vsel %vm559, %v5435, %v5439
        %v5442 = vshrl.u32 %v5365, 16
        %v5444 = vrot.slane %v5442, 4
        %v5445 = vshll.u32 %v5365, 16
        %v5447 = vrot.slane %v5445, 5
        %v5448 = vor.u32 %v5444, %v5447
        %v5449 = vrot.slane %v5448, 4
        %v5451 = vshll.u32 %v5366, 16
        %v5453 = vrot.slane %v5451, 5
        %v5454 = vsel %vm559, %v5449, %v5453
        %v5456 = vshrl.u32 %v5367, 16
        %v5458 = vrot.slane %v5456, 4
        %v5459 = vshll.u32 %v5367, 16
        %v5461 = vrot.slane %v5459, 5
        %v5462 = vor.u32 %v5458, %v5461
        %v5463 = vrot.slane %v5462, 4
        %v5465 = vshll.u32 %v5368, 16
        %v5467 = vrot.slane %v5465, 5
        %v5468 = vsel %vm559, %v5463, %v5467
        %v5470 = vshrl.u32 %v5369, 16
        %v5472 = vrot.slane %v5470, 4
        %v5473 = vshll.u32 %v5369, 16
        %v5475 = vrot.slane %v5473, 5
        %v5476 = vor.u32 %v5472, %v5475
        %v5477 = vrot.slane %v5476, 4
        %v5479 = vshll.u32 %v5370, 16
        %v5481 = vrot.slane %v5479, 5
        %v5482 = vsel %vm559, %v5477, %v5481
        %5483 = vrot.lane.b32.xlu0 %v5384, 96
        %v5484 = vpop.permute.xlu0 %5483
        %5485 = vrot.lane.b32.xlu0 %v5398, 96
        %v5486 = vpop.permute.xlu0 %5485
        %5487 = vrot.lane.b32.xlu0 %v5412, 96
        %v5488 = vpop.permute.xlu0 %5487
        %5489 = vrot.lane.b32.xlu0 %v5426, 96
        %v5490 = vpop.permute.xlu0 %5489
        %5491 = vrot.lane.b32.xlu0 %v5440, 96
        %v5492 = vpop.permute.xlu0 %5491
        %5493 = vrot.lane.b32.xlu0 %v5454, 96
        %v5494 = vpop.permute.xlu0 %5493
        %5495 = vrot.lane.b32.xlu0 %v5468, 96
        %v5496 = vpop.permute.xlu0 %5495
        %5497 = vrot.lane.b32.xlu0 %v5482, 96
        %v5498 = vpop.permute.xlu0 %5497
        %5507 = vst.msk [vmem:[#allocation3 + $0x4] sm:$0xf] %vm845, %v5484
        %5508 = vst.msk [vmem:[#allocation3 + $0x10] sm:$0xf] %vm845, %v5486
        %5509 = vst.msk [vmem:[#allocation3 + $0x1c] sm:$0xf] %vm845, %v5488
        %5510 = vst.msk [vmem:[#allocation3 + $0x28] sm:$0xf] %vm845, %v5490
        %5511 = vst.msk [vmem:[#allocation3 + $0x34] sm:$0xf] %vm845, %v5492
        %5512 = vst.msk [vmem:[#allocation3 + $0x40] sm:$0xf] %vm845, %v5494
        %5513 = vst.msk [vmem:[#allocation3 + $0x4c] sm:$0xf] %vm845, %v5496
        %5514 = vst.msk [vmem:[#allocation3 + $0x58] sm:$0xf] %vm845, %v5498
        %v5515 = vld [vmem:[%s1094] sm:$0xe]
        %v5516 = vld [vmem:[%s1094 + $0x4] sm:$0x1]
        %v5517 = vld [vmem:[%s1094 + $0x8] sm:$0xe]
        %v5518 = vld [vmem:[%s1094 + $0xc] sm:$0x1]
        %v5519 = vld [vmem:[%s1094 + $0x10] sm:$0xe]
        %v5520 = vld [vmem:[%s1094 + $0x14] sm:$0x1]
        %v5521 = vld [vmem:[%s1094 + $0x18] sm:$0xe]
        %v5522 = vld [vmem:[%s1094 + $0x1c] sm:$0x1]
        %v5523 = vld [vmem:[%s1094 + $0x20] sm:$0xe]
        %v5524 = vld [vmem:[%s1094 + $0x24] sm:$0x1]
        %v5525 = vld [vmem:[%s1094 + $0x28] sm:$0xe]
        %v5526 = vld [vmem:[%s1094 + $0x2c] sm:$0x1]
        %v5527 = vld [vmem:[%s1094 + $0x30] sm:$0xe]
        %v5528 = vld [vmem:[%s1094 + $0x34] sm:$0x1]
        %v5529 = vld [vmem:[%s1094 + $0x38] sm:$0xe]
        %v5530 = vld [vmem:[%s1094 + $0x3c] sm:$0x1]
        %v5547 = vrot.slane %v5515, 5
        %v5548 = vrot.slane %v5547, 4
        %v5549 = vrot.slane %v5516, 5
        %v5550 = vsel %vm739, %v5548, %v5549
        %v5551 = vrot.slane %v5517, 5
        %v5552 = vrot.slane %v5551, 4
        %v5553 = vrot.slane %v5518, 5
        %v5554 = vsel %vm739, %v5552, %v5553
        %v5555 = vrot.slane %v5519, 5
        %v5556 = vrot.slane %v5555, 4
        %v5557 = vrot.slane %v5520, 5
        %v5558 = vsel %vm739, %v5556, %v5557
        %v5559 = vrot.slane %v5521, 5
        %v5560 = vrot.slane %v5559, 4
        %v5561 = vrot.slane %v5522, 5
        %v5562 = vsel %vm739, %v5560, %v5561
        %v5563 = vrot.slane %v5523, 5
        %v5564 = vrot.slane %v5563, 4
        %v5565 = vrot.slane %v5524, 5
        %v5566 = vsel %vm739, %v5564, %v5565
        %v5567 = vrot.slane %v5525, 5
        %v5568 = vrot.slane %v5567, 4
        %v5569 = vrot.slane %v5526, 5
        %v5570 = vsel %vm739, %v5568, %v5569
        %v5571 = vrot.slane %v5527, 5
        %v5572 = vrot.slane %v5571, 4
        %v5573 = vrot.slane %v5528, 5
        %v5574 = vsel %vm739, %v5572, %v5573
        %v5575 = vrot.slane %v5529, 5
        %v5576 = vrot.slane %v5575, 4
        %v5577 = vrot.slane %v5530, 5
        %v5578 = vsel %vm739, %v5576, %v5577
        %5587 = vst.msk [vmem:[#allocation3 + $0x8] sm:$0xf] %vm278, %v5550
        %5588 = vst.msk [vmem:[#allocation3 + $0x14] sm:$0xf] %vm278, %v5554
        %5589 = vst.msk [vmem:[#allocation3 + $0x20] sm:$0xf] %vm278, %v5558
        %5590 = vst.msk [vmem:[#allocation3 + $0x2c] sm:$0xf] %vm278, %v5562
        %5591 = vst.msk [vmem:[#allocation3 + $0x38] sm:$0xf] %vm278, %v5566
        %5592 = vst.msk [vmem:[#allocation3 + $0x44] sm:$0xf] %vm278, %v5570
        %5593 = vst.msk [vmem:[#allocation3 + $0x50] sm:$0xf] %vm278, %v5574
        %5594 = vst.msk [vmem:[#allocation3 + $0x5c] sm:$0xf] %vm278, %v5578
        %v5595 = vld [vmem:[#allocation3] sm:$0xff]
        %v5596 = vld [vmem:[#allocation3 + $0x8] sm:$0xf]
        %v5597 = vld [vmem:[#allocation3 + $0xc] sm:$0xff]
        %v5598 = vld [vmem:[#allocation3 + $0x14] sm:$0xf]
        %v5599 = vld [vmem:[#allocation3 + $0x18] sm:$0xff]
        %v5600 = vld [vmem:[#allocation3 + $0x20] sm:$0xf]
        %v5601 = vld [vmem:[#allocation3 + $0x24] sm:$0xff]
        %v5602 = vld [vmem:[#allocation3 + $0x2c] sm:$0xf]
        %v5603 = vld [vmem:[#allocation3 + $0x30] sm:$0xff]
        %v5604 = vld [vmem:[#allocation3 + $0x38] sm:$0xf]
        %v5605 = vld [vmem:[#allocation3 + $0x3c] sm:$0xff]
        %v5606 = vld [vmem:[#allocation3 + $0x44] sm:$0xf]
        %v5607 = vld [vmem:[#allocation3 + $0x48] sm:$0xff]
        %v5608 = vld [vmem:[#allocation3 + $0x50] sm:$0xf]
        %v5609 = vld [vmem:[#allocation3 + $0x54] sm:$0xff]
        %v5610 = vld [vmem:[#allocation3 + $0x5c] sm:$0xf]
        %s5611 = scalar_lea.vmem %s3, 432
        %v5612 = vld [vmem:[%s5611] sm:$0xf]
        %v5613 = vld [vmem:[%s5611 + $0x4] sm:$0xf]
        %v5614 = vld [vmem:[%s5611 + $0x8] sm:$0xf]
        %v5615 = vld [vmem:[%s5611 + $0xc] sm:$0xf]
        %v5616 = vld [vmem:[%s5611 + $0x10] sm:$0xf]
        %v5617 = vld [vmem:[%s5611 + $0x14] sm:$0xf]
        %v5618 = vld [vmem:[%s5611 + $0x18] sm:$0xf]
        %v5619 = vld [vmem:[%s5611 + $0x1c] sm:$0xf]
        %v5620 = vld [vmem:[%s5611 + $0x20] sm:$0xf]
        %v5621 = vld [vmem:[%s5611 + $0x24] sm:$0xf]
        %v5622 = vld [vmem:[%s5611 + $0x28] sm:$0xf]
        %v5623 = vld [vmem:[%s5611 + $0x2c] sm:$0xf]
        %v5624 = vld [vmem:[%s5611 + $0x30] sm:$0xf]
        %v5625 = vld [vmem:[%s5611 + $0x34] sm:$0xf]
        %v5626 = vld [vmem:[%s5611 + $0x38] sm:$0xf]
        %v5627 = vld [vmem:[%s5611 + $0x3c] sm:$0xf]
        %v5628 = vld [vmem:[%s5611 + $0x40] sm:$0xf]
        %v5629 = vld [vmem:[%s5611 + $0x44] sm:$0xf]
        %v5630 = vld [vmem:[%s5611 + $0x48] sm:$0xf]
        %v5631 = vld [vmem:[%s5611 + $0x4c] sm:$0xf]
        %v5632 = vld [vmem:[%s5611 + $0x50] sm:$0xf]
        %v5633 = vld [vmem:[%s5611 + $0x54] sm:$0xf]
        %v5634 = vld [vmem:[%s5611 + $0x58] sm:$0xf]
        %v5635 = vld [vmem:[%s5611 + $0x5c] sm:$0xf]
        %v5636 = vld [vmem:[%s5611 + $0x60] sm:$0xf]
        %v5637 = vld [vmem:[%s5611 + $0x64] sm:$0xf]
        %v5638 = vld [vmem:[%s5611 + $0x68] sm:$0xf]
        %v5639 = vld [vmem:[%s5611 + $0x6c] sm:$0xf]
        %v5640 = vld [vmem:[%s5611 + $0x70] sm:$0xf]
        %v5641 = vld [vmem:[%s5611 + $0x74] sm:$0xf]
        %v5642 = vld [vmem:[%s5611 + $0x78] sm:$0xf]
        %v5643 = vld [vmem:[%s5611 + $0x7c] sm:$0xf]
        %v5644 = vld [vmem:[%s5611 + $0x80] sm:$0xf]
        %v5645 = vld [vmem:[%s5611 + $0x84] sm:$0xf]
        %v5646 = vld [vmem:[%s5611 + $0x88] sm:$0xf]
        %v5647 = vld [vmem:[%s5611 + $0x8c] sm:$0xf]
        %s5648 = scalar_lea.vmem %s4, 3
        %v5649 = vld [vmem:[%s5648] sm:$0x1]
        %v5651 = vlaneseq
        %v5652 = vshrl.u32 %v5651, 7
        %v5653 = vsub.s32 0, %v5652
        %v5654 = vrot.slane %v5649, %v5653
        %v5672 = vunpack.c.l.b16 %v5595
        %v5673 = vunpack.c.h.b16 %v5595
        %v5674 = vunpack.c.l.b16 %v5596
        %v5675 = vunpack.c.l.b16 %v5597
        %v5676 = vunpack.c.h.b16 %v5597
        %v5677 = vunpack.c.l.b16 %v5598
        %v5678 = vunpack.c.l.b16 %v5599
        %v5679 = vunpack.c.h.b16 %v5599
        %v5680 = vunpack.c.l.b16 %v5600
        %v5681 = vunpack.c.l.b16 %v5601
        %v5682 = vunpack.c.h.b16 %v5601
        %v5683 = vunpack.c.l.b16 %v5602
        %v5684 = vunpack.c.l.b16 %v5603
        %v5685 = vunpack.c.h.b16 %v5603
        %v5686 = vunpack.c.l.b16 %v5604
        %v5687 = vunpack.c.l.b16 %v5605
        %v5688 = vunpack.c.h.b16 %v5605
        %v5689 = vunpack.c.l.b16 %v5606
        %v5690 = vunpack.c.l.b16 %v5607
        %v5691 = vunpack.c.h.b16 %v5607
        %v5692 = vunpack.c.l.b16 %v5608
        %v5693 = vunpack.c.l.b16 %v5609
        %v5694 = vunpack.c.h.b16 %v5609
        %v5695 = vunpack.c.l.b16 %v5610
        %v5696 = vpack.c.b16 %v5675, %v5672
        %v5697 = vpack.c.b16 %v5676, %v5673
        %v5698 = vpack.c.b16 %v5677, %v5674
        %v5699 = vpack.c.b16 %v5681, %v5678
        %v5700 = vpack.c.b16 %v5682, %v5679
        %v5701 = vpack.c.b16 %v5683, %v5680
        %v5702 = vpack.c.b16 %v5687, %v5684
        %v5703 = vpack.c.b16 %v5688, %v5685
        %v5704 = vpack.c.b16 %v5689, %v5686
        %v5705 = vpack.c.b16 %v5693, %v5690
        %v5706 = vpack.c.b16 %v5694, %v5691
        %v5707 = vpack.c.b16 %v5695, %v5692
        %v5752 = vunpack.c.l.b16 %v5612
        %v5753 = vunpack.c.l.b16 %v5613
        %v5754 = vunpack.c.l.b16 %v5614
        %v5755 = vunpack.c.l.b16 %v5615
        %v5756 = vunpack.c.l.b16 %v5616
        %v5757 = vunpack.c.l.b16 %v5617
        %v5758 = vunpack.c.l.b16 %v5618
        %v5759 = vunpack.c.l.b16 %v5619
        %v5760 = vunpack.c.l.b16 %v5620
        %v5761 = vunpack.c.l.b16 %v5621
        %v5762 = vunpack.c.l.b16 %v5622
        %v5763 = vunpack.c.l.b16 %v5623
        %v5764 = vunpack.c.l.b16 %v5624
        %v5765 = vunpack.c.l.b16 %v5625
        %v5766 = vunpack.c.l.b16 %v5626
        %v5767 = vunpack.c.l.b16 %v5627
        %v5768 = vunpack.c.l.b16 %v5628
        %v5769 = vunpack.c.l.b16 %v5629
        %v5770 = vunpack.c.l.b16 %v5630
        %v5771 = vunpack.c.l.b16 %v5631
        %v5772 = vunpack.c.l.b16 %v5632
        %v5773 = vunpack.c.l.b16 %v5633
        %v5774 = vunpack.c.l.b16 %v5634
        %v5775 = vunpack.c.l.b16 %v5635
        %v5776 = vunpack.c.l.b16 %v5636
        %v5777 = vunpack.c.l.b16 %v5637
        %v5778 = vunpack.c.l.b16 %v5638
        %v5779 = vunpack.c.l.b16 %v5639
        %v5780 = vunpack.c.l.b16 %v5640
        %v5781 = vunpack.c.l.b16 %v5641
        %v5782 = vunpack.c.l.b16 %v5642
        %v5783 = vunpack.c.l.b16 %v5643
        %v5784 = vunpack.c.l.b16 %v5644
        %v5785 = vunpack.c.l.b16 %v5645
        %v5786 = vunpack.c.l.b16 %v5646
        %v5787 = vunpack.c.l.b16 %v5647
        %v5788 = vpack.c.b16 %v5753, %v5752
        %v5789 = vpack.c.b16 %v5755, %v5754
        %v5790 = vpack.c.b16 %v5757, %v5756
        %v5791 = vpack.c.b16 %v5759, %v5758
        %v5792 = vpack.c.b16 %v5761, %v5760
        %v5793 = vpack.c.b16 %v5763, %v5762
        %v5794 = vpack.c.b16 %v5765, %v5764
        %v5795 = vpack.c.b16 %v5767, %v5766
        %v5796 = vpack.c.b16 %v5769, %v5768
        %v5797 = vpack.c.b16 %v5771, %v5770
        %v5798 = vpack.c.b16 %v5773, %v5772
        %v5799 = vpack.c.b16 %v5775, %v5774
        %v5800 = vpack.c.b16 %v5777, %v5776
        %v5801 = vpack.c.b16 %v5779, %v5778
        %v5802 = vpack.c.b16 %v5781, %v5780
        %v5803 = vpack.c.b16 %v5783, %v5782
        %v5804 = vpack.c.b16 %v5785, %v5784
        %v5805 = vpack.c.b16 %v5787, %v5786
        %v5825 = vsel %vm269, %v5698, 0
        %v5828 = vsel %vm269, %v5701, 0
        %v5831 = vsel %vm269, %v5704, 0
        %v5834 = vsel %vm269, %v5707, 0
        %5836 = vmatprep.subr.bf16.mxu0 0
        %5837 = vmatpush1.bf16.msra.mxu0 %v5788
        %5838 = vmatprep.subr.bf16.mxu0 0
        %5839 = vmatpush1.bf16.msra.mxu0 %v5789
        %5840 = vmatprep.subr.bf16.mxu0 0
        %5841 = vmatpush1.bf16.msra.mxu0 %v5790
        %5842 = vmatprep.subr.bf16.mxu0 0
        %5843 = vmatpush1.bf16.msra.mxu0 %v5791
        %5844 = vmatprep.subr.bf16.mxu0 0
        %5845 = vmatpush1.bf16.msra.mxu0 %v5792
        %5846 = vmatprep.subr.bf16.mxu0 0
        %5847 = vmatpush1.bf16.msra.mxu0 %v5793
        %5848 = vmatprep.subr.bf16.mxu0 0
        %5849 = vmatpush1.bf16.msra.mxu0 %v5794
        %5850 = vmatprep.subr.bf16.mxu0 0
        %5851 = vmatpush1.bf16.msra.mxu0 %v5795
        %5852 = vmatprep.subr.bf16.mxu0 0
        %5853 = vmatpush1.bf16.msra.mxu0 %v5796
        %5854 = vmatprep.subr.bf16.mxu0 0
        %5855 = vmatpush1.bf16.msra.mxu0 %v5797
        %5856 = vmatprep.subr.bf16.mxu0 0
        %5857 = vmatpush1.bf16.msra.mxu0 %v5798
        %5858 = vmatprep.subr.bf16.mxu0 0
        %5859 = vmatpush1.bf16.msra.mxu0 %v5799
        %5860 = vmatprep.subr.bf16.mxu0 0
        %5861 = vmatpush1.bf16.msra.mxu0 %v5800
        %5862 = vmatprep.subr.bf16.mxu0 0
        %5863 = vmatpush1.bf16.msra.mxu0 %v5801
        %5864 = vmatprep.subr.bf16.mxu0 0
        %5865 = vmatpush1.bf16.msra.mxu0 %v5802
        %5866 = vmatprep.subr.bf16.mxu0 0
        %5867 = vmatpush1.bf16.msra.mxu0 %v5803
        %5868 = vmatprep.mubr.bf16.mxu0 %v5697
        %5869 = vmatmul.mubr.bf16.gmra.mrb[0].mxu0 %v5696
        %v5870 = vpop.f32.mrb[0].mxu0
        %v5871 = vadd.f32 %v5654, %v5870
        %v5872 = vpop.f32.mrb[0].mxu0
        %v5873 = vpop.f32.mrb[0].mxu0
        %v5874 = vadd.f32 %v5654, %v5873
        %v5875 = vpop.f32.mrb[0].mxu0
        %5876 = vmatprep.mubr.bf16.mxu0 %v5700
        %5877 = vmatmul.mubr.bf16.gmra.mrb[0].mxu0 %v5699
        %v5878 = vpop.f32.mrb[0].mxu0
        %v5879 = vadd.f32 %v5654, %v5878
        %v5880 = vpop.f32.mrb[0].mxu0
        %v5881 = vpop.f32.mrb[0].mxu0
        %v5882 = vadd.f32 %v5654, %v5881
        %v5883 = vpop.f32.mrb[0].mxu0
        %5884 = vmatprep.mubr.bf16.mxu0 %v5703
        %5885 = vmatmul.mubr.bf16.gmra.mrb[0].mxu0 %v5702
        %v5886 = vpop.f32.mrb[0].mxu0
        %v5887 = vadd.f32 %v5654, %v5886
        %v5888 = vpop.f32.mrb[0].mxu0
        %v5889 = vpop.f32.mrb[0].mxu0
        %v5890 = vadd.f32 %v5654, %v5889
        %v5891 = vpop.f32.mrb[0].mxu0
        %5892 = vmatprep.mubr.bf16.mxu0 %v5706
        %5893 = vmatmul.mubr.bf16.gmra.mrb[0].mxu0 %v5705
        %v5894 = vpop.f32.mrb[0].mxu0
        %v5895 = vadd.f32 %v5654, %v5894
        %v5896 = vpop.f32.mrb[0].mxu0
        %v5897 = vpop.f32.mrb[0].mxu0
        %v5898 = vadd.f32 %v5654, %v5897
        %v5899 = vpop.f32.mrb[0].mxu0
        %5900 = vdwg.mxu0
        %5901 = vmatprep.subr.bf16.mxu0 0
        %5902 = vmatpush1.bf16.msra.mxu0 %v5804
        %5903 = vmatprep.subr.bf16.mxu0 0
        %5904 = vmatpush1.bf16.msra.mxu0 %v5805
        %5905 = vmatprep.subr.bf16.mxu0 0
        %5906 = vmatpush1.bf16.msra.mxu0 0
        %5907 = vmatprep.subr.bf16.mxu0 0
        %5908 = vmatpush1.bf16.msra.mxu0 0
        %5909 = vmatprep.subr.bf16.mxu0 0
        %5910 = vmatpush1.bf16.msra.mxu0 0
        %5911 = vmatprep.subr.bf16.mxu0 0
        %5912 = vmatpush1.bf16.msra.mxu0 0
        %5913 = vmatprep.subr.bf16.mxu0 0
        %5914 = vmatpush1.bf16.msra.mxu0 0
        %5915 = vmatprep.subr.bf16.mxu0 0
        %5916 = vmatpush1.bf16.msra.mxu0 0
        %5917 = vmatprep.subr.bf16.mxu0 0
        %5918 = vmatpush1.bf16.msra.mxu0 0
        %5919 = vmatprep.subr.bf16.mxu0 0
        %5920 = vmatpush1.bf16.msra.mxu0 0
        %5921 = vmatprep.subr.bf16.mxu0 0
        %5922 = vmatpush1.bf16.msra.mxu0 0
        %5923 = vmatprep.subr.bf16.mxu0 0
        %5924 = vmatpush1.bf16.msra.mxu0 0
        %5925 = vmatprep.subr.bf16.mxu0 0
        %5926 = vmatpush1.bf16.msra.mxu0 0
        %5927 = vmatprep.subr.bf16.mxu0 0
        %5928 = vmatpush1.bf16.msra.mxu0 0
        %5929 = vmatprep.subr.bf16.mxu0 0
        %5930 = vmatpush1.bf16.msra.mxu0 0
        %5931 = vmatprep.subr.bf16.mxu0 0
        %5932 = vmatpush1.bf16.msra.mxu0 0
        %5933 = vmatprep.mubr.bf16.mxu0 0
        %5934 = vmatmul.mubr.bf16.gmra.mrb[0].mxu0 %v5825
        %v5935 = vpop.f32.mrb[0].mxu0
        %v5936 = vadd.f32 %v5871, %v5935
        %v5937 = vpop.f32.mrb[0].mxu0
        %v5938 = vpop.f32.mrb[0].mxu0
        %v5939 = vadd.f32 %v5874, %v5938
        %v5940 = vpop.f32.mrb[0].mxu0
        %5941 = vmatprep.mubr.bf16.mxu0 0
        %5942 = vmatmul.mubr.bf16.gmra.mrb[0].mxu0 %v5828
        %v5943 = vpop.f32.mrb[0].mxu0
        %v5944 = vadd.f32 %v5879, %v5943
        %v5945 = vpop.f32.mrb[0].mxu0
        %v5946 = vpop.f32.mrb[0].mxu0
        %v5947 = vadd.f32 %v5882, %v5946
        %v5948 = vpop.f32.mrb[0].mxu0
        %5949 = vmatprep.mubr.bf16.mxu0 0
        %5950 = vmatmul.mubr.bf16.gmra.mrb[0].mxu0 %v5831
        %v5951 = vpop.f32.mrb[0].mxu0
        %v5952 = vadd.f32 %v5887, %v5951
        %v5953 = vpop.f32.mrb[0].mxu0
        %v5954 = vpop.f32.mrb[0].mxu0
        %v5955 = vadd.f32 %v5890, %v5954
        %v5956 = vpop.f32.mrb[0].mxu0
        %5957 = vmatprep.mubr.bf16.mxu0 0
        %5958 = vmatmul.mubr.bf16.gmra.mrb[0].mxu0 %v5834
        %v5959 = vpop.f32.mrb[0].mxu0
        %v5960 = vadd.f32 %v5895, %v5959
        %v5961 = vpop.f32.mrb[0].mxu0
        %v5962 = vpop.f32.mrb[0].mxu0
        %v5963 = vadd.f32 %v5898, %v5962
        %v5964 = vpop.f32.mrb[0].mxu0
        %5965 = vdwg.mxu0
        %v5966 = vmax.f32 %v5936, 0.0
        %v5967 = vmax.f32 %v5939, 0.0
        %v5968 = vmax.f32 %v5944, 0.0
        %v5969 = vmax.f32 %v5947, 0.0
        %v5970 = vmax.f32 %v5952, 0.0
        %v5971 = vmax.f32 %v5955, 0.0
        %v5972 = vmax.f32 %v5960, 0.0
        %v5973 = vmax.f32 %v5963, 0.0
        %v5974 = vpack.c.bf16 %v5966, %v5966
        %v5975 = vpack.c.bf16 %v5967, %v5967
        %v5976 = vpack.c.bf16 %v5968, %v5968
        %v5977 = vpack.c.bf16 %v5969, %v5969
        %v5978 = vpack.c.bf16 %v5970, %v5970
        %v5979 = vpack.c.bf16 %v5971, %v5971
        %v5980 = vpack.c.bf16 %v5972, %v5972
        %v5981 = vpack.c.bf16 %v5973, %v5973
        %v5990 = vunpack.c.l.b16 %v5974
        %v5991 = vunpack.c.l.b16 %v5975
        %v5992 = vunpack.c.l.b16 %v5976
        %v5993 = vunpack.c.l.b16 %v5977
        %v5994 = vunpack.c.l.b16 %v5978
        %v5995 = vunpack.c.l.b16 %v5979
        %v5996 = vunpack.c.l.b16 %v5980
        %v5997 = vunpack.c.l.b16 %v5981
        %v5998 = vpack.c.b16 %v5990, %v5990
        %v5999 = vpack.c.b16 %v5991, %v5991
        %v6000 = vpack.c.b16 %v5992, %v5992
        %v6001 = vpack.c.b16 %v5993, %v5993
        %v6002 = vpack.c.b16 %v5994, %v5994
        %v6003 = vpack.c.b16 %v5995, %v5995
        %v6004 = vpack.c.b16 %v5996, %v5996
        %v6005 = vpack.c.b16 %v5997, %v5997
        %v6007 = vshrl.u32 %v5998, 16
        %v6009 = vrot.slane %v6007, 7
        %v6010 = vshll.u32 %v5998, 16
        %v6012 = vor.u32 %v6009, %v6010
        %v6013 = vrot.slane %v6009, 4
        %v6015 = vshrl.u32 %v5999, 16
        %v6017 = vrot.slane %v6015, 7
        %v6018 = vshll.u32 %v5999, 16
        %v6020 = vor.u32 %v6017, %v6018
        %v6021 = vrot.slane %v6017, 4
        %v6023 = vshrl.u32 %v6000, 16
        %v6025 = vrot.slane %v6023, 7
        %v6026 = vshll.u32 %v6000, 16
        %v6028 = vor.u32 %v6025, %v6026
        %v6029 = vrot.slane %v6025, 4
        %v6031 = vshrl.u32 %v6001, 16
        %v6033 = vrot.slane %v6031, 7
        %v6034 = vshll.u32 %v6001, 16
        %v6036 = vor.u32 %v6033, %v6034
        %v6037 = vrot.slane %v6033, 4
        %v6039 = vshrl.u32 %v6002, 16
        %v6041 = vrot.slane %v6039, 7
        %v6042 = vshll.u32 %v6002, 16
        %v6044 = vor.u32 %v6041, %v6042
        %v6045 = vrot.slane %v6041, 4
        %v6047 = vshrl.u32 %v6003, 16
        %v6049 = vrot.slane %v6047, 7
        %v6050 = vshll.u32 %v6003, 16
        %v6052 = vor.u32 %v6049, %v6050
        %v6053 = vrot.slane %v6049, 4
        %v6055 = vshrl.u32 %v6004, 16
        %v6057 = vrot.slane %v6055, 7
        %v6058 = vshll.u32 %v6004, 16
        %v6060 = vor.u32 %v6057, %v6058
        %v6061 = vrot.slane %v6057, 4
        %v6063 = vshrl.u32 %v6005, 16
        %v6065 = vrot.slane %v6063, 7
        %v6066 = vshll.u32 %v6005, 16
        %v6068 = vor.u32 %v6065, %v6066
        %v6069 = vrot.slane %v6065, 4
        %v6086 = vld [vmem:[%s285] sm:$0xf]
        %v6087 = vsel %vm476, %v6012, %v6086
        %6088 = vst [vmem:[%s285] sm:$0xf] %v6087
        %v6089 = vld [vmem:[%s285 + $0x4] sm:$0x1]
        %v6090 = vsel %vm288, %v6013, %v6089
        %6091 = vst [vmem:[%s285 + $0x4] sm:$0x1] %v6090
        %v6092 = vld [vmem:[%s285 + $0x8] sm:$0xf]
        %v6093 = vsel %vm476, %v6020, %v6092
        %6094 = vst [vmem:[%s285 + $0x8] sm:$0xf] %v6093
        %v6095 = vld [vmem:[%s285 + $0xc] sm:$0x1]
        %v6096 = vsel %vm288, %v6021, %v6095
        %6097 = vst [vmem:[%s285 + $0xc] sm:$0x1] %v6096
        %v6098 = vld [vmem:[%s285 + $0x10] sm:$0xf]
        %v6099 = vsel %vm476, %v6028, %v6098
        %6100 = vst [vmem:[%s285 + $0x10] sm:$0xf] %v6099
        %v6101 = vld [vmem:[%s285 + $0x14] sm:$0x1]
        %v6102 = vsel %vm288, %v6029, %v6101
        %6103 = vst [vmem:[%s285 + $0x14] sm:$0x1] %v6102
        %v6104 = vld [vmem:[%s285 + $0x18] sm:$0xf]
        %v6105 = vsel %vm476, %v6036, %v6104
        %6106 = vst [vmem:[%s285 + $0x18] sm:$0xf] %v6105
        %v6107 = vld [vmem:[%s285 + $0x1c] sm:$0x1]
        %v6108 = vsel %vm288, %v6037, %v6107
        %6109 = vst [vmem:[%s285 + $0x1c] sm:$0x1] %v6108
        %v6110 = vld [vmem:[%s285 + $0x20] sm:$0xf]
        %v6111 = vsel %vm476, %v6044, %v6110
        %6112 = vst [vmem:[%s285 + $0x20] sm:$0xf] %v6111
        %v6113 = vld [vmem:[%s285 + $0x24] sm:$0x1]
        %v6114 = vsel %vm288, %v6045, %v6113
        %6115 = vst [vmem:[%s285 + $0x24] sm:$0x1] %v6114
        %v6116 = vld [vmem:[%s285 + $0x28] sm:$0xf]
        %v6117 = vsel %vm476, %v6052, %v6116
        %6118 = vst [vmem:[%s285 + $0x28] sm:$0xf] %v6117
        %v6119 = vld [vmem:[%s285 + $0x2c] sm:$0x1]
        %v6120 = vsel %vm288, %v6053, %v6119
        %6121 = vst [vmem:[%s285 + $0x2c] sm:$0x1] %v6120
        %v6122 = vld [vmem:[%s285 + $0x30] sm:$0xf]
        %v6123 = vsel %vm476, %v6060, %v6122
        %6124 = vst [vmem:[%s285 + $0x30] sm:$0xf] %v6123
        %v6125 = vld [vmem:[%s285 + $0x34] sm:$0x1]
        %v6126 = vsel %vm288, %v6061, %v6125
        %6127 = vst [vmem:[%s285 + $0x34] sm:$0x1] %v6126
        %v6128 = vld [vmem:[%s285 + $0x38] sm:$0xf]
        %v6129 = vsel %vm476, %v6068, %v6128
        %6130 = vst [vmem:[%s285 + $0x38] sm:$0xf] %v6129
        %v6131 = vld [vmem:[%s285 + $0x3c] sm:$0x1]
        %v6132 = vsel %vm288, %v6069, %v6131
        %6133 = vst [vmem:[%s285 + $0x3c] sm:$0x1] %v6132
        %v6134 = vld [vmem:[#allocation2] sm:$0xf]
        %v6135 = vld [vmem:[#allocation2 + $0x8] sm:$0xf]
        %v6136 = vld [vmem:[#allocation2 + $0x10] sm:$0xf]
        %v6137 = vld [vmem:[#allocation2 + $0x18] sm:$0xf]
        %v6138 = vld [vmem:[#allocation2 + $0x20] sm:$0xf]
        %v6139 = vld [vmem:[#allocation2 + $0x28] sm:$0xf]
        %v6140 = vld [vmem:[#allocation2 + $0x30] sm:$0xf]
        %v6141 = vld [vmem:[#allocation2 + $0x38] sm:$0xf]
        %6142 = vst.msk [vmem:[#allocation3] sm:$0xf] %vm278, %v6134
        %6143 = vst.msk [vmem:[#allocation3 + $0xc] sm:$0xf] %vm278, %v6135
        %6144 = vst.msk [vmem:[#allocation3 + $0x18] sm:$0xf] %vm278, %v6136
        %6145 = vst.msk [vmem:[#allocation3 + $0x24] sm:$0xf] %vm278, %v6137
        %6146 = vst.msk [vmem:[#allocation3 + $0x30] sm:$0xf] %vm278, %v6138
        %6147 = vst.msk [vmem:[#allocation3 + $0x3c] sm:$0xf] %vm278, %v6139
        %6148 = vst.msk [vmem:[#allocation3 + $0x48] sm:$0xf] %vm278, %v6140
        %6149 = vst.msk [vmem:[#allocation3 + $0x54] sm:$0xf] %vm278, %v6141
        %v6150 = vld [vmem:[#allocation2] sm:$0xf]
        %v6151 = vld [vmem:[#allocation2 + $0x4] sm:$0x1]
        %v6152 = vld [vmem:[#allocation2 + $0x8] sm:$0xf]
        %v6153 = vld [vmem:[#allocation2 + $0xc] sm:$0x1]
        %v6154 = vld [vmem:[#allocation2 + $0x10] sm:$0xf]
        %v6155 = vld [vmem:[#allocation2 + $0x14] sm:$0x1]
        %v6156 = vld [vmem:[#allocation2 + $0x18] sm:$0xf]
        %v6157 = vld [vmem:[#allocation2 + $0x1c] sm:$0x1]
        %v6158 = vld [vmem:[#allocation2 + $0x20] sm:$0xf]
        %v6159 = vld [vmem:[#allocation2 + $0x24] sm:$0x1]
        %v6160 = vld [vmem:[#allocation2 + $0x28] sm:$0xf]
        %v6161 = vld [vmem:[#allocation2 + $0x2c] sm:$0x1]
        %v6162 = vld [vmem:[#allocation2 + $0x30] sm:$0xf]
        %v6163 = vld [vmem:[#allocation2 + $0x34] sm:$0x1]
        %v6164 = vld [vmem:[#allocation2 + $0x38] sm:$0xf]
        %v6165 = vld [vmem:[#allocation2 + $0x3c] sm:$0x1]
        %v6167 = vshrl.u32 %v6150, 16
        %v6169 = vrot.slane %v6167, 4
        %v6170 = vshll.u32 %v6150, 16
        %v6172 = vrot.slane %v6170, 5
        %v6173 = vor.u32 %v6169, %v6172
        %v6174 = vrot.slane %v6173, 4
        %v6176 = vshll.u32 %v6151, 16
        %v6178 = vrot.slane %v6176, 5
        %v6179 = vsel %vm559, %v6174, %v6178
        %v6181 = vshrl.u32 %v6152, 16
        %v6183 = vrot.slane %v6181, 4
        %v6184 = vshll.u32 %v6152, 16
        %v6186 = vrot.slane %v6184, 5
        %v6187 = vor.u32 %v6183, %v6186
        %v6188 = vrot.slane %v6187, 4
        %v6190 = vshll.u32 %v6153, 16
        %v6192 = vrot.slane %v6190, 5
        %v6193 = vsel %vm559, %v6188, %v6192
        %v6195 = vshrl.u32 %v6154, 16
        %v6197 = vrot.slane %v6195, 4
        %v6198 = vshll.u32 %v6154, 16
        %v6200 = vrot.slane %v6198, 5
        %v6201 = vor.u32 %v6197, %v6200
        %v6202 = vrot.slane %v6201, 4
        %v6204 = vshll.u32 %v6155, 16
        %v6206 = vrot.slane %v6204, 5
        %v6207 = vsel %vm559, %v6202, %v6206
        %v6209 = vshrl.u32 %v6156, 16
        %v6211 = vrot.slane %v6209, 4
        %v6212 = vshll.u32 %v6156, 16
        %v6214 = vrot.slane %v6212, 5
        %v6215 = vor.u32 %v6211, %v6214
        %v6216 = vrot.slane %v6215, 4
        %v6218 = vshll.u32 %v6157, 16
        %v6220 = vrot.slane %v6218, 5
        %v6221 = vsel %vm559, %v6216, %v6220
        %v6223 = vshrl.u32 %v6158, 16
        %v6225 = vrot.slane %v6223, 4
        %v6226 = vshll.u32 %v6158, 16
        %v6228 = vrot.slane %v6226, 5
        %v6229 = vor.u32 %v6225, %v6228
        %v6230 = vrot.slane %v6229, 4
        %v6232 = vshll.u32 %v6159, 16
        %v6234 = vrot.slane %v6232, 5
        %v6235 = vsel %vm559, %v6230, %v6234
        %v6237 = vshrl.u32 %v6160, 16
        %v6239 = vrot.slane %v6237, 4
        %v6240 = vshll.u32 %v6160, 16
        %v6242 = vrot.slane %v6240, 5
        %v6243 = vor.u32 %v6239, %v6242
        %v6244 = vrot.slane %v6243, 4
        %v6246 = vshll.u32 %v6161, 16
        %v6248 = vrot.slane %v6246, 5
        %v6249 = vsel %vm559, %v6244, %v6248
        %v6251 = vshrl.u32 %v6162, 16
        %v6253 = vrot.slane %v6251, 4
        %v6254 = vshll.u32 %v6162, 16
        %v6256 = vrot.slane %v6254, 5
        %v6257 = vor.u32 %v6253, %v6256
        %v6258 = vrot.slane %v6257, 4
        %v6260 = vshll.u32 %v6163, 16
        %v6262 = vrot.slane %v6260, 5
        %v6263 = vsel %vm559, %v6258, %v6262
        %v6265 = vshrl.u32 %v6164, 16
        %v6267 = vrot.slane %v6265, 4
        %v6268 = vshll.u32 %v6164, 16
        %v6270 = vrot.slane %v6268, 5
        %v6271 = vor.u32 %v6267, %v6270
        %v6272 = vrot.slane %v6271, 4
        %v6274 = vshll.u32 %v6165, 16
        %v6276 = vrot.slane %v6274, 5
        %v6277 = vsel %vm559, %v6272, %v6276
        %6278 = vrot.lane.b32.xlu0 %v6179, 32
        %v6279 = vpop.permute.xlu0 %6278
        %6280 = vrot.lane.b32.xlu0 %v6193, 32
        %v6281 = vpop.permute.xlu0 %6280
        %6282 = vrot.lane.b32.xlu0 %v6207, 32
        %v6283 = vpop.permute.xlu0 %6282
        %6284 = vrot.lane.b32.xlu0 %v6221, 32
        %v6285 = vpop.permute.xlu0 %6284
        %6286 = vrot.lane.b32.xlu0 %v6235, 32
        %v6287 = vpop.permute.xlu0 %6286
        %6288 = vrot.lane.b32.xlu0 %v6249, 32
        %v6289 = vpop.permute.xlu0 %6288
        %6290 = vrot.lane.b32.xlu0 %v6263, 32
        %v6291 = vpop.permute.xlu0 %6290
        %6292 = vrot.lane.b32.xlu0 %v6277, 32
        %v6293 = vpop.permute.xlu0 %6292
        %6302 = vst.msk [vmem:[#allocation3] sm:$0xf] %vm696, %v6279
        %6303 = vst.msk [vmem:[#allocation3 + $0xc] sm:$0xf] %vm696, %v6281
        %6304 = vst.msk [vmem:[#allocation3 + $0x18] sm:$0xf] %vm696, %v6283
        %6305 = vst.msk [vmem:[#allocation3 + $0x24] sm:$0xf] %vm696, %v6285
        %6306 = vst.msk [vmem:[#allocation3 + $0x30] sm:$0xf] %vm696, %v6287
        %6307 = vst.msk [vmem:[#allocation3 + $0x3c] sm:$0xf] %vm696, %v6289
        %6308 = vst.msk [vmem:[#allocation3 + $0x48] sm:$0xf] %vm696, %v6291
        %6309 = vst.msk [vmem:[#allocation3 + $0x54] sm:$0xf] %vm696, %v6293
        %v6310 = vld [vmem:[#allocation2] sm:$0xe]
        %v6311 = vld [vmem:[#allocation2 + $0x4] sm:$0x1]
        %v6312 = vld [vmem:[#allocation2 + $0x8] sm:$0xe]
        %v6313 = vld [vmem:[#allocation2 + $0xc] sm:$0x1]
        %v6314 = vld [vmem:[#allocation2 + $0x10] sm:$0xe]
        %v6315 = vld [vmem:[#allocation2 + $0x14] sm:$0x1]
        %v6316 = vld [vmem:[#allocation2 + $0x18] sm:$0xe]
        %v6317 = vld [vmem:[#allocation2 + $0x1c] sm:$0x1]
        %v6318 = vld [vmem:[#allocation2 + $0x20] sm:$0xe]
        %v6319 = vld [vmem:[#allocation2 + $0x24] sm:$0x1]
        %v6320 = vld [vmem:[#allocation2 + $0x28] sm:$0xe]
        %v6321 = vld [vmem:[#allocation2 + $0x2c] sm:$0x1]
        %v6322 = vld [vmem:[#allocation2 + $0x30] sm:$0xe]
        %v6323 = vld [vmem:[#allocation2 + $0x34] sm:$0x1]
        %v6324 = vld [vmem:[#allocation2 + $0x38] sm:$0xe]
        %v6325 = vld [vmem:[#allocation2 + $0x3c] sm:$0x1]
        %v6342 = vrot.slane %v6310, 5
        %v6343 = vrot.slane %v6342, 4
        %v6344 = vrot.slane %v6311, 5
        %v6345 = vsel %vm739, %v6343, %v6344
        %v6346 = vrot.slane %v6312, 5
        %v6347 = vrot.slane %v6346, 4
        %v6348 = vrot.slane %v6313, 5
        %v6349 = vsel %vm739, %v6347, %v6348
        %v6350 = vrot.slane %v6314, 5
        %v6351 = vrot.slane %v6350, 4
        %v6352 = vrot.slane %v6315, 5
        %v6353 = vsel %vm739, %v6351, %v6352
        %v6354 = vrot.slane %v6316, 5
        %v6355 = vrot.slane %v6354, 4
        %v6356 = vrot.slane %v6317, 5
        %v6357 = vsel %vm739, %v6355, %v6356
        %v6358 = vrot.slane %v6318, 5
        %v6359 = vrot.slane %v6358, 4
        %v6360 = vrot.slane %v6319, 5
        %v6361 = vsel %vm739, %v6359, %v6360
        %v6362 = vrot.slane %v6320, 5
        %v6363 = vrot.slane %v6362, 4
        %v6364 = vrot.slane %v6321, 5
        %v6365 = vsel %vm739, %v6363, %v6364
        %v6366 = vrot.slane %v6322, 5
        %v6367 = vrot.slane %v6366, 4
        %v6368 = vrot.slane %v6323, 5
        %v6369 = vsel %vm739, %v6367, %v6368
        %v6370 = vrot.slane %v6324, 5
        %v6371 = vrot.slane %v6370, 4
        %v6372 = vrot.slane %v6325, 5
        %v6373 = vsel %vm739, %v6371, %v6372
        %6374 = vrot.lane.b32.xlu0 %v6345, 64
        %v6375 = vpop.permute.xlu0 %6374
        %6376 = vrot.lane.b32.xlu0 %v6349, 64
        %v6377 = vpop.permute.xlu0 %6376
        %6378 = vrot.lane.b32.xlu0 %v6353, 64
        %v6379 = vpop.permute.xlu0 %6378
        %6380 = vrot.lane.b32.xlu0 %v6357, 64
        %v6381 = vpop.permute.xlu0 %6380
        %6382 = vrot.lane.b32.xlu0 %v6361, 64
        %v6383 = vpop.permute.xlu0 %6382
        %6384 = vrot.lane.b32.xlu0 %v6365, 64
        %v6385 = vpop.permute.xlu0 %6384
        %6386 = vrot.lane.b32.xlu0 %v6369, 64
        %v6387 = vpop.permute.xlu0 %6386
        %6388 = vrot.lane.b32.xlu0 %v6373, 64
        %v6389 = vpop.permute.xlu0 %6388
        %6398 = vst.msk [vmem:[#allocation3] sm:$0xf] %vm796, %v6375
        %6399 = vst.msk [vmem:[#allocation3 + $0xc] sm:$0xf] %vm796, %v6377
        %6400 = vst.msk [vmem:[#allocation3 + $0x18] sm:$0xf] %vm796, %v6379
        %6401 = vst.msk [vmem:[#allocation3 + $0x24] sm:$0xf] %vm796, %v6381
        %6402 = vst.msk [vmem:[#allocation3 + $0x30] sm:$0xf] %vm796, %v6383
        %6403 = vst.msk [vmem:[#allocation3 + $0x3c] sm:$0xf] %vm796, %v6385
        %6404 = vst.msk [vmem:[#allocation3 + $0x48] sm:$0xf] %vm796, %v6387
        %6405 = vst.msk [vmem:[#allocation3 + $0x54] sm:$0xf] %vm796, %v6389
        %v6406 = vld [vmem:[%s285] sm:$0xf]
        %v6407 = vld [vmem:[%s285 + $0x8] sm:$0xf]
        %v6408 = vld [vmem:[%s285 + $0x10] sm:$0xf]
        %v6409 = vld [vmem:[%s285 + $0x18] sm:$0xf]
        %v6410 = vld [vmem:[%s285 + $0x20] sm:$0xf]
        %v6411 = vld [vmem:[%s285 + $0x28] sm:$0xf]
        %v6412 = vld [vmem:[%s285 + $0x30] sm:$0xf]
        %v6413 = vld [vmem:[%s285 + $0x38] sm:$0xf]
        %6422 = vrot.lane.b32.xlu0 %v6406, 96
        %v6423 = vpop.permute.xlu0 %6422
        %6424 = vrot.lane.b32.xlu0 %v6407, 96
        %v6425 = vpop.permute.xlu0 %6424
        %6426 = vrot.lane.b32.xlu0 %v6408, 96
        %v6427 = vpop.permute.xlu0 %6426
        %6428 = vrot.lane.b32.xlu0 %v6409, 96
        %v6429 = vpop.permute.xlu0 %6428
        %6430 = vrot.lane.b32.xlu0 %v6410, 96
        %v6431 = vpop.permute.xlu0 %6430
        %6432 = vrot.lane.b32.xlu0 %v6411, 96
        %v6433 = vpop.permute.xlu0 %6432
        %6434 = vrot.lane.b32.xlu0 %v6412, 96
        %v6435 = vpop.permute.xlu0 %6434
        %6436 = vrot.lane.b32.xlu0 %v6413, 96
        %v6437 = vpop.permute.xlu0 %6436
        %6446 = vst.msk [vmem:[#allocation3] sm:$0xf] %vm845, %v6423
        %6447 = vst.msk [vmem:[#allocation3 + $0xc] sm:$0xf] %vm845, %v6425
        %6448 = vst.msk [vmem:[#allocation3 + $0x18] sm:$0xf] %vm845, %v6427
        %6449 = vst.msk [vmem:[#allocation3 + $0x24] sm:$0xf] %vm845, %v6429
        %6450 = vst.msk [vmem:[#allocation3 + $0x30] sm:$0xf] %vm845, %v6431
        %6451 = vst.msk [vmem:[#allocation3 + $0x3c] sm:$0xf] %vm845, %v6433
        %6452 = vst.msk [vmem:[#allocation3 + $0x48] sm:$0xf] %vm845, %v6435
        %6453 = vst.msk [vmem:[#allocation3 + $0x54] sm:$0xf] %vm845, %v6437
        %v6454 = vld [vmem:[%s285] sm:$0xf]
        %v6455 = vld [vmem:[%s285 + $0x4] sm:$0x1]
        %v6456 = vld [vmem:[%s285 + $0x8] sm:$0xf]
        %v6457 = vld [vmem:[%s285 + $0xc] sm:$0x1]
        %v6458 = vld [vmem:[%s285 + $0x10] sm:$0xf]
        %v6459 = vld [vmem:[%s285 + $0x14] sm:$0x1]
        %v6460 = vld [vmem:[%s285 + $0x18] sm:$0xf]
        %v6461 = vld [vmem:[%s285 + $0x1c] sm:$0x1]
        %v6462 = vld [vmem:[%s285 + $0x20] sm:$0xf]
        %v6463 = vld [vmem:[%s285 + $0x24] sm:$0x1]
        %v6464 = vld [vmem:[%s285 + $0x28] sm:$0xf]
        %v6465 = vld [vmem:[%s285 + $0x2c] sm:$0x1]
        %v6466 = vld [vmem:[%s285 + $0x30] sm:$0xf]
        %v6467 = vld [vmem:[%s285 + $0x34] sm:$0x1]
        %v6468 = vld [vmem:[%s285 + $0x38] sm:$0xf]
        %v6469 = vld [vmem:[%s285 + $0x3c] sm:$0x1]
        %v6471 = vshrl.u32 %v6454, 16
        %v6473 = vrot.slane %v6471, 4
        %v6474 = vshll.u32 %v6454, 16
        %v6476 = vrot.slane %v6474, 5
        %v6477 = vor.u32 %v6473, %v6476
        %v6478 = vrot.slane %v6477, 4
        %v6480 = vshll.u32 %v6455, 16
        %v6482 = vrot.slane %v6480, 5
        %v6483 = vsel %vm559, %v6478, %v6482
        %v6485 = vshrl.u32 %v6456, 16
        %v6487 = vrot.slane %v6485, 4
        %v6488 = vshll.u32 %v6456, 16
        %v6490 = vrot.slane %v6488, 5
        %v6491 = vor.u32 %v6487, %v6490
        %v6492 = vrot.slane %v6491, 4
        %v6494 = vshll.u32 %v6457, 16
        %v6496 = vrot.slane %v6494, 5
        %v6497 = vsel %vm559, %v6492, %v6496
        %v6499 = vshrl.u32 %v6458, 16
        %v6501 = vrot.slane %v6499, 4
        %v6502 = vshll.u32 %v6458, 16
        %v6504 = vrot.slane %v6502, 5
        %v6505 = vor.u32 %v6501, %v6504
        %v6506 = vrot.slane %v6505, 4
        %v6508 = vshll.u32 %v6459, 16
        %v6510 = vrot.slane %v6508, 5
        %v6511 = vsel %vm559, %v6506, %v6510
        %v6513 = vshrl.u32 %v6460, 16
        %v6515 = vrot.slane %v6513, 4
        %v6516 = vshll.u32 %v6460, 16
        %v6518 = vrot.slane %v6516, 5
        %v6519 = vor.u32 %v6515, %v6518
        %v6520 = vrot.slane %v6519, 4
        %v6522 = vshll.u32 %v6461, 16
        %v6524 = vrot.slane %v6522, 5
        %v6525 = vsel %vm559, %v6520, %v6524
        %v6527 = vshrl.u32 %v6462, 16
        %v6529 = vrot.slane %v6527, 4
        %v6530 = vshll.u32 %v6462, 16
        %v6532 = vrot.slane %v6530, 5
        %v6533 = vor.u32 %v6529, %v6532
        %v6534 = vrot.slane %v6533, 4
        %v6536 = vshll.u32 %v6463, 16
        %v6538 = vrot.slane %v6536, 5
        %v6539 = vsel %vm559, %v6534, %v6538
        %v6541 = vshrl.u32 %v6464, 16
        %v6543 = vrot.slane %v6541, 4
        %v6544 = vshll.u32 %v6464, 16
        %v6546 = vrot.slane %v6544, 5
        %v6547 = vor.u32 %v6543, %v6546
        %v6548 = vrot.slane %v6547, 4
        %v6550 = vshll.u32 %v6465, 16
        %v6552 = vrot.slane %v6550, 5
        %v6553 = vsel %vm559, %v6548, %v6552
        %v6555 = vshrl.u32 %v6466, 16
        %v6557 = vrot.slane %v6555, 4
        %v6558 = vshll.u32 %v6466, 16
        %v6560 = vrot.slane %v6558, 5
        %v6561 = vor.u32 %v6557, %v6560
        %v6562 = vrot.slane %v6561, 4
        %v6564 = vshll.u32 %v6467, 16
        %v6566 = vrot.slane %v6564, 5
        %v6567 = vsel %vm559, %v6562, %v6566
        %v6569 = vshrl.u32 %v6468, 16
        %v6571 = vrot.slane %v6569, 4
        %v6572 = vshll.u32 %v6468, 16
        %v6574 = vrot.slane %v6572, 5
        %v6575 = vor.u32 %v6571, %v6574
        %v6576 = vrot.slane %v6575, 4
        %v6578 = vshll.u32 %v6469, 16
        %v6580 = vrot.slane %v6578, 5
        %v6581 = vsel %vm559, %v6576, %v6580
        %6590 = vst.msk [vmem:[#allocation3 + $0x4] sm:$0xf] %vm278, %v6483
        %6591 = vst.msk [vmem:[#allocation3 + $0x10] sm:$0xf] %vm278, %v6497
        %6592 = vst.msk [vmem:[#allocation3 + $0x1c] sm:$0xf] %vm278, %v6511
        %6593 = vst.msk [vmem:[#allocation3 + $0x28] sm:$0xf] %vm278, %v6525
        %6594 = vst.msk [vmem:[#allocation3 + $0x34] sm:$0xf] %vm278, %v6539
        %6595 = vst.msk [vmem:[#allocation3 + $0x40] sm:$0xf] %vm278, %v6553
        %6596 = vst.msk [vmem:[#allocation3 + $0x4c] sm:$0xf] %vm278, %v6567
        %6597 = vst.msk [vmem:[#allocation3 + $0x58] sm:$0xf] %vm278, %v6581
        %v6598 = vld [vmem:[%s285] sm:$0xe]
        %v6599 = vld [vmem:[%s285 + $0x4] sm:$0x1]
        %v6600 = vld [vmem:[%s285 + $0x8] sm:$0xe]
        %v6601 = vld [vmem:[%s285 + $0xc] sm:$0x1]
        %v6602 = vld [vmem:[%s285 + $0x10] sm:$0xe]
        %v6603 = vld [vmem:[%s285 + $0x14] sm:$0x1]
        %v6604 = vld [vmem:[%s285 + $0x18] sm:$0xe]
        %v6605 = vld [vmem:[%s285 + $0x1c] sm:$0x1]
        %v6606 = vld [vmem:[%s285 + $0x20] sm:$0xe]
        %v6607 = vld [vmem:[%s285 + $0x24] sm:$0x1]
        %v6608 = vld [vmem:[%s285 + $0x28] sm:$0xe]
        %v6609 = vld [vmem:[%s285 + $0x2c] sm:$0x1]
        %v6610 = vld [vmem:[%s285 + $0x30] sm:$0xe]
        %v6611 = vld [vmem:[%s285 + $0x34] sm:$0x1]
        %v6612 = vld [vmem:[%s285 + $0x38] sm:$0xe]
        %v6613 = vld [vmem:[%s285 + $0x3c] sm:$0x1]
        %v6630 = vrot.slane %v6598, 5
        %v6631 = vrot.slane %v6630, 4
        %v6632 = vrot.slane %v6599, 5
        %v6633 = vsel %vm739, %v6631, %v6632
        %v6634 = vrot.slane %v6600, 5
        %v6635 = vrot.slane %v6634, 4
        %v6636 = vrot.slane %v6601, 5
        %v6637 = vsel %vm739, %v6635, %v6636
        %v6638 = vrot.slane %v6602, 5
        %v6639 = vrot.slane %v6638, 4
        %v6640 = vrot.slane %v6603, 5
        %v6641 = vsel %vm739, %v6639, %v6640
        %v6642 = vrot.slane %v6604, 5
        %v6643 = vrot.slane %v6642, 4
        %v6644 = vrot.slane %v6605, 5
        %v6645 = vsel %vm739, %v6643, %v6644
        %v6646 = vrot.slane %v6606, 5
        %v6647 = vrot.slane %v6646, 4
        %v6648 = vrot.slane %v6607, 5
        %v6649 = vsel %vm739, %v6647, %v6648
        %v6650 = vrot.slane %v6608, 5
        %v6651 = vrot.slane %v6650, 4
        %v6652 = vrot.slane %v6609, 5
        %v6653 = vsel %vm739, %v6651, %v6652
        %v6654 = vrot.slane %v6610, 5
        %v6655 = vrot.slane %v6654, 4
        %v6656 = vrot.slane %v6611, 5
        %v6657 = vsel %vm739, %v6655, %v6656
        %v6658 = vrot.slane %v6612, 5
        %v6659 = vrot.slane %v6658, 4
        %v6660 = vrot.slane %v6613, 5
        %v6661 = vsel %vm739, %v6659, %v6660
        %6662 = vrot.lane.b32.xlu0 %v6633, 32
        %v6663 = vpop.permute.xlu0 %6662
        %6664 = vrot.lane.b32.xlu0 %v6637, 32
        %v6665 = vpop.permute.xlu0 %6664
        %6666 = vrot.lane.b32.xlu0 %v6641, 32
        %v6667 = vpop.permute.xlu0 %6666
        %6668 = vrot.lane.b32.xlu0 %v6645, 32
        %v6669 = vpop.permute.xlu0 %6668
        %6670 = vrot.lane.b32.xlu0 %v6649, 32
        %v6671 = vpop.permute.xlu0 %6670
        %6672 = vrot.lane.b32.xlu0 %v6653, 32
        %v6673 = vpop.permute.xlu0 %6672
        %6674 = vrot.lane.b32.xlu0 %v6657, 32
        %v6675 = vpop.permute.xlu0 %6674
        %6676 = vrot.lane.b32.xlu0 %v6661, 32
        %v6677 = vpop.permute.xlu0 %6676
        %6686 = vst.msk [vmem:[#allocation3 + $0x4] sm:$0xf] %vm696, %v6663
        %6687 = vst.msk [vmem:[#allocation3 + $0x10] sm:$0xf] %vm696, %v6665
        %6688 = vst.msk [vmem:[#allocation3 + $0x1c] sm:$0xf] %vm696, %v6667
        %6689 = vst.msk [vmem:[#allocation3 + $0x28] sm:$0xf] %vm696, %v6669
        %6690 = vst.msk [vmem:[#allocation3 + $0x34] sm:$0xf] %vm696, %v6671
        %6691 = vst.msk [vmem:[#allocation3 + $0x40] sm:$0xf] %vm696, %v6673
        %6692 = vst.msk [vmem:[#allocation3 + $0x4c] sm:$0xf] %vm696, %v6675
        %6693 = vst.msk [vmem:[#allocation3 + $0x58] sm:$0xf] %vm696, %v6677
        %v6694 = vld [vmem:[%s1094] sm:$0xf]
        %v6695 = vld [vmem:[%s1094 + $0x8] sm:$0xf]
        %v6696 = vld [vmem:[%s1094 + $0x10] sm:$0xf]
        %v6697 = vld [vmem:[%s1094 + $0x18] sm:$0xf]
        %v6698 = vld [vmem:[%s1094 + $0x20] sm:$0xf]
        %v6699 = vld [vmem:[%s1094 + $0x28] sm:$0xf]
        %v6700 = vld [vmem:[%s1094 + $0x30] sm:$0xf]
        %v6701 = vld [vmem:[%s1094 + $0x38] sm:$0xf]
        %6710 = vrot.lane.b32.xlu0 %v6694, 64
        %v6711 = vpop.permute.xlu0 %6710
        %6712 = vrot.lane.b32.xlu0 %v6695, 64
        %v6713 = vpop.permute.xlu0 %6712
        %6714 = vrot.lane.b32.xlu0 %v6696, 64
        %v6715 = vpop.permute.xlu0 %6714
        %6716 = vrot.lane.b32.xlu0 %v6697, 64
        %v6717 = vpop.permute.xlu0 %6716
        %6718 = vrot.lane.b32.xlu0 %v6698, 64
        %v6719 = vpop.permute.xlu0 %6718
        %6720 = vrot.lane.b32.xlu0 %v6699, 64
        %v6721 = vpop.permute.xlu0 %6720
        %6722 = vrot.lane.b32.xlu0 %v6700, 64
        %v6723 = vpop.permute.xlu0 %6722
        %6724 = vrot.lane.b32.xlu0 %v6701, 64
        %v6725 = vpop.permute.xlu0 %6724
        %6734 = vst.msk [vmem:[#allocation3 + $0x4] sm:$0xf] %vm796, %v6711
        %6735 = vst.msk [vmem:[#allocation3 + $0x10] sm:$0xf] %vm796, %v6713
        %6736 = vst.msk [vmem:[#allocation3 + $0x1c] sm:$0xf] %vm796, %v6715
        %6737 = vst.msk [vmem:[#allocation3 + $0x28] sm:$0xf] %vm796, %v6717
        %6738 = vst.msk [vmem:[#allocation3 + $0x34] sm:$0xf] %vm796, %v6719
        %6739 = vst.msk [vmem:[#allocation3 + $0x40] sm:$0xf] %vm796, %v6721
        %6740 = vst.msk [vmem:[#allocation3 + $0x4c] sm:$0xf] %vm796, %v6723
        %6741 = vst.msk [vmem:[#allocation3 + $0x58] sm:$0xf] %vm796, %v6725
        %v6742 = vld [vmem:[%s1094] sm:$0xf]
        %v6743 = vld [vmem:[%s1094 + $0x4] sm:$0x1]
        %v6744 = vld [vmem:[%s1094 + $0x8] sm:$0xf]
        %v6745 = vld [vmem:[%s1094 + $0xc] sm:$0x1]
        %v6746 = vld [vmem:[%s1094 + $0x10] sm:$0xf]
        %v6747 = vld [vmem:[%s1094 + $0x14] sm:$0x1]
        %v6748 = vld [vmem:[%s1094 + $0x18] sm:$0xf]
        %v6749 = vld [vmem:[%s1094 + $0x1c] sm:$0x1]
        %v6750 = vld [vmem:[%s1094 + $0x20] sm:$0xf]
        %v6751 = vld [vmem:[%s1094 + $0x24] sm:$0x1]
        %v6752 = vld [vmem:[%s1094 + $0x28] sm:$0xf]
        %v6753 = vld [vmem:[%s1094 + $0x2c] sm:$0x1]
        %v6754 = vld [vmem:[%s1094 + $0x30] sm:$0xf]
        %v6755 = vld [vmem:[%s1094 + $0x34] sm:$0x1]
        %v6756 = vld [vmem:[%s1094 + $0x38] sm:$0xf]
        %v6757 = vld [vmem:[%s1094 + $0x3c] sm:$0x1]
        %v6759 = vshrl.u32 %v6742, 16
        %v6761 = vrot.slane %v6759, 4
        %v6762 = vshll.u32 %v6742, 16
        %v6764 = vrot.slane %v6762, 5
        %v6765 = vor.u32 %v6761, %v6764
        %v6766 = vrot.slane %v6765, 4
        %v6768 = vshll.u32 %v6743, 16
        %v6770 = vrot.slane %v6768, 5
        %v6771 = vsel %vm559, %v6766, %v6770
        %v6773 = vshrl.u32 %v6744, 16
        %v6775 = vrot.slane %v6773, 4
        %v6776 = vshll.u32 %v6744, 16
        %v6778 = vrot.slane %v6776, 5
        %v6779 = vor.u32 %v6775, %v6778
        %v6780 = vrot.slane %v6779, 4
        %v6782 = vshll.u32 %v6745, 16
        %v6784 = vrot.slane %v6782, 5
        %v6785 = vsel %vm559, %v6780, %v6784
        %v6787 = vshrl.u32 %v6746, 16
        %v6789 = vrot.slane %v6787, 4
        %v6790 = vshll.u32 %v6746, 16
        %v6792 = vrot.slane %v6790, 5
        %v6793 = vor.u32 %v6789, %v6792
        %v6794 = vrot.slane %v6793, 4
        %v6796 = vshll.u32 %v6747, 16
        %v6798 = vrot.slane %v6796, 5
        %v6799 = vsel %vm559, %v6794, %v6798
        %v6801 = vshrl.u32 %v6748, 16
        %v6803 = vrot.slane %v6801, 4
        %v6804 = vshll.u32 %v6748, 16
        %v6806 = vrot.slane %v6804, 5
        %v6807 = vor.u32 %v6803, %v6806
        %v6808 = vrot.slane %v6807, 4
        %v6810 = vshll.u32 %v6749, 16
        %v6812 = vrot.slane %v6810, 5
        %v6813 = vsel %vm559, %v6808, %v6812
        %v6815 = vshrl.u32 %v6750, 16
        %v6817 = vrot.slane %v6815, 4
        %v6818 = vshll.u32 %v6750, 16
        %v6820 = vrot.slane %v6818, 5
        %v6821 = vor.u32 %v6817, %v6820
        %v6822 = vrot.slane %v6821, 4
        %v6824 = vshll.u32 %v6751, 16
        %v6826 = vrot.slane %v6824, 5
        %v6827 = vsel %vm559, %v6822, %v6826
        %v6829 = vshrl.u32 %v6752, 16
        %v6831 = vrot.slane %v6829, 4
        %v6832 = vshll.u32 %v6752, 16
        %v6834 = vrot.slane %v6832, 5
        %v6835 = vor.u32 %v6831, %v6834
        %v6836 = vrot.slane %v6835, 4
        %v6838 = vshll.u32 %v6753, 16
        %v6840 = vrot.slane %v6838, 5
        %v6841 = vsel %vm559, %v6836, %v6840
        %v6843 = vshrl.u32 %v6754, 16
        %v6845 = vrot.slane %v6843, 4
        %v6846 = vshll.u32 %v6754, 16
        %v6848 = vrot.slane %v6846, 5
        %v6849 = vor.u32 %v6845, %v6848
        %v6850 = vrot.slane %v6849, 4
        %v6852 = vshll.u32 %v6755, 16
        %v6854 = vrot.slane %v6852, 5
        %v6855 = vsel %vm559, %v6850, %v6854
        %v6857 = vshrl.u32 %v6756, 16
        %v6859 = vrot.slane %v6857, 4
        %v6860 = vshll.u32 %v6756, 16
        %v6862 = vrot.slane %v6860, 5
        %v6863 = vor.u32 %v6859, %v6862
        %v6864 = vrot.slane %v6863, 4
        %v6866 = vshll.u32 %v6757, 16
        %v6868 = vrot.slane %v6866, 5
        %v6869 = vsel %vm559, %v6864, %v6868
        %6870 = vrot.lane.b32.xlu0 %v6771, 96
        %v6871 = vpop.permute.xlu0 %6870
        %6872 = vrot.lane.b32.xlu0 %v6785, 96
        %v6873 = vpop.permute.xlu0 %6872
        %6874 = vrot.lane.b32.xlu0 %v6799, 96
        %v6875 = vpop.permute.xlu0 %6874
        %6876 = vrot.lane.b32.xlu0 %v6813, 96
        %v6877 = vpop.permute.xlu0 %6876
        %6878 = vrot.lane.b32.xlu0 %v6827, 96
        %v6879 = vpop.permute.xlu0 %6878
        %6880 = vrot.lane.b32.xlu0 %v6841, 96
        %v6881 = vpop.permute.xlu0 %6880
        %6882 = vrot.lane.b32.xlu0 %v6855, 96
        %v6883 = vpop.permute.xlu0 %6882
        %6884 = vrot.lane.b32.xlu0 %v6869, 96
        %v6885 = vpop.permute.xlu0 %6884
        %6894 = vst.msk [vmem:[#allocation3 + $0x4] sm:$0xf] %vm845, %v6871
        %6895 = vst.msk [vmem:[#allocation3 + $0x10] sm:$0xf] %vm845, %v6873
        %6896 = vst.msk [vmem:[#allocation3 + $0x1c] sm:$0xf] %vm845, %v6875
        %6897 = vst.msk [vmem:[#allocation3 + $0x28] sm:$0xf] %vm845, %v6877
        %6898 = vst.msk [vmem:[#allocation3 + $0x34] sm:$0xf] %vm845, %v6879
        %6899 = vst.msk [vmem:[#allocation3 + $0x40] sm:$0xf] %vm845, %v6881
        %6900 = vst.msk [vmem:[#allocation3 + $0x4c] sm:$0xf] %vm845, %v6883
        %6901 = vst.msk [vmem:[#allocation3 + $0x58] sm:$0xf] %vm845, %v6885
        %v6902 = vld [vmem:[%s1094] sm:$0xe]
        %v6903 = vld [vmem:[%s1094 + $0x4] sm:$0x1]
        %v6904 = vld [vmem:[%s1094 + $0x8] sm:$0xe]
        %v6905 = vld [vmem:[%s1094 + $0xc] sm:$0x1]
        %v6906 = vld [vmem:[%s1094 + $0x10] sm:$0xe]
        %v6907 = vld [vmem:[%s1094 + $0x14] sm:$0x1]
        %v6908 = vld [vmem:[%s1094 + $0x18] sm:$0xe]
        %v6909 = vld [vmem:[%s1094 + $0x1c] sm:$0x1]
        %v6910 = vld [vmem:[%s1094 + $0x20] sm:$0xe]
        %v6911 = vld [vmem:[%s1094 + $0x24] sm:$0x1]
        %v6912 = vld [vmem:[%s1094 + $0x28] sm:$0xe]
        %v6913 = vld [vmem:[%s1094 + $0x2c] sm:$0x1]
        %v6914 = vld [vmem:[%s1094 + $0x30] sm:$0xe]
        %v6915 = vld [vmem:[%s1094 + $0x34] sm:$0x1]
        %v6916 = vld [vmem:[%s1094 + $0x38] sm:$0xe]
        %v6917 = vld [vmem:[%s1094 + $0x3c] sm:$0x1]
        %v6934 = vrot.slane %v6902, 5
        %v6935 = vrot.slane %v6934, 4
        %v6936 = vrot.slane %v6903, 5
        %v6937 = vsel %vm739, %v6935, %v6936
        %v6938 = vrot.slane %v6904, 5
        %v6939 = vrot.slane %v6938, 4
        %v6940 = vrot.slane %v6905, 5
        %v6941 = vsel %vm739, %v6939, %v6940
        %v6942 = vrot.slane %v6906, 5
        %v6943 = vrot.slane %v6942, 4
        %v6944 = vrot.slane %v6907, 5
        %v6945 = vsel %vm739, %v6943, %v6944
        %v6946 = vrot.slane %v6908, 5
        %v6947 = vrot.slane %v6946, 4
        %v6948 = vrot.slane %v6909, 5
        %v6949 = vsel %vm739, %v6947, %v6948
        %v6950 = vrot.slane %v6910, 5
        %v6951 = vrot.slane %v6950, 4
        %v6952 = vrot.slane %v6911, 5
        %v6953 = vsel %vm739, %v6951, %v6952
        %v6954 = vrot.slane %v6912, 5
        %v6955 = vrot.slane %v6954, 4
        %v6956 = vrot.slane %v6913, 5
        %v6957 = vsel %vm739, %v6955, %v6956
        %v6958 = vrot.slane %v6914, 5
        %v6959 = vrot.slane %v6958, 4
        %v6960 = vrot.slane %v6915, 5
        %v6961 = vsel %vm739, %v6959, %v6960
        %v6962 = vrot.slane %v6916, 5
        %v6963 = vrot.slane %v6962, 4
        %v6964 = vrot.slane %v6917, 5
        %v6965 = vsel %vm739, %v6963, %v6964
        %6974 = vst.msk [vmem:[#allocation3 + $0x8] sm:$0xf] %vm278, %v6937
        %6975 = vst.msk [vmem:[#allocation3 + $0x14] sm:$0xf] %vm278, %v6941
        %6976 = vst.msk [vmem:[#allocation3 + $0x20] sm:$0xf] %vm278, %v6945
        %6977 = vst.msk [vmem:[#allocation3 + $0x2c] sm:$0xf] %vm278, %v6949
        %6978 = vst.msk [vmem:[#allocation3 + $0x38] sm:$0xf] %vm278, %v6953
        %6979 = vst.msk [vmem:[#allocation3 + $0x44] sm:$0xf] %vm278, %v6957
        %6980 = vst.msk [vmem:[#allocation3 + $0x50] sm:$0xf] %vm278, %v6961
        %6981 = vst.msk [vmem:[#allocation3 + $0x5c] sm:$0xf] %vm278, %v6965
        %v6982 = vld [vmem:[#allocation3] sm:$0xff]
        %v6983 = vld [vmem:[#allocation3 + $0x8] sm:$0xf]
        %v6984 = vld [vmem:[#allocation3 + $0xc] sm:$0xff]
        %v6985 = vld [vmem:[#allocation3 + $0x14] sm:$0xf]
        %v6986 = vld [vmem:[#allocation3 + $0x18] sm:$0xff]
        %v6987 = vld [vmem:[#allocation3 + $0x20] sm:$0xf]
        %v6988 = vld [vmem:[#allocation3 + $0x24] sm:$0xff]
        %v6989 = vld [vmem:[#allocation3 + $0x2c] sm:$0xf]
        %v6990 = vld [vmem:[#allocation3 + $0x30] sm:$0xff]
        %v6991 = vld [vmem:[#allocation3 + $0x38] sm:$0xf]
        %v6992 = vld [vmem:[#allocation3 + $0x3c] sm:$0xff]
        %v6993 = vld [vmem:[#allocation3 + $0x44] sm:$0xf]
        %v6994 = vld [vmem:[#allocation3 + $0x48] sm:$0xff]
        %v6995 = vld [vmem:[#allocation3 + $0x50] sm:$0xf]
        %v6996 = vld [vmem:[#allocation3 + $0x54] sm:$0xff]
        %v6997 = vld [vmem:[#allocation3 + $0x5c] sm:$0xf]
        %s6998 = scalar_lea.vmem %s3, 576
        %v6999 = vld [vmem:[%s6998] sm:$0xf]
        %v7000 = vld [vmem:[%s6998 + $0x4] sm:$0xf]
        %v7001 = vld [vmem:[%s6998 + $0x8] sm:$0xf]
        %v7002 = vld [vmem:[%s6998 + $0xc] sm:$0xf]
        %v7003 = vld [vmem:[%s6998 + $0x10] sm:$0xf]
        %v7004 = vld [vmem:[%s6998 + $0x14] sm:$0xf]
        %v7005 = vld [vmem:[%s6998 + $0x18] sm:$0xf]
        %v7006 = vld [vmem:[%s6998 + $0x1c] sm:$0xf]
        %v7007 = vld [vmem:[%s6998 + $0x20] sm:$0xf]
        %v7008 = vld [vmem:[%s6998 + $0x24] sm:$0xf]
        %v7009 = vld [vmem:[%s6998 + $0x28] sm:$0xf]
        %v7010 = vld [vmem:[%s6998 + $0x2c] sm:$0xf]
        %v7011 = vld [vmem:[%s6998 + $0x30] sm:$0xf]
        %v7012 = vld [vmem:[%s6998 + $0x34] sm:$0xf]
        %v7013 = vld [vmem:[%s6998 + $0x38] sm:$0xf]
        %v7014 = vld [vmem:[%s6998 + $0x3c] sm:$0xf]
        %v7015 = vld [vmem:[%s6998 + $0x40] sm:$0xf]
        %v7016 = vld [vmem:[%s6998 + $0x44] sm:$0xf]
        %v7017 = vld [vmem:[%s6998 + $0x48] sm:$0xf]
        %v7018 = vld [vmem:[%s6998 + $0x4c] sm:$0xf]
        %v7019 = vld [vmem:[%s6998 + $0x50] sm:$0xf]
        %v7020 = vld [vmem:[%s6998 + $0x54] sm:$0xf]
        %v7021 = vld [vmem:[%s6998 + $0x58] sm:$0xf]
        %v7022 = vld [vmem:[%s6998 + $0x5c] sm:$0xf]
        %v7023 = vld [vmem:[%s6998 + $0x60] sm:$0xf]
        %v7024 = vld [vmem:[%s6998 + $0x64] sm:$0xf]
        %v7025 = vld [vmem:[%s6998 + $0x68] sm:$0xf]
        %v7026 = vld [vmem:[%s6998 + $0x6c] sm:$0xf]
        %v7027 = vld [vmem:[%s6998 + $0x70] sm:$0xf]
        %v7028 = vld [vmem:[%s6998 + $0x74] sm:$0xf]
        %v7029 = vld [vmem:[%s6998 + $0x78] sm:$0xf]
        %v7030 = vld [vmem:[%s6998 + $0x7c] sm:$0xf]
        %v7031 = vld [vmem:[%s6998 + $0x80] sm:$0xf]
        %v7032 = vld [vmem:[%s6998 + $0x84] sm:$0xf]
        %v7033 = vld [vmem:[%s6998 + $0x88] sm:$0xf]
        %v7034 = vld [vmem:[%s6998 + $0x8c] sm:$0xf]
        %s7035 = scalar_lea.vmem %s4, 4
        %v7036 = vld [vmem:[%s7035] sm:$0x1]
        %v7038 = vlaneseq
        %v7039 = vshrl.u32 %v7038, 7
        %v7040 = vsub.s32 0, %v7039
        %v7041 = vrot.slane %v7036, %v7040
        %v7059 = vunpack.c.l.b16 %v6982
        %v7060 = vunpack.c.h.b16 %v6982
        %v7061 = vunpack.c.l.b16 %v6983
        %v7062 = vunpack.c.l.b16 %v6984
        %v7063 = vunpack.c.h.b16 %v6984
        %v7064 = vunpack.c.l.b16 %v6985
        %v7065 = vunpack.c.l.b16 %v6986
        %v7066 = vunpack.c.h.b16 %v6986
        %v7067 = vunpack.c.l.b16 %v6987
        %v7068 = vunpack.c.l.b16 %v6988
        %v7069 = vunpack.c.h.b16 %v6988
        %v7070 = vunpack.c.l.b16 %v6989
        %v7071 = vunpack.c.l.b16 %v6990
        %v7072 = vunpack.c.h.b16 %v6990
        %v7073 = vunpack.c.l.b16 %v6991
        %v7074 = vunpack.c.l.b16 %v6992
        %v7075 = vunpack.c.h.b16 %v6992
        %v7076 = vunpack.c.l.b16 %v6993
        %v7077 = vunpack.c.l.b16 %v6994
        %v7078 = vunpack.c.h.b16 %v6994
        %v7079 = vunpack.c.l.b16 %v6995
        %v7080 = vunpack.c.l.b16 %v6996
        %v7081 = vunpack.c.h.b16 %v6996
        %v7082 = vunpack.c.l.b16 %v6997
        %v7083 = vpack.c.b16 %v7062, %v7059
        %v7084 = vpack.c.b16 %v7063, %v7060
        %v7085 = vpack.c.b16 %v7064, %v7061
        %v7086 = vpack.c.b16 %v7068, %v7065
        %v7087 = vpack.c.b16 %v7069, %v7066
        %v7088 = vpack.c.b16 %v7070, %v7067
        %v7089 = vpack.c.b16 %v7074, %v7071
        %v7090 = vpack.c.b16 %v7075, %v7072
        %v7091 = vpack.c.b16 %v7076, %v7073
        %v7092 = vpack.c.b16 %v7080, %v7077
        %v7093 = vpack.c.b16 %v7081, %v7078
        %v7094 = vpack.c.b16 %v7082, %v7079
        %v7139 = vunpack.c.l.b16 %v6999
        %v7140 = vunpack.c.l.b16 %v7000
        %v7141 = vunpack.c.l.b16 %v7001
        %v7142 = vunpack.c.l.b16 %v7002
        %v7143 = vunpack.c.l.b16 %v7003
        %v7144 = vunpack.c.l.b16 %v7004
        %v7145 = vunpack.c.l.b16 %v7005
        %v7146 = vunpack.c.l.b16 %v7006
        %v7147 = vunpack.c.l.b16 %v7007
        %v7148 = vunpack.c.l.b16 %v7008
        %v7149 = vunpack.c.l.b16 %v7009
        %v7150 = vunpack.c.l.b16 %v7010
        %v7151 = vunpack.c.l.b16 %v7011
        %v7152 = vunpack.c.l.b16 %v7012
        %v7153 = vunpack.c.l.b16 %v7013
        %v7154 = vunpack.c.l.b16 %v7014
        %v7155 = vunpack.c.l.b16 %v7015
        %v7156 = vunpack.c.l.b16 %v7016
        %v7157 = vunpack.c.l.b16 %v7017
        %v7158 = vunpack.c.l.b16 %v7018
        %v7159 = vunpack.c.l.b16 %v7019
        %v7160 = vunpack.c.l.b16 %v7020
        %v7161 = vunpack.c.l.b16 %v7021
        %v7162 = vunpack.c.l.b16 %v7022
        %v7163 = vunpack.c.l.b16 %v7023
        %v7164 = vunpack.c.l.b16 %v7024
        %v7165 = vunpack.c.l.b16 %v7025
        %v7166 = vunpack.c.l.b16 %v7026
        %v7167 = vunpack.c.l.b16 %v7027
        %v7168 = vunpack.c.l.b16 %v7028
        %v7169 = vunpack.c.l.b16 %v7029
        %v7170 = vunpack.c.l.b16 %v7030
        %v7171 = vunpack.c.l.b16 %v7031
        %v7172 = vunpack.c.l.b16 %v7032
        %v7173 = vunpack.c.l.b16 %v7033
        %v7174 = vunpack.c.l.b16 %v7034
        %v7175 = vpack.c.b16 %v7140, %v7139
        %v7176 = vpack.c.b16 %v7142, %v7141
        %v7177 = vpack.c.b16 %v7144, %v7143
        %v7178 = vpack.c.b16 %v7146, %v7145
        %v7179 = vpack.c.b16 %v7148, %v7147
        %v7180 = vpack.c.b16 %v7150, %v7149
        %v7181 = vpack.c.b16 %v7152, %v7151
        %v7182 = vpack.c.b16 %v7154, %v7153
        %v7183 = vpack.c.b16 %v7156, %v7155
        %v7184 = vpack.c.b16 %v7158, %v7157
        %v7185 = vpack.c.b16 %v7160, %v7159
        %v7186 = vpack.c.b16 %v7162, %v7161
        %v7187 = vpack.c.b16 %v7164, %v7163
        %v7188 = vpack.c.b16 %v7166, %v7165
        %v7189 = vpack.c.b16 %v7168, %v7167
        %v7190 = vpack.c.b16 %v7170, %v7169
        %v7191 = vpack.c.b16 %v7172, %v7171
        %v7192 = vpack.c.b16 %v7174, %v7173
        %v7212 = vsel %vm269, %v7085, 0
        %v7215 = vsel %vm269, %v7088, 0
        %v7218 = vsel %vm269, %v7091, 0
        %v7221 = vsel %vm269, %v7094, 0
        %7223 = vmatprep.subr.bf16.mxu0 0
        %7224 = vmatpush1.bf16.msra.mxu0 %v7175
        %7225 = vmatprep.subr.bf16.mxu0 0
        %7226 = vmatpush1.bf16.msra.mxu0 %v7176
        %7227 = vmatprep.subr.bf16.mxu0 0
        %7228 = vmatpush1.bf16.msra.mxu0 %v7177
        %7229 = vmatprep.subr.bf16.mxu0 0
        %7230 = vmatpush1.bf16.msra.mxu0 %v7178
        %7231 = vmatprep.subr.bf16.mxu0 0
        %7232 = vmatpush1.bf16.msra.mxu0 %v7179
        %7233 = vmatprep.subr.bf16.mxu0 0
        %7234 = vmatpush1.bf16.msra.mxu0 %v7180
        %7235 = vmatprep.subr.bf16.mxu0 0
        %7236 = vmatpush1.bf16.msra.mxu0 %v7181
        %7237 = vmatprep.subr.bf16.mxu0 0
        %7238 = vmatpush1.bf16.msra.mxu0 %v7182
        %7239 = vmatprep.subr.bf16.mxu0 0
        %7240 = vmatpush1.bf16.msra.mxu0 %v7183
        %7241 = vmatprep.subr.bf16.mxu0 0
        %7242 = vmatpush1.bf16.msra.mxu0 %v7184
        %7243 = vmatprep.subr.bf16.mxu0 0
        %7244 = vmatpush1.bf16.msra.mxu0 %v7185
        %7245 = vmatprep.subr.bf16.mxu0 0
        %7246 = vmatpush1.bf16.msra.mxu0 %v7186
        %7247 = vmatprep.subr.bf16.mxu0 0
        %7248 = vmatpush1.bf16.msra.mxu0 %v7187
        %7249 = vmatprep.subr.bf16.mxu0 0
        %7250 = vmatpush1.bf16.msra.mxu0 %v7188
        %7251 = vmatprep.subr.bf16.mxu0 0
        %7252 = vmatpush1.bf16.msra.mxu0 %v7189
        %7253 = vmatprep.subr.bf16.mxu0 0
        %7254 = vmatpush1.bf16.msra.mxu0 %v7190
        %7255 = vmatprep.mubr.bf16.mxu0 %v7084
        %7256 = vmatmul.mubr.bf16.gmra.mrb[0].mxu0 %v7083
        %v7257 = vpop.f32.mrb[0].mxu0
        %v7258 = vadd.f32 %v7041, %v7257
        %v7259 = vpop.f32.mrb[0].mxu0
        %v7260 = vpop.f32.mrb[0].mxu0
        %v7261 = vadd.f32 %v7041, %v7260
        %v7262 = vpop.f32.mrb[0].mxu0
        %7263 = vmatprep.mubr.bf16.mxu0 %v7087
        %7264 = vmatmul.mubr.bf16.gmra.mrb[0].mxu0 %v7086
        %v7265 = vpop.f32.mrb[0].mxu0
        %v7266 = vadd.f32 %v7041, %v7265
        %v7267 = vpop.f32.mrb[0].mxu0
        %v7268 = vpop.f32.mrb[0].mxu0
        %v7269 = vadd.f32 %v7041, %v7268
        %v7270 = vpop.f32.mrb[0].mxu0
        %7271 = vmatprep.mubr.bf16.mxu0 %v7090
        %7272 = vmatmul.mubr.bf16.gmra.mrb[0].mxu0 %v7089
        %v7273 = vpop.f32.mrb[0].mxu0
        %v7274 = vadd.f32 %v7041, %v7273
        %v7275 = vpop.f32.mrb[0].mxu0
        %v7276 = vpop.f32.mrb[0].mxu0
        %v7277 = vadd.f32 %v7041, %v7276
        %v7278 = vpop.f32.mrb[0].mxu0
        %7279 = vmatprep.mubr.bf16.mxu0 %v7093
        %7280 = vmatmul.mubr.bf16.gmra.mrb[0].mxu0 %v7092
        %v7281 = vpop.f32.mrb[0].mxu0
        %v7282 = vadd.f32 %v7041, %v7281
        %v7283 = vpop.f32.mrb[0].mxu0
        %v7284 = vpop.f32.mrb[0].mxu0
        %v7285 = vadd.f32 %v7041, %v7284
        %v7286 = vpop.f32.mrb[0].mxu0
        %7287 = vdwg.mxu0
        %7288 = vmatprep.subr.bf16.mxu0 0
        %7289 = vmatpush1.bf16.msra.mxu0 %v7191
        %7290 = vmatprep.subr.bf16.mxu0 0
        %7291 = vmatpush1.bf16.msra.mxu0 %v7192
        %7292 = vmatprep.subr.bf16.mxu0 0
        %7293 = vmatpush1.bf16.msra.mxu0 0
        %7294 = vmatprep.subr.bf16.mxu0 0
        %7295 = vmatpush1.bf16.msra.mxu0 0
        %7296 = vmatprep.subr.bf16.mxu0 0
        %7297 = vmatpush1.bf16.msra.mxu0 0
        %7298 = vmatprep.subr.bf16.mxu0 0
        %7299 = vmatpush1.bf16.msra.mxu0 0
        %7300 = vmatprep.subr.bf16.mxu0 0
        %7301 = vmatpush1.bf16.msra.mxu0 0
        %7302 = vmatprep.subr.bf16.mxu0 0
        %7303 = vmatpush1.bf16.msra.mxu0 0
        %7304 = vmatprep.subr.bf16.mxu0 0
        %7305 = vmatpush1.bf16.msra.mxu0 0
        %7306 = vmatprep.subr.bf16.mxu0 0
        %7307 = vmatpush1.bf16.msra.mxu0 0
        %7308 = vmatprep.subr.bf16.mxu0 0
        %7309 = vmatpush1.bf16.msra.mxu0 0
        %7310 = vmatprep.subr.bf16.mxu0 0
        %7311 = vmatpush1.bf16.msra.mxu0 0
        %7312 = vmatprep.subr.bf16.mxu0 0
        %7313 = vmatpush1.bf16.msra.mxu0 0
        %7314 = vmatprep.subr.bf16.mxu0 0
        %7315 = vmatpush1.bf16.msra.mxu0 0
        %7316 = vmatprep.subr.bf16.mxu0 0
        %7317 = vmatpush1.bf16.msra.mxu0 0
        %7318 = vmatprep.subr.bf16.mxu0 0
        %7319 = vmatpush1.bf16.msra.mxu0 0
        %7320 = vmatprep.mubr.bf16.mxu0 0
        %7321 = vmatmul.mubr.bf16.gmra.mrb[0].mxu0 %v7212
        %v7322 = vpop.f32.mrb[0].mxu0
        %v7323 = vadd.f32 %v7258, %v7322
        %v7324 = vpop.f32.mrb[0].mxu0
        %v7325 = vpop.f32.mrb[0].mxu0
        %v7326 = vadd.f32 %v7261, %v7325
        %v7327 = vpop.f32.mrb[0].mxu0
        %7328 = vmatprep.mubr.bf16.mxu0 0
        %7329 = vmatmul.mubr.bf16.gmra.mrb[0].mxu0 %v7215
        %v7330 = vpop.f32.mrb[0].mxu0
        %v7331 = vadd.f32 %v7266, %v7330
        %v7332 = vpop.f32.mrb[0].mxu0
        %v7333 = vpop.f32.mrb[0].mxu0
        %v7334 = vadd.f32 %v7269, %v7333
        %v7335 = vpop.f32.mrb[0].mxu0
        %7336 = vmatprep.mubr.bf16.mxu0 0
        %7337 = vmatmul.mubr.bf16.gmra.mrb[0].mxu0 %v7218
        %v7338 = vpop.f32.mrb[0].mxu0
        %v7339 = vadd.f32 %v7274, %v7338
        %v7340 = vpop.f32.mrb[0].mxu0
        %v7341 = vpop.f32.mrb[0].mxu0
        %v7342 = vadd.f32 %v7277, %v7341
        %v7343 = vpop.f32.mrb[0].mxu0
        %7344 = vmatprep.mubr.bf16.mxu0 0
        %7345 = vmatmul.mubr.bf16.gmra.mrb[0].mxu0 %v7221
        %v7346 = vpop.f32.mrb[0].mxu0
        %v7347 = vadd.f32 %v7282, %v7346
        %v7348 = vpop.f32.mrb[0].mxu0
        %v7349 = vpop.f32.mrb[0].mxu0
        %v7350 = vadd.f32 %v7285, %v7349
        %v7351 = vpop.f32.mrb[0].mxu0
        %7352 = vdwg.mxu0
        %v7353 = vmax.f32 %v7323, 0.0
        %v7354 = vmax.f32 %v7326, 0.0
        %v7355 = vmax.f32 %v7331, 0.0
        %v7356 = vmax.f32 %v7334, 0.0
        %v7357 = vmax.f32 %v7339, 0.0
        %v7358 = vmax.f32 %v7342, 0.0
        %v7359 = vmax.f32 %v7347, 0.0
        %v7360 = vmax.f32 %v7350, 0.0
        %v7361 = vpack.c.bf16 %v7353, %v7353
        %v7362 = vpack.c.bf16 %v7354, %v7354
        %v7363 = vpack.c.bf16 %v7355, %v7355
        %v7364 = vpack.c.bf16 %v7356, %v7356
        %v7365 = vpack.c.bf16 %v7357, %v7357
        %v7366 = vpack.c.bf16 %v7358, %v7358
        %v7367 = vpack.c.bf16 %v7359, %v7359
        %v7368 = vpack.c.bf16 %v7360, %v7360
        %v7377 = vunpack.c.l.b16 %v7361
        %v7378 = vunpack.c.l.b16 %v7362
        %v7379 = vunpack.c.l.b16 %v7363
        %v7380 = vunpack.c.l.b16 %v7364
        %v7381 = vunpack.c.l.b16 %v7365
        %v7382 = vunpack.c.l.b16 %v7366
        %v7383 = vunpack.c.l.b16 %v7367
        %v7384 = vunpack.c.l.b16 %v7368
        %v7385 = vpack.c.b16 %v7377, %v7377
        %v7386 = vpack.c.b16 %v7378, %v7378
        %v7387 = vpack.c.b16 %v7379, %v7379
        %v7388 = vpack.c.b16 %v7380, %v7380
        %v7389 = vpack.c.b16 %v7381, %v7381
        %v7390 = vpack.c.b16 %v7382, %v7382
        %v7391 = vpack.c.b16 %v7383, %v7383
        %v7392 = vpack.c.b16 %v7384, %v7384
        %v7394 = vshrl.u32 %v7385, 16
        %v7396 = vrot.slane %v7394, 7
        %v7397 = vshll.u32 %v7385, 16
        %v7399 = vor.u32 %v7396, %v7397
        %v7400 = vrot.slane %v7396, 4
        %v7402 = vshrl.u32 %v7386, 16
        %v7404 = vrot.slane %v7402, 7
        %v7405 = vshll.u32 %v7386, 16
        %v7407 = vor.u32 %v7404, %v7405
        %v7408 = vrot.slane %v7404, 4
        %v7410 = vshrl.u32 %v7387, 16
        %v7412 = vrot.slane %v7410, 7
        %v7413 = vshll.u32 %v7387, 16
        %v7415 = vor.u32 %v7412, %v7413
        %v7416 = vrot.slane %v7412, 4
        %v7418 = vshrl.u32 %v7388, 16
        %v7420 = vrot.slane %v7418, 7
        %v7421 = vshll.u32 %v7388, 16
        %v7423 = vor.u32 %v7420, %v7421
        %v7424 = vrot.slane %v7420, 4
        %v7426 = vshrl.u32 %v7389, 16
        %v7428 = vrot.slane %v7426, 7
        %v7429 = vshll.u32 %v7389, 16
        %v7431 = vor.u32 %v7428, %v7429
        %v7432 = vrot.slane %v7428, 4
        %v7434 = vshrl.u32 %v7390, 16
        %v7436 = vrot.slane %v7434, 7
        %v7437 = vshll.u32 %v7390, 16
        %v7439 = vor.u32 %v7436, %v7437
        %v7440 = vrot.slane %v7436, 4
        %v7442 = vshrl.u32 %v7391, 16
        %v7444 = vrot.slane %v7442, 7
        %v7445 = vshll.u32 %v7391, 16
        %v7447 = vor.u32 %v7444, %v7445
        %v7448 = vrot.slane %v7444, 4
        %v7450 = vshrl.u32 %v7392, 16
        %v7452 = vrot.slane %v7450, 7
        %v7453 = vshll.u32 %v7392, 16
        %v7455 = vor.u32 %v7452, %v7453
        %v7456 = vrot.slane %v7452, 4
        %v7473 = vld [vmem:[%s285] sm:$0xf]
        %v7474 = vsel %vm476, %v7399, %v7473
        %7475 = vst [vmem:[%s285] sm:$0xf] %v7474
        %v7476 = vld [vmem:[%s285 + $0x4] sm:$0x1]
        %v7477 = vsel %vm288, %v7400, %v7476
        %7478 = vst [vmem:[%s285 + $0x4] sm:$0x1] %v7477
        %v7479 = vld [vmem:[%s285 + $0x8] sm:$0xf]
        %v7480 = vsel %vm476, %v7407, %v7479
        %7481 = vst [vmem:[%s285 + $0x8] sm:$0xf] %v7480
        %v7482 = vld [vmem:[%s285 + $0xc] sm:$0x1]
        %v7483 = vsel %vm288, %v7408, %v7482
        %7484 = vst [vmem:[%s285 + $0xc] sm:$0x1] %v7483
        %v7485 = vld [vmem:[%s285 + $0x10] sm:$0xf]
        %v7486 = vsel %vm476, %v7415, %v7485
        %7487 = vst [vmem:[%s285 + $0x10] sm:$0xf] %v7486
        %v7488 = vld [vmem:[%s285 + $0x14] sm:$0x1]
        %v7489 = vsel %vm288, %v7416, %v7488
        %7490 = vst [vmem:[%s285 + $0x14] sm:$0x1] %v7489
        %v7491 = vld [vmem:[%s285 + $0x18] sm:$0xf]
        %v7492 = vsel %vm476, %v7423, %v7491
        %7493 = vst [vmem:[%s285 + $0x18] sm:$0xf] %v7492
        %v7494 = vld [vmem:[%s285 + $0x1c] sm:$0x1]
        %v7495 = vsel %vm288, %v7424, %v7494
        %7496 = vst [vmem:[%s285 + $0x1c] sm:$0x1] %v7495
        %v7497 = vld [vmem:[%s285 + $0x20] sm:$0xf]
        %v7498 = vsel %vm476, %v7431, %v7497
        %7499 = vst [vmem:[%s285 + $0x20] sm:$0xf] %v7498
        %v7500 = vld [vmem:[%s285 + $0x24] sm:$0x1]
        %v7501 = vsel %vm288, %v7432, %v7500
        %7502 = vst [vmem:[%s285 + $0x24] sm:$0x1] %v7501
        %v7503 = vld [vmem:[%s285 + $0x28] sm:$0xf]
        %v7504 = vsel %vm476, %v7439, %v7503
        %7505 = vst [vmem:[%s285 + $0x28] sm:$0xf] %v7504
        %v7506 = vld [vmem:[%s285 + $0x2c] sm:$0x1]
        %v7507 = vsel %vm288, %v7440, %v7506
        %7508 = vst [vmem:[%s285 + $0x2c] sm:$0x1] %v7507
        %v7509 = vld [vmem:[%s285 + $0x30] sm:$0xf]
        %v7510 = vsel %vm476, %v7447, %v7509
        %7511 = vst [vmem:[%s285 + $0x30] sm:$0xf] %v7510
        %v7512 = vld [vmem:[%s285 + $0x34] sm:$0x1]
        %v7513 = vsel %vm288, %v7448, %v7512
        %7514 = vst [vmem:[%s285 + $0x34] sm:$0x1] %v7513
        %v7515 = vld [vmem:[%s285 + $0x38] sm:$0xf]
        %v7516 = vsel %vm476, %v7455, %v7515
        %7517 = vst [vmem:[%s285 + $0x38] sm:$0xf] %v7516
        %v7518 = vld [vmem:[%s285 + $0x3c] sm:$0x1]
        %v7519 = vsel %vm288, %v7456, %v7518
        %7520 = vst [vmem:[%s285 + $0x3c] sm:$0x1] %v7519
        %v7521 = vld [vmem:[#allocation2] sm:$0xf]
        %v7522 = vld [vmem:[#allocation2 + $0x8] sm:$0xf]
        %v7523 = vld [vmem:[#allocation2 + $0x10] sm:$0xf]
        %v7524 = vld [vmem:[#allocation2 + $0x18] sm:$0xf]
        %v7525 = vld [vmem:[#allocation2 + $0x20] sm:$0xf]
        %v7526 = vld [vmem:[#allocation2 + $0x28] sm:$0xf]
        %v7527 = vld [vmem:[#allocation2 + $0x30] sm:$0xf]
        %v7528 = vld [vmem:[#allocation2 + $0x38] sm:$0xf]
        %7529 = vst.msk [vmem:[#allocation3] sm:$0xf] %vm278, %v7521
        %7530 = vst.msk [vmem:[#allocation3 + $0xc] sm:$0xf] %vm278, %v7522
        %7531 = vst.msk [vmem:[#allocation3 + $0x18] sm:$0xf] %vm278, %v7523
        %7532 = vst.msk [vmem:[#allocation3 + $0x24] sm:$0xf] %vm278, %v7524
        %7533 = vst.msk [vmem:[#allocation3 + $0x30] sm:$0xf] %vm278, %v7525
        %7534 = vst.msk [vmem:[#allocation3 + $0x3c] sm:$0xf] %vm278, %v7526
        %7535 = vst.msk [vmem:[#allocation3 + $0x48] sm:$0xf] %vm278, %v7527
        %7536 = vst.msk [vmem:[#allocation3 + $0x54] sm:$0xf] %vm278, %v7528
        %v7537 = vld [vmem:[#allocation2] sm:$0xf]
        %v7538 = vld [vmem:[#allocation2 + $0x4] sm:$0x1]
        %v7539 = vld [vmem:[#allocation2 + $0x8] sm:$0xf]
        %v7540 = vld [vmem:[#allocation2 + $0xc] sm:$0x1]
        %v7541 = vld [vmem:[#allocation2 + $0x10] sm:$0xf]
        %v7542 = vld [vmem:[#allocation2 + $0x14] sm:$0x1]
        %v7543 = vld [vmem:[#allocation2 + $0x18] sm:$0xf]
        %v7544 = vld [vmem:[#allocation2 + $0x1c] sm:$0x1]
        %v7545 = vld [vmem:[#allocation2 + $0x20] sm:$0xf]
        %v7546 = vld [vmem:[#allocation2 + $0x24] sm:$0x1]
        %v7547 = vld [vmem:[#allocation2 + $0x28] sm:$0xf]
        %v7548 = vld [vmem:[#allocation2 + $0x2c] sm:$0x1]
        %v7549 = vld [vmem:[#allocation2 + $0x30] sm:$0xf]
        %v7550 = vld [vmem:[#allocation2 + $0x34] sm:$0x1]
        %v7551 = vld [vmem:[#allocation2 + $0x38] sm:$0xf]
        %v7552 = vld [vmem:[#allocation2 + $0x3c] sm:$0x1]
        %v7554 = vshrl.u32 %v7537, 16
        %v7556 = vrot.slane %v7554, 4
        %v7557 = vshll.u32 %v7537, 16
        %v7559 = vrot.slane %v7557, 5
        %v7560 = vor.u32 %v7556, %v7559
        %v7561 = vrot.slane %v7560, 4
        %v7563 = vshll.u32 %v7538, 16
        %v7565 = vrot.slane %v7563, 5
        %v7566 = vsel %vm559, %v7561, %v7565
        %v7568 = vshrl.u32 %v7539, 16
        %v7570 = vrot.slane %v7568, 4
        %v7571 = vshll.u32 %v7539, 16
        %v7573 = vrot.slane %v7571, 5
        %v7574 = vor.u32 %v7570, %v7573
        %v7575 = vrot.slane %v7574, 4
        %v7577 = vshll.u32 %v7540, 16
        %v7579 = vrot.slane %v7577, 5
        %v7580 = vsel %vm559, %v7575, %v7579
        %v7582 = vshrl.u32 %v7541, 16
        %v7584 = vrot.slane %v7582, 4
        %v7585 = vshll.u32 %v7541, 16
        %v7587 = vrot.slane %v7585, 5
        %v7588 = vor.u32 %v7584, %v7587
        %v7589 = vrot.slane %v7588, 4
        %v7591 = vshll.u32 %v7542, 16
        %v7593 = vrot.slane %v7591, 5
        %v7594 = vsel %vm559, %v7589, %v7593
        %v7596 = vshrl.u32 %v7543, 16
        %v7598 = vrot.slane %v7596, 4
        %v7599 = vshll.u32 %v7543, 16
        %v7601 = vrot.slane %v7599, 5
        %v7602 = vor.u32 %v7598, %v7601
        %v7603 = vrot.slane %v7602, 4
        %v7605 = vshll.u32 %v7544, 16
        %v7607 = vrot.slane %v7605, 5
        %v7608 = vsel %vm559, %v7603, %v7607
        %v7610 = vshrl.u32 %v7545, 16
        %v7612 = vrot.slane %v7610, 4
        %v7613 = vshll.u32 %v7545, 16
        %v7615 = vrot.slane %v7613, 5
        %v7616 = vor.u32 %v7612, %v7615
        %v7617 = vrot.slane %v7616, 4
        %v7619 = vshll.u32 %v7546, 16
        %v7621 = vrot.slane %v7619, 5
        %v7622 = vsel %vm559, %v7617, %v7621
        %v7624 = vshrl.u32 %v7547, 16
        %v7626 = vrot.slane %v7624, 4
        %v7627 = vshll.u32 %v7547, 16
        %v7629 = vrot.slane %v7627, 5
        %v7630 = vor.u32 %v7626, %v7629
        %v7631 = vrot.slane %v7630, 4
        %v7633 = vshll.u32 %v7548, 16
        %v7635 = vrot.slane %v7633, 5
        %v7636 = vsel %vm559, %v7631, %v7635
        %v7638 = vshrl.u32 %v7549, 16
        %v7640 = vrot.slane %v7638, 4
        %v7641 = vshll.u32 %v7549, 16
        %v7643 = vrot.slane %v7641, 5
        %v7644 = vor.u32 %v7640, %v7643
        %v7645 = vrot.slane %v7644, 4
        %v7647 = vshll.u32 %v7550, 16
        %v7649 = vrot.slane %v7647, 5
        %v7650 = vsel %vm559, %v7645, %v7649
        %v7652 = vshrl.u32 %v7551, 16
        %v7654 = vrot.slane %v7652, 4
        %v7655 = vshll.u32 %v7551, 16
        %v7657 = vrot.slane %v7655, 5
        %v7658 = vor.u32 %v7654, %v7657
        %v7659 = vrot.slane %v7658, 4
        %v7661 = vshll.u32 %v7552, 16
        %v7663 = vrot.slane %v7661, 5
        %v7664 = vsel %vm559, %v7659, %v7663
        %7665 = vrot.lane.b32.xlu0 %v7566, 32
        %v7666 = vpop.permute.xlu0 %7665
        %7667 = vrot.lane.b32.xlu0 %v7580, 32
        %v7668 = vpop.permute.xlu0 %7667
        %7669 = vrot.lane.b32.xlu0 %v7594, 32
        %v7670 = vpop.permute.xlu0 %7669
        %7671 = vrot.lane.b32.xlu0 %v7608, 32
        %v7672 = vpop.permute.xlu0 %7671
        %7673 = vrot.lane.b32.xlu0 %v7622, 32
        %v7674 = vpop.permute.xlu0 %7673
        %7675 = vrot.lane.b32.xlu0 %v7636, 32
        %v7676 = vpop.permute.xlu0 %7675
        %7677 = vrot.lane.b32.xlu0 %v7650, 32
        %v7678 = vpop.permute.xlu0 %7677
        %7679 = vrot.lane.b32.xlu0 %v7664, 32
        %v7680 = vpop.permute.xlu0 %7679
        %7689 = vst.msk [vmem:[#allocation3] sm:$0xf] %vm696, %v7666
        %7690 = vst.msk [vmem:[#allocation3 + $0xc] sm:$0xf] %vm696, %v7668
        %7691 = vst.msk [vmem:[#allocation3 + $0x18] sm:$0xf] %vm696, %v7670
        %7692 = vst.msk [vmem:[#allocation3 + $0x24] sm:$0xf] %vm696, %v7672
        %7693 = vst.msk [vmem:[#allocation3 + $0x30] sm:$0xf] %vm696, %v7674
        %7694 = vst.msk [vmem:[#allocation3 + $0x3c] sm:$0xf] %vm696, %v7676
        %7695 = vst.msk [vmem:[#allocation3 + $0x48] sm:$0xf] %vm696, %v7678
        %7696 = vst.msk [vmem:[#allocation3 + $0x54] sm:$0xf] %vm696, %v7680
        %v7697 = vld [vmem:[#allocation2] sm:$0xe]
        %v7698 = vld [vmem:[#allocation2 + $0x4] sm:$0x1]
        %v7699 = vld [vmem:[#allocation2 + $0x8] sm:$0xe]
        %v7700 = vld [vmem:[#allocation2 + $0xc] sm:$0x1]
        %v7701 = vld [vmem:[#allocation2 + $0x10] sm:$0xe]
        %v7702 = vld [vmem:[#allocation2 + $0x14] sm:$0x1]
        %v7703 = vld [vmem:[#allocation2 + $0x18] sm:$0xe]
        %v7704 = vld [vmem:[#allocation2 + $0x1c] sm:$0x1]
        %v7705 = vld [vmem:[#allocation2 + $0x20] sm:$0xe]
        %v7706 = vld [vmem:[#allocation2 + $0x24] sm:$0x1]
        %v7707 = vld [vmem:[#allocation2 + $0x28] sm:$0xe]
        %v7708 = vld [vmem:[#allocation2 + $0x2c] sm:$0x1]
        %v7709 = vld [vmem:[#allocation2 + $0x30] sm:$0xe]
        %v7710 = vld [vmem:[#allocation2 + $0x34] sm:$0x1]
        %v7711 = vld [vmem:[#allocation2 + $0x38] sm:$0xe]
        %v7712 = vld [vmem:[#allocation2 + $0x3c] sm:$0x1]
        %v7729 = vrot.slane %v7697, 5
        %v7730 = vrot.slane %v7729, 4
        %v7731 = vrot.slane %v7698, 5
        %v7732 = vsel %vm739, %v7730, %v7731
        %v7733 = vrot.slane %v7699, 5
        %v7734 = vrot.slane %v7733, 4
        %v7735 = vrot.slane %v7700, 5
        %v7736 = vsel %vm739, %v7734, %v7735
        %v7737 = vrot.slane %v7701, 5
        %v7738 = vrot.slane %v7737, 4
        %v7739 = vrot.slane %v7702, 5
        %v7740 = vsel %vm739, %v7738, %v7739
        %v7741 = vrot.slane %v7703, 5
        %v7742 = vrot.slane %v7741, 4
        %v7743 = vrot.slane %v7704, 5
        %v7744 = vsel %vm739, %v7742, %v7743
        %v7745 = vrot.slane %v7705, 5
        %v7746 = vrot.slane %v7745, 4
        %v7747 = vrot.slane %v7706, 5
        %v7748 = vsel %vm739, %v7746, %v7747
        %v7749 = vrot.slane %v7707, 5
        %v7750 = vrot.slane %v7749, 4
        %v7751 = vrot.slane %v7708, 5
        %v7752 = vsel %vm739, %v7750, %v7751
        %v7753 = vrot.slane %v7709, 5
        %v7754 = vrot.slane %v7753, 4
        %v7755 = vrot.slane %v7710, 5
        %v7756 = vsel %vm739, %v7754, %v7755
        %v7757 = vrot.slane %v7711, 5
        %v7758 = vrot.slane %v7757, 4
        %v7759 = vrot.slane %v7712, 5
        %v7760 = vsel %vm739, %v7758, %v7759
        %7761 = vrot.lane.b32.xlu0 %v7732, 64
        %v7762 = vpop.permute.xlu0 %7761
        %7763 = vrot.lane.b32.xlu0 %v7736, 64
        %v7764 = vpop.permute.xlu0 %7763
        %7765 = vrot.lane.b32.xlu0 %v7740, 64
        %v7766 = vpop.permute.xlu0 %7765
        %7767 = vrot.lane.b32.xlu0 %v7744, 64
        %v7768 = vpop.permute.xlu0 %7767
        %7769 = vrot.lane.b32.xlu0 %v7748, 64
        %v7770 = vpop.permute.xlu0 %7769
        %7771 = vrot.lane.b32.xlu0 %v7752, 64
        %v7772 = vpop.permute.xlu0 %7771
        %7773 = vrot.lane.b32.xlu0 %v7756, 64
        %v7774 = vpop.permute.xlu0 %7773
        %7775 = vrot.lane.b32.xlu0 %v7760, 64
        %v7776 = vpop.permute.xlu0 %7775
        %7785 = vst.msk [vmem:[#allocation3] sm:$0xf] %vm796, %v7762
        %7786 = vst.msk [vmem:[#allocation3 + $0xc] sm:$0xf] %vm796, %v7764
        %7787 = vst.msk [vmem:[#allocation3 + $0x18] sm:$0xf] %vm796, %v7766
        %7788 = vst.msk [vmem:[#allocation3 + $0x24] sm:$0xf] %vm796, %v7768
        %7789 = vst.msk [vmem:[#allocation3 + $0x30] sm:$0xf] %vm796, %v7770
        %7790 = vst.msk [vmem:[#allocation3 + $0x3c] sm:$0xf] %vm796, %v7772
        %7791 = vst.msk [vmem:[#allocation3 + $0x48] sm:$0xf] %vm796, %v7774
        %7792 = vst.msk [vmem:[#allocation3 + $0x54] sm:$0xf] %vm796, %v7776
        %v7793 = vld [vmem:[%s285] sm:$0xf]
        %v7794 = vld [vmem:[%s285 + $0x8] sm:$0xf]
        %v7795 = vld [vmem:[%s285 + $0x10] sm:$0xf]
        %v7796 = vld [vmem:[%s285 + $0x18] sm:$0xf]
        %v7797 = vld [vmem:[%s285 + $0x20] sm:$0xf]
        %v7798 = vld [vmem:[%s285 + $0x28] sm:$0xf]
        %v7799 = vld [vmem:[%s285 + $0x30] sm:$0xf]
        %v7800 = vld [vmem:[%s285 + $0x38] sm:$0xf]
        %7809 = vrot.lane.b32.xlu0 %v7793, 96
        %v7810 = vpop.permute.xlu0 %7809
        %7811 = vrot.lane.b32.xlu0 %v7794, 96
        %v7812 = vpop.permute.xlu0 %7811
        %7813 = vrot.lane.b32.xlu0 %v7795, 96
        %v7814 = vpop.permute.xlu0 %7813
        %7815 = vrot.lane.b32.xlu0 %v7796, 96
        %v7816 = vpop.permute.xlu0 %7815
        %7817 = vrot.lane.b32.xlu0 %v7797, 96
        %v7818 = vpop.permute.xlu0 %7817
        %7819 = vrot.lane.b32.xlu0 %v7798, 96
        %v7820 = vpop.permute.xlu0 %7819
        %7821 = vrot.lane.b32.xlu0 %v7799, 96
        %v7822 = vpop.permute.xlu0 %7821
        %7823 = vrot.lane.b32.xlu0 %v7800, 96
        %v7824 = vpop.permute.xlu0 %7823
        %7833 = vst.msk [vmem:[#allocation3] sm:$0xf] %vm845, %v7810
        %7834 = vst.msk [vmem:[#allocation3 + $0xc] sm:$0xf] %vm845, %v7812
        %7835 = vst.msk [vmem:[#allocation3 + $0x18] sm:$0xf] %vm845, %v7814
        %7836 = vst.msk [vmem:[#allocation3 + $0x24] sm:$0xf] %vm845, %v7816
        %7837 = vst.msk [vmem:[#allocation3 + $0x30] sm:$0xf] %vm845, %v7818
        %7838 = vst.msk [vmem:[#allocation3 + $0x3c] sm:$0xf] %vm845, %v7820
        %7839 = vst.msk [vmem:[#allocation3 + $0x48] sm:$0xf] %vm845, %v7822
        %7840 = vst.msk [vmem:[#allocation3 + $0x54] sm:$0xf] %vm845, %v7824
        %v7841 = vld [vmem:[%s285] sm:$0xf]
        %v7842 = vld [vmem:[%s285 + $0x4] sm:$0x1]
        %v7843 = vld [vmem:[%s285 + $0x8] sm:$0xf]
        %v7844 = vld [vmem:[%s285 + $0xc] sm:$0x1]
        %v7845 = vld [vmem:[%s285 + $0x10] sm:$0xf]
        %v7846 = vld [vmem:[%s285 + $0x14] sm:$0x1]
        %v7847 = vld [vmem:[%s285 + $0x18] sm:$0xf]
        %v7848 = vld [vmem:[%s285 + $0x1c] sm:$0x1]
        %v7849 = vld [vmem:[%s285 + $0x20] sm:$0xf]
        %v7850 = vld [vmem:[%s285 + $0x24] sm:$0x1]
        %v7851 = vld [vmem:[%s285 + $0x28] sm:$0xf]
        %v7852 = vld [vmem:[%s285 + $0x2c] sm:$0x1]
        %v7853 = vld [vmem:[%s285 + $0x30] sm:$0xf]
        %v7854 = vld [vmem:[%s285 + $0x34] sm:$0x1]
        %v7855 = vld [vmem:[%s285 + $0x38] sm:$0xf]
        %v7856 = vld [vmem:[%s285 + $0x3c] sm:$0x1]
        %v7858 = vshrl.u32 %v7841, 16
        %v7860 = vrot.slane %v7858, 4
        %v7861 = vshll.u32 %v7841, 16
        %v7863 = vrot.slane %v7861, 5
        %v7864 = vor.u32 %v7860, %v7863
        %v7865 = vrot.slane %v7864, 4
        %v7867 = vshll.u32 %v7842, 16
        %v7869 = vrot.slane %v7867, 5
        %v7870 = vsel %vm559, %v7865, %v7869
        %v7872 = vshrl.u32 %v7843, 16
        %v7874 = vrot.slane %v7872, 4
        %v7875 = vshll.u32 %v7843, 16
        %v7877 = vrot.slane %v7875, 5
        %v7878 = vor.u32 %v7874, %v7877
        %v7879 = vrot.slane %v7878, 4
        %v7881 = vshll.u32 %v7844, 16
        %v7883 = vrot.slane %v7881, 5
        %v7884 = vsel %vm559, %v7879, %v7883
        %v7886 = vshrl.u32 %v7845, 16
        %v7888 = vrot.slane %v7886, 4
        %v7889 = vshll.u32 %v7845, 16
        %v7891 = vrot.slane %v7889, 5
        %v7892 = vor.u32 %v7888, %v7891
        %v7893 = vrot.slane %v7892, 4
        %v7895 = vshll.u32 %v7846, 16
        %v7897 = vrot.slane %v7895, 5
        %v7898 = vsel %vm559, %v7893, %v7897
        %v7900 = vshrl.u32 %v7847, 16
        %v7902 = vrot.slane %v7900, 4
        %v7903 = vshll.u32 %v7847, 16
        %v7905 = vrot.slane %v7903, 5
        %v7906 = vor.u32 %v7902, %v7905
        %v7907 = vrot.slane %v7906, 4
        %v7909 = vshll.u32 %v7848, 16
        %v7911 = vrot.slane %v7909, 5
        %v7912 = vsel %vm559, %v7907, %v7911
        %v7914 = vshrl.u32 %v7849, 16
        %v7916 = vrot.slane %v7914, 4
        %v7917 = vshll.u32 %v7849, 16
        %v7919 = vrot.slane %v7917, 5
        %v7920 = vor.u32 %v7916, %v7919
        %v7921 = vrot.slane %v7920, 4
        %v7923 = vshll.u32 %v7850, 16
        %v7925 = vrot.slane %v7923, 5
        %v7926 = vsel %vm559, %v7921, %v7925
        %v7928 = vshrl.u32 %v7851, 16
        %v7930 = vrot.slane %v7928, 4
        %v7931 = vshll.u32 %v7851, 16
        %v7933 = vrot.slane %v7931, 5
        %v7934 = vor.u32 %v7930, %v7933
        %v7935 = vrot.slane %v7934, 4
        %v7937 = vshll.u32 %v7852, 16
        %v7939 = vrot.slane %v7937, 5
        %v7940 = vsel %vm559, %v7935, %v7939
        %v7942 = vshrl.u32 %v7853, 16
        %v7944 = vrot.slane %v7942, 4
        %v7945 = vshll.u32 %v7853, 16
        %v7947 = vrot.slane %v7945, 5
        %v7948 = vor.u32 %v7944, %v7947
        %v7949 = vrot.slane %v7948, 4
        %v7951 = vshll.u32 %v7854, 16
        %v7953 = vrot.slane %v7951, 5
        %v7954 = vsel %vm559, %v7949, %v7953
        %v7956 = vshrl.u32 %v7855, 16
        %v7958 = vrot.slane %v7956, 4
        %v7959 = vshll.u32 %v7855, 16
        %v7961 = vrot.slane %v7959, 5
        %v7962 = vor.u32 %v7958, %v7961
        %v7963 = vrot.slane %v7962, 4
        %v7965 = vshll.u32 %v7856, 16
        %v7967 = vrot.slane %v7965, 5
        %v7968 = vsel %vm559, %v7963, %v7967
        %7977 = vst.msk [vmem:[#allocation3 + $0x4] sm:$0xf] %vm278, %v7870
        %7978 = vst.msk [vmem:[#allocation3 + $0x10] sm:$0xf] %vm278, %v7884
        %7979 = vst.msk [vmem:[#allocation3 + $0x1c] sm:$0xf] %vm278, %v7898
        %7980 = vst.msk [vmem:[#allocation3 + $0x28] sm:$0xf] %vm278, %v7912
        %7981 = vst.msk [vmem:[#allocation3 + $0x34] sm:$0xf] %vm278, %v7926
        %7982 = vst.msk [vmem:[#allocation3 + $0x40] sm:$0xf] %vm278, %v7940
        %7983 = vst.msk [vmem:[#allocation3 + $0x4c] sm:$0xf] %vm278, %v7954
        %7984 = vst.msk [vmem:[#allocation3 + $0x58] sm:$0xf] %vm278, %v7968
        %v7985 = vld [vmem:[%s285] sm:$0xe]
        %v7986 = vld [vmem:[%s285 + $0x4] sm:$0x1]
        %v7987 = vld [vmem:[%s285 + $0x8] sm:$0xe]
        %v7988 = vld [vmem:[%s285 + $0xc] sm:$0x1]
        %v7989 = vld [vmem:[%s285 + $0x10] sm:$0xe]
        %v7990 = vld [vmem:[%s285 + $0x14] sm:$0x1]
        %v7991 = vld [vmem:[%s285 + $0x18] sm:$0xe]
        %v7992 = vld [vmem:[%s285 + $0x1c] sm:$0x1]
        %v7993 = vld [vmem:[%s285 + $0x20] sm:$0xe]
        %v7994 = vld [vmem:[%s285 + $0x24] sm:$0x1]
        %v7995 = vld [vmem:[%s285 + $0x28] sm:$0xe]
        %v7996 = vld [vmem:[%s285 + $0x2c] sm:$0x1]
        %v7997 = vld [vmem:[%s285 + $0x30] sm:$0xe]
        %v7998 = vld [vmem:[%s285 + $0x34] sm:$0x1]
        %v7999 = vld [vmem:[%s285 + $0x38] sm:$0xe]
        %v8000 = vld [vmem:[%s285 + $0x3c] sm:$0x1]
        %v8017 = vrot.slane %v7985, 5
        %v8018 = vrot.slane %v8017, 4
        %v8019 = vrot.slane %v7986, 5
        %v8020 = vsel %vm739, %v8018, %v8019
        %v8021 = vrot.slane %v7987, 5
        %v8022 = vrot.slane %v8021, 4
        %v8023 = vrot.slane %v7988, 5
        %v8024 = vsel %vm739, %v8022, %v8023
        %v8025 = vrot.slane %v7989, 5
        %v8026 = vrot.slane %v8025, 4
        %v8027 = vrot.slane %v7990, 5
        %v8028 = vsel %vm739, %v8026, %v8027
        %v8029 = vrot.slane %v7991, 5
        %v8030 = vrot.slane %v8029, 4
        %v8031 = vrot.slane %v7992, 5
        %v8032 = vsel %vm739, %v8030, %v8031
        %v8033 = vrot.slane %v7993, 5
        %v8034 = vrot.slane %v8033, 4
        %v8035 = vrot.slane %v7994, 5
        %v8036 = vsel %vm739, %v8034, %v8035
        %v8037 = vrot.slane %v7995, 5
        %v8038 = vrot.slane %v8037, 4
        %v8039 = vrot.slane %v7996, 5
        %v8040 = vsel %vm739, %v8038, %v8039
        %v8041 = vrot.slane %v7997, 5
        %v8042 = vrot.slane %v8041, 4
        %v8043 = vrot.slane %v7998, 5
        %v8044 = vsel %vm739, %v8042, %v8043
        %v8045 = vrot.slane %v7999, 5
        %v8046 = vrot.slane %v8045, 4
        %v8047 = vrot.slane %v8000, 5
        %v8048 = vsel %vm739, %v8046, %v8047
        %8049 = vrot.lane.b32.xlu0 %v8020, 32
        %v8050 = vpop.permute.xlu0 %8049
        %8051 = vrot.lane.b32.xlu0 %v8024, 32
        %v8052 = vpop.permute.xlu0 %8051
        %8053 = vrot.lane.b32.xlu0 %v8028, 32
        %v8054 = vpop.permute.xlu0 %8053
        %8055 = vrot.lane.b32.xlu0 %v8032, 32
        %v8056 = vpop.permute.xlu0 %8055
        %8057 = vrot.lane.b32.xlu0 %v8036, 32
        %v8058 = vpop.permute.xlu0 %8057
        %8059 = vrot.lane.b32.xlu0 %v8040, 32
        %v8060 = vpop.permute.xlu0 %8059
        %8061 = vrot.lane.b32.xlu0 %v8044, 32
        %v8062 = vpop.permute.xlu0 %8061
        %8063 = vrot.lane.b32.xlu0 %v8048, 32
        %v8064 = vpop.permute.xlu0 %8063
        %8073 = vst.msk [vmem:[#allocation3 + $0x4] sm:$0xf] %vm696, %v8050
        %8074 = vst.msk [vmem:[#allocation3 + $0x10] sm:$0xf] %vm696, %v8052
        %8075 = vst.msk [vmem:[#allocation3 + $0x1c] sm:$0xf] %vm696, %v8054
        %8076 = vst.msk [vmem:[#allocation3 + $0x28] sm:$0xf] %vm696, %v8056
        %8077 = vst.msk [vmem:[#allocation3 + $0x34] sm:$0xf] %vm696, %v8058
        %8078 = vst.msk [vmem:[#allocation3 + $0x40] sm:$0xf] %vm696, %v8060
        %8079 = vst.msk [vmem:[#allocation3 + $0x4c] sm:$0xf] %vm696, %v8062
        %8080 = vst.msk [vmem:[#allocation3 + $0x58] sm:$0xf] %vm696, %v8064
        %v8081 = vld [vmem:[%s1094] sm:$0xf]
        %v8082 = vld [vmem:[%s1094 + $0x8] sm:$0xf]
        %v8083 = vld [vmem:[%s1094 + $0x10] sm:$0xf]
        %v8084 = vld [vmem:[%s1094 + $0x18] sm:$0xf]
        %v8085 = vld [vmem:[%s1094 + $0x20] sm:$0xf]
        %v8086 = vld [vmem:[%s1094 + $0x28] sm:$0xf]
        %v8087 = vld [vmem:[%s1094 + $0x30] sm:$0xf]
        %v8088 = vld [vmem:[%s1094 + $0x38] sm:$0xf]
        %8097 = vrot.lane.b32.xlu0 %v8081, 64
        %v8098 = vpop.permute.xlu0 %8097
        %8099 = vrot.lane.b32.xlu0 %v8082, 64
        %v8100 = vpop.permute.xlu0 %8099
        %8101 = vrot.lane.b32.xlu0 %v8083, 64
        %v8102 = vpop.permute.xlu0 %8101
        %8103 = vrot.lane.b32.xlu0 %v8084, 64
        %v8104 = vpop.permute.xlu0 %8103
        %8105 = vrot.lane.b32.xlu0 %v8085, 64
        %v8106 = vpop.permute.xlu0 %8105
        %8107 = vrot.lane.b32.xlu0 %v8086, 64
        %v8108 = vpop.permute.xlu0 %8107
        %8109 = vrot.lane.b32.xlu0 %v8087, 64
        %v8110 = vpop.permute.xlu0 %8109
        %8111 = vrot.lane.b32.xlu0 %v8088, 64
        %v8112 = vpop.permute.xlu0 %8111
        %8121 = vst.msk [vmem:[#allocation3 + $0x4] sm:$0xf] %vm796, %v8098
        %8122 = vst.msk [vmem:[#allocation3 + $0x10] sm:$0xf] %vm796, %v8100
        %8123 = vst.msk [vmem:[#allocation3 + $0x1c] sm:$0xf] %vm796, %v8102
        %8124 = vst.msk [vmem:[#allocation3 + $0x28] sm:$0xf] %vm796, %v8104
        %8125 = vst.msk [vmem:[#allocation3 + $0x34] sm:$0xf] %vm796, %v8106
        %8126 = vst.msk [vmem:[#allocation3 + $0x40] sm:$0xf] %vm796, %v8108
        %8127 = vst.msk [vmem:[#allocation3 + $0x4c] sm:$0xf] %vm796, %v8110
        %8128 = vst.msk [vmem:[#allocation3 + $0x58] sm:$0xf] %vm796, %v8112
        %v8129 = vld [vmem:[%s1094] sm:$0xf]
        %v8130 = vld [vmem:[%s1094 + $0x4] sm:$0x1]
        %v8131 = vld [vmem:[%s1094 + $0x8] sm:$0xf]
        %v8132 = vld [vmem:[%s1094 + $0xc] sm:$0x1]
        %v8133 = vld [vmem:[%s1094 + $0x10] sm:$0xf]
        %v8134 = vld [vmem:[%s1094 + $0x14] sm:$0x1]
        %v8135 = vld [vmem:[%s1094 + $0x18] sm:$0xf]
        %v8136 = vld [vmem:[%s1094 + $0x1c] sm:$0x1]
        %v8137 = vld [vmem:[%s1094 + $0x20] sm:$0xf]
        %v8138 = vld [vmem:[%s1094 + $0x24] sm:$0x1]
        %v8139 = vld [vmem:[%s1094 + $0x28] sm:$0xf]
        %v8140 = vld [vmem:[%s1094 + $0x2c] sm:$0x1]
        %v8141 = vld [vmem:[%s1094 + $0x30] sm:$0xf]
        %v8142 = vld [vmem:[%s1094 + $0x34] sm:$0x1]
        %v8143 = vld [vmem:[%s1094 + $0x38] sm:$0xf]
        %v8144 = vld [vmem:[%s1094 + $0x3c] sm:$0x1]
        %v8146 = vshrl.u32 %v8129, 16
        %v8148 = vrot.slane %v8146, 4
        %v8149 = vshll.u32 %v8129, 16
        %v8151 = vrot.slane %v8149, 5
        %v8152 = vor.u32 %v8148, %v8151
        %v8153 = vrot.slane %v8152, 4
        %v8155 = vshll.u32 %v8130, 16
        %v8157 = vrot.slane %v8155, 5
        %v8158 = vsel %vm559, %v8153, %v8157
        %v8160 = vshrl.u32 %v8131, 16
        %v8162 = vrot.slane %v8160, 4
        %v8163 = vshll.u32 %v8131, 16
        %v8165 = vrot.slane %v8163, 5
        %v8166 = vor.u32 %v8162, %v8165
        %v8167 = vrot.slane %v8166, 4
        %v8169 = vshll.u32 %v8132, 16
        %v8171 = vrot.slane %v8169, 5
        %v8172 = vsel %vm559, %v8167, %v8171
        %v8174 = vshrl.u32 %v8133, 16
        %v8176 = vrot.slane %v8174, 4
        %v8177 = vshll.u32 %v8133, 16
        %v8179 = vrot.slane %v8177, 5
        %v8180 = vor.u32 %v8176, %v8179
        %v8181 = vrot.slane %v8180, 4
        %v8183 = vshll.u32 %v8134, 16
        %v8185 = vrot.slane %v8183, 5
        %v8186 = vsel %vm559, %v8181, %v8185
        %v8188 = vshrl.u32 %v8135, 16
        %v8190 = vrot.slane %v8188, 4
        %v8191 = vshll.u32 %v8135, 16
        %v8193 = vrot.slane %v8191, 5
        %v8194 = vor.u32 %v8190, %v8193
        %v8195 = vrot.slane %v8194, 4
        %v8197 = vshll.u32 %v8136, 16
        %v8199 = vrot.slane %v8197, 5
        %v8200 = vsel %vm559, %v8195, %v8199
        %v8202 = vshrl.u32 %v8137, 16
        %v8204 = vrot.slane %v8202, 4
        %v8205 = vshll.u32 %v8137, 16
        %v8207 = vrot.slane %v8205, 5
        %v8208 = vor.u32 %v8204, %v8207
        %v8209 = vrot.slane %v8208, 4
        %v8211 = vshll.u32 %v8138, 16
        %v8213 = vrot.slane %v8211, 5
        %v8214 = vsel %vm559, %v8209, %v8213
        %v8216 = vshrl.u32 %v8139, 16
        %v8218 = vrot.slane %v8216, 4
        %v8219 = vshll.u32 %v8139, 16
        %v8221 = vrot.slane %v8219, 5
        %v8222 = vor.u32 %v8218, %v8221
        %v8223 = vrot.slane %v8222, 4
        %v8225 = vshll.u32 %v8140, 16
        %v8227 = vrot.slane %v8225, 5
        %v8228 = vsel %vm559, %v8223, %v8227
        %v8230 = vshrl.u32 %v8141, 16
        %v8232 = vrot.slane %v8230, 4
        %v8233 = vshll.u32 %v8141, 16
        %v8235 = vrot.slane %v8233, 5
        %v8236 = vor.u32 %v8232, %v8235
        %v8237 = vrot.slane %v8236, 4
        %v8239 = vshll.u32 %v8142, 16
        %v8241 = vrot.slane %v8239, 5
        %v8242 = vsel %vm559, %v8237, %v8241
        %v8244 = vshrl.u32 %v8143, 16
        %v8246 = vrot.slane %v8244, 4
        %v8247 = vshll.u32 %v8143, 16
        %v8249 = vrot.slane %v8247, 5
        %v8250 = vor.u32 %v8246, %v8249
        %v8251 = vrot.slane %v8250, 4
        %v8253 = vshll.u32 %v8144, 16
        %v8255 = vrot.slane %v8253, 5
        %v8256 = vsel %vm559, %v8251, %v8255
        %8257 = vrot.lane.b32.xlu0 %v8158, 96
        %v8258 = vpop.permute.xlu0 %8257
        %8259 = vrot.lane.b32.xlu0 %v8172, 96
        %v8260 = vpop.permute.xlu0 %8259
        %8261 = vrot.lane.b32.xlu0 %v8186, 96
        %v8262 = vpop.permute.xlu0 %8261
        %8263 = vrot.lane.b32.xlu0 %v8200, 96
        %v8264 = vpop.permute.xlu0 %8263
        %8265 = vrot.lane.b32.xlu0 %v8214, 96
        %v8266 = vpop.permute.xlu0 %8265
        %8267 = vrot.lane.b32.xlu0 %v8228, 96
        %v8268 = vpop.permute.xlu0 %8267
        %8269 = vrot.lane.b32.xlu0 %v8242, 96
        %v8270 = vpop.permute.xlu0 %8269
        %8271 = vrot.lane.b32.xlu0 %v8256, 96
        %v8272 = vpop.permute.xlu0 %8271
        %8281 = vst.msk [vmem:[#allocation3 + $0x4] sm:$0xf] %vm845, %v8258
        %8282 = vst.msk [vmem:[#allocation3 + $0x10] sm:$0xf] %vm845, %v8260
        %8283 = vst.msk [vmem:[#allocation3 + $0x1c] sm:$0xf] %vm845, %v8262
        %8284 = vst.msk [vmem:[#allocation3 + $0x28] sm:$0xf] %vm845, %v8264
        %8285 = vst.msk [vmem:[#allocation3 + $0x34] sm:$0xf] %vm845, %v8266
        %8286 = vst.msk [vmem:[#allocation3 + $0x40] sm:$0xf] %vm845, %v8268
        %8287 = vst.msk [vmem:[#allocation3 + $0x4c] sm:$0xf] %vm845, %v8270
        %8288 = vst.msk [vmem:[#allocation3 + $0x58] sm:$0xf] %vm845, %v8272
        %v8289 = vld [vmem:[%s1094] sm:$0xe]
        %v8290 = vld [vmem:[%s1094 + $0x4] sm:$0x1]
        %v8291 = vld [vmem:[%s1094 + $0x8] sm:$0xe]
        %v8292 = vld [vmem:[%s1094 + $0xc] sm:$0x1]
        %v8293 = vld [vmem:[%s1094 + $0x10] sm:$0xe]
        %v8294 = vld [vmem:[%s1094 + $0x14] sm:$0x1]
        %v8295 = vld [vmem:[%s1094 + $0x18] sm:$0xe]
        %v8296 = vld [vmem:[%s1094 + $0x1c] sm:$0x1]
        %v8297 = vld [vmem:[%s1094 + $0x20] sm:$0xe]
        %v8298 = vld [vmem:[%s1094 + $0x24] sm:$0x1]
        %v8299 = vld [vmem:[%s1094 + $0x28] sm:$0xe]
        %v8300 = vld [vmem:[%s1094 + $0x2c] sm:$0x1]
        %v8301 = vld [vmem:[%s1094 + $0x30] sm:$0xe]
        %v8302 = vld [vmem:[%s1094 + $0x34] sm:$0x1]
        %v8303 = vld [vmem:[%s1094 + $0x38] sm:$0xe]
        %v8304 = vld [vmem:[%s1094 + $0x3c] sm:$0x1]
        %v8321 = vrot.slane %v8289, 5
        %v8322 = vrot.slane %v8321, 4
        %v8323 = vrot.slane %v8290, 5
        %v8324 = vsel %vm739, %v8322, %v8323
        %v8325 = vrot.slane %v8291, 5
        %v8326 = vrot.slane %v8325, 4
        %v8327 = vrot.slane %v8292, 5
        %v8328 = vsel %vm739, %v8326, %v8327
        %v8329 = vrot.slane %v8293, 5
        %v8330 = vrot.slane %v8329, 4
        %v8331 = vrot.slane %v8294, 5
        %v8332 = vsel %vm739, %v8330, %v8331
        %v8333 = vrot.slane %v8295, 5
        %v8334 = vrot.slane %v8333, 4
        %v8335 = vrot.slane %v8296, 5
        %v8336 = vsel %vm739, %v8334, %v8335
        %v8337 = vrot.slane %v8297, 5
        %v8338 = vrot.slane %v8337, 4
        %v8339 = vrot.slane %v8298, 5
        %v8340 = vsel %vm739, %v8338, %v8339
        %v8341 = vrot.slane %v8299, 5
        %v8342 = vrot.slane %v8341, 4
        %v8343 = vrot.slane %v8300, 5
        %v8344 = vsel %vm739, %v8342, %v8343
        %v8345 = vrot.slane %v8301, 5
        %v8346 = vrot.slane %v8345, 4
        %v8347 = vrot.slane %v8302, 5
        %v8348 = vsel %vm739, %v8346, %v8347
        %v8349 = vrot.slane %v8303, 5
        %v8350 = vrot.slane %v8349, 4
        %v8351 = vrot.slane %v8304, 5
        %v8352 = vsel %vm739, %v8350, %v8351
        %8361 = vst.msk [vmem:[#allocation3 + $0x8] sm:$0xf] %vm278, %v8324
        %8362 = vst.msk [vmem:[#allocation3 + $0x14] sm:$0xf] %vm278, %v8328
        %8363 = vst.msk [vmem:[#allocation3 + $0x20] sm:$0xf] %vm278, %v8332
        %8364 = vst.msk [vmem:[#allocation3 + $0x2c] sm:$0xf] %vm278, %v8336
        %8365 = vst.msk [vmem:[#allocation3 + $0x38] sm:$0xf] %vm278, %v8340
        %8366 = vst.msk [vmem:[#allocation3 + $0x44] sm:$0xf] %vm278, %v8344
        %8367 = vst.msk [vmem:[#allocation3 + $0x50] sm:$0xf] %vm278, %v8348
        %8368 = vst.msk [vmem:[#allocation3 + $0x5c] sm:$0xf] %vm278, %v8352
        %v8369 = vld [vmem:[#allocation3] sm:$0xff]
        %v8370 = vld [vmem:[#allocation3 + $0x8] sm:$0xf]
        %v8371 = vld [vmem:[#allocation3 + $0xc] sm:$0xff]
        %v8372 = vld [vmem:[#allocation3 + $0x14] sm:$0xf]
        %v8373 = vld [vmem:[#allocation3 + $0x18] sm:$0xff]
        %v8374 = vld [vmem:[#allocation3 + $0x20] sm:$0xf]
        %v8375 = vld [vmem:[#allocation3 + $0x24] sm:$0xff]
        %v8376 = vld [vmem:[#allocation3 + $0x2c] sm:$0xf]
        %v8377 = vld [vmem:[#allocation3 + $0x30] sm:$0xff]
        %v8378 = vld [vmem:[#allocation3 + $0x38] sm:$0xf]
        %v8379 = vld [vmem:[#allocation3 + $0x3c] sm:$0xff]
        %v8380 = vld [vmem:[#allocation3 + $0x44] sm:$0xf]
        %v8381 = vld [vmem:[#allocation3 + $0x48] sm:$0xff]
        %v8382 = vld [vmem:[#allocation3 + $0x50] sm:$0xf]
        %v8383 = vld [vmem:[#allocation3 + $0x54] sm:$0xff]
        %v8384 = vld [vmem:[#allocation3 + $0x5c] sm:$0xf]
        %s8385 = scalar_lea.vmem %s3, 720
        %v8386 = vld [vmem:[%s8385] sm:$0xf]
        %v8387 = vld [vmem:[%s8385 + $0x4] sm:$0xf]
        %v8388 = vld [vmem:[%s8385 + $0x8] sm:$0xf]
        %v8389 = vld [vmem:[%s8385 + $0xc] sm:$0xf]
        %v8390 = vld [vmem:[%s8385 + $0x10] sm:$0xf]
        %v8391 = vld [vmem:[%s8385 + $0x14] sm:$0xf]
        %v8392 = vld [vmem:[%s8385 + $0x18] sm:$0xf]
        %v8393 = vld [vmem:[%s8385 + $0x1c] sm:$0xf]
        %v8394 = vld [vmem:[%s8385 + $0x20] sm:$0xf]
        %v8395 = vld [vmem:[%s8385 + $0x24] sm:$0xf]
        %v8396 = vld [vmem:[%s8385 + $0x28] sm:$0xf]
        %v8397 = vld [vmem:[%s8385 + $0x2c] sm:$0xf]
        %v8398 = vld [vmem:[%s8385 + $0x30] sm:$0xf]
        %v8399 = vld [vmem:[%s8385 + $0x34] sm:$0xf]
        %v8400 = vld [vmem:[%s8385 + $0x38] sm:$0xf]
        %v8401 = vld [vmem:[%s8385 + $0x3c] sm:$0xf]
        %v8402 = vld [vmem:[%s8385 + $0x40] sm:$0xf]
        %v8403 = vld [vmem:[%s8385 + $0x44] sm:$0xf]
        %v8404 = vld [vmem:[%s8385 + $0x48] sm:$0xf]
        %v8405 = vld [vmem:[%s8385 + $0x4c] sm:$0xf]
        %v8406 = vld [vmem:[%s8385 + $0x50] sm:$0xf]
        %v8407 = vld [vmem:[%s8385 + $0x54] sm:$0xf]
        %v8408 = vld [vmem:[%s8385 + $0x58] sm:$0xf]
        %v8409 = vld [vmem:[%s8385 + $0x5c] sm:$0xf]
        %v8410 = vld [vmem:[%s8385 + $0x60] sm:$0xf]
        %v8411 = vld [vmem:[%s8385 + $0x64] sm:$0xf]
        %v8412 = vld [vmem:[%s8385 + $0x68] sm:$0xf]
        %v8413 = vld [vmem:[%s8385 + $0x6c] sm:$0xf]
        %v8414 = vld [vmem:[%s8385 + $0x70] sm:$0xf]
        %v8415 = vld [vmem:[%s8385 + $0x74] sm:$0xf]
        %v8416 = vld [vmem:[%s8385 + $0x78] sm:$0xf]
        %v8417 = vld [vmem:[%s8385 + $0x7c] sm:$0xf]
        %v8418 = vld [vmem:[%s8385 + $0x80] sm:$0xf]
        %v8419 = vld [vmem:[%s8385 + $0x84] sm:$0xf]
        %v8420 = vld [vmem:[%s8385 + $0x88] sm:$0xf]
        %v8421 = vld [vmem:[%s8385 + $0x8c] sm:$0xf]
        %s8422 = scalar_lea.vmem %s4, 5
        %v8423 = vld [vmem:[%s8422] sm:$0x1]
        %v8425 = vlaneseq
        %v8426 = vshrl.u32 %v8425, 7
        %v8427 = vsub.s32 0, %v8426
        %v8428 = vrot.slane %v8423, %v8427
        %v8446 = vunpack.c.l.b16 %v8369
        %v8447 = vunpack.c.h.b16 %v8369
        %v8448 = vunpack.c.l.b16 %v8370
        %v8449 = vunpack.c.l.b16 %v8371
        %v8450 = vunpack.c.h.b16 %v8371
        %v8451 = vunpack.c.l.b16 %v8372
        %v8452 = vunpack.c.l.b16 %v8373
        %v8453 = vunpack.c.h.b16 %v8373
        %v8454 = vunpack.c.l.b16 %v8374
        %v8455 = vunpack.c.l.b16 %v8375
        %v8456 = vunpack.c.h.b16 %v8375
        %v8457 = vunpack.c.l.b16 %v8376
        %v8458 = vunpack.c.l.b16 %v8377
        %v8459 = vunpack.c.h.b16 %v8377
        %v8460 = vunpack.c.l.b16 %v8378
        %v8461 = vunpack.c.l.b16 %v8379
        %v8462 = vunpack.c.h.b16 %v8379
        %v8463 = vunpack.c.l.b16 %v8380
        %v8464 = vunpack.c.l.b16 %v8381
        %v8465 = vunpack.c.h.b16 %v8381
        %v8466 = vunpack.c.l.b16 %v8382
        %v8467 = vunpack.c.l.b16 %v8383
        %v8468 = vunpack.c.h.b16 %v8383
        %v8469 = vunpack.c.l.b16 %v8384
        %v8470 = vpack.c.b16 %v8449, %v8446
        %v8471 = vpack.c.b16 %v8450, %v8447
        %v8472 = vpack.c.b16 %v8451, %v8448
        %v8473 = vpack.c.b16 %v8455, %v8452
        %v8474 = vpack.c.b16 %v8456, %v8453
        %v8475 = vpack.c.b16 %v8457, %v8454
        %v8476 = vpack.c.b16 %v8461, %v8458
        %v8477 = vpack.c.b16 %v8462, %v8459
        %v8478 = vpack.c.b16 %v8463, %v8460
        %v8479 = vpack.c.b16 %v8467, %v8464
        %v8480 = vpack.c.b16 %v8468, %v8465
        %v8481 = vpack.c.b16 %v8469, %v8466
        %v8526 = vunpack.c.l.b16 %v8386
        %v8527 = vunpack.c.l.b16 %v8387
        %v8528 = vunpack.c.l.b16 %v8388
        %v8529 = vunpack.c.l.b16 %v8389
        %v8530 = vunpack.c.l.b16 %v8390
        %v8531 = vunpack.c.l.b16 %v8391
        %v8532 = vunpack.c.l.b16 %v8392
        %v8533 = vunpack.c.l.b16 %v8393
        %v8534 = vunpack.c.l.b16 %v8394
        %v8535 = vunpack.c.l.b16 %v8395
        %v8536 = vunpack.c.l.b16 %v8396
        %v8537 = vunpack.c.l.b16 %v8397
        %v8538 = vunpack.c.l.b16 %v8398
        %v8539 = vunpack.c.l.b16 %v8399
        %v8540 = vunpack.c.l.b16 %v8400
        %v8541 = vunpack.c.l.b16 %v8401
        %v8542 = vunpack.c.l.b16 %v8402
        %v8543 = vunpack.c.l.b16 %v8403
        %v8544 = vunpack.c.l.b16 %v8404
        %v8545 = vunpack.c.l.b16 %v8405
        %v8546 = vunpack.c.l.b16 %v8406
        %v8547 = vunpack.c.l.b16 %v8407
        %v8548 = vunpack.c.l.b16 %v8408
        %v8549 = vunpack.c.l.b16 %v8409
        %v8550 = vunpack.c.l.b16 %v8410
        %v8551 = vunpack.c.l.b16 %v8411
        %v8552 = vunpack.c.l.b16 %v8412
        %v8553 = vunpack.c.l.b16 %v8413
        %v8554 = vunpack.c.l.b16 %v8414
        %v8555 = vunpack.c.l.b16 %v8415
        %v8556 = vunpack.c.l.b16 %v8416
        %v8557 = vunpack.c.l.b16 %v8417
        %v8558 = vunpack.c.l.b16 %v8418
        %v8559 = vunpack.c.l.b16 %v8419
        %v8560 = vunpack.c.l.b16 %v8420
        %v8561 = vunpack.c.l.b16 %v8421
        %v8562 = vpack.c.b16 %v8527, %v8526
        %v8563 = vpack.c.b16 %v8529, %v8528
        %v8564 = vpack.c.b16 %v8531, %v8530
        %v8565 = vpack.c.b16 %v8533, %v8532
        %v8566 = vpack.c.b16 %v8535, %v8534
        %v8567 = vpack.c.b16 %v8537, %v8536
        %v8568 = vpack.c.b16 %v8539, %v8538
        %v8569 = vpack.c.b16 %v8541, %v8540
        %v8570 = vpack.c.b16 %v8543, %v8542
        %v8571 = vpack.c.b16 %v8545, %v8544
        %v8572 = vpack.c.b16 %v8547, %v8546
        %v8573 = vpack.c.b16 %v8549, %v8548
        %v8574 = vpack.c.b16 %v8551, %v8550
        %v8575 = vpack.c.b16 %v8553, %v8552
        %v8576 = vpack.c.b16 %v8555, %v8554
        %v8577 = vpack.c.b16 %v8557, %v8556
        %v8578 = vpack.c.b16 %v8559, %v8558
        %v8579 = vpack.c.b16 %v8561, %v8560
        %v8599 = vsel %vm269, %v8472, 0
        %v8602 = vsel %vm269, %v8475, 0
        %v8605 = vsel %vm269, %v8478, 0
        %v8608 = vsel %vm269, %v8481, 0
        %8610 = vmatprep.subr.bf16.mxu0 0
        %8611 = vmatpush1.bf16.msra.mxu0 %v8562
        %8612 = vmatprep.subr.bf16.mxu0 0
        %8613 = vmatpush1.bf16.msra.mxu0 %v8563
        %8614 = vmatprep.subr.bf16.mxu0 0
        %8615 = vmatpush1.bf16.msra.mxu0 %v8564
        %8616 = vmatprep.subr.bf16.mxu0 0
        %8617 = vmatpush1.bf16.msra.mxu0 %v8565
        %8618 = vmatprep.subr.bf16.mxu0 0
        %8619 = vmatpush1.bf16.msra.mxu0 %v8566
        %8620 = vmatprep.subr.bf16.mxu0 0
        %8621 = vmatpush1.bf16.msra.mxu0 %v8567
        %8622 = vmatprep.subr.bf16.mxu0 0
        %8623 = vmatpush1.bf16.msra.mxu0 %v8568
        %8624 = vmatprep.subr.bf16.mxu0 0
        %8625 = vmatpush1.bf16.msra.mxu0 %v8569
        %8626 = vmatprep.subr.bf16.mxu0 0
        %8627 = vmatpush1.bf16.msra.mxu0 %v8570
        %8628 = vmatprep.subr.bf16.mxu0 0
        %8629 = vmatpush1.bf16.msra.mxu0 %v8571
        %8630 = vmatprep.subr.bf16.mxu0 0
        %8631 = vmatpush1.bf16.msra.mxu0 %v8572
        %8632 = vmatprep.subr.bf16.mxu0 0
        %8633 = vmatpush1.bf16.msra.mxu0 %v8573
        %8634 = vmatprep.subr.bf16.mxu0 0
        %8635 = vmatpush1.bf16.msra.mxu0 %v8574
        %8636 = vmatprep.subr.bf16.mxu0 0
        %8637 = vmatpush1.bf16.msra.mxu0 %v8575
        %8638 = vmatprep.subr.bf16.mxu0 0
        %8639 = vmatpush1.bf16.msra.mxu0 %v8576
        %8640 = vmatprep.subr.bf16.mxu0 0
        %8641 = vmatpush1.bf16.msra.mxu0 %v8577
        %8642 = vmatprep.mubr.bf16.mxu0 %v8471
        %8643 = vmatmul.mubr.bf16.gmra.mrb[0].mxu0 %v8470
        %v8644 = vpop.f32.mrb[0].mxu0
        %v8645 = vadd.f32 %v8428, %v8644
        %v8646 = vpop.f32.mrb[0].mxu0
        %v8647 = vpop.f32.mrb[0].mxu0
        %v8648 = vadd.f32 %v8428, %v8647
        %v8649 = vpop.f32.mrb[0].mxu0
        %8650 = vmatprep.mubr.bf16.mxu0 %v8474
        %8651 = vmatmul.mubr.bf16.gmra.mrb[0].mxu0 %v8473
        %v8652 = vpop.f32.mrb[0].mxu0
        %v8653 = vadd.f32 %v8428, %v8652
        %v8654 = vpop.f32.mrb[0].mxu0
        %v8655 = vpop.f32.mrb[0].mxu0
        %v8656 = vadd.f32 %v8428, %v8655
        %v8657 = vpop.f32.mrb[0].mxu0
        %8658 = vmatprep.mubr.bf16.mxu0 %v8477
        %8659 = vmatmul.mubr.bf16.gmra.mrb[0].mxu0 %v8476
        %v8660 = vpop.f32.mrb[0].mxu0
        %v8661 = vadd.f32 %v8428, %v8660
        %v8662 = vpop.f32.mrb[0].mxu0
        %v8663 = vpop.f32.mrb[0].mxu0
        %v8664 = vadd.f32 %v8428, %v8663
        %v8665 = vpop.f32.mrb[0].mxu0
        %8666 = vmatprep.mubr.bf16.mxu0 %v8480
        %8667 = vmatmul.mubr.bf16.gmra.mrb[0].mxu0 %v8479
        %v8668 = vpop.f32.mrb[0].mxu0
        %v8669 = vadd.f32 %v8428, %v8668
        %v8670 = vpop.f32.mrb[0].mxu0
        %v8671 = vpop.f32.mrb[0].mxu0
        %v8672 = vadd.f32 %v8428, %v8671
        %v8673 = vpop.f32.mrb[0].mxu0
        %8674 = vdwg.mxu0
        %8675 = vmatprep.subr.bf16.mxu0 0
        %8676 = vmatpush1.bf16.msra.mxu0 %v8578
        %8677 = vmatprep.subr.bf16.mxu0 0
        %8678 = vmatpush1.bf16.msra.mxu0 %v8579
        %8679 = vmatprep.subr.bf16.mxu0 0
        %8680 = vmatpush1.bf16.msra.mxu0 0
        %8681 = vmatprep.subr.bf16.mxu0 0
        %8682 = vmatpush1.bf16.msra.mxu0 0
        %8683 = vmatprep.subr.bf16.mxu0 0
        %8684 = vmatpush1.bf16.msra.mxu0 0
        %8685 = vmatprep.subr.bf16.mxu0 0
        %8686 = vmatpush1.bf16.msra.mxu0 0
        %8687 = vmatprep.subr.bf16.mxu0 0
        %8688 = vmatpush1.bf16.msra.mxu0 0
        %8689 = vmatprep.subr.bf16.mxu0 0
        %8690 = vmatpush1.bf16.msra.mxu0 0
        %8691 = vmatprep.subr.bf16.mxu0 0
        %8692 = vmatpush1.bf16.msra.mxu0 0
        %8693 = vmatprep.subr.bf16.mxu0 0
        %8694 = vmatpush1.bf16.msra.mxu0 0
        %8695 = vmatprep.subr.bf16.mxu0 0
        %8696 = vmatpush1.bf16.msra.mxu0 0
        %8697 = vmatprep.subr.bf16.mxu0 0
        %8698 = vmatpush1.bf16.msra.mxu0 0
        %8699 = vmatprep.subr.bf16.mxu0 0
        %8700 = vmatpush1.bf16.msra.mxu0 0
        %8701 = vmatprep.subr.bf16.mxu0 0
        %8702 = vmatpush1.bf16.msra.mxu0 0
        %8703 = vmatprep.subr.bf16.mxu0 0
        %8704 = vmatpush1.bf16.msra.mxu0 0
        %8705 = vmatprep.subr.bf16.mxu0 0
        %8706 = vmatpush1.bf16.msra.mxu0 0
        %8707 = vmatprep.mubr.bf16.mxu0 0
        %8708 = vmatmul.mubr.bf16.gmra.mrb[0].mxu0 %v8599
        %v8709 = vpop.f32.mrb[0].mxu0
        %v8710 = vadd.f32 %v8645, %v8709
        %v8711 = vpop.f32.mrb[0].mxu0
        %v8712 = vpop.f32.mrb[0].mxu0
        %v8713 = vadd.f32 %v8648, %v8712
        %v8714 = vpop.f32.mrb[0].mxu0
        %8715 = vmatprep.mubr.bf16.mxu0 0
        %8716 = vmatmul.mubr.bf16.gmra.mrb[0].mxu0 %v8602
        %v8717 = vpop.f32.mrb[0].mxu0
        %v8718 = vadd.f32 %v8653, %v8717
        %v8719 = vpop.f32.mrb[0].mxu0
        %v8720 = vpop.f32.mrb[0].mxu0
        %v8721 = vadd.f32 %v8656, %v8720
        %v8722 = vpop.f32.mrb[0].mxu0
        %8723 = vmatprep.mubr.bf16.mxu0 0
        %8724 = vmatmul.mubr.bf16.gmra.mrb[0].mxu0 %v8605
        %v8725 = vpop.f32.mrb[0].mxu0
        %v8726 = vadd.f32 %v8661, %v8725
        %v8727 = vpop.f32.mrb[0].mxu0
        %v8728 = vpop.f32.mrb[0].mxu0
        %v8729 = vadd.f32 %v8664, %v8728
        %v8730 = vpop.f32.mrb[0].mxu0
        %8731 = vmatprep.mubr.bf16.mxu0 0
        %8732 = vmatmul.mubr.bf16.gmra.mrb[0].mxu0 %v8608
        %v8733 = vpop.f32.mrb[0].mxu0
        %v8734 = vadd.f32 %v8669, %v8733
        %v8735 = vpop.f32.mrb[0].mxu0
        %v8736 = vpop.f32.mrb[0].mxu0
        %v8737 = vadd.f32 %v8672, %v8736
        %v8738 = vpop.f32.mrb[0].mxu0
        %8739 = vdwg.mxu0
        %v8740 = vld [vmem:[%s259 + $0x1] sm:$0x1]
        %v8741 = vld [vmem:[%s245] sm:$0xff]
        %v8742 = vld [vmem:[%s245 + $0x8] sm:$0xff]
        %v8743 = vld [vmem:[%s245 + $0x10] sm:$0xff]
        %v8744 = vld [vmem:[%s245 + $0x18] sm:$0xff]
        %v8745 = vld [vmem:[%s245 + $0x20] sm:$0xff]
        %v8746 = vld [vmem:[%s245 + $0x28] sm:$0xff]
        %v8747 = vld [vmem:[%s245 + $0x30] sm:$0xff]
        %v8748 = vld [vmem:[%s245 + $0x38] sm:$0xff]
        %v8749 = vlaneseq
        %v8750 = vshrl.u32 %v8749, 7
        %v8751 = vsub.s32 0, %v8750
        %v8752 = vrot.slane %v8740, %v8751
        %v8753 = vmul.f32 %v8710, %v8752
        %v8754 = vmul.f32 %v8713, %v8752
        %v8755 = vmul.f32 %v8718, %v8752
        %v8756 = vmul.f32 %v8721, %v8752
        %v8757 = vmul.f32 %v8726, %v8752
        %v8758 = vmul.f32 %v8729, %v8752
        %v8759 = vmul.f32 %v8734, %v8752
        %v8760 = vmul.f32 %v8737, %v8752
        %v8761 = vadd.f32 %v8741, %v8753
        %v8762 = vadd.f32 %v8742, %v8754
        %v8763 = vadd.f32 %v8743, %v8755
        %v8764 = vadd.f32 %v8744, %v8756
        %v8765 = vadd.f32 %v8745, %v8757
        %v8766 = vadd.f32 %v8746, %v8758
        %v8767 = vadd.f32 %v8747, %v8759
        %v8768 = vadd.f32 %v8748, %v8760
        %8769 = vst.msk [vmem:[%s245] sm:$0xff] %vm269, %v8761
        %8770 = vst.msk [vmem:[%s245 + $0x8] sm:$0xff] %vm269, %v8762
        %8771 = vst.msk [vmem:[%s245 + $0x10] sm:$0xff] %vm269, %v8763
        %8772 = vst.msk [vmem:[%s245 + $0x18] sm:$0xff] %vm269, %v8764
        %8773 = vst.msk [vmem:[%s245 + $0x20] sm:$0xff] %vm269, %v8765
        %8774 = vst.msk [vmem:[%s245 + $0x28] sm:$0xff] %vm269, %v8766
        %8775 = vst.msk [vmem:[%s245 + $0x30] sm:$0xff] %vm269, %v8767
        %8776 = vst.msk [vmem:[%s245 + $0x38] sm:$0xff] %vm269, %v8768
        %s8777 = sand.u32 %s147, 1
        %s8778 = scalar_lea.sflag [#allocation5], %s8777
        %s8779 = sand.u32 %s147, 1
        %s8780 = smul.addr %s8779, 64
        %s8781 = scalar_lea.vmem [#allocation4], %s8780
        // Predicated region
        $region41: #{tpu_custom_call.1} parent=39 // pred_check
          %p8782 = pneg %p157
        $region42: #{tpu_custom_call.1} parent=39 // pred_check_branch
          %8784 = sbr.rel (%p8782) target = $region44
        $region43: #{tpu_custom_call.1} parent=39 // pred_region
          %s8786 = ssub.s32 1024, 1024
          %8787 = vsyncadd %s8778, %s8786
          %s8788 = smul.addr %s19, 8
          %s8789 = smul.addr %s8788, 128
          %s8790 = scalar_lea.hbm %s5, %s8789
          %s8791 = sshll.u32 %s8781, 4
          %s8792 = int_to_ptr.vmem [resolvable:$true] %s8791
          %8797 = dma.vmem_to_hbm [thread:$0]  %s8792, 1024, %s8790, %s8778, 128, 128, 8
        $region44: #{tpu_custom_call.1} parent=39 // pred_fallthru
          _
      $region40: #{tpu_custom_call.1} parent=5 // pred_fallthru
        _
      %p8798 = scmp.le.s32.totalorder 2, %s14
      // Predicated region
      $region45: #{tpu_custom_call.1} parent=5 // pred_check
        %p8799 = pneg %p8798
      $region46: #{tpu_custom_call.1} parent=5 // pred_check_branch
        %8801 = sbr.rel (%p8799) target = $region48
      $region47: #{tpu_custom_call.1} parent=5 // pred_region
        %s8802 = ssub.s32 %s14, 2
        // Predicated region
        $region49: #{tpu_custom_call.1} parent=47 // pred_check
          %p8803 = pneg %p163
        $region50: #{tpu_custom_call.1} parent=47 // pred_check_branch
          %8805 = sbr.rel (%p8803) target = $region52
        $region51: #{tpu_custom_call.1} parent=47 // pred_region
          %s8806 = sand.u32 %s148, 1
          %s8807 = scalar_lea.sflag [#allocation5], %s8806
          %s8808 = sand.u32 %s148, 1
          %s8809 = smul.addr %s8808, 64
          %s8810 = scalar_lea.vmem [#allocation4], %s8809
          %8811 = dma.done %s8807, 1024
        $region52: #{tpu_custom_call.1} parent=47 // pred_fallthru
          _
      $region48: #{tpu_custom_call.1} parent=5 // pred_fallthru
        _
    $region6: #{tpu_custom_call.1} parent=1 // loop_footer
      %s18 = sadd.s32 1, %s14
    $region7: #{tpu_custom_call.1} parent=1 // loop_footer_branch
      %13 = sbr.rel target = $region3
    $region8: #{tpu_custom_call.1} parent=1 // loop_exit
      _
    %8812 = vsyncpa [#allocation5], 1
    %s8813 = scalar_lea.sflag [#allocation5], 1
    %8814 = vsyncpa %s8813, 1

</llo_original>
